<compile_context>
chip_gen: v7x
topology: tpu7x:2x2x1
jax: 0.10.0
libtpu: 0.0.40
codegen_flags: <defaults>
</compile_context>

<pallas_src>
import math
import numpy as np
import jax
import jax.numpy as jnp
from jax.experimental import pallas as pl
from jax.experimental.pallas import tpu as pltpu

# ---------------- small config consistent with the module ----------------
B = 2
INPUT_SIZE = 16                 # sequence length L0
WINDOW_SIZE = [2, 2]            # pyramid window sizes
INNER_SIZE = 3                  # intra-scale neighbourhood
D_MODEL = 32
D_INNER_HID = 64
N_HEAD = 4
D_K = 8
D_V = 8
COV_SIZE = 3
NUM_SEQ = 4
N_LAYER = 2
C_BOT = D_K                     # BottleneckConstruct inner dim = opt.d_k
F_IN = COV_SIZE + 2             # input features: [target, covariates..., series-id]


# ---------------- graph-structure helpers (exact ports of get_mask / refer_points) -------------
def get_mask(input_size, window_size, inner_size):
    all_size = [input_size]
    for i in range(len(window_size)):
        all_size.append(all_size[i] // window_size[i])
    L = sum(all_size)
    mask = np.zeros((L, L), dtype=np.float32)
    inner = inner_size // 2
    for li in range(len(all_size)):
        start = sum(all_size[:li])
        for i in range(start, start + all_size[li]):
            left = max(i - inner, start)
            right = min(i + inner + 1, start + all_size[li])
            mask[i, left:right] = 1
    for li in range(1, len(all_size)):
        start = sum(all_size[:li])
        for i in range(start, start + all_size[li]):
            left = (start - all_size[li - 1]) + (i - start) * window_size[li - 1]
            if i == start + all_size[li] - 1:
                right = start
            else:
                right = (start - all_size[li - 1]) + (i - start + 1) * window_size[li - 1]
            mask[i, left:right] = 1
            mask[left:right, i] = 1
    return (1.0 - mask).astype(np.float32), all_size      # 1.0 == masked (NOT attended)


def refer_points(all_sizes, window_size):
    input_size = all_sizes[0]
    idx = np.zeros((input_size, len(all_sizes)), dtype=np.int32)
    for i in range(input_size):
        idx[i, 0] = i
        former = i
        for j in range(1, len(all_sizes)):
            start = sum(all_sizes[:j])
            inner_layer_idx = former - (start - all_sizes[j - 1])
            former = start + min(inner_layer_idx // window_size[j - 1], all_sizes[j] - 1)
            idx[i, j] = former
    return idx                                             # (input_size, n_scales)


MASK_NP, ALL_SIZE = get_mask(INPUT_SIZE, WINDOW_SIZE, INNER_SIZE)
L_TOT = sum(ALL_SIZE)
N_SCALES = len(ALL_SIZE)
INDEXES_NP = refer_points(ALL_SIZE, WINDOW_SIZE)

# additive attention-mask bias (0 where attended, -1e9 where masked), shared by all heads/batch
MASK_BIAS_NP = (-1e9 * MASK_NP).astype(np.float32)

# one-hot gather matrices for scales 1..N_SCALES-1 (scale 0 of refer_points is the identity)
GATHER_NP = np.zeros((N_SCALES - 1, INPUT_SIZE, L_TOT), dtype=np.float32)
for _j in range(1, N_SCALES):
    for _i in range(INPUT_SIZE):
        GATHER_NP[_j - 1, _i, INDEXES_NP[_i, _j]] = 1.0


# ---------------- in-kernel numeric helpers ----------------
def _layer_norm(z, w, b, eps):
    m = jnp.mean(z, axis=-1, keepdims=True)
    v = jnp.mean(jnp.square(z - m), axis=-1, keepdims=True)
    return (z - m) * jax.lax.rsqrt(v + eps) * w + b


def _gelu_tanh(z):
    # tanh-approx GELU: tanh goes to the EUP slot instead of ~10 VALU ops of the erf poly.
    # (~1e-3-level difference vs torch's exact-erf F.gelu.)
    c = math.sqrt(2.0 / math.pi)
    return 0.5 * z * (1.0 + jnp.tanh(c * (z + 0.044715 * z * z * z)))


# ---------------- the single fused kernel ----------------
def fused_encoder_kernel(*refs):
    n_sc = len(WINDOW_SIZE)
    (x_ref, pos_ref, covw_ref, covb_ref, convw_ref, downw_ref, downb_ref) = refs[0:7]
    conv_refs = refs[7:7 + 3 * n_sc]
    (upw_ref, upb_ref, blnw_ref, blnb_ref, maskb_ref, gmat_ref,
     wq_ref, wk_ref, wv_ref, fcw_ref, fcb_ref,
     ln1w_ref, ln1b_ref, w1_ref, b1_ref, w2_ref, b2_ref,
     ln2w_ref, ln2b_ref,
     out_ref, seq_scr, t_scr) = refs[7 + 3 * n_sc:]

    # ---------------- SingleStepEmbedding ----------------
    x = x_ref[0]                                               # (L0, F_IN)
    covs = x[:, 1:1 + COV_SIZE]                                # (L0, COV)
    seq_ids = x[:, F_IN - 1:F_IN] * (1.0 / NUM_SEQ) - 0.5      # (L0, 1)
    # Linear(cov_size+1, d_model) on cat([covs, seq_ids]) decomposed (avoids tiny lane concat)
    cov_emb = (jnp.dot(covs, covw_ref[0:COV_SIZE, :], preferred_element_type=jnp.float32)
               + seq_ids * covw_ref[COV_SIZE:COV_SIZE + 1, :]
               + covb_ref[...])
    # Conv1d(1, d_model, k=3, padding=1, circular, bias=False) on the target channel.
    # Circular pad folded in-kernel: static jnp.roll (lowers to concat of static slices).
    xt = x[:, 0:1]                                             # (L0, 1)
    w3 = convw_ref[...]                                        # (3, D): w3[k, d] = torch W[d, 0, k]
    prev = jnp.roll(xt, 1, axis=0)                             # x[(i-1) mod L]
    nxt = jnp.roll(xt, -1, axis=0)                             # x[(i+1) mod L]
    data_emb = prev * w3[0:1, :] + xt * w3[1:2, :] + nxt * w3[2:3, :]
    emb = cov_emb + data_emb + pos_ref[...]                    # (L0, D)

    # ---------------- BottleneckConstruct (CSCM) ----------------
    lnw = blnw_ref[...]
    lnb = blnb_ref[...]
    # rows [0:L0) of the pyramid sequence = LayerNorm(enc_input)   (LayerNorm is row-wise)
    seq_scr[0:INPUT_SIZE, :] = _layer_norm(emb, lnw, lnb, 1e-5)
    t = jnp.dot(emb, downw_ref[...], preferred_element_type=jnp.float32) + downb_ref[...]
    t_scr[0:INPUT_SIZE, :] = t                                 # (L0, C_BOT)

    off = INPUT_SIZE
    Lc = INPUT_SIZE
    for s in range(n_sc):
        w = WINDOW_SIZE[s]
        Lo = Lc // w
        cw_ref = conv_refs[3 * s]      # (w, C, C): cw[k, c_in, c_out] = torch W[c_out, c_in, k]
        cb_ref = conv_refs[3 * s + 1]  # (1, C)
        bn_ref = conv_refs[3 * s + 2]  # (4, C): [gamma, beta, running_mean, running_var]
        # strided Conv1d (stride == kernel == w) via strided sublane reads of the VMEM scratch
        acc = jnp.zeros((Lo, C_BOT), jnp.float32)
        for k in range(w):
            tap = t_scr[pl.ds(k, Lo, stride=w), :]             # rows k, k+w, k+2w, ...
            acc = acc + jnp.dot(tap, cw_ref[k], preferred_element_type=jnp.float32)
        y = acc + cb_ref[...]
        # eval-mode BatchNorm1d over channels (running stats), then ELU
        gamma, beta = bn_ref[0:1, :], bn_ref[1:2, :]
        mu, var = bn_ref[2:3, :], bn_ref[3:4, :]
        y = (y - mu) * jax.lax.rsqrt(var + 1e-5) * gamma + beta
        y = jnp.where(y > 0, y, jnp.exp(y) - 1.0)              # ELU(alpha=1)
        # up-projection + LayerNorm (row-wise, so per-segment application == concat-then-LN)
        up = jnp.dot(y, upw_ref[...], preferred_element_type=jnp.float32) + upb_ref[...]
        seq_scr[off:off + Lo, :] = _layer_norm(up, lnw, lnb, 1e-5)
        t_scr[0:Lo, :] = y                                     # input of next scale
        off += Lo
        Lc = Lo

    # ---------------- pyramidal self-attention encoder layers (normalize_before=False) --------
    mask_bias = maskb_ref[...]                                 # (L, L): 0 / -1e9 additive bias
    xcur = seq_scr[...]                                        # (L_TOT, D), VMEM-resident pyramid
    for l in range(N_LAYER):
        attn = jnp.zeros((L_TOT, D_MODEL), jnp.float32)
        for h in range(N_HEAD):
            idx = l * N_HEAD + h
            # per-head (D_MODEL, D_K) weight tiles: K=32 contractions, no 8-lane slicing.
            qh = jnp.dot(xcur, wq_ref[idx], preferred_element_type=jnp.float32)  # Wq pre-scaled
            kh = jnp.dot(xcur, wk_ref[idx], preferred_element_type=jnp.float32)
            vh = jnp.dot(xcur, wv_ref[idx], preferred_element_type=jnp.float32)
            s_h = jax.lax.dot_general(qh, kh, (((1,), (1,)), ((), ())),
                                      preferred_element_type=jnp.float32) + mask_bias
            s_h = s_h - jnp.max(s_h, axis=-1, keepdims=True)
            p = jnp.exp(s_h)
            inv = pl.reciprocal(jnp.sum(p, axis=-1, keepdims=True), approx=True)
            head = jnp.dot(p, vh, preferred_element_type=jnp.float32) * inv
            attn = attn + jnp.dot(head, fcw_ref[idx], preferred_element_type=jnp.float32)
        o = attn + fcb_ref[l] + xcur                           # fc output (bias) + residual
        o = _layer_norm(o, ln1w_ref[l], ln1b_ref[l], 1e-6)     # post-norm
        h1 = jnp.dot(o, w1_ref[l], preferred_element_type=jnp.float32) + b1_ref[l]
        h1 = _gelu_tanh(h1)                                    # F.gelu (tanh approximation)
        o2 = jnp.dot(h1, w2_ref[l], preferred_element_type=jnp.float32) + b2_ref[l] + o
        xcur = _layer_norm(o2, ln2w_ref[l], ln2b_ref[l], 1e-6)

    # ---------------- final pyramid gather -> lane-dense (L0, n_scales*D) ----------------
    out_ref[0, :, 0:D_MODEL] = xcur[0:INPUT_SIZE, :]           # scale 0 of refer_points = identity
    for j in range(1, N_SCALES):
        g = gmat_ref[j - 1]                                    # (L0, L_TOT) one-hot rows
        out_ref[0, :, j * D_MODEL:(j + 1) * D_MODEL] = jnp.dot(
            g, xcur, preferred_element_type=jnp.float32)


# ---------------- BlockSpec helpers ----------------
def _full_spec(shape):
    shape = tuple(shape)
    zeros = (0,) * len(shape)
    return pl.BlockSpec(shape, lambda b, _z=zeros: _z)


def _batch_spec(tail):
    tail = tuple(tail)
    zeros = (0,) * len(tail)
    return pl.BlockSpec((1,) + tail, lambda b, _z=zeros: (b,) + _z)


# ---------------- parameters (deterministic, synthetic) ----------------
def make_params(key):
    ks = iter(jax.random.split(key, 32))

    def rnd(shape, scale=0.1):
        return (scale * jax.random.normal(next(ks), shape)).astype(jnp.float32)

    # positional embedding of SingleStepEmbedding (depends only on input_size / d_model)
    pos = np.arange(INPUT_SIZE, dtype=np.float64)[:, None]
    vec = np.array([10000.0 ** (2.0 * (i // 2) / D_MODEL) for i in range(D_MODEL)], np.float64)
    pe = pos / vec
    pe[:, 0::2] = np.sin(pe[:, 0::2])
    pe[:, 1::2] = np.cos(pe[:, 1::2])

    p = {
        'pos_emb': jnp.asarray(pe, jnp.float32),
        'cov_w': rnd((COV_SIZE + 1, D_MODEL)),
        'cov_b': rnd((1, D_MODEL)),
        'conv_w': rnd((3, D_MODEL)),                 # conv_w[k, d] = torch W[d, 0, k]
        'down_w': rnd((D_MODEL, C_BOT)),
        'down_b': rnd((1, C_BOT)),
        'up_w': rnd((C_BOT, D_MODEL)),
        'up_b': rnd((1, D_MODEL)),
        'bott_ln_w': jnp.ones((1, D_MODEL), jnp.float32),
        'bott_ln_b': jnp.zeros((1, D_MODEL), jnp.float32),
        # graph-structure buffers, precomputed on the host:
        'mask_bias': jnp.asarray(MASK_BIAS_NP),      # additive -1e9 attention mask
        'gather_mats': jnp.asarray(GATHER_NP),       # one-hot gather matrices (scales 1..S-1)
        # stacked encoder-layer weights (leading dim = layer or layer*head):
        'wq': (rnd((N_LAYER * N_HEAD, D_MODEL, D_K))
               * jnp.float32(1.0 / math.sqrt(D_K))), # 1/sqrt(d_k) temperature folded into Wq
        'wk': rnd((N_LAYER * N_HEAD, D_MODEL, D_K)),
        'wv': rnd((N_LAYER * N_HEAD, D_MODEL, D_V)),
        'fc_w': rnd((N_LAYER * N_HEAD, D_V, D_MODEL)),
        'fc_b': rnd((N_LAYER, 1, D_MODEL)),
        'ln1_w': jnp.ones((N_LAYER, 1, D_MODEL), jnp.float32),
        'ln1_b': jnp.zeros((N_LAYER, 1, D_MODEL), jnp.float32),
        'w1': rnd((N_LAYER, D_MODEL, D_INNER_HID)),
        'b1': rnd((N_LAYER, 1, D_INNER_HID)),
        'w2': rnd((N_LAYER, D_INNER_HID, D_MODEL)),
        'b2': rnd((N_LAYER, 1, D_MODEL)),
        'ln2_w': jnp.ones((N_LAYER, 1, D_MODEL), jnp.float32),
        'ln2_b': jnp.zeros((N_LAYER, 1, D_MODEL), jnp.float32),
        'conv_scales': [],
    }
    for w in WINDOW_SIZE:
        cw = rnd((w, C_BOT, C_BOT))                  # cw[k, c_in, c_out] = torch W[c_out, c_in, k]
        cb = rnd((1, C_BOT))
        bn = jnp.concatenate([jnp.ones((1, C_BOT)), jnp.zeros((1, C_BOT)),
                              jnp.zeros((1, C_BOT)), jnp.ones((1, C_BOT))],
                             axis=0).astype(jnp.float32)
        p['conv_scales'].append((cw, cb, bn))
    return p


# ---------------- full forward: ONE pallas_call ----------------
def encoder_forward(x, params):
    # grid=(B,) "parallel": shards the 2 batch rows across v7x's two TensorCores; on v5e/v6e
    # it is a 2-step serial loop with negligible overhead (all other fixed costs fused away).
    cp = pltpu.CompilerParams(dimension_semantics=("parallel",))

    conv_flat = []
    for (cw, cb, bn) in params['conv_scales']:
        conv_flat += [cw, cb, bn]

    inputs = [x,
              params['pos_emb'], params['cov_w'], params['cov_b'], params['conv_w'],
              params['down_w'], params['down_b'],
              *conv_flat,
              params['up_w'], params['up_b'], params['bott_ln_w'], params['bott_ln_b'],
              params['mask_bias'], params['gather_mats'],
              params['wq'], params['wk'], params['wv'], params['fc_w'], params['fc_b'],
              params['ln1_w'], params['ln1_b'], params['w1'], params['b1'],
              params['w2'], params['b2'], params['ln2_w'], params['ln2_b']]

    in_specs = ([_batch_spec((INPUT_SIZE, F_IN))] +
                [_full_spec(a.shape) for a in inputs[1:]])

    return pl.pallas_call(
        fused_encoder_kernel,
        grid=(B,),
        in_specs=in_specs,
        out_specs=_batch_spec((INPUT_SIZE, N_SCALES * D_MODEL)),
        out_shape=jax.ShapeDtypeStruct((B, INPUT_SIZE, N_SCALES * D_MODEL), jnp.float32),
        scratch_shapes=[pltpu.VMEM((L_TOT, D_MODEL), jnp.float32),     # pyramid sequence
                        pltpu.VMEM((INPUT_SIZE, C_BOT), jnp.float32)],  # bottleneck temporaries
        compiler_params=cp,
    )(*inputs)


if __name__ == "__main__":
    root = jax.random.PRNGKey(0)
    kx, kp = jax.random.split(root)
    x = jax.random.normal(kx, (B, INPUT_SIZE, F_IN), dtype=jnp.float32)
    # last input channel is the series-id used by SingleStepEmbedding
    x = x.at[:, :, -1].set(jnp.floor(jnp.abs(x[:, :, -1]) * NUM_SEQ) % NUM_SEQ)

    params = make_params(kp)
    out = encoder_forward(x, params)
    out = jax.block_until_ready(out)

    assert out.shape == (B, INPUT_SIZE, N_SCALES * D_MODEL), out.shape
    assert bool(jnp.all(jnp.isfinite(out)))
    print("KERNEL_OK")
</pallas_src>

<mosaic_0001>
module attributes {stable_mosaic.version = 11 : i64} {
  func.func @fused_encoder_kernel(%arg0: i32, %arg1: memref<1x16x5xf32, #tpu.memory_space<vmem>>, %arg2: memref<16x32xf32, #tpu.memory_space<vmem>>, %arg3: memref<4x32xf32, #tpu.memory_space<vmem>>, %arg4: memref<1x32xf32, #tpu.memory_space<vmem>>, %arg5: memref<3x32xf32, #tpu.memory_space<vmem>>, %arg6: memref<32x8xf32, #tpu.memory_space<vmem>>, %arg7: memref<1x8xf32, #tpu.memory_space<vmem>>, %arg8: memref<2x8x8xf32, #tpu.memory_space<vmem>>, %arg9: memref<1x8xf32, #tpu.memory_space<vmem>>, %arg10: memref<4x8xf32, #tpu.memory_space<vmem>>, %arg11: memref<2x8x8xf32, #tpu.memory_space<vmem>>, %arg12: memref<1x8xf32, #tpu.memory_space<vmem>>, %arg13: memref<4x8xf32, #tpu.memory_space<vmem>>, %arg14: memref<8x32xf32, #tpu.memory_space<vmem>>, %arg15: memref<1x32xf32, #tpu.memory_space<vmem>>, %arg16: memref<1x32xf32, #tpu.memory_space<vmem>>, %arg17: memref<1x32xf32, #tpu.memory_space<vmem>>, %arg18: memref<28x28xf32, #tpu.memory_space<vmem>>, %arg19: memref<2x16x28xf32, #tpu.memory_space<vmem>>, %arg20: memref<8x32x8xf32, #tpu.memory_space<vmem>>, %arg21: memref<8x32x8xf32, #tpu.memory_space<vmem>>, %arg22: memref<8x32x8xf32, #tpu.memory_space<vmem>>, %arg23: memref<8x8x32xf32, #tpu.memory_space<vmem>>, %arg24: memref<2x1x32xf32, #tpu.memory_space<vmem>>, %arg25: memref<2x1x32xf32, #tpu.memory_space<vmem>>, %arg26: memref<2x1x32xf32, #tpu.memory_space<vmem>>, %arg27: memref<2x32x64xf32, #tpu.memory_space<vmem>>, %arg28: memref<2x1x64xf32, #tpu.memory_space<vmem>>, %arg29: memref<2x64x32xf32, #tpu.memory_space<vmem>>, %arg30: memref<2x1x32xf32, #tpu.memory_space<vmem>>, %arg31: memref<2x1x32xf32, #tpu.memory_space<vmem>>, %arg32: memref<2x1x32xf32, #tpu.memory_space<vmem>>, %arg33: memref<1x16x96xf32, #tpu.memory_space<vmem>>, %arg34: memref<28x32xf32, #tpu.memory_space<vmem>>, %arg35: memref<16x8xf32, #tpu.memory_space<vmem>>) attributes {dimension_semantics = [#tpu.dimension_semantics<parallel>], iteration_bounds = array<i64: 2>, scalar_prefetch = 0 : i64, scratch_operands = 2 : i64, tpu.core_type = #tpu.core_type<tc>, window_params = [{transform_indices = @transform_0, window_bounds = array<i64: 1, 16, 5>}, {pipeline_mode = #tpu.pipeline_mode<synchronous>, transform_indices = @transform_1, window_bounds = array<i64: 16, 32>}, {pipeline_mode = #tpu.pipeline_mode<synchronous>, transform_indices = @transform_2, window_bounds = array<i64: 4, 32>}, {pipeline_mode = #tpu.pipeline_mode<synchronous>, transform_indices = @transform_3, window_bounds = array<i64: 1, 32>}, {pipeline_mode = #tpu.pipeline_mode<synchronous>, transform_indices = @transform_4, window_bounds = array<i64: 3, 32>}, {pipeline_mode = #tpu.pipeline_mode<synchronous>, transform_indices = @transform_5, window_bounds = array<i64: 32, 8>}, {pipeline_mode = #tpu.pipeline_mode<synchronous>, transform_indices = @transform_6, window_bounds = array<i64: 1, 8>}, {pipeline_mode = #tpu.pipeline_mode<synchronous>, transform_indices = @transform_7, window_bounds = array<i64: 2, 8, 8>}, {pipeline_mode = #tpu.pipeline_mode<synchronous>, transform_indices = @transform_8, window_bounds = array<i64: 1, 8>}, {pipeline_mode = #tpu.pipeline_mode<synchronous>, transform_indices = @transform_9, window_bounds = array<i64: 4, 8>}, {pipeline_mode = #tpu.pipeline_mode<synchronous>, transform_indices = @transform_10, window_bounds = array<i64: 2, 8, 8>}, {pipeline_mode = #tpu.pipeline_mode<synchronous>, transform_indices = @transform_11, window_bounds = array<i64: 1, 8>}, {pipeline_mode = #tpu.pipeline_mode<synchronous>, transform_indices = @transform_12, window_bounds = array<i64: 4, 8>}, {pipeline_mode = #tpu.pipeline_mode<synchronous>, transform_indices = @transform_13, window_bounds = array<i64: 8, 32>}, {pipeline_mode = #tpu.pipeline_mode<synchronous>, transform_indices = @transform_14, window_bounds = array<i64: 1, 32>}, {pipeline_mode = #tpu.pipeline_mode<synchronous>, transform_indices = @transform_15, window_bounds = array<i64: 1, 32>}, {pipeline_mode = #tpu.pipeline_mode<synchronous>, transform_indices = @transform_16, window_bounds = array<i64: 1, 32>}, {pipeline_mode = #tpu.pipeline_mode<synchronous>, transform_indices = @transform_17, window_bounds = array<i64: 28, 28>}, {pipeline_mode = #tpu.pipeline_mode<synchronous>, transform_indices = @transform_18, window_bounds = array<i64: 2, 16, 28>}, {pipeline_mode = #tpu.pipeline_mode<synchronous>, transform_indices = @transform_19, window_bounds = array<i64: 8, 32, 8>}, {pipeline_mode = #tpu.pipeline_mode<synchronous>, transform_indices = @transform_20, window_bounds = array<i64: 8, 32, 8>}, {pipeline_mode = #tpu.pipeline_mode<synchronous>, transform_indices = @transform_21, window_bounds = array<i64: 8, 32, 8>}, {pipeline_mode = #tpu.pipeline_mode<synchronous>, transform_indices = @transform_22, window_bounds = array<i64: 8, 8, 32>}, {pipeline_mode = #tpu.pipeline_mode<synchronous>, transform_indices = @transform_23, window_bounds = array<i64: 2, 1, 32>}, {pipeline_mode = #tpu.pipeline_mode<synchronous>, transform_indices = @transform_24, window_bounds = array<i64: 2, 1, 32>}, {pipeline_mode = #tpu.pipeline_mode<synchronous>, transform_indices = @transform_25, window_bounds = array<i64: 2, 1, 32>}, {pipeline_mode = #tpu.pipeline_mode<synchronous>, transform_indices = @transform_26, window_bounds = array<i64: 2, 32, 64>}, {pipeline_mode = #tpu.pipeline_mode<synchronous>, transform_indices = @transform_27, window_bounds = array<i64: 2, 1, 64>}, {pipeline_mode = #tpu.pipeline_mode<synchronous>, transform_indices = @transform_28, window_bounds = array<i64: 2, 64, 32>}, {pipeline_mode = #tpu.pipeline_mode<synchronous>, transform_indices = @transform_29, window_bounds = array<i64: 2, 1, 32>}, {pipeline_mode = #tpu.pipeline_mode<synchronous>, transform_indices = @transform_30, window_bounds = array<i64: 2, 1, 32>}, {pipeline_mode = #tpu.pipeline_mode<synchronous>, transform_indices = @transform_31, window_bounds = array<i64: 2, 1, 32>}, {transform_indices = @transform_32, window_bounds = array<i64: 1, 16, 96>}]} {
    %c0 = arith.constant 0 : index
    %c0_0 = arith.constant 0 : index
    %c0_1 = arith.constant 0 : index
    %0 = vector.load %arg1[%c0, %c0_0, %c0_1] : memref<1x16x5xf32, #tpu.memory_space<vmem>>, vector<1x16x5xf32>
    %1 = vector.shape_cast %0 : vector<1x16x5xf32> to vector<16x5xf32>
    %2 = vector.extract_strided_slice %1 {offsets = [0, 1], sizes = [16, 3], strides = [1, 1]} : vector<16x5xf32> to vector<16x3xf32>
    %3 = vector.extract_strided_slice %1 {offsets = [0, 4], sizes = [16, 1], strides = [1, 1]} : vector<16x5xf32> to vector<16x1xf32>
    %cst = arith.constant 2.500000e-01 : f32
    %4 = vector.broadcast %cst : f32 to vector<16x1xf32>
    %5 = arith.mulf %3, %4 : vector<16x1xf32>
    %cst_2 = arith.constant 5.000000e-01 : f32
    %6 = vector.broadcast %cst_2 : f32 to vector<16x1xf32>
    %7 = arith.subf %5, %6 : vector<16x1xf32>
    %c0_3 = arith.constant 0 : index
    %c0_4 = arith.constant 0 : index
    %8 = vector.load %arg3[%c0_3, %c0_4] : memref<4x32xf32, #tpu.memory_space<vmem>>, vector<3x32xf32>
    %cst_5 = arith.constant dense<0.000000e+00> : vector<16x32xf32>
    %9 = tpu.matmul %2, %8, %cst_5 {dimension_numbers = #tpu.dot_dimension_numbers<[1], [0], [0], [1], [0, 0, 1, 1], [], []>} : vector<16x3xf32>, vector<3x32xf32>, vector<16x32xf32> -> vector<16x32xf32>
    %c3 = arith.constant 3 : index
    %c0_6 = arith.constant 0 : index
    %10 = vector.load %arg3[%c3, %c0_6] : memref<4x32xf32, #tpu.memory_space<vmem>>, vector<1x32xf32>
    %11 = vector.broadcast %7 : vector<16x1xf32> to vector<16x32xf32>
    %12 = vector.broadcast %10 : vector<1x32xf32> to vector<16x32xf32>
    %13 = arith.mulf %11, %12 : vector<16x32xf32>
    %14 = arith.addf %9, %13 : vector<16x32xf32>
    %c0_7 = arith.constant 0 : index
    %c0_8 = arith.constant 0 : index
    %15 = vector.load %arg4[%c0_7, %c0_8] : memref<1x32xf32, #tpu.memory_space<vmem>>, vector<1x32xf32>
    %16 = vector.broadcast %15 : vector<1x32xf32> to vector<16x32xf32>
    %17 = arith.addf %14, %16 : vector<16x32xf32>
    %18 = vector.extract_strided_slice %1 {offsets = [0, 0], sizes = [16, 1], strides = [1, 1]} : vector<16x5xf32> to vector<16x1xf32>
    %c0_9 = arith.constant 0 : index
    %c0_10 = arith.constant 0 : index
    %19 = vector.load %arg5[%c0_9, %c0_10] : memref<3x32xf32, #tpu.memory_space<vmem>>, vector<3x32xf32>
    %20 = vector.extract_strided_slice %18 {offsets = [15, 0], sizes = [1, 1], strides = [1, 1]} : vector<16x1xf32> to vector<1x1xf32>
    %21 = vector.extract_strided_slice %18 {offsets = [0, 0], sizes = [15, 1], strides = [1, 1]} : vector<16x1xf32> to vector<15x1xf32>
    %22 = tpu.concatenate %20, %21 in 0 : vector<1x1xf32>, vector<15x1xf32> -> vector<16x1xf32>
    %23 = vector.extract_strided_slice %18 {offsets = [1, 0], sizes = [15, 1], strides = [1, 1]} : vector<16x1xf32> to vector<15x1xf32>
    %24 = vector.extract_strided_slice %18 {offsets = [0, 0], sizes = [1, 1], strides = [1, 1]} : vector<16x1xf32> to vector<1x1xf32>
    %25 = tpu.concatenate %23, %24 in 0 : vector<15x1xf32>, vector<1x1xf32> -> vector<16x1xf32>
    %26 = vector.extract_strided_slice %19 {offsets = [0, 0], sizes = [1, 32], strides = [1, 1]} : vector<3x32xf32> to vector<1x32xf32>
    %27 = vector.broadcast %22 : vector<16x1xf32> to vector<16x32xf32>
    %28 = vector.broadcast %26 : vector<1x32xf32> to vector<16x32xf32>
    %29 = arith.mulf %27, %28 : vector<16x32xf32>
    %30 = vector.extract_strided_slice %19 {offsets = [1, 0], sizes = [1, 32], strides = [1, 1]} : vector<3x32xf32> to vector<1x32xf32>
    %31 = vector.broadcast %18 : vector<16x1xf32> to vector<16x32xf32>
    %32 = vector.broadcast %30 : vector<1x32xf32> to vector<16x32xf32>
    %33 = arith.mulf %31, %32 : vector<16x32xf32>
    %34 = arith.addf %29, %33 : vector<16x32xf32>
    %35 = vector.extract_strided_slice %19 {offsets = [2, 0], sizes = [1, 32], strides = [1, 1]} : vector<3x32xf32> to vector<1x32xf32>
    %36 = vector.broadcast %25 : vector<16x1xf32> to vector<16x32xf32>
    %37 = vector.broadcast %35 : vector<1x32xf32> to vector<16x32xf32>
    %38 = arith.mulf %36, %37 : vector<16x32xf32>
    %39 = arith.addf %34, %38 : vector<16x32xf32>
    %40 = arith.addf %17, %39 : vector<16x32xf32>
    %c0_11 = arith.constant 0 : index
    %c0_12 = arith.constant 0 : index
    %41 = vector.load %arg2[%c0_11, %c0_12] : memref<16x32xf32, #tpu.memory_space<vmem>>, vector<16x32xf32>
    %42 = arith.addf %40, %41 : vector<16x32xf32>
    %c0_13 = arith.constant 0 : index
    %c0_14 = arith.constant 0 : index
    %43 = vector.load %arg16[%c0_13, %c0_14] : memref<1x32xf32, #tpu.memory_space<vmem>>, vector<1x32xf32>
    %c0_15 = arith.constant 0 : index
    %c0_16 = arith.constant 0 : index
    %44 = vector.load %arg17[%c0_15, %c0_16] : memref<1x32xf32, #tpu.memory_space<vmem>>, vector<1x32xf32>
    %cst_17 = arith.constant dense<0.000000e+00> : vector<16xf32>
    %45 = vector.multi_reduction <add>, %42, %cst_17 [1] : vector<16x32xf32> to vector<16xf32>
    %46 = vector.shape_cast %45 : vector<16xf32> to vector<16x1xf32>
    %cst_18 = arith.constant 3.200000e+01 : f32
    %47 = vector.broadcast %cst_18 : f32 to vector<16x1xf32>
    %48 = arith.divf %46, %47 : vector<16x1xf32>
    %49 = vector.broadcast %48 : vector<16x1xf32> to vector<16x32xf32>
    %50 = arith.subf %42, %49 : vector<16x32xf32>
    %51 = arith.mulf %50, %50 : vector<16x32xf32>
    %cst_19 = arith.constant dense<0.000000e+00> : vector<16xf32>
    %52 = vector.multi_reduction <add>, %51, %cst_19 [1] : vector<16x32xf32> to vector<16xf32>
    %53 = vector.shape_cast %52 : vector<16xf32> to vector<16x1xf32>
    %cst_20 = arith.constant 3.200000e+01 : f32
    %54 = vector.broadcast %cst_20 : f32 to vector<16x1xf32>
    %55 = arith.divf %53, %54 : vector<16x1xf32>
    %56 = vector.broadcast %48 : vector<16x1xf32> to vector<16x32xf32>
    %57 = arith.subf %42, %56 : vector<16x32xf32>
    %cst_21 = arith.constant 9.99999974E-6 : f32
    %58 = vector.broadcast %cst_21 : f32 to vector<16x1xf32>
    %59 = arith.addf %55, %58 : vector<16x1xf32>
    %60 = math.rsqrt %59 : vector<16x1xf32>
    %61 = vector.broadcast %60 : vector<16x1xf32> to vector<16x32xf32>
    %62 = arith.mulf %57, %61 : vector<16x32xf32>
    %63 = vector.broadcast %43 : vector<1x32xf32> to vector<16x32xf32>
    %64 = arith.mulf %62, %63 : vector<16x32xf32>
    %65 = vector.broadcast %44 : vector<1x32xf32> to vector<16x32xf32>
    %66 = arith.addf %64, %65 : vector<16x32xf32>
    %c0_22 = arith.constant 0 : index
    %c0_23 = arith.constant 0 : index
    %67 = vector.load %arg34[%c0_22, %c0_23] : memref<28x32xf32, #tpu.memory_space<vmem>>, vector<16x32xf32>
    tpu.vector_store %arg34[%c0_22, %c0_23], %66 {strides = array<i32>} : memref<28x32xf32, #tpu.memory_space<vmem>>, vector<16x32xf32>,
    %c0_24 = arith.constant 0 : index
    %c0_25 = arith.constant 0 : index
    %68 = vector.load %arg6[%c0_24, %c0_25] : memref<32x8xf32, #tpu.memory_space<vmem>>, vector<32x8xf32>
    %cst_26 = arith.constant dense<0.000000e+00> : vector<16x8xf32>
    %69 = tpu.matmul %42, %68, %cst_26 {dimension_numbers = #tpu.dot_dimension_numbers<[1], [0], [0], [1], [0, 0, 1, 1], [], []>} : vector<16x32xf32>, vector<32x8xf32>, vector<16x8xf32> -> vector<16x8xf32>
    %c0_27 = arith.constant 0 : index
    %c0_28 = arith.constant 0 : index
    %70 = vector.load %arg7[%c0_27, %c0_28] : memref<1x8xf32, #tpu.memory_space<vmem>>, vector<1x8xf32>
    %71 = vector.broadcast %70 : vector<1x8xf32> to vector<16x8xf32>
    %72 = arith.addf %69, %71 : vector<16x8xf32>
    %c0_29 = arith.constant 0 : index
    %c0_30 = arith.constant 0 : index
    %73 = vector.load %arg35[%c0_29, %c0_30] : memref<16x8xf32, #tpu.memory_space<vmem>>, vector<16x8xf32>
    tpu.vector_store %arg35[%c0_29, %c0_30], %72 {strides = array<i32>} : memref<16x8xf32, #tpu.memory_space<vmem>>, vector<16x8xf32>,
    %cst_31 = arith.constant 0.000000e+00 : f32
    %74 = vector.broadcast %cst_31 : f32 to vector<8x8xf32>
    %c0_32 = arith.constant 0 : index
    %c0_33 = arith.constant 0 : index
    %75 = tpu.strided_load %arg35[%c0_32, %c0_33] {strides = array<i32: 2, 1>} : memref<16x8xf32, #tpu.memory_space<vmem>>, vector<8x8xf32>
    %c0_34 = arith.constant 0 : index
    %c0_35 = arith.constant 0 : index
    %c0_36 = arith.constant 0 : index
    %76 = vector.load %arg8[%c0_34, %c0_35, %c0_36] : memref<2x8x8xf32, #tpu.memory_space<vmem>>, vector<1x8x8xf32>
    %77 = vector.shape_cast %76 : vector<1x8x8xf32> to vector<8x8xf32>
    %cst_37 = arith.constant dense<0.000000e+00> : vector<8x8xf32>
    %78 = tpu.matmul %75, %77, %cst_37 {dimension_numbers = #tpu.dot_dimension_numbers<[1], [0], [0], [1], [0, 0, 1, 1], [], []>} : vector<8x8xf32>, vector<8x8xf32>, vector<8x8xf32> -> vector<8x8xf32>
    %79 = arith.addf %74, %78 : vector<8x8xf32>
    %c1 = arith.constant 1 : index
    %c0_38 = arith.constant 0 : index
    %80 = tpu.strided_load %arg35[%c1, %c0_38] {strides = array<i32: 2, 1>} : memref<16x8xf32, #tpu.memory_space<vmem>>, vector<8x8xf32>
    %c1_39 = arith.constant 1 : index
    %c0_40 = arith.constant 0 : index
    %c0_41 = arith.constant 0 : index
    %81 = vector.load %arg8[%c1_39, %c0_40, %c0_41] : memref<2x8x8xf32, #tpu.memory_space<vmem>>, vector<1x8x8xf32>
    %82 = vector.shape_cast %81 : vector<1x8x8xf32> to vector<8x8xf32>
    %cst_42 = arith.constant dense<0.000000e+00> : vector<8x8xf32>
    %83 = tpu.matmul %80, %82, %cst_42 {dimension_numbers = #tpu.dot_dimension_numbers<[1], [0], [0], [1], [0, 0, 1, 1], [], []>} : vector<8x8xf32>, vector<8x8xf32>, vector<8x8xf32> -> vector<8x8xf32>
    %84 = arith.addf %79, %83 : vector<8x8xf32>
    %c0_43 = arith.constant 0 : index
    %c0_44 = arith.constant 0 : index
    %85 = vector.load %arg9[%c0_43, %c0_44] : memref<1x8xf32, #tpu.memory_space<vmem>>, vector<1x8xf32>
    %86 = vector.broadcast %85 : vector<1x8xf32> to vector<8x8xf32>
    %87 = arith.addf %84, %86 : vector<8x8xf32>
    %c0_45 = arith.constant 0 : index
    %c0_46 = arith.constant 0 : index
    %88 = vector.load %arg10[%c0_45, %c0_46] : memref<4x8xf32, #tpu.memory_space<vmem>>, vector<1x8xf32>
    %c1_47 = arith.constant 1 : index
    %c0_48 = arith.constant 0 : index
    %89 = vector.load %arg10[%c1_47, %c0_48] : memref<4x8xf32, #tpu.memory_space<vmem>>, vector<1x8xf32>
    %c2 = arith.constant 2 : index
    %c0_49 = arith.constant 0 : index
    %90 = vector.load %arg10[%c2, %c0_49] : memref<4x8xf32, #tpu.memory_space<vmem>>, vector<1x8xf32>
    %c3_50 = arith.constant 3 : index
    %c0_51 = arith.constant 0 : index
    %91 = vector.load %arg10[%c3_50, %c0_51] : memref<4x8xf32, #tpu.memory_space<vmem>>, vector<1x8xf32>
    %92 = vector.broadcast %90 : vector<1x8xf32> to vector<8x8xf32>
    %93 = arith.subf %87, %92 : vector<8x8xf32>
    %cst_52 = arith.constant 9.99999974E-6 : f32
    %94 = vector.broadcast %cst_52 : f32 to vector<1x8xf32>
    %95 = arith.addf %91, %94 : vector<1x8xf32>
    %96 = math.rsqrt %95 : vector<1x8xf32>
    %97 = vector.broadcast %96 : vector<1x8xf32> to vector<8x8xf32>
    %98 = arith.mulf %93, %97 : vector<8x8xf32>
    %99 = vector.broadcast %88 : vector<1x8xf32> to vector<8x8xf32>
    %100 = arith.mulf %98, %99 : vector<8x8xf32>
    %101 = vector.broadcast %89 : vector<1x8xf32> to vector<8x8xf32>
    %102 = arith.addf %100, %101 : vector<8x8xf32>
    %cst_53 = arith.constant 0.000000e+00 : f32
    %103 = vector.broadcast %cst_53 : f32 to vector<8x8xf32>
    %104 = arith.cmpf ogt, %102, %103 : vector<8x8xf32>
    %105 = math.exp %102 : vector<8x8xf32>
    %cst_54 = arith.constant 1.000000e+00 : f32
    %106 = vector.broadcast %cst_54 : f32 to vector<8x8xf32>
    %107 = arith.subf %105, %106 : vector<8x8xf32>
    %108 = arith.select %104, %102, %107 : vector<8x8xi1>, vector<8x8xf32>
    %c0_55 = arith.constant 0 : index
    %c0_56 = arith.constant 0 : index
    %109 = vector.load %arg14[%c0_55, %c0_56] : memref<8x32xf32, #tpu.memory_space<vmem>>, vector<8x32xf32>
    %cst_57 = arith.constant dense<0.000000e+00> : vector<8x32xf32>
    %110 = tpu.matmul %108, %109, %cst_57 {dimension_numbers = #tpu.dot_dimension_numbers<[1], [0], [0], [1], [0, 0, 1, 1], [], []>} : vector<8x8xf32>, vector<8x32xf32>, vector<8x32xf32> -> vector<8x32xf32>
    %c0_58 = arith.constant 0 : index
    %c0_59 = arith.constant 0 : index
    %111 = vector.load %arg15[%c0_58, %c0_59] : memref<1x32xf32, #tpu.memory_space<vmem>>, vector<1x32xf32>
    %112 = vector.broadcast %111 : vector<1x32xf32> to vector<8x32xf32>
    %113 = arith.addf %110, %112 : vector<8x32xf32>
    %cst_60 = arith.constant dense<0.000000e+00> : vector<8xf32>
    %114 = vector.multi_reduction <add>, %113, %cst_60 [1] : vector<8x32xf32> to vector<8xf32>
    %115 = vector.shape_cast %114 : vector<8xf32> to vector<8x1xf32>
    %cst_61 = arith.constant 3.200000e+01 : f32
    %116 = vector.broadcast %cst_61 : f32 to vector<8x1xf32>
    %117 = arith.divf %115, %116 : vector<8x1xf32>
    %118 = vector.broadcast %117 : vector<8x1xf32> to vector<8x32xf32>
    %119 = arith.subf %113, %118 : vector<8x32xf32>
    %120 = arith.mulf %119, %119 : vector<8x32xf32>
    %cst_62 = arith.constant dense<0.000000e+00> : vector<8xf32>
    %121 = vector.multi_reduction <add>, %120, %cst_62 [1] : vector<8x32xf32> to vector<8xf32>
    %122 = vector.shape_cast %121 : vector<8xf32> to vector<8x1xf32>
    %cst_63 = arith.constant 3.200000e+01 : f32
    %123 = vector.broadcast %cst_63 : f32 to vector<8x1xf32>
    %124 = arith.divf %122, %123 : vector<8x1xf32>
    %125 = vector.broadcast %117 : vector<8x1xf32> to vector<8x32xf32>
    %126 = arith.subf %113, %125 : vector<8x32xf32>
    %cst_64 = arith.constant 9.99999974E-6 : f32
    %127 = vector.broadcast %cst_64 : f32 to vector<8x1xf32>
    %128 = arith.addf %124, %127 : vector<8x1xf32>
    %129 = math.rsqrt %128 : vector<8x1xf32>
    %130 = vector.broadcast %129 : vector<8x1xf32> to vector<8x32xf32>
    %131 = arith.mulf %126, %130 : vector<8x32xf32>
    %132 = vector.broadcast %43 : vector<1x32xf32> to vector<8x32xf32>
    %133 = arith.mulf %131, %132 : vector<8x32xf32>
    %134 = vector.broadcast %44 : vector<1x32xf32> to vector<8x32xf32>
    %135 = arith.addf %133, %134 : vector<8x32xf32>
    %c16 = arith.constant 16 : index
    %c0_65 = arith.constant 0 : index
    %136 = vector.load %arg34[%c16, %c0_65] : memref<28x32xf32, #tpu.memory_space<vmem>>, vector<8x32xf32>
    tpu.vector_store %arg34[%c16, %c0_65], %135 {strides = array<i32>} : memref<28x32xf32, #tpu.memory_space<vmem>>, vector<8x32xf32>,
    %c0_66 = arith.constant 0 : index
    %c0_67 = arith.constant 0 : index
    %137 = vector.load %arg35[%c0_66, %c0_67] : memref<16x8xf32, #tpu.memory_space<vmem>>, vector<8x8xf32>
    tpu.vector_store %arg35[%c0_66, %c0_67], %108 {strides = array<i32>} : memref<16x8xf32, #tpu.memory_space<vmem>>, vector<8x8xf32>,
    %cst_68 = arith.constant 0.000000e+00 : f32
    %138 = vector.broadcast %cst_68 : f32 to vector<4x8xf32>
    %c0_69 = arith.constant 0 : index
    %c0_70 = arith.constant 0 : index
    %139 = tpu.strided_load %arg35[%c0_69, %c0_70] {strides = array<i32: 2, 1>} : memref<16x8xf32, #tpu.memory_space<vmem>>, vector<4x8xf32>
    %c0_71 = arith.constant 0 : index
    %c0_72 = arith.constant 0 : index
    %c0_73 = arith.constant 0 : index
    %140 = vector.load %arg11[%c0_71, %c0_72, %c0_73] : memref<2x8x8xf32, #tpu.memory_space<vmem>>, vector<1x8x8xf32>
    %141 = vector.shape_cast %140 : vector<1x8x8xf32> to vector<8x8xf32>
    %cst_74 = arith.constant dense<0.000000e+00> : vector<4x8xf32>
    %142 = tpu.matmul %139, %141, %cst_74 {dimension_numbers = #tpu.dot_dimension_numbers<[1], [0], [0], [1], [0, 0, 1, 1], [], []>} : vector<4x8xf32>, vector<8x8xf32>, vector<4x8xf32> -> vector<4x8xf32>
    %143 = arith.addf %138, %142 : vector<4x8xf32>
    %c1_75 = arith.constant 1 : index
    %c0_76 = arith.constant 0 : index
    %144 = tpu.strided_load %arg35[%c1_75, %c0_76] {strides = array<i32: 2, 1>} : memref<16x8xf32, #tpu.memory_space<vmem>>, vector<4x8xf32>
    %c1_77 = arith.constant 1 : index
    %c0_78 = arith.constant 0 : index
    %c0_79 = arith.constant 0 : index
    %145 = vector.load %arg11[%c1_77, %c0_78, %c0_79] : memref<2x8x8xf32, #tpu.memory_space<vmem>>, vector<1x8x8xf32>
    %146 = vector.shape_cast %145 : vector<1x8x8xf32> to vector<8x8xf32>
    %cst_80 = arith.constant dense<0.000000e+00> : vector<4x8xf32>
    %147 = tpu.matmul %144, %146, %cst_80 {dimension_numbers = #tpu.dot_dimension_numbers<[1], [0], [0], [1], [0, 0, 1, 1], [], []>} : vector<4x8xf32>, vector<8x8xf32>, vector<4x8xf32> -> vector<4x8xf32>
    %148 = arith.addf %143, %147 : vector<4x8xf32>
    %c0_81 = arith.constant 0 : index
    %c0_82 = arith.constant 0 : index
    %149 = vector.load %arg12[%c0_81, %c0_82] : memref<1x8xf32, #tpu.memory_space<vmem>>, vector<1x8xf32>
    %150 = vector.broadcast %149 : vector<1x8xf32> to vector<4x8xf32>
    %151 = arith.addf %148, %150 : vector<4x8xf32>
    %c0_83 = arith.constant 0 : index
    %c0_84 = arith.constant 0 : index
    %152 = vector.load %arg13[%c0_83, %c0_84] : memref<4x8xf32, #tpu.memory_space<vmem>>, vector<1x8xf32>
    %c1_85 = arith.constant 1 : index
    %c0_86 = arith.constant 0 : index
    %153 = vector.load %arg13[%c1_85, %c0_86] : memref<4x8xf32, #tpu.memory_space<vmem>>, vector<1x8xf32>
    %c2_87 = arith.constant 2 : index
    %c0_88 = arith.constant 0 : index
    %154 = vector.load %arg13[%c2_87, %c0_88] : memref<4x8xf32, #tpu.memory_space<vmem>>, vector<1x8xf32>
    %c3_89 = arith.constant 3 : index
    %c0_90 = arith.constant 0 : index
    %155 = vector.load %arg13[%c3_89, %c0_90] : memref<4x8xf32, #tpu.memory_space<vmem>>, vector<1x8xf32>
    %156 = vector.broadcast %154 : vector<1x8xf32> to vector<4x8xf32>
    %157 = arith.subf %151, %156 : vector<4x8xf32>
    %cst_91 = arith.constant 9.99999974E-6 : f32
    %158 = vector.broadcast %cst_91 : f32 to vector<1x8xf32>
    %159 = arith.addf %155, %158 : vector<1x8xf32>
    %160 = math.rsqrt %159 : vector<1x8xf32>
    %161 = vector.broadcast %160 : vector<1x8xf32> to vector<4x8xf32>
    %162 = arith.mulf %157, %161 : vector<4x8xf32>
    %163 = vector.broadcast %152 : vector<1x8xf32> to vector<4x8xf32>
    %164 = arith.mulf %162, %163 : vector<4x8xf32>
    %165 = vector.broadcast %153 : vector<1x8xf32> to vector<4x8xf32>
    %166 = arith.addf %164, %165 : vector<4x8xf32>
    %cst_92 = arith.constant 0.000000e+00 : f32
    %167 = vector.broadcast %cst_92 : f32 to vector<4x8xf32>
    %168 = arith.cmpf ogt, %166, %167 : vector<4x8xf32>
    %169 = math.exp %166 : vector<4x8xf32>
    %cst_93 = arith.constant 1.000000e+00 : f32
    %170 = vector.broadcast %cst_93 : f32 to vector<4x8xf32>
    %171 = arith.subf %169, %170 : vector<4x8xf32>
    %172 = arith.select %168, %166, %171 : vector<4x8xi1>, vector<4x8xf32>
    %c0_94 = arith.constant 0 : index
    %c0_95 = arith.constant 0 : index
    %173 = vector.load %arg14[%c0_94, %c0_95] : memref<8x32xf32, #tpu.memory_space<vmem>>, vector<8x32xf32>
    %cst_96 = arith.constant dense<0.000000e+00> : vector<4x32xf32>
    %174 = tpu.matmul %172, %173, %cst_96 {dimension_numbers = #tpu.dot_dimension_numbers<[1], [0], [0], [1], [0, 0, 1, 1], [], []>} : vector<4x8xf32>, vector<8x32xf32>, vector<4x32xf32> -> vector<4x32xf32>
    %c0_97 = arith.constant 0 : index
    %c0_98 = arith.constant 0 : index
    %175 = vector.load %arg15[%c0_97, %c0_98] : memref<1x32xf32, #tpu.memory_space<vmem>>, vector<1x32xf32>
    %176 = vector.broadcast %175 : vector<1x32xf32> to vector<4x32xf32>
    %177 = arith.addf %174, %176 : vector<4x32xf32>
    %cst_99 = arith.constant dense<0.000000e+00> : vector<4xf32>
    %178 = vector.multi_reduction <add>, %177, %cst_99 [1] : vector<4x32xf32> to vector<4xf32>
    %179 = vector.shape_cast %178 : vector<4xf32> to vector<4x1xf32>
    %cst_100 = arith.constant 3.200000e+01 : f32
    %180 = vector.broadcast %cst_100 : f32 to vector<4x1xf32>
    %181 = arith.divf %179, %180 : vector<4x1xf32>
    %182 = vector.broadcast %181 : vector<4x1xf32> to vector<4x32xf32>
    %183 = arith.subf %177, %182 : vector<4x32xf32>
    %184 = arith.mulf %183, %183 : vector<4x32xf32>
    %cst_101 = arith.constant dense<0.000000e+00> : vector<4xf32>
    %185 = vector.multi_reduction <add>, %184, %cst_101 [1] : vector<4x32xf32> to vector<4xf32>
    %186 = vector.shape_cast %185 : vector<4xf32> to vector<4x1xf32>
    %cst_102 = arith.constant 3.200000e+01 : f32
    %187 = vector.broadcast %cst_102 : f32 to vector<4x1xf32>
    %188 = arith.divf %186, %187 : vector<4x1xf32>
    %189 = vector.broadcast %181 : vector<4x1xf32> to vector<4x32xf32>
    %190 = arith.subf %177, %189 : vector<4x32xf32>
    %cst_103 = arith.constant 9.99999974E-6 : f32
    %191 = vector.broadcast %cst_103 : f32 to vector<4x1xf32>
    %192 = arith.addf %188, %191 : vector<4x1xf32>
    %193 = math.rsqrt %192 : vector<4x1xf32>
    %194 = vector.broadcast %193 : vector<4x1xf32> to vector<4x32xf32>
    %195 = arith.mulf %190, %194 : vector<4x32xf32>
    %196 = vector.broadcast %43 : vector<1x32xf32> to vector<4x32xf32>
    %197 = arith.mulf %195, %196 : vector<4x32xf32>
    %198 = vector.broadcast %44 : vector<1x32xf32> to vector<4x32xf32>
    %199 = arith.addf %197, %198 : vector<4x32xf32>
    %c24 = arith.constant 24 : index
    %c0_104 = arith.constant 0 : index
    %200 = vector.load %arg34[%c24, %c0_104] : memref<28x32xf32, #tpu.memory_space<vmem>>, vector<4x32xf32>
    tpu.vector_store %arg34[%c24, %c0_104], %199 {strides = array<i32>} : memref<28x32xf32, #tpu.memory_space<vmem>>, vector<4x32xf32>,
    %c0_105 = arith.constant 0 : index
    %c0_106 = arith.constant 0 : index
    %201 = vector.load %arg35[%c0_105, %c0_106] : memref<16x8xf32, #tpu.memory_space<vmem>>, vector<4x8xf32>
    tpu.vector_store %arg35[%c0_105, %c0_106], %172 {strides = array<i32>} : memref<16x8xf32, #tpu.memory_space<vmem>>, vector<4x8xf32>,
    %c0_107 = arith.constant 0 : index
    %c0_108 = arith.constant 0 : index
    %202 = vector.load %arg18[%c0_107, %c0_108] : memref<28x28xf32, #tpu.memory_space<vmem>>, vector<28x28xf32>
    %c0_109 = arith.constant 0 : index
    %c0_110 = arith.constant 0 : index
    %203 = vector.load %arg34[%c0_109, %c0_110] : memref<28x32xf32, #tpu.memory_space<vmem>>, vector<28x32xf32>
    %cst_111 = arith.constant 0.000000e+00 : f32
    %204 = vector.broadcast %cst_111 : f32 to vector<28x32xf32>
    %c0_112 = arith.constant 0 : index
    %c0_113 = arith.constant 0 : index
    %c0_114 = arith.constant 0 : index
    %205 = vector.load %arg20[%c0_112, %c0_113, %c0_114] : memref<8x32x8xf32, #tpu.memory_space<vmem>>, vector<1x32x8xf32>
    %206 = vector.shape_cast %205 : vector<1x32x8xf32> to vector<32x8xf32>
    %cst_115 = arith.constant dense<0.000000e+00> : vector<28x8xf32>
    %207 = tpu.matmul %203, %206, %cst_115 {dimension_numbers = #tpu.dot_dimension_numbers<[1], [0], [0], [1], [0, 0, 1, 1], [], []>} : vector<28x32xf32>, vector<32x8xf32>, vector<28x8xf32> -> vector<28x8xf32>
    %c0_116 = arith.constant 0 : index
    %c0_117 = arith.constant 0 : index
    %c0_118 = arith.constant 0 : index
    %208 = vector.load %arg21[%c0_116, %c0_117, %c0_118] : memref<8x32x8xf32, #tpu.memory_space<vmem>>, vector<1x32x8xf32>
    %209 = vector.shape_cast %208 : vector<1x32x8xf32> to vector<32x8xf32>
    %cst_119 = arith.constant dense<0.000000e+00> : vector<28x8xf32>
    %210 = tpu.matmul %203, %209, %cst_119 {dimension_numbers = #tpu.dot_dimension_numbers<[1], [0], [0], [1], [0, 0, 1, 1], [], []>} : vector<28x32xf32>, vector<32x8xf32>, vector<28x8xf32> -> vector<28x8xf32>
    %c0_120 = arith.constant 0 : index
    %c0_121 = arith.constant 0 : index
    %c0_122 = arith.constant 0 : index
    %211 = vector.load %arg22[%c0_120, %c0_121, %c0_122] : memref<8x32x8xf32, #tpu.memory_space<vmem>>, vector<1x32x8xf32>
    %212 = vector.shape_cast %211 : vector<1x32x8xf32> to vector<32x8xf32>
    %cst_123 = arith.constant dense<0.000000e+00> : vector<28x8xf32>
    %213 = tpu.matmul %203, %212, %cst_123 {dimension_numbers = #tpu.dot_dimension_numbers<[1], [0], [0], [1], [0, 0, 1, 1], [], []>} : vector<28x32xf32>, vector<32x8xf32>, vector<28x8xf32> -> vector<28x8xf32>
    %cst_124 = arith.constant dense<0.000000e+00> : vector<28x28xf32>
    %214 = tpu.matmul %207, %210, %cst_124 {dimension_numbers = #tpu.dot_dimension_numbers<[1], [1], [0], [0], [0, 0, 1, 0], [], []>} : vector<28x8xf32>, vector<28x8xf32>, vector<28x28xf32> -> vector<28x28xf32>
    %215 = arith.addf %214, %202 : vector<28x28xf32>
    %cst_125 = arith.constant dense<0xFF800000> : vector<28xf32>
    %216 = vector.multi_reduction <maximumf>, %215, %cst_125 [1] : vector<28x28xf32> to vector<28xf32>
    %217 = vector.shape_cast %216 : vector<28xf32> to vector<28x1xf32>
    %218 = vector.broadcast %217 : vector<28x1xf32> to vector<28x28xf32>
    %219 = arith.subf %215, %218 : vector<28x28xf32>
    %220 = math.exp %219 : vector<28x28xf32>
    %cst_126 = arith.constant dense<0.000000e+00> : vector<28xf32>
    %221 = vector.multi_reduction <add>, %220, %cst_126 [1] : vector<28x28xf32> to vector<28xf32>
    %222 = vector.shape_cast %221 : vector<28xf32> to vector<28x1xf32>
    %223 = tpu.reciprocal %222 {approx = true} : vector<28x1xf32> -> vector<28x1xf32>
    %cst_127 = arith.constant dense<0.000000e+00> : vector<28x8xf32>
    %224 = tpu.matmul %220, %213, %cst_127 {dimension_numbers = #tpu.dot_dimension_numbers<[1], [0], [0], [1], [0, 0, 1, 1], [], []>} : vector<28x28xf32>, vector<28x8xf32>, vector<28x8xf32> -> vector<28x8xf32>
    %225 = vector.broadcast %223 : vector<28x1xf32> to vector<28x8xf32>
    %226 = arith.mulf %224, %225 : vector<28x8xf32>
    %c0_128 = arith.constant 0 : index
    %c0_129 = arith.constant 0 : index
    %c0_130 = arith.constant 0 : index
    %227 = vector.load %arg23[%c0_128, %c0_129, %c0_130] : memref<8x8x32xf32, #tpu.memory_space<vmem>>, vector<1x8x32xf32>
    %228 = vector.shape_cast %227 : vector<1x8x32xf32> to vector<8x32xf32>
    %cst_131 = arith.constant dense<0.000000e+00> : vector<28x32xf32>
    %229 = tpu.matmul %226, %228, %cst_131 {dimension_numbers = #tpu.dot_dimension_numbers<[1], [0], [0], [1], [0, 0, 1, 1], [], []>} : vector<28x8xf32>, vector<8x32xf32>, vector<28x32xf32> -> vector<28x32xf32>
    %230 = arith.addf %204, %229 : vector<28x32xf32>
    %c1_132 = arith.constant 1 : index
    %c0_133 = arith.constant 0 : index
    %c0_134 = arith.constant 0 : index
    %231 = vector.load %arg20[%c1_132, %c0_133, %c0_134] : memref<8x32x8xf32, #tpu.memory_space<vmem>>, vector<1x32x8xf32>
    %232 = vector.shape_cast %231 : vector<1x32x8xf32> to vector<32x8xf32>
    %cst_135 = arith.constant dense<0.000000e+00> : vector<28x8xf32>
    %233 = tpu.matmul %203, %232, %cst_135 {dimension_numbers = #tpu.dot_dimension_numbers<[1], [0], [0], [1], [0, 0, 1, 1], [], []>} : vector<28x32xf32>, vector<32x8xf32>, vector<28x8xf32> -> vector<28x8xf32>
    %c1_136 = arith.constant 1 : index
    %c0_137 = arith.constant 0 : index
    %c0_138 = arith.constant 0 : index
    %234 = vector.load %arg21[%c1_136, %c0_137, %c0_138] : memref<8x32x8xf32, #tpu.memory_space<vmem>>, vector<1x32x8xf32>
    %235 = vector.shape_cast %234 : vector<1x32x8xf32> to vector<32x8xf32>
    %cst_139 = arith.constant dense<0.000000e+00> : vector<28x8xf32>
    %236 = tpu.matmul %203, %235, %cst_139 {dimension_numbers = #tpu.dot_dimension_numbers<[1], [0], [0], [1], [0, 0, 1, 1], [], []>} : vector<28x32xf32>, vector<32x8xf32>, vector<28x8xf32> -> vector<28x8xf32>
    %c1_140 = arith.constant 1 : index
    %c0_141 = arith.constant 0 : index
    %c0_142 = arith.constant 0 : index
    %237 = vector.load %arg22[%c1_140, %c0_141, %c0_142] : memref<8x32x8xf32, #tpu.memory_space<vmem>>, vector<1x32x8xf32>
    %238 = vector.shape_cast %237 : vector<1x32x8xf32> to vector<32x8xf32>
    %cst_143 = arith.constant dense<0.000000e+00> : vector<28x8xf32>
    %239 = tpu.matmul %203, %238, %cst_143 {dimension_numbers = #tpu.dot_dimension_numbers<[1], [0], [0], [1], [0, 0, 1, 1], [], []>} : vector<28x32xf32>, vector<32x8xf32>, vector<28x8xf32> -> vector<28x8xf32>
    %cst_144 = arith.constant dense<0.000000e+00> : vector<28x28xf32>
    %240 = tpu.matmul %233, %236, %cst_144 {dimension_numbers = #tpu.dot_dimension_numbers<[1], [1], [0], [0], [0, 0, 1, 0], [], []>} : vector<28x8xf32>, vector<28x8xf32>, vector<28x28xf32> -> vector<28x28xf32>
    %241 = arith.addf %240, %202 : vector<28x28xf32>
    %cst_145 = arith.constant dense<0xFF800000> : vector<28xf32>
    %242 = vector.multi_reduction <maximumf>, %241, %cst_145 [1] : vector<28x28xf32> to vector<28xf32>
    %243 = vector.shape_cast %242 : vector<28xf32> to vector<28x1xf32>
    %244 = vector.broadcast %243 : vector<28x1xf32> to vector<28x28xf32>
    %245 = arith.subf %241, %244 : vector<28x28xf32>
    %246 = math.exp %245 : vector<28x28xf32>
    %cst_146 = arith.constant dense<0.000000e+00> : vector<28xf32>
    %247 = vector.multi_reduction <add>, %246, %cst_146 [1] : vector<28x28xf32> to vector<28xf32>
    %248 = vector.shape_cast %247 : vector<28xf32> to vector<28x1xf32>
    %249 = tpu.reciprocal %248 {approx = true} : vector<28x1xf32> -> vector<28x1xf32>
    %cst_147 = arith.constant dense<0.000000e+00> : vector<28x8xf32>
    %250 = tpu.matmul %246, %239, %cst_147 {dimension_numbers = #tpu.dot_dimension_numbers<[1], [0], [0], [1], [0, 0, 1, 1], [], []>} : vector<28x28xf32>, vector<28x8xf32>, vector<28x8xf32> -> vector<28x8xf32>
    %251 = vector.broadcast %249 : vector<28x1xf32> to vector<28x8xf32>
    %252 = arith.mulf %250, %251 : vector<28x8xf32>
    %c1_148 = arith.constant 1 : index
    %c0_149 = arith.constant 0 : index
    %c0_150 = arith.constant 0 : index
    %253 = vector.load %arg23[%c1_148, %c0_149, %c0_150] : memref<8x8x32xf32, #tpu.memory_space<vmem>>, vector<1x8x32xf32>
    %254 = vector.shape_cast %253 : vector<1x8x32xf32> to vector<8x32xf32>
    %cst_151 = arith.constant dense<0.000000e+00> : vector<28x32xf32>
    %255 = tpu.matmul %252, %254, %cst_151 {dimension_numbers = #tpu.dot_dimension_numbers<[1], [0], [0], [1], [0, 0, 1, 1], [], []>} : vector<28x8xf32>, vector<8x32xf32>, vector<28x32xf32> -> vector<28x32xf32>
    %256 = arith.addf %230, %255 : vector<28x32xf32>
    %c2_152 = arith.constant 2 : index
    %c0_153 = arith.constant 0 : index
    %c0_154 = arith.constant 0 : index
    %257 = vector.load %arg20[%c2_152, %c0_153, %c0_154] : memref<8x32x8xf32, #tpu.memory_space<vmem>>, vector<1x32x8xf32>
    %258 = vector.shape_cast %257 : vector<1x32x8xf32> to vector<32x8xf32>
    %cst_155 = arith.constant dense<0.000000e+00> : vector<28x8xf32>
    %259 = tpu.matmul %203, %258, %cst_155 {dimension_numbers = #tpu.dot_dimension_numbers<[1], [0], [0], [1], [0, 0, 1, 1], [], []>} : vector<28x32xf32>, vector<32x8xf32>, vector<28x8xf32> -> vector<28x8xf32>
    %c2_156 = arith.constant 2 : index
    %c0_157 = arith.constant 0 : index
    %c0_158 = arith.constant 0 : index
    %260 = vector.load %arg21[%c2_156, %c0_157, %c0_158] : memref<8x32x8xf32, #tpu.memory_space<vmem>>, vector<1x32x8xf32>
    %261 = vector.shape_cast %260 : vector<1x32x8xf32> to vector<32x8xf32>
    %cst_159 = arith.constant dense<0.000000e+00> : vector<28x8xf32>
    %262 = tpu.matmul %203, %261, %cst_159 {dimension_numbers = #tpu.dot_dimension_numbers<[1], [0], [0], [1], [0, 0, 1, 1], [], []>} : vector<28x32xf32>, vector<32x8xf32>, vector<28x8xf32> -> vector<28x8xf32>
    %c2_160 = arith.constant 2 : index
    %c0_161 = arith.constant 0 : index
    %c0_162 = arith.constant 0 : index
    %263 = vector.load %arg22[%c2_160, %c0_161, %c0_162] : memref<8x32x8xf32, #tpu.memory_space<vmem>>, vector<1x32x8xf32>
    %264 = vector.shape_cast %263 : vector<1x32x8xf32> to vector<32x8xf32>
    %cst_163 = arith.constant dense<0.000000e+00> : vector<28x8xf32>
    %265 = tpu.matmul %203, %264, %cst_163 {dimension_numbers = #tpu.dot_dimension_numbers<[1], [0], [0], [1], [0, 0, 1, 1], [], []>} : vector<28x32xf32>, vector<32x8xf32>, vector<28x8xf32> -> vector<28x8xf32>
    %cst_164 = arith.constant dense<0.000000e+00> : vector<28x28xf32>
    %266 = tpu.matmul %259, %262, %cst_164 {dimension_numbers = #tpu.dot_dimension_numbers<[1], [1], [0], [0], [0, 0, 1, 0], [], []>} : vector<28x8xf32>, vector<28x8xf32>, vector<28x28xf32> -> vector<28x28xf32>
    %267 = arith.addf %266, %202 : vector<28x28xf32>
    %cst_165 = arith.constant dense<0xFF800000> : vector<28xf32>
    %268 = vector.multi_reduction <maximumf>, %267, %cst_165 [1] : vector<28x28xf32> to vector<28xf32>
    %269 = vector.shape_cast %268 : vector<28xf32> to vector<28x1xf32>
    %270 = vector.broadcast %269 : vector<28x1xf32> to vector<28x28xf32>
    %271 = arith.subf %267, %270 : vector<28x28xf32>
    %272 = math.exp %271 : vector<28x28xf32>
    %cst_166 = arith.constant dense<0.000000e+00> : vector<28xf32>
    %273 = vector.multi_reduction <add>, %272, %cst_166 [1] : vector<28x28xf32> to vector<28xf32>
    %274 = vector.shape_cast %273 : vector<28xf32> to vector<28x1xf32>
    %275 = tpu.reciprocal %274 {approx = true} : vector<28x1xf32> -> vector<28x1xf32>
    %cst_167 = arith.constant dense<0.000000e+00> : vector<28x8xf32>
    %276 = tpu.matmul %272, %265, %cst_167 {dimension_numbers = #tpu.dot_dimension_numbers<[1], [0], [0], [1], [0, 0, 1, 1], [], []>} : vector<28x28xf32>, vector<28x8xf32>, vector<28x8xf32> -> vector<28x8xf32>
    %277 = vector.broadcast %275 : vector<28x1xf32> to vector<28x8xf32>
    %278 = arith.mulf %276, %277 : vector<28x8xf32>
    %c2_168 = arith.constant 2 : index
    %c0_169 = arith.constant 0 : index
    %c0_170 = arith.constant 0 : index
    %279 = vector.load %arg23[%c2_168, %c0_169, %c0_170] : memref<8x8x32xf32, #tpu.memory_space<vmem>>, vector<1x8x32xf32>
    %280 = vector.shape_cast %279 : vector<1x8x32xf32> to vector<8x32xf32>
    %cst_171 = arith.constant dense<0.000000e+00> : vector<28x32xf32>
    %281 = tpu.matmul %278, %280, %cst_171 {dimension_numbers = #tpu.dot_dimension_numbers<[1], [0], [0], [1], [0, 0, 1, 1], [], []>} : vector<28x8xf32>, vector<8x32xf32>, vector<28x32xf32> -> vector<28x32xf32>
    %282 = arith.addf %256, %281 : vector<28x32xf32>
    %c3_172 = arith.constant 3 : index
    %c0_173 = arith.constant 0 : index
    %c0_174 = arith.constant 0 : index
    %283 = vector.load %arg20[%c3_172, %c0_173, %c0_174] : memref<8x32x8xf32, #tpu.memory_space<vmem>>, vector<1x32x8xf32>
    %284 = vector.shape_cast %283 : vector<1x32x8xf32> to vector<32x8xf32>
    %cst_175 = arith.constant dense<0.000000e+00> : vector<28x8xf32>
    %285 = tpu.matmul %203, %284, %cst_175 {dimension_numbers = #tpu.dot_dimension_numbers<[1], [0], [0], [1], [0, 0, 1, 1], [], []>} : vector<28x32xf32>, vector<32x8xf32>, vector<28x8xf32> -> vector<28x8xf32>
    %c3_176 = arith.constant 3 : index
    %c0_177 = arith.constant 0 : index
    %c0_178 = arith.constant 0 : index
    %286 = vector.load %arg21[%c3_176, %c0_177, %c0_178] : memref<8x32x8xf32, #tpu.memory_space<vmem>>, vector<1x32x8xf32>
    %287 = vector.shape_cast %286 : vector<1x32x8xf32> to vector<32x8xf32>
    %cst_179 = arith.constant dense<0.000000e+00> : vector<28x8xf32>
    %288 = tpu.matmul %203, %287, %cst_179 {dimension_numbers = #tpu.dot_dimension_numbers<[1], [0], [0], [1], [0, 0, 1, 1], [], []>} : vector<28x32xf32>, vector<32x8xf32>, vector<28x8xf32> -> vector<28x8xf32>
    %c3_180 = arith.constant 3 : index
    %c0_181 = arith.constant 0 : index
    %c0_182 = arith.constant 0 : index
    %289 = vector.load %arg22[%c3_180, %c0_181, %c0_182] : memref<8x32x8xf32, #tpu.memory_space<vmem>>, vector<1x32x8xf32>
    %290 = vector.shape_cast %289 : vector<1x32x8xf32> to vector<32x8xf32>
    %cst_183 = arith.constant dense<0.000000e+00> : vector<28x8xf32>
    %291 = tpu.matmul %203, %290, %cst_183 {dimension_numbers = #tpu.dot_dimension_numbers<[1], [0], [0], [1], [0, 0, 1, 1], [], []>} : vector<28x32xf32>, vector<32x8xf32>, vector<28x8xf32> -> vector<28x8xf32>
    %cst_184 = arith.constant dense<0.000000e+00> : vector<28x28xf32>
    %292 = tpu.matmul %285, %288, %cst_184 {dimension_numbers = #tpu.dot_dimension_numbers<[1], [1], [0], [0], [0, 0, 1, 0], [], []>} : vector<28x8xf32>, vector<28x8xf32>, vector<28x28xf32> -> vector<28x28xf32>
    %293 = arith.addf %292, %202 : vector<28x28xf32>
    %cst_185 = arith.constant dense<0xFF800000> : vector<28xf32>
    %294 = vector.multi_reduction <maximumf>, %293, %cst_185 [1] : vector<28x28xf32> to vector<28xf32>
    %295 = vector.shape_cast %294 : vector<28xf32> to vector<28x1xf32>
    %296 = vector.broadcast %295 : vector<28x1xf32> to vector<28x28xf32>
    %297 = arith.subf %293, %296 : vector<28x28xf32>
    %298 = math.exp %297 : vector<28x28xf32>
    %cst_186 = arith.constant dense<0.000000e+00> : vector<28xf32>
    %299 = vector.multi_reduction <add>, %298, %cst_186 [1] : vector<28x28xf32> to vector<28xf32>
    %300 = vector.shape_cast %299 : vector<28xf32> to vector<28x1xf32>
    %301 = tpu.reciprocal %300 {approx = true} : vector<28x1xf32> -> vector<28x1xf32>
    %cst_187 = arith.constant dense<0.000000e+00> : vector<28x8xf32>
    %302 = tpu.matmul %298, %291, %cst_187 {dimension_numbers = #tpu.dot_dimension_numbers<[1], [0], [0], [1], [0, 0, 1, 1], [], []>} : vector<28x28xf32>, vector<28x8xf32>, vector<28x8xf32> -> vector<28x8xf32>
    %303 = vector.broadcast %301 : vector<28x1xf32> to vector<28x8xf32>
    %304 = arith.mulf %302, %303 : vector<28x8xf32>
    %c3_188 = arith.constant 3 : index
    %c0_189 = arith.constant 0 : index
    %c0_190 = arith.constant 0 : index
    %305 = vector.load %arg23[%c3_188, %c0_189, %c0_190] : memref<8x8x32xf32, #tpu.memory_space<vmem>>, vector<1x8x32xf32>
    %306 = vector.shape_cast %305 : vector<1x8x32xf32> to vector<8x32xf32>
    %cst_191 = arith.constant dense<0.000000e+00> : vector<28x32xf32>
    %307 = tpu.matmul %304, %306, %cst_191 {dimension_numbers = #tpu.dot_dimension_numbers<[1], [0], [0], [1], [0, 0, 1, 1], [], []>} : vector<28x8xf32>, vector<8x32xf32>, vector<28x32xf32> -> vector<28x32xf32>
    %308 = arith.addf %282, %307 : vector<28x32xf32>
    %c0_192 = arith.constant 0 : index
    %c0_193 = arith.constant 0 : index
    %c0_194 = arith.constant 0 : index
    %309 = vector.load %arg24[%c0_192, %c0_193, %c0_194] : memref<2x1x32xf32, #tpu.memory_space<vmem>>, vector<1x1x32xf32>
    %310 = vector.shape_cast %309 : vector<1x1x32xf32> to vector<1x32xf32>
    %311 = vector.broadcast %310 : vector<1x32xf32> to vector<28x32xf32>
    %312 = arith.addf %308, %311 : vector<28x32xf32>
    %313 = arith.addf %312, %203 : vector<28x32xf32>
    %c0_195 = arith.constant 0 : index
    %c0_196 = arith.constant 0 : index
    %c0_197 = arith.constant 0 : index
    %314 = vector.load %arg25[%c0_195, %c0_196, %c0_197] : memref<2x1x32xf32, #tpu.memory_space<vmem>>, vector<1x1x32xf32>
    %315 = vector.shape_cast %314 : vector<1x1x32xf32> to vector<1x32xf32>
    %c0_198 = arith.constant 0 : index
    %c0_199 = arith.constant 0 : index
    %c0_200 = arith.constant 0 : index
    %316 = vector.load %arg26[%c0_198, %c0_199, %c0_200] : memref<2x1x32xf32, #tpu.memory_space<vmem>>, vector<1x1x32xf32>
    %317 = vector.shape_cast %316 : vector<1x1x32xf32> to vector<1x32xf32>
    %cst_201 = arith.constant dense<0.000000e+00> : vector<28xf32>
    %318 = vector.multi_reduction <add>, %313, %cst_201 [1] : vector<28x32xf32> to vector<28xf32>
    %319 = vector.shape_cast %318 : vector<28xf32> to vector<28x1xf32>
    %cst_202 = arith.constant 3.200000e+01 : f32
    %320 = vector.broadcast %cst_202 : f32 to vector<28x1xf32>
    %321 = arith.divf %319, %320 : vector<28x1xf32>
    %322 = vector.broadcast %321 : vector<28x1xf32> to vector<28x32xf32>
    %323 = arith.subf %313, %322 : vector<28x32xf32>
    %324 = arith.mulf %323, %323 : vector<28x32xf32>
    %cst_203 = arith.constant dense<0.000000e+00> : vector<28xf32>
    %325 = vector.multi_reduction <add>, %324, %cst_203 [1] : vector<28x32xf32> to vector<28xf32>
    %326 = vector.shape_cast %325 : vector<28xf32> to vector<28x1xf32>
    %cst_204 = arith.constant 3.200000e+01 : f32
    %327 = vector.broadcast %cst_204 : f32 to vector<28x1xf32>
    %328 = arith.divf %326, %327 : vector<28x1xf32>
    %329 = vector.broadcast %321 : vector<28x1xf32> to vector<28x32xf32>
    %330 = arith.subf %313, %329 : vector<28x32xf32>
    %cst_205 = arith.constant 9.99999997E-7 : f32
    %331 = vector.broadcast %cst_205 : f32 to vector<28x1xf32>
    %332 = arith.addf %328, %331 : vector<28x1xf32>
    %333 = math.rsqrt %332 : vector<28x1xf32>
    %334 = vector.broadcast %333 : vector<28x1xf32> to vector<28x32xf32>
    %335 = arith.mulf %330, %334 : vector<28x32xf32>
    %336 = vector.broadcast %315 : vector<1x32xf32> to vector<28x32xf32>
    %337 = arith.mulf %335, %336 : vector<28x32xf32>
    %338 = vector.broadcast %317 : vector<1x32xf32> to vector<28x32xf32>
    %339 = arith.addf %337, %338 : vector<28x32xf32>
    %c0_206 = arith.constant 0 : index
    %c0_207 = arith.constant 0 : index
    %c0_208 = arith.constant 0 : index
    %340 = vector.load %arg27[%c0_206, %c0_207, %c0_208] : memref<2x32x64xf32, #tpu.memory_space<vmem>>, vector<1x32x64xf32>
    %341 = vector.shape_cast %340 : vector<1x32x64xf32> to vector<32x64xf32>
    %cst_209 = arith.constant dense<0.000000e+00> : vector<28x64xf32>
    %342 = tpu.matmul %339, %341, %cst_209 {dimension_numbers = #tpu.dot_dimension_numbers<[1], [0], [0], [1], [0, 0, 1, 1], [], []>} : vector<28x32xf32>, vector<32x64xf32>, vector<28x64xf32> -> vector<28x64xf32>
    %c0_210 = arith.constant 0 : index
    %c0_211 = arith.constant 0 : index
    %c0_212 = arith.constant 0 : index
    %343 = vector.load %arg28[%c0_210, %c0_211, %c0_212] : memref<2x1x64xf32, #tpu.memory_space<vmem>>, vector<1x1x64xf32>
    %344 = vector.shape_cast %343 : vector<1x1x64xf32> to vector<1x64xf32>
    %345 = vector.broadcast %344 : vector<1x64xf32> to vector<28x64xf32>
    %346 = arith.addf %342, %345 : vector<28x64xf32>
    %cst_213 = arith.constant 5.000000e-01 : f32
    %347 = vector.broadcast %cst_213 : f32 to vector<28x64xf32>
    %348 = arith.mulf %347, %346 : vector<28x64xf32>
    %cst_214 = arith.constant 4.471500e-02 : f32
    %349 = vector.broadcast %cst_214 : f32 to vector<28x64xf32>
    %350 = arith.mulf %349, %346 : vector<28x64xf32>
    %351 = arith.mulf %350, %346 : vector<28x64xf32>
    %352 = arith.mulf %351, %346 : vector<28x64xf32>
    %353 = arith.addf %346, %352 : vector<28x64xf32>
    %cst_215 = arith.constant 0.797884583 : f32
    %354 = vector.broadcast %cst_215 : f32 to vector<28x64xf32>
    %355 = arith.mulf %354, %353 : vector<28x64xf32>
    %356 = math.tanh %355 : vector<28x64xf32>
    %cst_216 = arith.constant 1.000000e+00 : f32
    %357 = vector.broadcast %cst_216 : f32 to vector<28x64xf32>
    %358 = arith.addf %357, %356 : vector<28x64xf32>
    %359 = arith.mulf %348, %358 : vector<28x64xf32>
    %c0_217 = arith.constant 0 : index
    %c0_218 = arith.constant 0 : index
    %c0_219 = arith.constant 0 : index
    %360 = vector.load %arg29[%c0_217, %c0_218, %c0_219] : memref<2x64x32xf32, #tpu.memory_space<vmem>>, vector<1x64x32xf32>
    %361 = vector.shape_cast %360 : vector<1x64x32xf32> to vector<64x32xf32>
    %cst_220 = arith.constant dense<0.000000e+00> : vector<28x32xf32>
    %362 = tpu.matmul %359, %361, %cst_220 {dimension_numbers = #tpu.dot_dimension_numbers<[1], [0], [0], [1], [0, 0, 1, 1], [], []>} : vector<28x64xf32>, vector<64x32xf32>, vector<28x32xf32> -> vector<28x32xf32>
    %c0_221 = arith.constant 0 : index
    %c0_222 = arith.constant 0 : index
    %c0_223 = arith.constant 0 : index
    %363 = vector.load %arg30[%c0_221, %c0_222, %c0_223] : memref<2x1x32xf32, #tpu.memory_space<vmem>>, vector<1x1x32xf32>
    %364 = vector.shape_cast %363 : vector<1x1x32xf32> to vector<1x32xf32>
    %365 = vector.broadcast %364 : vector<1x32xf32> to vector<28x32xf32>
    %366 = arith.addf %362, %365 : vector<28x32xf32>
    %367 = arith.addf %366, %339 : vector<28x32xf32>
    %c0_224 = arith.constant 0 : index
    %c0_225 = arith.constant 0 : index
    %c0_226 = arith.constant 0 : index
    %368 = vector.load %arg31[%c0_224, %c0_225, %c0_226] : memref<2x1x32xf32, #tpu.memory_space<vmem>>, vector<1x1x32xf32>
    %369 = vector.shape_cast %368 : vector<1x1x32xf32> to vector<1x32xf32>
    %c0_227 = arith.constant 0 : index
    %c0_228 = arith.constant 0 : index
    %c0_229 = arith.constant 0 : index
    %370 = vector.load %arg32[%c0_227, %c0_228, %c0_229] : memref<2x1x32xf32, #tpu.memory_space<vmem>>, vector<1x1x32xf32>
    %371 = vector.shape_cast %370 : vector<1x1x32xf32> to vector<1x32xf32>
    %cst_230 = arith.constant dense<0.000000e+00> : vector<28xf32>
    %372 = vector.multi_reduction <add>, %367, %cst_230 [1] : vector<28x32xf32> to vector<28xf32>
    %373 = vector.shape_cast %372 : vector<28xf32> to vector<28x1xf32>
    %cst_231 = arith.constant 3.200000e+01 : f32
    %374 = vector.broadcast %cst_231 : f32 to vector<28x1xf32>
    %375 = arith.divf %373, %374 : vector<28x1xf32>
    %376 = vector.broadcast %375 : vector<28x1xf32> to vector<28x32xf32>
    %377 = arith.subf %367, %376 : vector<28x32xf32>
    %378 = arith.mulf %377, %377 : vector<28x32xf32>
    %cst_232 = arith.constant dense<0.000000e+00> : vector<28xf32>
    %379 = vector.multi_reduction <add>, %378, %cst_232 [1] : vector<28x32xf32> to vector<28xf32>
    %380 = vector.shape_cast %379 : vector<28xf32> to vector<28x1xf32>
    %cst_233 = arith.constant 3.200000e+01 : f32
    %381 = vector.broadcast %cst_233 : f32 to vector<28x1xf32>
    %382 = arith.divf %380, %381 : vector<28x1xf32>
    %383 = vector.broadcast %375 : vector<28x1xf32> to vector<28x32xf32>
    %384 = arith.subf %367, %383 : vector<28x32xf32>
    %cst_234 = arith.constant 9.99999997E-7 : f32
    %385 = vector.broadcast %cst_234 : f32 to vector<28x1xf32>
    %386 = arith.addf %382, %385 : vector<28x1xf32>
    %387 = math.rsqrt %386 : vector<28x1xf32>
    %388 = vector.broadcast %387 : vector<28x1xf32> to vector<28x32xf32>
    %389 = arith.mulf %384, %388 : vector<28x32xf32>
    %390 = vector.broadcast %369 : vector<1x32xf32> to vector<28x32xf32>
    %391 = arith.mulf %389, %390 : vector<28x32xf32>
    %392 = vector.broadcast %371 : vector<1x32xf32> to vector<28x32xf32>
    %393 = arith.addf %391, %392 : vector<28x32xf32>
    %cst_235 = arith.constant 0.000000e+00 : f32
    %394 = vector.broadcast %cst_235 : f32 to vector<28x32xf32>
    %c4 = arith.constant 4 : index
    %c0_236 = arith.constant 0 : index
    %c0_237 = arith.constant 0 : index
    %395 = vector.load %arg20[%c4, %c0_236, %c0_237] : memref<8x32x8xf32, #tpu.memory_space<vmem>>, vector<1x32x8xf32>
    %396 = vector.shape_cast %395 : vector<1x32x8xf32> to vector<32x8xf32>
    %cst_238 = arith.constant dense<0.000000e+00> : vector<28x8xf32>
    %397 = tpu.matmul %393, %396, %cst_238 {dimension_numbers = #tpu.dot_dimension_numbers<[1], [0], [0], [1], [0, 0, 1, 1], [], []>} : vector<28x32xf32>, vector<32x8xf32>, vector<28x8xf32> -> vector<28x8xf32>
    %c4_239 = arith.constant 4 : index
    %c0_240 = arith.constant 0 : index
    %c0_241 = arith.constant 0 : index
    %398 = vector.load %arg21[%c4_239, %c0_240, %c0_241] : memref<8x32x8xf32, #tpu.memory_space<vmem>>, vector<1x32x8xf32>
    %399 = vector.shape_cast %398 : vector<1x32x8xf32> to vector<32x8xf32>
    %cst_242 = arith.constant dense<0.000000e+00> : vector<28x8xf32>
    %400 = tpu.matmul %393, %399, %cst_242 {dimension_numbers = #tpu.dot_dimension_numbers<[1], [0], [0], [1], [0, 0, 1, 1], [], []>} : vector<28x32xf32>, vector<32x8xf32>, vector<28x8xf32> -> vector<28x8xf32>
    %c4_243 = arith.constant 4 : index
    %c0_244 = arith.constant 0 : index
    %c0_245 = arith.constant 0 : index
    %401 = vector.load %arg22[%c4_243, %c0_244, %c0_245] : memref<8x32x8xf32, #tpu.memory_space<vmem>>, vector<1x32x8xf32>
    %402 = vector.shape_cast %401 : vector<1x32x8xf32> to vector<32x8xf32>
    %cst_246 = arith.constant dense<0.000000e+00> : vector<28x8xf32>
    %403 = tpu.matmul %393, %402, %cst_246 {dimension_numbers = #tpu.dot_dimension_numbers<[1], [0], [0], [1], [0, 0, 1, 1], [], []>} : vector<28x32xf32>, vector<32x8xf32>, vector<28x8xf32> -> vector<28x8xf32>
    %cst_247 = arith.constant dense<0.000000e+00> : vector<28x28xf32>
    %404 = tpu.matmul %397, %400, %cst_247 {dimension_numbers = #tpu.dot_dimension_numbers<[1], [1], [0], [0], [0, 0, 1, 0], [], []>} : vector<28x8xf32>, vector<28x8xf32>, vector<28x28xf32> -> vector<28x28xf32>
    %405 = arith.addf %404, %202 : vector<28x28xf32>
    %cst_248 = arith.constant dense<0xFF800000> : vector<28xf32>
    %406 = vector.multi_reduction <maximumf>, %405, %cst_248 [1] : vector<28x28xf32> to vector<28xf32>
    %407 = vector.shape_cast %406 : vector<28xf32> to vector<28x1xf32>
    %408 = vector.broadcast %407 : vector<28x1xf32> to vector<28x28xf32>
    %409 = arith.subf %405, %408 : vector<28x28xf32>
    %410 = math.exp %409 : vector<28x28xf32>
    %cst_249 = arith.constant dense<0.000000e+00> : vector<28xf32>
    %411 = vector.multi_reduction <add>, %410, %cst_249 [1] : vector<28x28xf32> to vector<28xf32>
    %412 = vector.shape_cast %411 : vector<28xf32> to vector<28x1xf32>
    %413 = tpu.reciprocal %412 {approx = true} : vector<28x1xf32> -> vector<28x1xf32>
    %cst_250 = arith.constant dense<0.000000e+00> : vector<28x8xf32>
    %414 = tpu.matmul %410, %403, %cst_250 {dimension_numbers = #tpu.dot_dimension_numbers<[1], [0], [0], [1], [0, 0, 1, 1], [], []>} : vector<28x28xf32>, vector<28x8xf32>, vector<28x8xf32> -> vector<28x8xf32>
    %415 = vector.broadcast %413 : vector<28x1xf32> to vector<28x8xf32>
    %416 = arith.mulf %414, %415 : vector<28x8xf32>
    %c4_251 = arith.constant 4 : index
    %c0_252 = arith.constant 0 : index
    %c0_253 = arith.constant 0 : index
    %417 = vector.load %arg23[%c4_251, %c0_252, %c0_253] : memref<8x8x32xf32, #tpu.memory_space<vmem>>, vector<1x8x32xf32>
    %418 = vector.shape_cast %417 : vector<1x8x32xf32> to vector<8x32xf32>
    %cst_254 = arith.constant dense<0.000000e+00> : vector<28x32xf32>
    %419 = tpu.matmul %416, %418, %cst_254 {dimension_numbers = #tpu.dot_dimension_numbers<[1], [0], [0], [1], [0, 0, 1, 1], [], []>} : vector<28x8xf32>, vector<8x32xf32>, vector<28x32xf32> -> vector<28x32xf32>
    %420 = arith.addf %394, %419 : vector<28x32xf32>
    %c5 = arith.constant 5 : index
    %c0_255 = arith.constant 0 : index
    %c0_256 = arith.constant 0 : index
    %421 = vector.load %arg20[%c5, %c0_255, %c0_256] : memref<8x32x8xf32, #tpu.memory_space<vmem>>, vector<1x32x8xf32>
    %422 = vector.shape_cast %421 : vector<1x32x8xf32> to vector<32x8xf32>
    %cst_257 = arith.constant dense<0.000000e+00> : vector<28x8xf32>
    %423 = tpu.matmul %393, %422, %cst_257 {dimension_numbers = #tpu.dot_dimension_numbers<[1], [0], [0], [1], [0, 0, 1, 1], [], []>} : vector<28x32xf32>, vector<32x8xf32>, vector<28x8xf32> -> vector<28x8xf32>
    %c5_258 = arith.constant 5 : index
    %c0_259 = arith.constant 0 : index
    %c0_260 = arith.constant 0 : index
    %424 = vector.load %arg21[%c5_258, %c0_259, %c0_260] : memref<8x32x8xf32, #tpu.memory_space<vmem>>, vector<1x32x8xf32>
    %425 = vector.shape_cast %424 : vector<1x32x8xf32> to vector<32x8xf32>
    %cst_261 = arith.constant dense<0.000000e+00> : vector<28x8xf32>
    %426 = tpu.matmul %393, %425, %cst_261 {dimension_numbers = #tpu.dot_dimension_numbers<[1], [0], [0], [1], [0, 0, 1, 1], [], []>} : vector<28x32xf32>, vector<32x8xf32>, vector<28x8xf32> -> vector<28x8xf32>
    %c5_262 = arith.constant 5 : index
    %c0_263 = arith.constant 0 : index
    %c0_264 = arith.constant 0 : index
    %427 = vector.load %arg22[%c5_262, %c0_263, %c0_264] : memref<8x32x8xf32, #tpu.memory_space<vmem>>, vector<1x32x8xf32>
    %428 = vector.shape_cast %427 : vector<1x32x8xf32> to vector<32x8xf32>
    %cst_265 = arith.constant dense<0.000000e+00> : vector<28x8xf32>
    %429 = tpu.matmul %393, %428, %cst_265 {dimension_numbers = #tpu.dot_dimension_numbers<[1], [0], [0], [1], [0, 0, 1, 1], [], []>} : vector<28x32xf32>, vector<32x8xf32>, vector<28x8xf32> -> vector<28x8xf32>
    %cst_266 = arith.constant dense<0.000000e+00> : vector<28x28xf32>
    %430 = tpu.matmul %423, %426, %cst_266 {dimension_numbers = #tpu.dot_dimension_numbers<[1], [1], [0], [0], [0, 0, 1, 0], [], []>} : vector<28x8xf32>, vector<28x8xf32>, vector<28x28xf32> -> vector<28x28xf32>
    %431 = arith.addf %430, %202 : vector<28x28xf32>
    %cst_267 = arith.constant dense<0xFF800000> : vector<28xf32>
    %432 = vector.multi_reduction <maximumf>, %431, %cst_267 [1] : vector<28x28xf32> to vector<28xf32>
    %433 = vector.shape_cast %432 : vector<28xf32> to vector<28x1xf32>
    %434 = vector.broadcast %433 : vector<28x1xf32> to vector<28x28xf32>
    %435 = arith.subf %431, %434 : vector<28x28xf32>
    %436 = math.exp %435 : vector<28x28xf32>
    %cst_268 = arith.constant dense<0.000000e+00> : vector<28xf32>
    %437 = vector.multi_reduction <add>, %436, %cst_268 [1] : vector<28x28xf32> to vector<28xf32>
    %438 = vector.shape_cast %437 : vector<28xf32> to vector<28x1xf32>
    %439 = tpu.reciprocal %438 {approx = true} : vector<28x1xf32> -> vector<28x1xf32>
    %cst_269 = arith.constant dense<0.000000e+00> : vector<28x8xf32>
    %440 = tpu.matmul %436, %429, %cst_269 {dimension_numbers = #tpu.dot_dimension_numbers<[1], [0], [0], [1], [0, 0, 1, 1], [], []>} : vector<28x28xf32>, vector<28x8xf32>, vector<28x8xf32> -> vector<28x8xf32>
    %441 = vector.broadcast %439 : vector<28x1xf32> to vector<28x8xf32>
    %442 = arith.mulf %440, %441 : vector<28x8xf32>
    %c5_270 = arith.constant 5 : index
    %c0_271 = arith.constant 0 : index
    %c0_272 = arith.constant 0 : index
    %443 = vector.load %arg23[%c5_270, %c0_271, %c0_272] : memref<8x8x32xf32, #tpu.memory_space<vmem>>, vector<1x8x32xf32>
    %444 = vector.shape_cast %443 : vector<1x8x32xf32> to vector<8x32xf32>
    %cst_273 = arith.constant dense<0.000000e+00> : vector<28x32xf32>
    %445 = tpu.matmul %442, %444, %cst_273 {dimension_numbers = #tpu.dot_dimension_numbers<[1], [0], [0], [1], [0, 0, 1, 1], [], []>} : vector<28x8xf32>, vector<8x32xf32>, vector<28x32xf32> -> vector<28x32xf32>
    %446 = arith.addf %420, %445 : vector<28x32xf32>
    %c6 = arith.constant 6 : index
    %c0_274 = arith.constant 0 : index
    %c0_275 = arith.constant 0 : index
    %447 = vector.load %arg20[%c6, %c0_274, %c0_275] : memref<8x32x8xf32, #tpu.memory_space<vmem>>, vector<1x32x8xf32>
    %448 = vector.shape_cast %447 : vector<1x32x8xf32> to vector<32x8xf32>
    %cst_276 = arith.constant dense<0.000000e+00> : vector<28x8xf32>
    %449 = tpu.matmul %393, %448, %cst_276 {dimension_numbers = #tpu.dot_dimension_numbers<[1], [0], [0], [1], [0, 0, 1, 1], [], []>} : vector<28x32xf32>, vector<32x8xf32>, vector<28x8xf32> -> vector<28x8xf32>
    %c6_277 = arith.constant 6 : index
    %c0_278 = arith.constant 0 : index
    %c0_279 = arith.constant 0 : index
    %450 = vector.load %arg21[%c6_277, %c0_278, %c0_279] : memref<8x32x8xf32, #tpu.memory_space<vmem>>, vector<1x32x8xf32>
    %451 = vector.shape_cast %450 : vector<1x32x8xf32> to vector<32x8xf32>
    %cst_280 = arith.constant dense<0.000000e+00> : vector<28x8xf32>
    %452 = tpu.matmul %393, %451, %cst_280 {dimension_numbers = #tpu.dot_dimension_numbers<[1], [0], [0], [1], [0, 0, 1, 1], [], []>} : vector<28x32xf32>, vector<32x8xf32>, vector<28x8xf32> -> vector<28x8xf32>
    %c6_281 = arith.constant 6 : index
    %c0_282 = arith.constant 0 : index
    %c0_283 = arith.constant 0 : index
    %453 = vector.load %arg22[%c6_281, %c0_282, %c0_283] : memref<8x32x8xf32, #tpu.memory_space<vmem>>, vector<1x32x8xf32>
    %454 = vector.shape_cast %453 : vector<1x32x8xf32> to vector<32x8xf32>
    %cst_284 = arith.constant dense<0.000000e+00> : vector<28x8xf32>
    %455 = tpu.matmul %393, %454, %cst_284 {dimension_numbers = #tpu.dot_dimension_numbers<[1], [0], [0], [1], [0, 0, 1, 1], [], []>} : vector<28x32xf32>, vector<32x8xf32>, vector<28x8xf32> -> vector<28x8xf32>
    %cst_285 = arith.constant dense<0.000000e+00> : vector<28x28xf32>
    %456 = tpu.matmul %449, %452, %cst_285 {dimension_numbers = #tpu.dot_dimension_numbers<[1], [1], [0], [0], [0, 0, 1, 0], [], []>} : vector<28x8xf32>, vector<28x8xf32>, vector<28x28xf32> -> vector<28x28xf32>
    %457 = arith.addf %456, %202 : vector<28x28xf32>
    %cst_286 = arith.constant dense<0xFF800000> : vector<28xf32>
    %458 = vector.multi_reduction <maximumf>, %457, %cst_286 [1] : vector<28x28xf32> to vector<28xf32>
    %459 = vector.shape_cast %458 : vector<28xf32> to vector<28x1xf32>
    %460 = vector.broadcast %459 : vector<28x1xf32> to vector<28x28xf32>
    %461 = arith.subf %457, %460 : vector<28x28xf32>
    %462 = math.exp %461 : vector<28x28xf32>
    %cst_287 = arith.constant dense<0.000000e+00> : vector<28xf32>
    %463 = vector.multi_reduction <add>, %462, %cst_287 [1] : vector<28x28xf32> to vector<28xf32>
    %464 = vector.shape_cast %463 : vector<28xf32> to vector<28x1xf32>
    %465 = tpu.reciprocal %464 {approx = true} : vector<28x1xf32> -> vector<28x1xf32>
    %cst_288 = arith.constant dense<0.000000e+00> : vector<28x8xf32>
    %466 = tpu.matmul %462, %455, %cst_288 {dimension_numbers = #tpu.dot_dimension_numbers<[1], [0], [0], [1], [0, 0, 1, 1], [], []>} : vector<28x28xf32>, vector<28x8xf32>, vector<28x8xf32> -> vector<28x8xf32>
    %467 = vector.broadcast %465 : vector<28x1xf32> to vector<28x8xf32>
    %468 = arith.mulf %466, %467 : vector<28x8xf32>
    %c6_289 = arith.constant 6 : index
    %c0_290 = arith.constant 0 : index
    %c0_291 = arith.constant 0 : index
    %469 = vector.load %arg23[%c6_289, %c0_290, %c0_291] : memref<8x8x32xf32, #tpu.memory_space<vmem>>, vector<1x8x32xf32>
    %470 = vector.shape_cast %469 : vector<1x8x32xf32> to vector<8x32xf32>
    %cst_292 = arith.constant dense<0.000000e+00> : vector<28x32xf32>
    %471 = tpu.matmul %468, %470, %cst_292 {dimension_numbers = #tpu.dot_dimension_numbers<[1], [0], [0], [1], [0, 0, 1, 1], [], []>} : vector<28x8xf32>, vector<8x32xf32>, vector<28x32xf32> -> vector<28x32xf32>
    %472 = arith.addf %446, %471 : vector<28x32xf32>
    %c7 = arith.constant 7 : index
    %c0_293 = arith.constant 0 : index
    %c0_294 = arith.constant 0 : index
    %473 = vector.load %arg20[%c7, %c0_293, %c0_294] : memref<8x32x8xf32, #tpu.memory_space<vmem>>, vector<1x32x8xf32>
    %474 = vector.shape_cast %473 : vector<1x32x8xf32> to vector<32x8xf32>
    %cst_295 = arith.constant dense<0.000000e+00> : vector<28x8xf32>
    %475 = tpu.matmul %393, %474, %cst_295 {dimension_numbers = #tpu.dot_dimension_numbers<[1], [0], [0], [1], [0, 0, 1, 1], [], []>} : vector<28x32xf32>, vector<32x8xf32>, vector<28x8xf32> -> vector<28x8xf32>
    %c7_296 = arith.constant 7 : index
    %c0_297 = arith.constant 0 : index
    %c0_298 = arith.constant 0 : index
    %476 = vector.load %arg21[%c7_296, %c0_297, %c0_298] : memref<8x32x8xf32, #tpu.memory_space<vmem>>, vector<1x32x8xf32>
    %477 = vector.shape_cast %476 : vector<1x32x8xf32> to vector<32x8xf32>
    %cst_299 = arith.constant dense<0.000000e+00> : vector<28x8xf32>
    %478 = tpu.matmul %393, %477, %cst_299 {dimension_numbers = #tpu.dot_dimension_numbers<[1], [0], [0], [1], [0, 0, 1, 1], [], []>} : vector<28x32xf32>, vector<32x8xf32>, vector<28x8xf32> -> vector<28x8xf32>
    %c7_300 = arith.constant 7 : index
    %c0_301 = arith.constant 0 : index
    %c0_302 = arith.constant 0 : index
    %479 = vector.load %arg22[%c7_300, %c0_301, %c0_302] : memref<8x32x8xf32, #tpu.memory_space<vmem>>, vector<1x32x8xf32>
    %480 = vector.shape_cast %479 : vector<1x32x8xf32> to vector<32x8xf32>
    %cst_303 = arith.constant dense<0.000000e+00> : vector<28x8xf32>
    %481 = tpu.matmul %393, %480, %cst_303 {dimension_numbers = #tpu.dot_dimension_numbers<[1], [0], [0], [1], [0, 0, 1, 1], [], []>} : vector<28x32xf32>, vector<32x8xf32>, vector<28x8xf32> -> vector<28x8xf32>
    %cst_304 = arith.constant dense<0.000000e+00> : vector<28x28xf32>
    %482 = tpu.matmul %475, %478, %cst_304 {dimension_numbers = #tpu.dot_dimension_numbers<[1], [1], [0], [0], [0, 0, 1, 0], [], []>} : vector<28x8xf32>, vector<28x8xf32>, vector<28x28xf32> -> vector<28x28xf32>
    %483 = arith.addf %482, %202 : vector<28x28xf32>
    %cst_305 = arith.constant dense<0xFF800000> : vector<28xf32>
    %484 = vector.multi_reduction <maximumf>, %483, %cst_305 [1] : vector<28x28xf32> to vector<28xf32>
    %485 = vector.shape_cast %484 : vector<28xf32> to vector<28x1xf32>
    %486 = vector.broadcast %485 : vector<28x1xf32> to vector<28x28xf32>
    %487 = arith.subf %483, %486 : vector<28x28xf32>
    %488 = math.exp %487 : vector<28x28xf32>
    %cst_306 = arith.constant dense<0.000000e+00> : vector<28xf32>
    %489 = vector.multi_reduction <add>, %488, %cst_306 [1] : vector<28x28xf32> to vector<28xf32>
    %490 = vector.shape_cast %489 : vector<28xf32> to vector<28x1xf32>
    %491 = tpu.reciprocal %490 {approx = true} : vector<28x1xf32> -> vector<28x1xf32>
    %cst_307 = arith.constant dense<0.000000e+00> : vector<28x8xf32>
    %492 = tpu.matmul %488, %481, %cst_307 {dimension_numbers = #tpu.dot_dimension_numbers<[1], [0], [0], [1], [0, 0, 1, 1], [], []>} : vector<28x28xf32>, vector<28x8xf32>, vector<28x8xf32> -> vector<28x8xf32>
    %493 = vector.broadcast %491 : vector<28x1xf32> to vector<28x8xf32>
    %494 = arith.mulf %492, %493 : vector<28x8xf32>
    %c7_308 = arith.constant 7 : index
    %c0_309 = arith.constant 0 : index
    %c0_310 = arith.constant 0 : index
    %495 = vector.load %arg23[%c7_308, %c0_309, %c0_310] : memref<8x8x32xf32, #tpu.memory_space<vmem>>, vector<1x8x32xf32>
    %496 = vector.shape_cast %495 : vector<1x8x32xf32> to vector<8x32xf32>
    %cst_311 = arith.constant dense<0.000000e+00> : vector<28x32xf32>
    %497 = tpu.matmul %494, %496, %cst_311 {dimension_numbers = #tpu.dot_dimension_numbers<[1], [0], [0], [1], [0, 0, 1, 1], [], []>} : vector<28x8xf32>, vector<8x32xf32>, vector<28x32xf32> -> vector<28x32xf32>
    %498 = arith.addf %472, %497 : vector<28x32xf32>
    %c1_312 = arith.constant 1 : index
    %c0_313 = arith.constant 0 : index
    %c0_314 = arith.constant 0 : index
    %499 = vector.load %arg24[%c1_312, %c0_313, %c0_314] : memref<2x1x32xf32, #tpu.memory_space<vmem>>, vector<1x1x32xf32>
    %500 = vector.shape_cast %499 : vector<1x1x32xf32> to vector<1x32xf32>
    %501 = vector.broadcast %500 : vector<1x32xf32> to vector<28x32xf32>
    %502 = arith.addf %498, %501 : vector<28x32xf32>
    %503 = arith.addf %502, %393 : vector<28x32xf32>
    %c1_315 = arith.constant 1 : index
    %c0_316 = arith.constant 0 : index
    %c0_317 = arith.constant 0 : index
    %504 = vector.load %arg25[%c1_315, %c0_316, %c0_317] : memref<2x1x32xf32, #tpu.memory_space<vmem>>, vector<1x1x32xf32>
    %505 = vector.shape_cast %504 : vector<1x1x32xf32> to vector<1x32xf32>
    %c1_318 = arith.constant 1 : index
    %c0_319 = arith.constant 0 : index
    %c0_320 = arith.constant 0 : index
    %506 = vector.load %arg26[%c1_318, %c0_319, %c0_320] : memref<2x1x32xf32, #tpu.memory_space<vmem>>, vector<1x1x32xf32>
    %507 = vector.shape_cast %506 : vector<1x1x32xf32> to vector<1x32xf32>
    %cst_321 = arith.constant dense<0.000000e+00> : vector<28xf32>
    %508 = vector.multi_reduction <add>, %503, %cst_321 [1] : vector<28x32xf32> to vector<28xf32>
    %509 = vector.shape_cast %508 : vector<28xf32> to vector<28x1xf32>
    %cst_322 = arith.constant 3.200000e+01 : f32
    %510 = vector.broadcast %cst_322 : f32 to vector<28x1xf32>
    %511 = arith.divf %509, %510 : vector<28x1xf32>
    %512 = vector.broadcast %511 : vector<28x1xf32> to vector<28x32xf32>
    %513 = arith.subf %503, %512 : vector<28x32xf32>
    %514 = arith.mulf %513, %513 : vector<28x32xf32>
    %cst_323 = arith.constant dense<0.000000e+00> : vector<28xf32>
    %515 = vector.multi_reduction <add>, %514, %cst_323 [1] : vector<28x32xf32> to vector<28xf32>
    %516 = vector.shape_cast %515 : vector<28xf32> to vector<28x1xf32>
    %cst_324 = arith.constant 3.200000e+01 : f32
    %517 = vector.broadcast %cst_324 : f32 to vector<28x1xf32>
    %518 = arith.divf %516, %517 : vector<28x1xf32>
    %519 = vector.broadcast %511 : vector<28x1xf32> to vector<28x32xf32>
    %520 = arith.subf %503, %519 : vector<28x32xf32>
    %cst_325 = arith.constant 9.99999997E-7 : f32
    %521 = vector.broadcast %cst_325 : f32 to vector<28x1xf32>
    %522 = arith.addf %518, %521 : vector<28x1xf32>
    %523 = math.rsqrt %522 : vector<28x1xf32>
    %524 = vector.broadcast %523 : vector<28x1xf32> to vector<28x32xf32>
    %525 = arith.mulf %520, %524 : vector<28x32xf32>
    %526 = vector.broadcast %505 : vector<1x32xf32> to vector<28x32xf32>
    %527 = arith.mulf %525, %526 : vector<28x32xf32>
    %528 = vector.broadcast %507 : vector<1x32xf32> to vector<28x32xf32>
    %529 = arith.addf %527, %528 : vector<28x32xf32>
    %c1_326 = arith.constant 1 : index
    %c0_327 = arith.constant 0 : index
    %c0_328 = arith.constant 0 : index
    %530 = vector.load %arg27[%c1_326, %c0_327, %c0_328] : memref<2x32x64xf32, #tpu.memory_space<vmem>>, vector<1x32x64xf32>
    %531 = vector.shape_cast %530 : vector<1x32x64xf32> to vector<32x64xf32>
    %cst_329 = arith.constant dense<0.000000e+00> : vector<28x64xf32>
    %532 = tpu.matmul %529, %531, %cst_329 {dimension_numbers = #tpu.dot_dimension_numbers<[1], [0], [0], [1], [0, 0, 1, 1], [], []>} : vector<28x32xf32>, vector<32x64xf32>, vector<28x64xf32> -> vector<28x64xf32>
    %c1_330 = arith.constant 1 : index
    %c0_331 = arith.constant 0 : index
    %c0_332 = arith.constant 0 : index
    %533 = vector.load %arg28[%c1_330, %c0_331, %c0_332] : memref<2x1x64xf32, #tpu.memory_space<vmem>>, vector<1x1x64xf32>
    %534 = vector.shape_cast %533 : vector<1x1x64xf32> to vector<1x64xf32>
    %535 = vector.broadcast %534 : vector<1x64xf32> to vector<28x64xf32>
    %536 = arith.addf %532, %535 : vector<28x64xf32>
    %cst_333 = arith.constant 5.000000e-01 : f32
    %537 = vector.broadcast %cst_333 : f32 to vector<28x64xf32>
    %538 = arith.mulf %537, %536 : vector<28x64xf32>
    %cst_334 = arith.constant 4.471500e-02 : f32
    %539 = vector.broadcast %cst_334 : f32 to vector<28x64xf32>
    %540 = arith.mulf %539, %536 : vector<28x64xf32>
    %541 = arith.mulf %540, %536 : vector<28x64xf32>
    %542 = arith.mulf %541, %536 : vector<28x64xf32>
    %543 = arith.addf %536, %542 : vector<28x64xf32>
    %cst_335 = arith.constant 0.797884583 : f32
    %544 = vector.broadcast %cst_335 : f32 to vector<28x64xf32>
    %545 = arith.mulf %544, %543 : vector<28x64xf32>
    %546 = math.tanh %545 : vector<28x64xf32>
    %cst_336 = arith.constant 1.000000e+00 : f32
    %547 = vector.broadcast %cst_336 : f32 to vector<28x64xf32>
    %548 = arith.addf %547, %546 : vector<28x64xf32>
    %549 = arith.mulf %538, %548 : vector<28x64xf32>
    %c1_337 = arith.constant 1 : index
    %c0_338 = arith.constant 0 : index
    %c0_339 = arith.constant 0 : index
    %550 = vector.load %arg29[%c1_337, %c0_338, %c0_339] : memref<2x64x32xf32, #tpu.memory_space<vmem>>, vector<1x64x32xf32>
    %551 = vector.shape_cast %550 : vector<1x64x32xf32> to vector<64x32xf32>
    %cst_340 = arith.constant dense<0.000000e+00> : vector<28x32xf32>
    %552 = tpu.matmul %549, %551, %cst_340 {dimension_numbers = #tpu.dot_dimension_numbers<[1], [0], [0], [1], [0, 0, 1, 1], [], []>} : vector<28x64xf32>, vector<64x32xf32>, vector<28x32xf32> -> vector<28x32xf32>
    %c1_341 = arith.constant 1 : index
    %c0_342 = arith.constant 0 : index
    %c0_343 = arith.constant 0 : index
    %553 = vector.load %arg30[%c1_341, %c0_342, %c0_343] : memref<2x1x32xf32, #tpu.memory_space<vmem>>, vector<1x1x32xf32>
    %554 = vector.shape_cast %553 : vector<1x1x32xf32> to vector<1x32xf32>
    %555 = vector.broadcast %554 : vector<1x32xf32> to vector<28x32xf32>
    %556 = arith.addf %552, %555 : vector<28x32xf32>
    %557 = arith.addf %556, %529 : vector<28x32xf32>
    %c1_344 = arith.constant 1 : index
    %c0_345 = arith.constant 0 : index
    %c0_346 = arith.constant 0 : index
    %558 = vector.load %arg31[%c1_344, %c0_345, %c0_346] : memref<2x1x32xf32, #tpu.memory_space<vmem>>, vector<1x1x32xf32>
    %559 = vector.shape_cast %558 : vector<1x1x32xf32> to vector<1x32xf32>
    %c1_347 = arith.constant 1 : index
    %c0_348 = arith.constant 0 : index
    %c0_349 = arith.constant 0 : index
    %560 = vector.load %arg32[%c1_347, %c0_348, %c0_349] : memref<2x1x32xf32, #tpu.memory_space<vmem>>, vector<1x1x32xf32>
    %561 = vector.shape_cast %560 : vector<1x1x32xf32> to vector<1x32xf32>
    %cst_350 = arith.constant dense<0.000000e+00> : vector<28xf32>
    %562 = vector.multi_reduction <add>, %557, %cst_350 [1] : vector<28x32xf32> to vector<28xf32>
    %563 = vector.shape_cast %562 : vector<28xf32> to vector<28x1xf32>
    %cst_351 = arith.constant 3.200000e+01 : f32
    %564 = vector.broadcast %cst_351 : f32 to vector<28x1xf32>
    %565 = arith.divf %563, %564 : vector<28x1xf32>
    %566 = vector.broadcast %565 : vector<28x1xf32> to vector<28x32xf32>
    %567 = arith.subf %557, %566 : vector<28x32xf32>
    %568 = arith.mulf %567, %567 : vector<28x32xf32>
    %cst_352 = arith.constant dense<0.000000e+00> : vector<28xf32>
    %569 = vector.multi_reduction <add>, %568, %cst_352 [1] : vector<28x32xf32> to vector<28xf32>
    %570 = vector.shape_cast %569 : vector<28xf32> to vector<28x1xf32>
    %cst_353 = arith.constant 3.200000e+01 : f32
    %571 = vector.broadcast %cst_353 : f32 to vector<28x1xf32>
    %572 = arith.divf %570, %571 : vector<28x1xf32>
    %573 = vector.broadcast %565 : vector<28x1xf32> to vector<28x32xf32>
    %574 = arith.subf %557, %573 : vector<28x32xf32>
    %cst_354 = arith.constant 9.99999997E-7 : f32
    %575 = vector.broadcast %cst_354 : f32 to vector<28x1xf32>
    %576 = arith.addf %572, %575 : vector<28x1xf32>
    %577 = math.rsqrt %576 : vector<28x1xf32>
    %578 = vector.broadcast %577 : vector<28x1xf32> to vector<28x32xf32>
    %579 = arith.mulf %574, %578 : vector<28x32xf32>
    %580 = vector.broadcast %559 : vector<1x32xf32> to vector<28x32xf32>
    %581 = arith.mulf %579, %580 : vector<28x32xf32>
    %582 = vector.broadcast %561 : vector<1x32xf32> to vector<28x32xf32>
    %583 = arith.addf %581, %582 : vector<28x32xf32>
    %584 = vector.extract_strided_slice %583 {offsets = [0, 0], sizes = [16, 32], strides = [1, 1]} : vector<28x32xf32> to vector<16x32xf32>
    %c0_355 = arith.constant 0 : index
    %c0_356 = arith.constant 0 : index
    %c0_357 = arith.constant 0 : index
    %585 = vector.load %arg33[%c0_355, %c0_356, %c0_357] : memref<1x16x96xf32, #tpu.memory_space<vmem>>, vector<1x16x32xf32>
    %586 = vector.shape_cast %585 : vector<1x16x32xf32> to vector<16x32xf32>
    %587 = vector.shape_cast %584 : vector<16x32xf32> to vector<1x16x32xf32>
    tpu.vector_store %arg33[%c0_355, %c0_356, %c0_357], %587 {strides = array<i32>} : memref<1x16x96xf32, #tpu.memory_space<vmem>>, vector<1x16x32xf32>,
    %c0_358 = arith.constant 0 : index
    %c0_359 = arith.constant 0 : index
    %c0_360 = arith.constant 0 : index
    %588 = vector.load %arg19[%c0_358, %c0_359, %c0_360] : memref<2x16x28xf32, #tpu.memory_space<vmem>>, vector<1x16x28xf32>
    %589 = vector.shape_cast %588 : vector<1x16x28xf32> to vector<16x28xf32>
    %cst_361 = arith.constant dense<0.000000e+00> : vector<16x32xf32>
    %590 = tpu.matmul %589, %583, %cst_361 {dimension_numbers = #tpu.dot_dimension_numbers<[1], [0], [0], [1], [0, 0, 1, 1], [], []>} : vector<16x28xf32>, vector<28x32xf32>, vector<16x32xf32> -> vector<16x32xf32>
    %c0_362 = arith.constant 0 : index
    %c0_363 = arith.constant 0 : index
    %c32 = arith.constant 32 : index
    %591 = vector.load %arg33[%c0_362, %c0_363, %c32] : memref<1x16x96xf32, #tpu.memory_space<vmem>>, vector<1x16x32xf32>
    %592 = vector.shape_cast %591 : vector<1x16x32xf32> to vector<16x32xf32>
    %593 = vector.shape_cast %590 : vector<16x32xf32> to vector<1x16x32xf32>
    tpu.vector_store %arg33[%c0_362, %c0_363, %c32], %593 {strides = array<i32>} : memref<1x16x96xf32, #tpu.memory_space<vmem>>, vector<1x16x32xf32>,
    %c1_364 = arith.constant 1 : index
    %c0_365 = arith.constant 0 : index
    %c0_366 = arith.constant 0 : index
    %594 = vector.load %arg19[%c1_364, %c0_365, %c0_366] : memref<2x16x28xf32, #tpu.memory_space<vmem>>, vector<1x16x28xf32>
    %595 = vector.shape_cast %594 : vector<1x16x28xf32> to vector<16x28xf32>
    %cst_367 = arith.constant dense<0.000000e+00> : vector<16x32xf32>
    %596 = tpu.matmul %595, %583, %cst_367 {dimension_numbers = #tpu.dot_dimension_numbers<[1], [0], [0], [1], [0, 0, 1, 1], [], []>} : vector<16x28xf32>, vector<28x32xf32>, vector<16x32xf32> -> vector<16x32xf32>
    %c0_368 = arith.constant 0 : index
    %c0_369 = arith.constant 0 : index
    %c64 = arith.constant 64 : index
    %597 = vector.load %arg33[%c0_368, %c0_369, %c64] : memref<1x16x96xf32, #tpu.memory_space<vmem>>, vector<1x16x32xf32>
    %598 = vector.shape_cast %597 : vector<1x16x32xf32> to vector<16x32xf32>
    %599 = vector.shape_cast %596 : vector<16x32xf32> to vector<1x16x32xf32>
    tpu.vector_store %arg33[%c0_368, %c0_369, %c64], %599 {strides = array<i32>} : memref<1x16x96xf32, #tpu.memory_space<vmem>>, vector<1x16x32xf32>,
    return
  }
  func.func @transform_0(%arg0: i32) -> (i32, i32, i32) {
    %c0_i32 = arith.constant 0 : i32
    %c0_i32_0 = arith.constant 0 : i32
    %c0_i32_1 = arith.constant 0 : i32
    return %arg0, %c0_i32, %c0_i32_0 : i32, i32, i32
  }
  func.func @transform_1(%arg0: i32) -> (i32, i32) {
    %c0_i32 = arith.constant 0 : i32
    %c0_i32_0 = arith.constant 0 : i32
    %c0_i32_1 = arith.constant 0 : i32
    return %c0_i32, %c0_i32_0 : i32, i32
  }
  func.func @transform_2(%arg0: i32) -> (i32, i32) {
    %c0_i32 = arith.constant 0 : i32
    %c0_i32_0 = arith.constant 0 : i32
    %c0_i32_1 = arith.constant 0 : i32
    return %c0_i32, %c0_i32_0 : i32, i32
  }
  func.func @transform_3(%arg0: i32) -> (i32, i32) {
    %c0_i32 = arith.constant 0 : i32
    %c0_i32_0 = arith.constant 0 : i32
    %c0_i32_1 = arith.constant 0 : i32
    return %c0_i32, %c0_i32_0 : i32, i32
  }
  func.func @transform_4(%arg0: i32) -> (i32, i32) {
    %c0_i32 = arith.constant 0 : i32
    %c0_i32_0 = arith.constant 0 : i32
    %c0_i32_1 = arith.constant 0 : i32
    return %c0_i32, %c0_i32_0 : i32, i32
  }
  func.func @transform_5(%arg0: i32) -> (i32, i32) {
    %c0_i32 = arith.constant 0 : i32
    %c0_i32_0 = arith.constant 0 : i32
    %c0_i32_1 = arith.constant 0 : i32
    return %c0_i32, %c0_i32_0 : i32, i32
  }
  func.func @transform_6(%arg0: i32) -> (i32, i32) {
    %c0_i32 = arith.constant 0 : i32
    %c0_i32_0 = arith.constant 0 : i32
    %c0_i32_1 = arith.constant 0 : i32
    return %c0_i32, %c0_i32_0 : i32, i32
  }
  func.func @transform_7(%arg0: i32) -> (i32, i32, i32) {
    %c0_i32 = arith.constant 0 : i32
    %c0_i32_0 = arith.constant 0 : i32
    %c0_i32_1 = arith.constant 0 : i32
    %c0_i32_2 = arith.constant 0 : i32
    return %c0_i32, %c0_i32_0, %c0_i32_1 : i32, i32, i32
  }
  func.func @transform_8(%arg0: i32) -> (i32, i32) {
    %c0_i32 = arith.constant 0 : i32
    %c0_i32_0 = arith.constant 0 : i32
    %c0_i32_1 = arith.constant 0 : i32
    return %c0_i32, %c0_i32_0 : i32, i32
  }
  func.func @transform_9(%arg0: i32) -> (i32, i32) {
    %c0_i32 = arith.constant 0 : i32
    %c0_i32_0 = arith.constant 0 : i32
    %c0_i32_1 = arith.constant 0 : i32
    return %c0_i32, %c0_i32_0 : i32, i32
  }
  func.func @transform_10(%arg0: i32) -> (i32, i32, i32) {
    %c0_i32 = arith.constant 0 : i32
    %c0_i32_0 = arith.constant 0 : i32
    %c0_i32_1 = arith.constant 0 : i32
    %c0_i32_2 = arith.constant 0 : i32
    return %c0_i32, %c0_i32_0, %c0_i32_1 : i32, i32, i32
  }
  func.func @transform_11(%arg0: i32) -> (i32, i32) {
    %c0_i32 = arith.constant 0 : i32
    %c0_i32_0 = arith.constant 0 : i32
    %c0_i32_1 = arith.constant 0 : i32
    return %c0_i32, %c0_i32_0 : i32, i32
  }
  func.func @transform_12(%arg0: i32) -> (i32, i32) {
    %c0_i32 = arith.constant 0 : i32
    %c0_i32_0 = arith.constant 0 : i32
    %c0_i32_1 = arith.constant 0 : i32
    return %c0_i32, %c0_i32_0 : i32, i32
  }
  func.func @transform_13(%arg0: i32) -> (i32, i32) {
    %c0_i32 = arith.constant 0 : i32
    %c0_i32_0 = arith.constant 0 : i32
    %c0_i32_1 = arith.constant 0 : i32
    return %c0_i32, %c0_i32_0 : i32, i32
  }
  func.func @transform_14(%arg0: i32) -> (i32, i32) {
    %c0_i32 = arith.constant 0 : i32
    %c0_i32_0 = arith.constant 0 : i32
    %c0_i32_1 = arith.constant 0 : i32
    return %c0_i32, %c0_i32_0 : i32, i32
  }
  func.func @transform_15(%arg0: i32) -> (i32, i32) {
    %c0_i32 = arith.constant 0 : i32
    %c0_i32_0 = arith.constant 0 : i32
    %c0_i32_1 = arith.constant 0 : i32
    return %c0_i32, %c0_i32_0 : i32, i32
  }
  func.func @transform_16(%arg0: i32) -> (i32, i32) {
    %c0_i32 = arith.constant 0 : i32
    %c0_i32_0 = arith.constant 0 : i32
    %c0_i32_1 = arith.constant 0 : i32
    return %c0_i32, %c0_i32_0 : i32, i32
  }
  func.func @transform_17(%arg0: i32) -> (i32, i32) {
    %c0_i32 = arith.constant 0 : i32
    %c0_i32_0 = arith.constant 0 : i32
    %c0_i32_1 = arith.constant 0 : i32
    return %c0_i32, %c0_i32_0 : i32, i32
  }
  func.func @transform_18(%arg0: i32) -> (i32, i32, i32) {
    %c0_i32 = arith.constant 0 : i32
    %c0_i32_0 = arith.constant 0 : i32
    %c0_i32_1 = arith.constant 0 : i32
    %c0_i32_2 = arith.constant 0 : i32
    return %c0_i32, %c0_i32_0, %c0_i32_1 : i32, i32, i32
  }
  func.func @transform_19(%arg0: i32) -> (i32, i32, i32) {
    %c0_i32 = arith.constant 0 : i32
    %c0_i32_0 = arith.constant 0 : i32
    %c0_i32_1 = arith.constant 0 : i32
    %c0_i32_2 = arith.constant 0 : i32
    return %c0_i32, %c0_i32_0, %c0_i32_1 : i32, i32, i32
  }
  func.func @transform_20(%arg0: i32) -> (i32, i32, i32) {
    %c0_i32 = arith.constant 0 : i32
    %c0_i32_0 = arith.constant 0 : i32
    %c0_i32_1 = arith.constant 0 : i32
    %c0_i32_2 = arith.constant 0 : i32
    return %c0_i32, %c0_i32_0, %c0_i32_1 : i32, i32, i32
  }
  func.func @transform_21(%arg0: i32) -> (i32, i32, i32) {
    %c0_i32 = arith.constant 0 : i32
    %c0_i32_0 = arith.constant 0 : i32
    %c0_i32_1 = arith.constant 0 : i32
    %c0_i32_2 = arith.constant 0 : i32
    return %c0_i32, %c0_i32_0, %c0_i32_1 : i32, i32, i32
  }
  func.func @transform_22(%arg0: i32) -> (i32, i32, i32) {
    %c0_i32 = arith.constant 0 : i32
    %c0_i32_0 = arith.constant 0 : i32
    %c0_i32_1 = arith.constant 0 : i32
    %c0_i32_2 = arith.constant 0 : i32
    return %c0_i32, %c0_i32_0, %c0_i32_1 : i32, i32, i32
  }
  func.func @transform_23(%arg0: i32) -> (i32, i32, i32) {
    %c0_i32 = arith.constant 0 : i32
    %c0_i32_0 = arith.constant 0 : i32
    %c0_i32_1 = arith.constant 0 : i32
    %c0_i32_2 = arith.constant 0 : i32
    return %c0_i32, %c0_i32_0, %c0_i32_1 : i32, i32, i32
  }
  func.func @transform_24(%arg0: i32) -> (i32, i32, i32) {
    %c0_i32 = arith.constant 0 : i32
    %c0_i32_0 = arith.constant 0 : i32
    %c0_i32_1 = arith.constant 0 : i32
    %c0_i32_2 = arith.constant 0 : i32
    return %c0_i32, %c0_i32_0, %c0_i32_1 : i32, i32, i32
  }
  func.func @transform_25(%arg0: i32) -> (i32, i32, i32) {
    %c0_i32 = arith.constant 0 : i32
    %c0_i32_0 = arith.constant 0 : i32
    %c0_i32_1 = arith.constant 0 : i32
    %c0_i32_2 = arith.constant 0 : i32
    return %c0_i32, %c0_i32_0, %c0_i32_1 : i32, i32, i32
  }
  func.func @transform_26(%arg0: i32) -> (i32, i32, i32) {
    %c0_i32 = arith.constant 0 : i32
    %c0_i32_0 = arith.constant 0 : i32
    %c0_i32_1 = arith.constant 0 : i32
    %c0_i32_2 = arith.constant 0 : i32
    return %c0_i32, %c0_i32_0, %c0_i32_1 : i32, i32, i32
  }
  func.func @transform_27(%arg0: i32) -> (i32, i32, i32) {
    %c0_i32 = arith.constant 0 : i32
    %c0_i32_0 = arith.constant 0 : i32
    %c0_i32_1 = arith.constant 0 : i32
    %c0_i32_2 = arith.constant 0 : i32
    return %c0_i32, %c0_i32_0, %c0_i32_1 : i32, i32, i32
  }
  func.func @transform_28(%arg0: i32) -> (i32, i32, i32) {
    %c0_i32 = arith.constant 0 : i32
    %c0_i32_0 = arith.constant 0 : i32
    %c0_i32_1 = arith.constant 0 : i32
    %c0_i32_2 = arith.constant 0 : i32
    return %c0_i32, %c0_i32_0, %c0_i32_1 : i32, i32, i32
  }
  func.func @transform_29(%arg0: i32) -> (i32, i32, i32) {
    %c0_i32 = arith.constant 0 : i32
    %c0_i32_0 = arith.constant 0 : i32
    %c0_i32_1 = arith.constant 0 : i32
    %c0_i32_2 = arith.constant 0 : i32
    return %c0_i32, %c0_i32_0, %c0_i32_1 : i32, i32, i32
  }
  func.func @transform_30(%arg0: i32) -> (i32, i32, i32) {
    %c0_i32 = arith.constant 0 : i32
    %c0_i32_0 = arith.constant 0 : i32
    %c0_i32_1 = arith.constant 0 : i32
    %c0_i32_2 = arith.constant 0 : i32
    return %c0_i32, %c0_i32_0, %c0_i32_1 : i32, i32, i32
  }
  func.func @transform_31(%arg0: i32) -> (i32, i32, i32) {
    %c0_i32 = arith.constant 0 : i32
    %c0_i32_0 = arith.constant 0 : i32
    %c0_i32_1 = arith.constant 0 : i32
    %c0_i32_2 = arith.constant 0 : i32
    return %c0_i32, %c0_i32_0, %c0_i32_1 : i32, i32, i32
  }
  func.func @transform_32(%arg0: i32) -> (i32, i32, i32) {
    %c0_i32 = arith.constant 0 : i32
    %c0_i32_0 = arith.constant 0 : i32
    %c0_i32_1 = arith.constant 0 : i32
    return %arg0, %c0_i32, %c0_i32_0 : i32, i32, i32
  }
}

</mosaic_0001>

<llo_original>
// kernel: tpu_custom_call.1
$region0: #{tpu_custom_call.1}
  #allocation0 [shape = 'u32[]', space=smem, size = 0x4, offset = 0x4, fixed_abs, tag = 'smem constant byte address 0x4 - core index']
  #allocation1 [shape = 'u32[144,128]{1,0:T(1,128)}', space=vmem, size = 0x12000, scoped, tag = 'internal scratch']
  #allocation2 [shape = 'f32[28,32]{1,0:T(8,128)}', space=vmem, size = 0x4000, scoped, tag = 'scratch operand']
  #allocation3 [shape = 'f32[16,8]{1,0:T(8,128)}', space=vmem, size = 0x2000, scoped, tag = 'scratch operand']
  %s0 = inlined_call_operand.smem [shape: u32[33], index: -1, kind: input, shape index: {}]
  %s1 = sld [smem:[%s0]]
  %s2 = scalar_lea.smem %s0, 1
  %s3 = sld [smem:[%s2]]
  %s4 = scalar_lea.smem %s0, 2
  %s5 = sld [smem:[%s4]]
  %s6 = scalar_lea.smem %s0, 3
  %s7 = sld [smem:[%s6]]
  %s8 = scalar_lea.smem %s0, 4
  %s9 = sld [smem:[%s8]]
  %s10 = scalar_lea.smem %s0, 5
  %s11 = sld [smem:[%s10]]
  %s12 = scalar_lea.smem %s0, 6
  %s13 = sld [smem:[%s12]]
  %s14 = scalar_lea.smem %s0, 7
  %s15 = sld [smem:[%s14]]
  %s16 = scalar_lea.smem %s0, 8
  %s17 = sld [smem:[%s16]]
  %s18 = scalar_lea.smem %s0, 9
  %s19 = sld [smem:[%s18]]
  %s20 = scalar_lea.smem %s0, 10
  %s21 = sld [smem:[%s20]]
  %s22 = scalar_lea.smem %s0, 11
  %s23 = sld [smem:[%s22]]
  %s24 = scalar_lea.smem %s0, 12
  %s25 = sld [smem:[%s24]]
  %s26 = scalar_lea.smem %s0, 13
  %s27 = sld [smem:[%s26]]
  %s28 = scalar_lea.smem %s0, 14
  %s29 = sld [smem:[%s28]]
  %s30 = scalar_lea.smem %s0, 15
  %s31 = sld [smem:[%s30]]
  %s32 = scalar_lea.smem %s0, 16
  %s33 = sld [smem:[%s32]]
  %s34 = scalar_lea.smem %s0, 17
  %s35 = sld [smem:[%s34]]
  %s36 = scalar_lea.smem %s0, 18
  %s37 = sld [smem:[%s36]]
  %s38 = scalar_lea.smem %s0, 19
  %s39 = sld [smem:[%s38]]
  %s40 = scalar_lea.smem %s0, 20
  %s41 = sld [smem:[%s40]]
  %s42 = scalar_lea.smem %s0, 21
  %s43 = sld [smem:[%s42]]
  %s44 = scalar_lea.smem %s0, 22
  %s45 = sld [smem:[%s44]]
  %s46 = scalar_lea.smem %s0, 23
  %s47 = sld [smem:[%s46]]
  %s48 = scalar_lea.smem %s0, 24
  %s49 = sld [smem:[%s48]]
  %s50 = scalar_lea.smem %s0, 25
  %s51 = sld [smem:[%s50]]
  %s52 = scalar_lea.smem %s0, 26
  %s53 = sld [smem:[%s52]]
  %s54 = scalar_lea.smem %s0, 27
  %s55 = sld [smem:[%s54]]
  %s56 = scalar_lea.smem %s0, 28
  %s57 = sld [smem:[%s56]]
  %s58 = scalar_lea.smem %s0, 29
  %s59 = sld [smem:[%s58]]
  %s60 = scalar_lea.smem %s0, 30
  %s61 = sld [smem:[%s60]]
  %s62 = scalar_lea.smem %s0, 31
  %s63 = sld [smem:[%s62]]
  %s64 = scalar_lea.smem %s0, 32
  %s65 = sld [smem:[%s64]]
  %s66 = sld [smem:[#allocation0]]
  $region161: #{tpu_custom_call.1} parent=0
    _
  %s68 = ssub.s32 1, %s66
  %s69 = scalar_select 0, %s68, %s66
  $region1: #{tpu_custom_call.1} parent=0
    #allocation4 [shape = 'u8[16384]{0}', space=vmem, size = 0x4000, scoped, tag = 'output window, operand 0']
    #allocation5 [shape = 's32[2]{0}', space=sflag, size = 0x8, scoped, tag = 'scoped memory for tpu_custom_call.1']
    %70 = vsyncpa [#allocation5], 0
    %s71 = scalar_lea.sflag [#allocation5], 1
    %72 = vsyncpa %s71, 0
    loop: start=0, step=1, limit=4
    $region2: #{tpu_custom_call.1} parent=1 // loop_pre_header
      _
    $region3: #{tpu_custom_call.1} parent=1 // loop_header
      %s74 = sphi 0, %s78
      %p75 = scmp.ge.s32.totalorder %s74, 4
      %s84 = sphi 0, %s86
      %s87 = sphi 0, %s84
      %s88 = sphi 0, %s87
      %s104 = sphi 0, %s88
      %s108 = sphi 0, %s108
      %s110 = sphi 0, %s108
      %s111 = sphi 0, %s110
      %s125 = sphi 0, %s111
      %s129 = sphi 0, %s129
      %s131 = sphi 0, %s129
      %s132 = sphi 0, %s131
      %s146 = sphi 0, %s132
      %s150 = sphi 0, %s150
      %s152 = sphi 0, %s150
      %s153 = sphi 0, %s152
      %s167 = sphi 0, %s153
      %s171 = sphi 0, %s171
      %s173 = sphi 0, %s171
      %s174 = sphi 0, %s173
      %s188 = sphi 0, %s174
      %s192 = sphi 0, %s192
      %s194 = sphi 0, %s192
      %s195 = sphi 0, %s194
      %s209 = sphi 0, %s195
      %s213 = sphi 0, %s213
      %s215 = sphi 0, %s213
      %s216 = sphi 0, %s215
      %s230 = sphi 0, %s216
      %s234 = sphi 0, %s234
      %s236 = sphi 0, %s234
      %s237 = sphi 0, %s236
      %s251 = sphi 0, %s237
      %s255 = sphi 0, %s255
      %s257 = sphi 0, %s255
      %s258 = sphi 0, %s257
      %s272 = sphi 0, %s258
      %s276 = sphi 0, %s276
      %s278 = sphi 0, %s276
      %s279 = sphi 0, %s278
      %s293 = sphi 0, %s279
      %s297 = sphi 0, %s297
      %s299 = sphi 0, %s297
      %s300 = sphi 0, %s299
      %s314 = sphi 0, %s300
      %s318 = sphi 0, %s318
      %s320 = sphi 0, %s318
      %s321 = sphi 0, %s320
      %s335 = sphi 0, %s321
      %s339 = sphi 0, %s339
      %s341 = sphi 0, %s339
      %s342 = sphi 0, %s341
      %s356 = sphi 0, %s342
      %s360 = sphi 0, %s360
      %s362 = sphi 0, %s360
      %s363 = sphi 0, %s362
      %s377 = sphi 0, %s363
      %s381 = sphi 0, %s381
      %s383 = sphi 0, %s381
      %s384 = sphi 0, %s383
      %s398 = sphi 0, %s384
      %s402 = sphi 0, %s402
      %s404 = sphi 0, %s402
      %s405 = sphi 0, %s404
      %s419 = sphi 0, %s405
      %s423 = sphi 0, %s423
      %s425 = sphi 0, %s423
      %s426 = sphi 0, %s425
      %s440 = sphi 0, %s426
      %s444 = sphi 0, %s444
      %s446 = sphi 0, %s444
      %s447 = sphi 0, %s446
      %s461 = sphi 0, %s447
      %s465 = sphi 0, %s465
      %s467 = sphi 0, %s465
      %s468 = sphi 0, %s467
      %s482 = sphi 0, %s468
      %s486 = sphi 0, %s486
      %s488 = sphi 0, %s486
      %s489 = sphi 0, %s488
      %s503 = sphi 0, %s489
      %s507 = sphi 0, %s507
      %s509 = sphi 0, %s507
      %s510 = sphi 0, %s509
      %s524 = sphi 0, %s510
      %s528 = sphi 0, %s528
      %s530 = sphi 0, %s528
      %s531 = sphi 0, %s530
      %s545 = sphi 0, %s531
      %s549 = sphi 0, %s549
      %s551 = sphi 0, %s549
      %s552 = sphi 0, %s551
      %s566 = sphi 0, %s552
      %s570 = sphi 0, %s570
      %s572 = sphi 0, %s570
      %s573 = sphi 0, %s572
      %s587 = sphi 0, %s573
      %s591 = sphi 0, %s591
      %s593 = sphi 0, %s591
      %s594 = sphi 0, %s593
      %s608 = sphi 0, %s594
      %s612 = sphi 0, %s612
      %s614 = sphi 0, %s612
      %s615 = sphi 0, %s614
      %s629 = sphi 0, %s615
      %s633 = sphi 0, %s633
      %s635 = sphi 0, %s633
      %s636 = sphi 0, %s635
      %s650 = sphi 0, %s636
      %s654 = sphi 0, %s654
      %s656 = sphi 0, %s654
      %s657 = sphi 0, %s656
      %s671 = sphi 0, %s657
      %s675 = sphi 0, %s675
      %s677 = sphi 0, %s675
      %s678 = sphi 0, %s677
      %s692 = sphi 0, %s678
      %s696 = sphi 0, %s696
      %s698 = sphi 0, %s696
      %s699 = sphi 0, %s698
      %s713 = sphi 0, %s699
      %s717 = sphi 0, %s717
      %s719 = sphi 0, %s717
      %s720 = sphi 0, %s719
      %s734 = sphi 0, %s720
      %s738 = sphi 0, %s738
      %s740 = sphi 0, %s738
      %s741 = sphi 0, %s740
      %s755 = sphi 0, %s741
      %s761 = sphi 0, %s763
      %s764 = sphi 0, %s761
      %s765 = sphi 0, %s764
      %s781 = sphi 0, %s765
    $region4: #{tpu_custom_call.1} parent=1 // loop_header_branch
      %77 = sbr.rel (%p75) target = $region8
    $region5: #{tpu_custom_call.1} parent=1 // loop_body
      %s79 = ssub.s32 %s74, 1
      %s80 = ssub.s32 %s74, 2
      %s81 = sadd.s32 %s74, 1
      %s82 = ssub.s32 %s74, %s81
      %p83 = scmp.eq.s32.totalorder %s82, 0
      %s85 = sadd.s32 %s84, 1
      %s86 = scalar_select %p83, %s84, %s85
      %p89 = pneg %p83
      %p90 = scmp.eq.s32.totalorder %s74, 1
      %p91 = por %p89, %p90
      %p92 = scmp.ne.s32.totalorder %s84, %s87
      %p93 = scmp.eq.s32.totalorder %s74, 0
      %p94 = por %p92, %p93
      %p95 = scmp.ne.s32.totalorder %s84, %s87
      %p96 = scmp.eq.s32.totalorder %s79, 1
      %p97 = por %p95, %p96
      %p98 = scmp.ne.s32.totalorder %s87, %s88
      %p99 = scmp.eq.s32.totalorder %s79, 0
      %p100 = por %p98, %p99
      %p101 = scmp.ne.s32.totalorder %s87, %s88
      %p102 = scmp.eq.s32.totalorder %s80, 1
      %p103 = por %p101, %p102
      %p105 = scmp.ne.s32.totalorder %s88, %s104
      %p106 = scmp.eq.s32.totalorder %s80, 0
      %p107 = por %p105, %p106
      %s109 = sadd.s32 %s108, 1
      %p112 = scmp.eq.s32.totalorder %s74, 1
      %p113 = scmp.ne.s32.totalorder %s108, %s110
      %p114 = scmp.eq.s32.totalorder %s74, 0
      %p115 = por %p113, %p114
      %p116 = scmp.ne.s32.totalorder %s108, %s110
      %p117 = scmp.eq.s32.totalorder %s79, 1
      %p118 = por %p116, %p117
      %p119 = scmp.ne.s32.totalorder %s110, %s111
      %p120 = scmp.eq.s32.totalorder %s79, 0
      %p121 = por %p119, %p120
      %p122 = scmp.ne.s32.totalorder %s110, %s111
      %p123 = scmp.eq.s32.totalorder %s80, 1
      %p124 = por %p122, %p123
      %p126 = scmp.ne.s32.totalorder %s111, %s125
      %p127 = scmp.eq.s32.totalorder %s80, 0
      %p128 = por %p126, %p127
      %s130 = sadd.s32 %s129, 1
      %p133 = scmp.eq.s32.totalorder %s74, 1
      %p134 = scmp.ne.s32.totalorder %s129, %s131
      %p135 = scmp.eq.s32.totalorder %s74, 0
      %p136 = por %p134, %p135
      %p137 = scmp.ne.s32.totalorder %s129, %s131
      %p138 = scmp.eq.s32.totalorder %s79, 1
      %p139 = por %p137, %p138
      %p140 = scmp.ne.s32.totalorder %s131, %s132
      %p141 = scmp.eq.s32.totalorder %s79, 0
      %p142 = por %p140, %p141
      %p143 = scmp.ne.s32.totalorder %s131, %s132
      %p144 = scmp.eq.s32.totalorder %s80, 1
      %p145 = por %p143, %p144
      %p147 = scmp.ne.s32.totalorder %s132, %s146
      %p148 = scmp.eq.s32.totalorder %s80, 0
      %p149 = por %p147, %p148
      %s151 = sadd.s32 %s150, 1
      %p154 = scmp.eq.s32.totalorder %s74, 1
      %p155 = scmp.ne.s32.totalorder %s150, %s152
      %p156 = scmp.eq.s32.totalorder %s74, 0
      %p157 = por %p155, %p156
      %p158 = scmp.ne.s32.totalorder %s150, %s152
      %p159 = scmp.eq.s32.totalorder %s79, 1
      %p160 = por %p158, %p159
      %p161 = scmp.ne.s32.totalorder %s152, %s153
      %p162 = scmp.eq.s32.totalorder %s79, 0
      %p163 = por %p161, %p162
      %p164 = scmp.ne.s32.totalorder %s152, %s153
      %p165 = scmp.eq.s32.totalorder %s80, 1
      %p166 = por %p164, %p165
      %p168 = scmp.ne.s32.totalorder %s153, %s167
      %p169 = scmp.eq.s32.totalorder %s80, 0
      %p170 = por %p168, %p169
      %s172 = sadd.s32 %s171, 1
      %p175 = scmp.eq.s32.totalorder %s74, 1
      %p176 = scmp.ne.s32.totalorder %s171, %s173
      %p177 = scmp.eq.s32.totalorder %s74, 0
      %p178 = por %p176, %p177
      %p179 = scmp.ne.s32.totalorder %s171, %s173
      %p180 = scmp.eq.s32.totalorder %s79, 1
      %p181 = por %p179, %p180
      %p182 = scmp.ne.s32.totalorder %s173, %s174
      %p183 = scmp.eq.s32.totalorder %s79, 0
      %p184 = por %p182, %p183
      %p185 = scmp.ne.s32.totalorder %s173, %s174
      %p186 = scmp.eq.s32.totalorder %s80, 1
      %p187 = por %p185, %p186
      %p189 = scmp.ne.s32.totalorder %s174, %s188
      %p190 = scmp.eq.s32.totalorder %s80, 0
      %p191 = por %p189, %p190
      %s193 = sadd.s32 %s192, 1
      %p196 = scmp.eq.s32.totalorder %s74, 1
      %p197 = scmp.ne.s32.totalorder %s192, %s194
      %p198 = scmp.eq.s32.totalorder %s74, 0
      %p199 = por %p197, %p198
      %p200 = scmp.ne.s32.totalorder %s192, %s194
      %p201 = scmp.eq.s32.totalorder %s79, 1
      %p202 = por %p200, %p201
      %p203 = scmp.ne.s32.totalorder %s194, %s195
      %p204 = scmp.eq.s32.totalorder %s79, 0
      %p205 = por %p203, %p204
      %p206 = scmp.ne.s32.totalorder %s194, %s195
      %p207 = scmp.eq.s32.totalorder %s80, 1
      %p208 = por %p206, %p207
      %p210 = scmp.ne.s32.totalorder %s195, %s209
      %p211 = scmp.eq.s32.totalorder %s80, 0
      %p212 = por %p210, %p211
      %s214 = sadd.s32 %s213, 1
      %p217 = scmp.eq.s32.totalorder %s74, 1
      %p218 = scmp.ne.s32.totalorder %s213, %s215
      %p219 = scmp.eq.s32.totalorder %s74, 0
      %p220 = por %p218, %p219
      %p221 = scmp.ne.s32.totalorder %s213, %s215
      %p222 = scmp.eq.s32.totalorder %s79, 1
      %p223 = por %p221, %p222
      %p224 = scmp.ne.s32.totalorder %s215, %s216
      %p225 = scmp.eq.s32.totalorder %s79, 0
      %p226 = por %p224, %p225
      %p227 = scmp.ne.s32.totalorder %s215, %s216
      %p228 = scmp.eq.s32.totalorder %s80, 1
      %p229 = por %p227, %p228
      %p231 = scmp.ne.s32.totalorder %s216, %s230
      %p232 = scmp.eq.s32.totalorder %s80, 0
      %p233 = por %p231, %p232
      %s235 = sadd.s32 %s234, 1
      %p238 = scmp.eq.s32.totalorder %s74, 1
      %p239 = scmp.ne.s32.totalorder %s234, %s236
      %p240 = scmp.eq.s32.totalorder %s74, 0
      %p241 = por %p239, %p240
      %p242 = scmp.ne.s32.totalorder %s234, %s236
      %p243 = scmp.eq.s32.totalorder %s79, 1
      %p244 = por %p242, %p243
      %p245 = scmp.ne.s32.totalorder %s236, %s237
      %p246 = scmp.eq.s32.totalorder %s79, 0
      %p247 = por %p245, %p246
      %p248 = scmp.ne.s32.totalorder %s236, %s237
      %p249 = scmp.eq.s32.totalorder %s80, 1
      %p250 = por %p248, %p249
      %p252 = scmp.ne.s32.totalorder %s237, %s251
      %p253 = scmp.eq.s32.totalorder %s80, 0
      %p254 = por %p252, %p253
      %s256 = sadd.s32 %s255, 1
      %p259 = scmp.eq.s32.totalorder %s74, 1
      %p260 = scmp.ne.s32.totalorder %s255, %s257
      %p261 = scmp.eq.s32.totalorder %s74, 0
      %p262 = por %p260, %p261
      %p263 = scmp.ne.s32.totalorder %s255, %s257
      %p264 = scmp.eq.s32.totalorder %s79, 1
      %p265 = por %p263, %p264
      %p266 = scmp.ne.s32.totalorder %s257, %s258
      %p267 = scmp.eq.s32.totalorder %s79, 0
      %p268 = por %p266, %p267
      %p269 = scmp.ne.s32.totalorder %s257, %s258
      %p270 = scmp.eq.s32.totalorder %s80, 1
      %p271 = por %p269, %p270
      %p273 = scmp.ne.s32.totalorder %s258, %s272
      %p274 = scmp.eq.s32.totalorder %s80, 0
      %p275 = por %p273, %p274
      %s277 = sadd.s32 %s276, 1
      %p280 = scmp.eq.s32.totalorder %s74, 1
      %p281 = scmp.ne.s32.totalorder %s276, %s278
      %p282 = scmp.eq.s32.totalorder %s74, 0
      %p283 = por %p281, %p282
      %p284 = scmp.ne.s32.totalorder %s276, %s278
      %p285 = scmp.eq.s32.totalorder %s79, 1
      %p286 = por %p284, %p285
      %p287 = scmp.ne.s32.totalorder %s278, %s279
      %p288 = scmp.eq.s32.totalorder %s79, 0
      %p289 = por %p287, %p288
      %p290 = scmp.ne.s32.totalorder %s278, %s279
      %p291 = scmp.eq.s32.totalorder %s80, 1
      %p292 = por %p290, %p291
      %p294 = scmp.ne.s32.totalorder %s279, %s293
      %p295 = scmp.eq.s32.totalorder %s80, 0
      %p296 = por %p294, %p295
      %s298 = sadd.s32 %s297, 1
      %p301 = scmp.eq.s32.totalorder %s74, 1
      %p302 = scmp.ne.s32.totalorder %s297, %s299
      %p303 = scmp.eq.s32.totalorder %s74, 0
      %p304 = por %p302, %p303
      %p305 = scmp.ne.s32.totalorder %s297, %s299
      %p306 = scmp.eq.s32.totalorder %s79, 1
      %p307 = por %p305, %p306
      %p308 = scmp.ne.s32.totalorder %s299, %s300
      %p309 = scmp.eq.s32.totalorder %s79, 0
      %p310 = por %p308, %p309
      %p311 = scmp.ne.s32.totalorder %s299, %s300
      %p312 = scmp.eq.s32.totalorder %s80, 1
      %p313 = por %p311, %p312
      %p315 = scmp.ne.s32.totalorder %s300, %s314
      %p316 = scmp.eq.s32.totalorder %s80, 0
      %p317 = por %p315, %p316
      %s319 = sadd.s32 %s318, 1
      %p322 = scmp.eq.s32.totalorder %s74, 1
      %p323 = scmp.ne.s32.totalorder %s318, %s320
      %p324 = scmp.eq.s32.totalorder %s74, 0
      %p325 = por %p323, %p324
      %p326 = scmp.ne.s32.totalorder %s318, %s320
      %p327 = scmp.eq.s32.totalorder %s79, 1
      %p328 = por %p326, %p327
      %p329 = scmp.ne.s32.totalorder %s320, %s321
      %p330 = scmp.eq.s32.totalorder %s79, 0
      %p331 = por %p329, %p330
      %p332 = scmp.ne.s32.totalorder %s320, %s321
      %p333 = scmp.eq.s32.totalorder %s80, 1
      %p334 = por %p332, %p333
      %p336 = scmp.ne.s32.totalorder %s321, %s335
      %p337 = scmp.eq.s32.totalorder %s80, 0
      %p338 = por %p336, %p337
      %s340 = sadd.s32 %s339, 1
      %p343 = scmp.eq.s32.totalorder %s74, 1
      %p344 = scmp.ne.s32.totalorder %s339, %s341
      %p345 = scmp.eq.s32.totalorder %s74, 0
      %p346 = por %p344, %p345
      %p347 = scmp.ne.s32.totalorder %s339, %s341
      %p348 = scmp.eq.s32.totalorder %s79, 1
      %p349 = por %p347, %p348
      %p350 = scmp.ne.s32.totalorder %s341, %s342
      %p351 = scmp.eq.s32.totalorder %s79, 0
      %p352 = por %p350, %p351
      %p353 = scmp.ne.s32.totalorder %s341, %s342
      %p354 = scmp.eq.s32.totalorder %s80, 1
      %p355 = por %p353, %p354
      %p357 = scmp.ne.s32.totalorder %s342, %s356
      %p358 = scmp.eq.s32.totalorder %s80, 0
      %p359 = por %p357, %p358
      %s361 = sadd.s32 %s360, 1
      %p364 = scmp.eq.s32.totalorder %s74, 1
      %p365 = scmp.ne.s32.totalorder %s360, %s362
      %p366 = scmp.eq.s32.totalorder %s74, 0
      %p367 = por %p365, %p366
      %p368 = scmp.ne.s32.totalorder %s360, %s362
      %p369 = scmp.eq.s32.totalorder %s79, 1
      %p370 = por %p368, %p369
      %p371 = scmp.ne.s32.totalorder %s362, %s363
      %p372 = scmp.eq.s32.totalorder %s79, 0
      %p373 = por %p371, %p372
      %p374 = scmp.ne.s32.totalorder %s362, %s363
      %p375 = scmp.eq.s32.totalorder %s80, 1
      %p376 = por %p374, %p375
      %p378 = scmp.ne.s32.totalorder %s363, %s377
      %p379 = scmp.eq.s32.totalorder %s80, 0
      %p380 = por %p378, %p379
      %s382 = sadd.s32 %s381, 1
      %p385 = scmp.eq.s32.totalorder %s74, 1
      %p386 = scmp.ne.s32.totalorder %s381, %s383
      %p387 = scmp.eq.s32.totalorder %s74, 0
      %p388 = por %p386, %p387
      %p389 = scmp.ne.s32.totalorder %s381, %s383
      %p390 = scmp.eq.s32.totalorder %s79, 1
      %p391 = por %p389, %p390
      %p392 = scmp.ne.s32.totalorder %s383, %s384
      %p393 = scmp.eq.s32.totalorder %s79, 0
      %p394 = por %p392, %p393
      %p395 = scmp.ne.s32.totalorder %s383, %s384
      %p396 = scmp.eq.s32.totalorder %s80, 1
      %p397 = por %p395, %p396
      %p399 = scmp.ne.s32.totalorder %s384, %s398
      %p400 = scmp.eq.s32.totalorder %s80, 0
      %p401 = por %p399, %p400
      %s403 = sadd.s32 %s402, 1
      %p406 = scmp.eq.s32.totalorder %s74, 1
      %p407 = scmp.ne.s32.totalorder %s402, %s404
      %p408 = scmp.eq.s32.totalorder %s74, 0
      %p409 = por %p407, %p408
      %p410 = scmp.ne.s32.totalorder %s402, %s404
      %p411 = scmp.eq.s32.totalorder %s79, 1
      %p412 = por %p410, %p411
      %p413 = scmp.ne.s32.totalorder %s404, %s405
      %p414 = scmp.eq.s32.totalorder %s79, 0
      %p415 = por %p413, %p414
      %p416 = scmp.ne.s32.totalorder %s404, %s405
      %p417 = scmp.eq.s32.totalorder %s80, 1
      %p418 = por %p416, %p417
      %p420 = scmp.ne.s32.totalorder %s405, %s419
      %p421 = scmp.eq.s32.totalorder %s80, 0
      %p422 = por %p420, %p421
      %s424 = sadd.s32 %s423, 1
      %p427 = scmp.eq.s32.totalorder %s74, 1
      %p428 = scmp.ne.s32.totalorder %s423, %s425
      %p429 = scmp.eq.s32.totalorder %s74, 0
      %p430 = por %p428, %p429
      %p431 = scmp.ne.s32.totalorder %s423, %s425
      %p432 = scmp.eq.s32.totalorder %s79, 1
      %p433 = por %p431, %p432
      %p434 = scmp.ne.s32.totalorder %s425, %s426
      %p435 = scmp.eq.s32.totalorder %s79, 0
      %p436 = por %p434, %p435
      %p437 = scmp.ne.s32.totalorder %s425, %s426
      %p438 = scmp.eq.s32.totalorder %s80, 1
      %p439 = por %p437, %p438
      %p441 = scmp.ne.s32.totalorder %s426, %s440
      %p442 = scmp.eq.s32.totalorder %s80, 0
      %p443 = por %p441, %p442
      %s445 = sadd.s32 %s444, 1
      %p448 = scmp.eq.s32.totalorder %s74, 1
      %p449 = scmp.ne.s32.totalorder %s444, %s446
      %p450 = scmp.eq.s32.totalorder %s74, 0
      %p451 = por %p449, %p450
      %p452 = scmp.ne.s32.totalorder %s444, %s446
      %p453 = scmp.eq.s32.totalorder %s79, 1
      %p454 = por %p452, %p453
      %p455 = scmp.ne.s32.totalorder %s446, %s447
      %p456 = scmp.eq.s32.totalorder %s79, 0
      %p457 = por %p455, %p456
      %p458 = scmp.ne.s32.totalorder %s446, %s447
      %p459 = scmp.eq.s32.totalorder %s80, 1
      %p460 = por %p458, %p459
      %p462 = scmp.ne.s32.totalorder %s447, %s461
      %p463 = scmp.eq.s32.totalorder %s80, 0
      %p464 = por %p462, %p463
      %s466 = sadd.s32 %s465, 1
      %p469 = scmp.eq.s32.totalorder %s74, 1
      %p470 = scmp.ne.s32.totalorder %s465, %s467
      %p471 = scmp.eq.s32.totalorder %s74, 0
      %p472 = por %p470, %p471
      %p473 = scmp.ne.s32.totalorder %s465, %s467
      %p474 = scmp.eq.s32.totalorder %s79, 1
      %p475 = por %p473, %p474
      %p476 = scmp.ne.s32.totalorder %s467, %s468
      %p477 = scmp.eq.s32.totalorder %s79, 0
      %p478 = por %p476, %p477
      %p479 = scmp.ne.s32.totalorder %s467, %s468
      %p480 = scmp.eq.s32.totalorder %s80, 1
      %p481 = por %p479, %p480
      %p483 = scmp.ne.s32.totalorder %s468, %s482
      %p484 = scmp.eq.s32.totalorder %s80, 0
      %p485 = por %p483, %p484
      %s487 = sadd.s32 %s486, 1
      %p490 = scmp.eq.s32.totalorder %s74, 1
      %p491 = scmp.ne.s32.totalorder %s486, %s488
      %p492 = scmp.eq.s32.totalorder %s74, 0
      %p493 = por %p491, %p492
      %p494 = scmp.ne.s32.totalorder %s486, %s488
      %p495 = scmp.eq.s32.totalorder %s79, 1
      %p496 = por %p494, %p495
      %p497 = scmp.ne.s32.totalorder %s488, %s489
      %p498 = scmp.eq.s32.totalorder %s79, 0
      %p499 = por %p497, %p498
      %p500 = scmp.ne.s32.totalorder %s488, %s489
      %p501 = scmp.eq.s32.totalorder %s80, 1
      %p502 = por %p500, %p501
      %p504 = scmp.ne.s32.totalorder %s489, %s503
      %p505 = scmp.eq.s32.totalorder %s80, 0
      %p506 = por %p504, %p505
      %s508 = sadd.s32 %s507, 1
      %p511 = scmp.eq.s32.totalorder %s74, 1
      %p512 = scmp.ne.s32.totalorder %s507, %s509
      %p513 = scmp.eq.s32.totalorder %s74, 0
      %p514 = por %p512, %p513
      %p515 = scmp.ne.s32.totalorder %s507, %s509
      %p516 = scmp.eq.s32.totalorder %s79, 1
      %p517 = por %p515, %p516
      %p518 = scmp.ne.s32.totalorder %s509, %s510
      %p519 = scmp.eq.s32.totalorder %s79, 0
      %p520 = por %p518, %p519
      %p521 = scmp.ne.s32.totalorder %s509, %s510
      %p522 = scmp.eq.s32.totalorder %s80, 1
      %p523 = por %p521, %p522
      %p525 = scmp.ne.s32.totalorder %s510, %s524
      %p526 = scmp.eq.s32.totalorder %s80, 0
      %p527 = por %p525, %p526
      %s529 = sadd.s32 %s528, 1
      %p532 = scmp.eq.s32.totalorder %s74, 1
      %p533 = scmp.ne.s32.totalorder %s528, %s530
      %p534 = scmp.eq.s32.totalorder %s74, 0
      %p535 = por %p533, %p534
      %p536 = scmp.ne.s32.totalorder %s528, %s530
      %p537 = scmp.eq.s32.totalorder %s79, 1
      %p538 = por %p536, %p537
      %p539 = scmp.ne.s32.totalorder %s530, %s531
      %p540 = scmp.eq.s32.totalorder %s79, 0
      %p541 = por %p539, %p540
      %p542 = scmp.ne.s32.totalorder %s530, %s531
      %p543 = scmp.eq.s32.totalorder %s80, 1
      %p544 = por %p542, %p543
      %p546 = scmp.ne.s32.totalorder %s531, %s545
      %p547 = scmp.eq.s32.totalorder %s80, 0
      %p548 = por %p546, %p547
      %s550 = sadd.s32 %s549, 1
      %p553 = scmp.eq.s32.totalorder %s74, 1
      %p554 = scmp.ne.s32.totalorder %s549, %s551
      %p555 = scmp.eq.s32.totalorder %s74, 0
      %p556 = por %p554, %p555
      %p557 = scmp.ne.s32.totalorder %s549, %s551
      %p558 = scmp.eq.s32.totalorder %s79, 1
      %p559 = por %p557, %p558
      %p560 = scmp.ne.s32.totalorder %s551, %s552
      %p561 = scmp.eq.s32.totalorder %s79, 0
      %p562 = por %p560, %p561
      %p563 = scmp.ne.s32.totalorder %s551, %s552
      %p564 = scmp.eq.s32.totalorder %s80, 1
      %p565 = por %p563, %p564
      %p567 = scmp.ne.s32.totalorder %s552, %s566
      %p568 = scmp.eq.s32.totalorder %s80, 0
      %p569 = por %p567, %p568
      %s571 = sadd.s32 %s570, 1
      %p574 = scmp.eq.s32.totalorder %s74, 1
      %p575 = scmp.ne.s32.totalorder %s570, %s572
      %p576 = scmp.eq.s32.totalorder %s74, 0
      %p577 = por %p575, %p576
      %p578 = scmp.ne.s32.totalorder %s570, %s572
      %p579 = scmp.eq.s32.totalorder %s79, 1
      %p580 = por %p578, %p579
      %p581 = scmp.ne.s32.totalorder %s572, %s573
      %p582 = scmp.eq.s32.totalorder %s79, 0
      %p583 = por %p581, %p582
      %p584 = scmp.ne.s32.totalorder %s572, %s573
      %p585 = scmp.eq.s32.totalorder %s80, 1
      %p586 = por %p584, %p585
      %p588 = scmp.ne.s32.totalorder %s573, %s587
      %p589 = scmp.eq.s32.totalorder %s80, 0
      %p590 = por %p588, %p589
      %s592 = sadd.s32 %s591, 1
      %p595 = scmp.eq.s32.totalorder %s74, 1
      %p596 = scmp.ne.s32.totalorder %s591, %s593
      %p597 = scmp.eq.s32.totalorder %s74, 0
      %p598 = por %p596, %p597
      %p599 = scmp.ne.s32.totalorder %s591, %s593
      %p600 = scmp.eq.s32.totalorder %s79, 1
      %p601 = por %p599, %p600
      %p602 = scmp.ne.s32.totalorder %s593, %s594
      %p603 = scmp.eq.s32.totalorder %s79, 0
      %p604 = por %p602, %p603
      %p605 = scmp.ne.s32.totalorder %s593, %s594
      %p606 = scmp.eq.s32.totalorder %s80, 1
      %p607 = por %p605, %p606
      %p609 = scmp.ne.s32.totalorder %s594, %s608
      %p610 = scmp.eq.s32.totalorder %s80, 0
      %p611 = por %p609, %p610
      %s613 = sadd.s32 %s612, 1
      %p616 = scmp.eq.s32.totalorder %s74, 1
      %p617 = scmp.ne.s32.totalorder %s612, %s614
      %p618 = scmp.eq.s32.totalorder %s74, 0
      %p619 = por %p617, %p618
      %p620 = scmp.ne.s32.totalorder %s612, %s614
      %p621 = scmp.eq.s32.totalorder %s79, 1
      %p622 = por %p620, %p621
      %p623 = scmp.ne.s32.totalorder %s614, %s615
      %p624 = scmp.eq.s32.totalorder %s79, 0
      %p625 = por %p623, %p624
      %p626 = scmp.ne.s32.totalorder %s614, %s615
      %p627 = scmp.eq.s32.totalorder %s80, 1
      %p628 = por %p626, %p627
      %p630 = scmp.ne.s32.totalorder %s615, %s629
      %p631 = scmp.eq.s32.totalorder %s80, 0
      %p632 = por %p630, %p631
      %s634 = sadd.s32 %s633, 1
      %p637 = scmp.eq.s32.totalorder %s74, 1
      %p638 = scmp.ne.s32.totalorder %s633, %s635
      %p639 = scmp.eq.s32.totalorder %s74, 0
      %p640 = por %p638, %p639
      %p641 = scmp.ne.s32.totalorder %s633, %s635
      %p642 = scmp.eq.s32.totalorder %s79, 1
      %p643 = por %p641, %p642
      %p644 = scmp.ne.s32.totalorder %s635, %s636
      %p645 = scmp.eq.s32.totalorder %s79, 0
      %p646 = por %p644, %p645
      %p647 = scmp.ne.s32.totalorder %s635, %s636
      %p648 = scmp.eq.s32.totalorder %s80, 1
      %p649 = por %p647, %p648
      %p651 = scmp.ne.s32.totalorder %s636, %s650
      %p652 = scmp.eq.s32.totalorder %s80, 0
      %p653 = por %p651, %p652
      %s655 = sadd.s32 %s654, 1
      %p658 = scmp.eq.s32.totalorder %s74, 1
      %p659 = scmp.ne.s32.totalorder %s654, %s656
      %p660 = scmp.eq.s32.totalorder %s74, 0
      %p661 = por %p659, %p660
      %p662 = scmp.ne.s32.totalorder %s654, %s656
      %p663 = scmp.eq.s32.totalorder %s79, 1
      %p664 = por %p662, %p663
      %p665 = scmp.ne.s32.totalorder %s656, %s657
      %p666 = scmp.eq.s32.totalorder %s79, 0
      %p667 = por %p665, %p666
      %p668 = scmp.ne.s32.totalorder %s656, %s657
      %p669 = scmp.eq.s32.totalorder %s80, 1
      %p670 = por %p668, %p669
      %p672 = scmp.ne.s32.totalorder %s657, %s671
      %p673 = scmp.eq.s32.totalorder %s80, 0
      %p674 = por %p672, %p673
      %s676 = sadd.s32 %s675, 1
      %p679 = scmp.eq.s32.totalorder %s74, 1
      %p680 = scmp.ne.s32.totalorder %s675, %s677
      %p681 = scmp.eq.s32.totalorder %s74, 0
      %p682 = por %p680, %p681
      %p683 = scmp.ne.s32.totalorder %s675, %s677
      %p684 = scmp.eq.s32.totalorder %s79, 1
      %p685 = por %p683, %p684
      %p686 = scmp.ne.s32.totalorder %s677, %s678
      %p687 = scmp.eq.s32.totalorder %s79, 0
      %p688 = por %p686, %p687
      %p689 = scmp.ne.s32.totalorder %s677, %s678
      %p690 = scmp.eq.s32.totalorder %s80, 1
      %p691 = por %p689, %p690
      %p693 = scmp.ne.s32.totalorder %s678, %s692
      %p694 = scmp.eq.s32.totalorder %s80, 0
      %p695 = por %p693, %p694
      %s697 = sadd.s32 %s696, 1
      %p700 = scmp.eq.s32.totalorder %s74, 1
      %p701 = scmp.ne.s32.totalorder %s696, %s698
      %p702 = scmp.eq.s32.totalorder %s74, 0
      %p703 = por %p701, %p702
      %p704 = scmp.ne.s32.totalorder %s696, %s698
      %p705 = scmp.eq.s32.totalorder %s79, 1
      %p706 = por %p704, %p705
      %p707 = scmp.ne.s32.totalorder %s698, %s699
      %p708 = scmp.eq.s32.totalorder %s79, 0
      %p709 = por %p707, %p708
      %p710 = scmp.ne.s32.totalorder %s698, %s699
      %p711 = scmp.eq.s32.totalorder %s80, 1
      %p712 = por %p710, %p711
      %p714 = scmp.ne.s32.totalorder %s699, %s713
      %p715 = scmp.eq.s32.totalorder %s80, 0
      %p716 = por %p714, %p715
      %s718 = sadd.s32 %s717, 1
      %p721 = scmp.eq.s32.totalorder %s74, 1
      %p722 = scmp.ne.s32.totalorder %s717, %s719
      %p723 = scmp.eq.s32.totalorder %s74, 0
      %p724 = por %p722, %p723
      %p725 = scmp.ne.s32.totalorder %s717, %s719
      %p726 = scmp.eq.s32.totalorder %s79, 1
      %p727 = por %p725, %p726
      %p728 = scmp.ne.s32.totalorder %s719, %s720
      %p729 = scmp.eq.s32.totalorder %s79, 0
      %p730 = por %p728, %p729
      %p731 = scmp.ne.s32.totalorder %s719, %s720
      %p732 = scmp.eq.s32.totalorder %s80, 1
      %p733 = por %p731, %p732
      %p735 = scmp.ne.s32.totalorder %s720, %s734
      %p736 = scmp.eq.s32.totalorder %s80, 0
      %p737 = por %p735, %p736
      %s739 = sadd.s32 %s738, 1
      %p742 = scmp.eq.s32.totalorder %s74, 1
      %p743 = scmp.ne.s32.totalorder %s738, %s740
      %p744 = scmp.eq.s32.totalorder %s74, 0
      %p745 = por %p743, %p744
      %p746 = scmp.ne.s32.totalorder %s738, %s740
      %p747 = scmp.eq.s32.totalorder %s79, 1
      %p748 = por %p746, %p747
      %p749 = scmp.ne.s32.totalorder %s740, %s741
      %p750 = scmp.eq.s32.totalorder %s79, 0
      %p751 = por %p749, %p750
      %p752 = scmp.ne.s32.totalorder %s740, %s741
      %p753 = scmp.eq.s32.totalorder %s80, 1
      %p754 = por %p752, %p753
      %p756 = scmp.ne.s32.totalorder %s741, %s755
      %p757 = scmp.eq.s32.totalorder %s80, 0
      %p758 = por %p756, %p757
      %s759 = ssub.s32 %s74, %s81
      %p760 = scmp.eq.s32.totalorder %s759, 0
      %s762 = sadd.s32 %s761, 1
      %s763 = scalar_select %p760, %s761, %s762
      %p766 = pneg %p760
      %p767 = scmp.eq.s32.totalorder %s74, 1
      %p768 = por %p766, %p767
      %p769 = scmp.ne.s32.totalorder %s761, %s764
      %p770 = scmp.eq.s32.totalorder %s74, 0
      %p771 = por %p769, %p770
      %p772 = scmp.ne.s32.totalorder %s761, %s764
      %p773 = scmp.eq.s32.totalorder %s79, 1
      %p774 = por %p772, %p773
      %p775 = scmp.ne.s32.totalorder %s764, %s765
      %p776 = scmp.eq.s32.totalorder %s79, 0
      %p777 = por %p775, %p776
      %p778 = scmp.ne.s32.totalorder %s764, %s765
      %p779 = scmp.eq.s32.totalorder %s80, 1
      %p780 = por %p778, %p779
      %p782 = scmp.ne.s32.totalorder %s765, %s781
      %p783 = scmp.eq.s32.totalorder %s80, 0
      %p784 = por %p782, %p783
      %p785 = scmp.le.s32.totalorder 1, %s74
      %p786 = scmp.lt.s32.totalorder %s74, 3
      %p787 = pnand %p785, %p786
      %p788 = pneg %p787
      // Predicated region
      $region9: #{tpu_custom_call.1} parent=5 // pred_check
        _
      $region10: #{tpu_custom_call.1} parent=5 // pred_check_branch
        %790 = sbr.rel (%p787) target = $region12
      $region11: #{tpu_custom_call.1} parent=5 // pred_region
        %s791 = ssub.s32 %s74, 1
        // Predicated region
        $region13: #{tpu_custom_call.1} parent=11 // pred_check
          %p792 = pneg %p121
        $region14: #{tpu_custom_call.1} parent=11 // pred_check_branch
          %794 = sbr.rel (%p792) target = $region16
        $region15: #{tpu_custom_call.1} parent=11 // pred_region
          _
        $region16: #{tpu_custom_call.1} parent=11 // pred_fallthru
          _
        // Predicated region
        $region17: #{tpu_custom_call.1} parent=11 // pred_check
          %p795 = pneg %p142
        $region18: #{tpu_custom_call.1} parent=11 // pred_check_branch
          %797 = sbr.rel (%p795) target = $region20
        $region19: #{tpu_custom_call.1} parent=11 // pred_region
          _
        $region20: #{tpu_custom_call.1} parent=11 // pred_fallthru
          _
        // Predicated region
        $region21: #{tpu_custom_call.1} parent=11 // pred_check
          %p798 = pneg %p163
        $region22: #{tpu_custom_call.1} parent=11 // pred_check_branch
          %800 = sbr.rel (%p798) target = $region24
        $region23: #{tpu_custom_call.1} parent=11 // pred_region
          _
        $region24: #{tpu_custom_call.1} parent=11 // pred_fallthru
          _
        // Predicated region
        $region25: #{tpu_custom_call.1} parent=11 // pred_check
          %p801 = pneg %p184
        $region26: #{tpu_custom_call.1} parent=11 // pred_check_branch
          %803 = sbr.rel (%p801) target = $region28
        $region27: #{tpu_custom_call.1} parent=11 // pred_region
          _
        $region28: #{tpu_custom_call.1} parent=11 // pred_fallthru
          _
        // Predicated region
        $region29: #{tpu_custom_call.1} parent=11 // pred_check
          %p804 = pneg %p205
        $region30: #{tpu_custom_call.1} parent=11 // pred_check_branch
          %806 = sbr.rel (%p804) target = $region32
        $region31: #{tpu_custom_call.1} parent=11 // pred_region
          _
        $region32: #{tpu_custom_call.1} parent=11 // pred_fallthru
          _
        // Predicated region
        $region33: #{tpu_custom_call.1} parent=11 // pred_check
          %p807 = pneg %p226
        $region34: #{tpu_custom_call.1} parent=11 // pred_check_branch
          %809 = sbr.rel (%p807) target = $region36
        $region35: #{tpu_custom_call.1} parent=11 // pred_region
          _
        $region36: #{tpu_custom_call.1} parent=11 // pred_fallthru
          _
        // Predicated region
        $region37: #{tpu_custom_call.1} parent=11 // pred_check
          %p810 = pneg %p247
        $region38: #{tpu_custom_call.1} parent=11 // pred_check_branch
          %812 = sbr.rel (%p810) target = $region40
        $region39: #{tpu_custom_call.1} parent=11 // pred_region
          _
        $region40: #{tpu_custom_call.1} parent=11 // pred_fallthru
          _
        // Predicated region
        $region41: #{tpu_custom_call.1} parent=11 // pred_check
          %p813 = pneg %p268
        $region42: #{tpu_custom_call.1} parent=11 // pred_check_branch
          %815 = sbr.rel (%p813) target = $region44
        $region43: #{tpu_custom_call.1} parent=11 // pred_region
          _
        $region44: #{tpu_custom_call.1} parent=11 // pred_fallthru
          _
        // Predicated region
        $region45: #{tpu_custom_call.1} parent=11 // pred_check
          %p816 = pneg %p289
        $region46: #{tpu_custom_call.1} parent=11 // pred_check_branch
          %818 = sbr.rel (%p816) target = $region48
        $region47: #{tpu_custom_call.1} parent=11 // pred_region
          _
        $region48: #{tpu_custom_call.1} parent=11 // pred_fallthru
          _
        // Predicated region
        $region49: #{tpu_custom_call.1} parent=11 // pred_check
          %p819 = pneg %p310
        $region50: #{tpu_custom_call.1} parent=11 // pred_check_branch
          %821 = sbr.rel (%p819) target = $region52
        $region51: #{tpu_custom_call.1} parent=11 // pred_region
          _
        $region52: #{tpu_custom_call.1} parent=11 // pred_fallthru
          _
        // Predicated region
        $region53: #{tpu_custom_call.1} parent=11 // pred_check
          %p822 = pneg %p331
        $region54: #{tpu_custom_call.1} parent=11 // pred_check_branch
          %824 = sbr.rel (%p822) target = $region56
        $region55: #{tpu_custom_call.1} parent=11 // pred_region
          _
        $region56: #{tpu_custom_call.1} parent=11 // pred_fallthru
          _
        // Predicated region
        $region57: #{tpu_custom_call.1} parent=11 // pred_check
          %p825 = pneg %p352
        $region58: #{tpu_custom_call.1} parent=11 // pred_check_branch
          %827 = sbr.rel (%p825) target = $region60
        $region59: #{tpu_custom_call.1} parent=11 // pred_region
          _
        $region60: #{tpu_custom_call.1} parent=11 // pred_fallthru
          _
        // Predicated region
        $region61: #{tpu_custom_call.1} parent=11 // pred_check
          %p828 = pneg %p373
        $region62: #{tpu_custom_call.1} parent=11 // pred_check_branch
          %830 = sbr.rel (%p828) target = $region64
        $region63: #{tpu_custom_call.1} parent=11 // pred_region
          _
        $region64: #{tpu_custom_call.1} parent=11 // pred_fallthru
          _
        // Predicated region
        $region65: #{tpu_custom_call.1} parent=11 // pred_check
          %p831 = pneg %p394
        $region66: #{tpu_custom_call.1} parent=11 // pred_check_branch
          %833 = sbr.rel (%p831) target = $region68
        $region67: #{tpu_custom_call.1} parent=11 // pred_region
          _
        $region68: #{tpu_custom_call.1} parent=11 // pred_fallthru
          _
        // Predicated region
        $region69: #{tpu_custom_call.1} parent=11 // pred_check
          %p834 = pneg %p415
        $region70: #{tpu_custom_call.1} parent=11 // pred_check_branch
          %836 = sbr.rel (%p834) target = $region72
        $region71: #{tpu_custom_call.1} parent=11 // pred_region
          _
        $region72: #{tpu_custom_call.1} parent=11 // pred_fallthru
          _
        // Predicated region
        $region73: #{tpu_custom_call.1} parent=11 // pred_check
          %p837 = pneg %p436
        $region74: #{tpu_custom_call.1} parent=11 // pred_check_branch
          %839 = sbr.rel (%p837) target = $region76
        $region75: #{tpu_custom_call.1} parent=11 // pred_region
          _
        $region76: #{tpu_custom_call.1} parent=11 // pred_fallthru
          _
        // Predicated region
        $region77: #{tpu_custom_call.1} parent=11 // pred_check
          %p840 = pneg %p457
        $region78: #{tpu_custom_call.1} parent=11 // pred_check_branch
          %842 = sbr.rel (%p840) target = $region80
        $region79: #{tpu_custom_call.1} parent=11 // pred_region
          _
        $region80: #{tpu_custom_call.1} parent=11 // pred_fallthru
          _
        // Predicated region
        $region81: #{tpu_custom_call.1} parent=11 // pred_check
          %p843 = pneg %p478
        $region82: #{tpu_custom_call.1} parent=11 // pred_check_branch
          %845 = sbr.rel (%p843) target = $region84
        $region83: #{tpu_custom_call.1} parent=11 // pred_region
          _
        $region84: #{tpu_custom_call.1} parent=11 // pred_fallthru
          _
        // Predicated region
        $region85: #{tpu_custom_call.1} parent=11 // pred_check
          %p846 = pneg %p499
        $region86: #{tpu_custom_call.1} parent=11 // pred_check_branch
          %848 = sbr.rel (%p846) target = $region88
        $region87: #{tpu_custom_call.1} parent=11 // pred_region
          _
        $region88: #{tpu_custom_call.1} parent=11 // pred_fallthru
          _
        // Predicated region
        $region89: #{tpu_custom_call.1} parent=11 // pred_check
          %p849 = pneg %p520
        $region90: #{tpu_custom_call.1} parent=11 // pred_check_branch
          %851 = sbr.rel (%p849) target = $region92
        $region91: #{tpu_custom_call.1} parent=11 // pred_region
          _
        $region92: #{tpu_custom_call.1} parent=11 // pred_fallthru
          _
        // Predicated region
        $region93: #{tpu_custom_call.1} parent=11 // pred_check
          %p852 = pneg %p541
        $region94: #{tpu_custom_call.1} parent=11 // pred_check_branch
          %854 = sbr.rel (%p852) target = $region96
        $region95: #{tpu_custom_call.1} parent=11 // pred_region
          _
        $region96: #{tpu_custom_call.1} parent=11 // pred_fallthru
          _
        // Predicated region
        $region97: #{tpu_custom_call.1} parent=11 // pred_check
          %p855 = pneg %p562
        $region98: #{tpu_custom_call.1} parent=11 // pred_check_branch
          %857 = sbr.rel (%p855) target = $region100
        $region99: #{tpu_custom_call.1} parent=11 // pred_region
          _
        $region100: #{tpu_custom_call.1} parent=11 // pred_fallthru
          _
        // Predicated region
        $region101: #{tpu_custom_call.1} parent=11 // pred_check
          %p858 = pneg %p583
        $region102: #{tpu_custom_call.1} parent=11 // pred_check_branch
          %860 = sbr.rel (%p858) target = $region104
        $region103: #{tpu_custom_call.1} parent=11 // pred_region
          _
        $region104: #{tpu_custom_call.1} parent=11 // pred_fallthru
          _
        // Predicated region
        $region105: #{tpu_custom_call.1} parent=11 // pred_check
          %p861 = pneg %p604
        $region106: #{tpu_custom_call.1} parent=11 // pred_check_branch
          %863 = sbr.rel (%p861) target = $region108
        $region107: #{tpu_custom_call.1} parent=11 // pred_region
          _
        $region108: #{tpu_custom_call.1} parent=11 // pred_fallthru
          _
        // Predicated region
        $region109: #{tpu_custom_call.1} parent=11 // pred_check
          %p864 = pneg %p625
        $region110: #{tpu_custom_call.1} parent=11 // pred_check_branch
          %866 = sbr.rel (%p864) target = $region112
        $region111: #{tpu_custom_call.1} parent=11 // pred_region
          _
        $region112: #{tpu_custom_call.1} parent=11 // pred_fallthru
          _
        // Predicated region
        $region113: #{tpu_custom_call.1} parent=11 // pred_check
          %p867 = pneg %p646
        $region114: #{tpu_custom_call.1} parent=11 // pred_check_branch
          %869 = sbr.rel (%p867) target = $region116
        $region115: #{tpu_custom_call.1} parent=11 // pred_region
          _
        $region116: #{tpu_custom_call.1} parent=11 // pred_fallthru
          _
        // Predicated region
        $region117: #{tpu_custom_call.1} parent=11 // pred_check
          %p870 = pneg %p667
        $region118: #{tpu_custom_call.1} parent=11 // pred_check_branch
          %872 = sbr.rel (%p870) target = $region120
        $region119: #{tpu_custom_call.1} parent=11 // pred_region
          _
        $region120: #{tpu_custom_call.1} parent=11 // pred_fallthru
          _
        // Predicated region
        $region121: #{tpu_custom_call.1} parent=11 // pred_check
          %p873 = pneg %p688
        $region122: #{tpu_custom_call.1} parent=11 // pred_check_branch
          %875 = sbr.rel (%p873) target = $region124
        $region123: #{tpu_custom_call.1} parent=11 // pred_region
          _
        $region124: #{tpu_custom_call.1} parent=11 // pred_fallthru
          _
        // Predicated region
        $region125: #{tpu_custom_call.1} parent=11 // pred_check
          %p876 = pneg %p709
        $region126: #{tpu_custom_call.1} parent=11 // pred_check_branch
          %878 = sbr.rel (%p876) target = $region128
        $region127: #{tpu_custom_call.1} parent=11 // pred_region
          _
        $region128: #{tpu_custom_call.1} parent=11 // pred_fallthru
          _
        // Predicated region
        $region129: #{tpu_custom_call.1} parent=11 // pred_check
          %p879 = pneg %p730
        $region130: #{tpu_custom_call.1} parent=11 // pred_check_branch
          %881 = sbr.rel (%p879) target = $region132
        $region131: #{tpu_custom_call.1} parent=11 // pred_region
          _
        $region132: #{tpu_custom_call.1} parent=11 // pred_fallthru
          _
        // Predicated region
        $region133: #{tpu_custom_call.1} parent=11 // pred_check
          %p882 = pneg %p751
        $region134: #{tpu_custom_call.1} parent=11 // pred_check_branch
          %884 = sbr.rel (%p882) target = $region136
        $region135: #{tpu_custom_call.1} parent=11 // pred_region
          _
        $region136: #{tpu_custom_call.1} parent=11 // pred_fallthru
          _
      $region12: #{tpu_custom_call.1} parent=5 // pred_fallthru
        _
      %p885 = scmp.lt.s32.totalorder %s74, 2
      // Predicated region
      $region137: #{tpu_custom_call.1} parent=5 // pred_check
        %p886 = pneg %p885
      $region138: #{tpu_custom_call.1} parent=5 // pred_check_branch
        %888 = sbr.rel (%p886) target = $region140
      $region139: #{tpu_custom_call.1} parent=5 // pred_region
        // Predicated region
        $region141: #{tpu_custom_call.1} parent=139 // pred_check
          %p889 = pneg %p94
        $region142: #{tpu_custom_call.1} parent=139 // pred_check_branch
          %891 = sbr.rel (%p889) target = $region144
        $region143: #{tpu_custom_call.1} parent=139 // pred_region
          %p892 = scmp.lt.s32.totalorder %s74, 1
          %s893 = scalar_select %p892, %s74, 1
          %s894 = smul.addr %s893, 2
          %s895 = smul.addr %s894, 8
          %s896 = scalar_lea.vmem %s1, %s895
        $region144: #{tpu_custom_call.1} parent=139 // pred_fallthru
          _
      $region140: #{tpu_custom_call.1} parent=5 // pred_fallthru
        _
      %p897 = scmp.le.s32.totalorder 1, %s74
      %p898 = scmp.lt.s32.totalorder %s74, 3
      %p899 = pnand %p897, %p898
      %p900 = pneg %p899
      // Predicated region
      $region145: #{tpu_custom_call.1} parent=5 // pred_check
        _
      $region146: #{tpu_custom_call.1} parent=5 // pred_check_branch
        %902 = sbr.rel (%p899) target = $region148
      $region147: #{tpu_custom_call.1} parent=5 // pred_region
        %s903 = ssub.s32 %s74, 1
        %p904 = scmp.lt.s32.totalorder %s79, 1
        %s905 = scalar_select %p904, %s79, 1
        %s906 = smul.addr %s905, 2
        %s907 = smul.addr %s906, 8
        %s908 = scalar_lea.vmem %s1, %s907
        %p909 = pneg %p100
        %p910 = pneg %p97
        %p911 = pneg %p121
        %p912 = pneg %p118
        %p913 = pneg %p142
        %p914 = pneg %p139
        %p915 = pneg %p163
        %p916 = pneg %p160
        %p917 = pneg %p184
        %p918 = pneg %p181
        %p919 = pneg %p205
        %p920 = pneg %p202
        %p921 = pneg %p226
        %p922 = pneg %p223
        %p923 = pneg %p247
        %p924 = pneg %p244
        %p925 = pneg %p268
        %p926 = pneg %p265
        %p927 = pneg %p289
        %p928 = pneg %p286
        %p929 = pneg %p310
        %p930 = pneg %p307
        %p931 = pneg %p331
        %p932 = pneg %p328
        %p933 = pneg %p352
        %p934 = pneg %p349
        %p935 = pneg %p373
        %p936 = pneg %p370
        %p937 = pneg %p394
        %p938 = pneg %p391
        %p939 = pneg %p415
        %p940 = pneg %p412
        %p941 = pneg %p436
        %p942 = pneg %p433
        %p943 = pneg %p457
        %p944 = pneg %p454
        %p945 = pneg %p478
        %p946 = pneg %p475
        %p947 = pneg %p499
        %p948 = pneg %p496
        %p949 = pneg %p520
        %p950 = pneg %p517
        %p951 = pneg %p541
        %p952 = pneg %p538
        %p953 = pneg %p562
        %p954 = pneg %p559
        %p955 = pneg %p583
        %p956 = pneg %p580
        %p957 = pneg %p604
        %p958 = pneg %p601
        %p959 = pneg %p625
        %p960 = pneg %p622
        %p961 = pneg %p646
        %p962 = pneg %p643
        %p963 = pneg %p667
        %p964 = pneg %p664
        %p965 = pneg %p688
        %p966 = pneg %p685
        %p967 = pneg %p709
        %p968 = pneg %p706
        %p969 = pneg %p730
        %p970 = pneg %p727
        %p971 = pneg %p751
        %p972 = pneg %p748
        %p973 = pneg %p777
        %p974 = pneg %p774
        %s975 = sand.u32 %s764, 1
        %s976 = scalar_lea.sflag [#allocation5], %s975
        %s977 = sand.u32 %s764, 1
        %s978 = smul.addr %s977, 16
        %s979 = scalar_lea.vmem [#allocation4], %s978
        %p980 = scmp.lt.s32.totalorder %s79, 1
        %s981 = scalar_select %p980, %s79, 1
        %s982 = smul.addr %s981, 2
        %s983 = smul.addr %s982, 8
        %s984 = scalar_lea.vmem %s1, %s983
        %v985 = vld [vmem:[%s984] sm:$0xff]
        %v986 = vld [vmem:[%s984 + $0x8] sm:$0xff]
        %v987 = vmul.f32 %v985, 0.25
        %v988 = vmul.f32 %v986, 0.25
        %v989 = vsub.f32 %v987, 0.5
        %v990 = vsub.f32 %v988, 0.5
        %v991 = vld [vmem:[%s5] sm:$0x7]
        %v992 = vld [vmem:[%s5 + $0x3] sm:$0x1]
        %994 = vset.pattern.permute.xlu0 4
        %995 = vperm.xlu0 %994, %v989
        %v996 = vpop.permute.xlu0 %995
        %999 = vset.pattern.permute.xlu0 4
        %1000 = vperm.xlu0 %999, %v990
        %v1001 = vpop.permute.xlu0 %1000
        %v1003 = vlaneseq
        %v1004 = vshrl.u32 %v1003, 7
        %v1005 = vsub.s32 0, %v1004
        %v1006 = vrot.slane %v992, %v1005
        %v1007 = vmul.f32 %v996, %v1006
        %v1008 = vmul.f32 %v1001, %v1006
        %1011 = vrot.lane.b32.xlu0 %v985, 127
        %v1012 = vpop.permute.xlu0 %1011
        %1013 = vrot.lane.b32.xlu0 %v986, 127
        %v1014 = vpop.permute.xlu0 %1013
        %vm1015 = vcmask 23552
        %v1016 = vsel %vm1015, %v1012, 0
        %v1018 = vsel %vm1015, %v1014, 0
        %vm1020 = vcmask 1042432
        %v1022 = vsel %vm1020, %v991, 0
        %1024 = vmatprep.subr.mxu0 0.0
        %1025 = vmatpush1.msra.mxu0 %v1022
        %1026 = vmatprep.subr.mxu0 0.0
        %1027 = vmatpush1.msra.mxu0 0.0
        %1028 = vmatprep.subr.mxu0 0.0
        %1029 = vmatpush1.msra.mxu0 0.0
        %1030 = vmatprep.subr.mxu0 0.0
        %1031 = vmatpush1.msra.mxu0 0.0
        %1032 = vmatprep.subr.mxu0 0.0
        %1033 = vmatpush1.msra.mxu0 0.0
        %1034 = vmatprep.subr.mxu0 0.0
        %1035 = vmatpush1.msra.mxu0 0.0
        %1036 = vmatprep.subr.mxu0 0.0
        %1037 = vmatpush1.msra.mxu0 0.0
        %1038 = vmatprep.subr.mxu0 0.0
        %1039 = vmatpush1.msra.mxu0 0.0
        %1040 = vmatprep.subr.mxu0 0.0
        %1041 = vmatpush1.msra.mxu0 0.0
        %1042 = vmatprep.subr.mxu0 0.0
        %1043 = vmatpush1.msra.mxu0 0.0
        %1044 = vmatprep.subr.mxu0 0.0
        %1045 = vmatpush1.msra.mxu0 0.0
        %1046 = vmatprep.subr.mxu0 0.0
        %1047 = vmatpush1.msra.mxu0 0.0
        %1048 = vmatprep.subr.mxu0 0.0
        %1049 = vmatpush1.msra.mxu0 0.0
        %1050 = vmatprep.subr.mxu0 0.0
        %1051 = vmatpush1.msra.mxu0 0.0
        %1052 = vmatprep.subr.mxu0 0.0
        %1053 = vmatpush1.msra.mxu0 0.0
        %1054 = vmatprep.subr.mxu0 0.0
        %1055 = vmatpush1.msra.mxu0 0.0
        %1056 = vmatprep.subr.mxu0 0.0
        %1057 = vmatpush1.msra.mxu0 0.0
        %1058 = vmatprep.subr.mxu0 0.0
        %1059 = vmatpush1.msra.mxu0 0.0
        %1060 = vmatprep.subr.mxu0 0.0
        %1061 = vmatpush1.msra.mxu0 0.0
        %1062 = vmatprep.subr.mxu0 0.0
        %1063 = vmatpush1.msra.mxu0 0.0
        %1064 = vmatprep.subr.mxu0 0.0
        %1065 = vmatpush1.msra.mxu0 0.0
        %1066 = vmatprep.subr.mxu0 0.0
        %1067 = vmatpush1.msra.mxu0 0.0
        %1068 = vmatprep.subr.mxu0 0.0
        %1069 = vmatpush1.msra.mxu0 0.0
        %1070 = vmatprep.subr.mxu0 0.0
        %1071 = vmatpush1.msra.mxu0 0.0
        %1072 = vmatprep.subr.mxu0 0.0
        %1073 = vmatpush1.msra.mxu0 0.0
        %1074 = vmatprep.subr.mxu0 0.0
        %1075 = vmatpush1.msra.mxu0 0.0
        %1076 = vmatprep.subr.mxu0 0.0
        %1077 = vmatpush1.msra.mxu0 0.0
        %1078 = vmatprep.subr.mxu0 0.0
        %1079 = vmatpush1.msra.mxu0 0.0
        %1080 = vmatprep.subr.mxu0 0.0
        %1081 = vmatpush1.msra.mxu0 0.0
        %1082 = vmatprep.subr.mxu0 0.0
        %1083 = vmatpush1.msra.mxu0 0.0
        %1084 = vmatprep.subr.mxu0 0.0
        %1085 = vmatpush1.msra.mxu0 0.0
        %1086 = vmatprep.subr.mxu0 0.0
        %1087 = vmatpush1.msra.mxu0 0.0
        %1088 = vmatprep.mubr.f32.mxu0 0.0
        %1089 = vmatmul.mubr.f32.gmra.mrb[0].mxu0 %v1016
        %v1090 = vpop.f32.mrb[0].mxu0
        %v1091 = vadd.f32 %v1007, %v1090
        %v1092 = vpop.f32.mrb[0].mxu0
        %1093 = vmatprep.mubr.f32.mxu0 0.0
        %1094 = vmatmul.mubr.f32.gmra.mrb[0].mxu0 %v1018
        %v1095 = vpop.f32.mrb[0].mxu0
        %v1096 = vadd.f32 %v1008, %v1095
        %v1097 = vpop.f32.mrb[0].mxu0
        %1098 = vdwg.mxu0
        %v1099 = vld [vmem:[%s7] sm:$0x1]
        %v1101 = vlaneseq
        %v1102 = vshrl.u32 %v1101, 7
        %v1103 = vsub.s32 0, %v1102
        %v1104 = vrot.slane %v1099, %v1103
        %v1106 = vadd.f32 %v1091, %v1104
        %v1107 = vadd.f32 %v1096, %v1104
        %v1108 = vld [vmem:[%s9] sm:$0x7]
        %v1109 = vrot.slane %v986, 7
        %vm1111 = vcmask 1040384
        %v1112 = vrot.slane %v985, 7
        %v1113 = vsel %vm1111, %v1112, %v1109
        %v1115 = vsel %vm1111, %v1109, %v1112
        %vm1116 = vcmask 1046528
        %v1117 = vrot.slane %v985, 1
        %v1118 = vrot.slane %v986, 1
        %v1119 = vsel %vm1116, %v1117, %v1118
        %v1122 = vsel %vm1116, %v1118, %v1117
        %1124 = vset.pattern.permute.xlu0 0
        %1125 = vperm.xlu0 %1124, %v1115
        %v1126 = vpop.permute.xlu0 %1125
        %1128 = vset.pattern.permute.xlu0 0
        %1129 = vperm.xlu0 %1128, %v1113
        %v1130 = vpop.permute.xlu0 %1129
        %v1132 = vlaneseq
        %v1133 = vshrl.u32 %v1132, 7
        %v1134 = vsub.s32 0, %v1133
        %v1135 = vrot.slane %v1108, %v1134
        %v1136 = vmul.f32 %v1126, %v1135
        %v1137 = vmul.f32 %v1130, %v1135
        %1138 = vset.pattern.permute.xlu0 0
        %1139 = vperm.xlu0 %1138, %v985
        %v1140 = vpop.permute.xlu0 %1139
        %1142 = vset.pattern.permute.xlu0 0
        %1143 = vperm.xlu0 %1142, %v986
        %v1144 = vpop.permute.xlu0 %1143
        %v1146 = vlaneseq
        %v1147 = vshrl.u32 %v1146, 7
        %v1148 = vsub.s32 1, %v1147
        %v1149 = vrot.slane %v1108, %v1148
        %v1150 = vmul.f32 %v1140, %v1149
        %v1151 = vmul.f32 %v1144, %v1149
        %v1152 = vadd.f32 %v1136, %v1150
        %v1153 = vadd.f32 %v1137, %v1151
        %1154 = vset.pattern.permute.xlu0 0
        %1155 = vperm.xlu0 %1154, %v1119
        %v1156 = vpop.permute.xlu0 %1155
        %1159 = vset.pattern.permute.xlu0 0
        %1160 = vperm.xlu0 %1159, %v1122
        %v1161 = vpop.permute.xlu0 %1160
        %v1163 = vlaneseq
        %v1164 = vshrl.u32 %v1163, 7
        %v1165 = vsub.s32 2, %v1164
        %v1166 = vrot.slane %v1108, %v1165
        %v1167 = vmul.f32 %v1156, %v1166
        %v1168 = vmul.f32 %v1161, %v1166
        %v1169 = vadd.f32 %v1152, %v1167
        %v1170 = vadd.f32 %v1153, %v1168
        %v1171 = vadd.f32 %v1106, %v1169
        %v1172 = vadd.f32 %v1107, %v1170
        %v1173 = vld [vmem:[%s3] sm:$0xff]
        %v1174 = vld [vmem:[%s3 + $0x8] sm:$0xff]
        %v1175 = vadd.f32 %v1171, %v1173
        %v1176 = vadd.f32 %v1172, %v1174
        %v1177 = vld [vmem:[%s31] sm:$0x1]
        %v1178 = vld [vmem:[%s33] sm:$0x1]
        %vm1179 = vcmask 261120
        %v1180 = vsel %vm1179, %v1175, 0.0
        %1181 = vadd.xlane.f32.xlu0 %v1180
        %v1182 = vpop.xlane.xlu0 %1181
        %v1183 = vsel %vm1179, %v1176, 0.0
        %1184 = vadd.xlane.f32.xlu0 %v1183
        %v1185 = vpop.xlane.xlu0 %1184
        %v1186 = vrcp.pop 32.0
        %v1187 = vmul.f32 %v1182, %v1186
        %v1188 = vmul.f32 %v1185, %v1186
        %v1189 = vsub.f32 %v1175, %v1187
        %v1190 = vsub.f32 %v1176, %v1188
        %v1191 = vmul.f32 %v1189, %v1189
        %v1192 = vmul.f32 %v1190, %v1190
        %v1193 = vsel %vm1179, %v1191, 0.0
        %1194 = vadd.xlane.f32.xlu0 %v1193
        %v1195 = vpop.xlane.xlu0 %1194
        %v1196 = vsel %vm1179, %v1192, 0.0
        %1197 = vadd.xlane.f32.xlu0 %v1196
        %v1198 = vpop.xlane.xlu0 %1197
        %v1199 = vmul.f32 %v1195, %v1186
        %v1200 = vmul.f32 %v1198, %v1186
        %v1201 = vadd.f32 %v1199, 1e-05
        %v1202 = vadd.f32 %v1200, 1e-05
        %v1203 = vrsqrt.pop %v1201
        %v1204 = vrsqrt.pop %v1202
        %v1205 = vmul.f32 %v1189, %v1203
        %v1206 = vmul.f32 %v1190, %v1204
        %v1208 = vlaneseq
        %v1209 = vshrl.u32 %v1208, 7
        %v1210 = vsub.s32 0, %v1209
        %v1211 = vrot.slane %v1177, %v1210
        %v1213 = vmul.f32 %v1205, %v1211
        %v1214 = vmul.f32 %v1206, %v1211
        %v1216 = vlaneseq
        %v1217 = vshrl.u32 %v1216, 7
        %v1218 = vsub.s32 0, %v1217
        %v1219 = vrot.slane %v1178, %v1218
        %v1221 = vadd.f32 %v1213, %v1219
        %v1222 = vadd.f32 %v1214, %v1219
        %1223 = vst.msk [vmem:[#allocation2] sm:$0xff] %vm1179, %v1221
        %1224 = vst.msk [vmem:[#allocation2 + $0x8] sm:$0xff] %vm1179, %v1222
        %v1225 = vld [vmem:[%s11] sm:$0xff]
        %v1226 = vld [vmem:[%s11 + $0x8] sm:$0xff]
        %v1227 = vld [vmem:[%s11 + $0x10] sm:$0xff]
        %v1228 = vld [vmem:[%s11 + $0x18] sm:$0xff]
        %v1229 = vld [vmem:[%s13] sm:$0x1]
        %v1231 = vlaneseq
        %v1232 = vshrl.u32 %v1231, 7
        %v1233 = vsub.s32 0, %v1232
        %v1234 = vrot.slane %v1229, %v1233
        %v1237 = vsel %vm1179, %v1175, 0
        %v1240 = vsel %vm1179, %v1176, 0
        %1242 = vmatprep.subr.mxu0 0.0
        %1243 = vmatpush1.msra.mxu0 %v1225
        %1244 = vmatprep.subr.mxu0 0.0
        %1245 = vmatpush1.msra.mxu0 %v1226
        %1246 = vmatprep.subr.mxu0 0.0
        %1247 = vmatpush1.msra.mxu0 %v1227
        %1248 = vmatprep.subr.mxu0 0.0
        %1249 = vmatpush1.msra.mxu0 %v1228
        %1250 = vmatprep.subr.mxu0 0.0
        %1251 = vmatpush1.msra.mxu0 0.0
        %1252 = vmatprep.subr.mxu0 0.0
        %1253 = vmatpush1.msra.mxu0 0.0
        %1254 = vmatprep.subr.mxu0 0.0
        %1255 = vmatpush1.msra.mxu0 0.0
        %1256 = vmatprep.subr.mxu0 0.0
        %1257 = vmatpush1.msra.mxu0 0.0
        %1258 = vmatprep.subr.mxu0 0.0
        %1259 = vmatpush1.msra.mxu0 0.0
        %1260 = vmatprep.subr.mxu0 0.0
        %1261 = vmatpush1.msra.mxu0 0.0
        %1262 = vmatprep.subr.mxu0 0.0
        %1263 = vmatpush1.msra.mxu0 0.0
        %1264 = vmatprep.subr.mxu0 0.0
        %1265 = vmatpush1.msra.mxu0 0.0
        %1266 = vmatprep.subr.mxu0 0.0
        %1267 = vmatpush1.msra.mxu0 0.0
        %1268 = vmatprep.subr.mxu0 0.0
        %1269 = vmatpush1.msra.mxu0 0.0
        %1270 = vmatprep.subr.mxu0 0.0
        %1271 = vmatpush1.msra.mxu0 0.0
        %1272 = vmatprep.subr.mxu0 0.0
        %1273 = vmatpush1.msra.mxu0 0.0
        %1274 = vmatprep.subr.mxu0 0.0
        %1275 = vmatpush1.msra.mxu0 0.0
        %1276 = vmatprep.subr.mxu0 0.0
        %1277 = vmatpush1.msra.mxu0 0.0
        %1278 = vmatprep.subr.mxu0 0.0
        %1279 = vmatpush1.msra.mxu0 0.0
        %1280 = vmatprep.subr.mxu0 0.0
        %1281 = vmatpush1.msra.mxu0 0.0
        %1282 = vmatprep.subr.mxu0 0.0
        %1283 = vmatpush1.msra.mxu0 0.0
        %1284 = vmatprep.subr.mxu0 0.0
        %1285 = vmatpush1.msra.mxu0 0.0
        %1286 = vmatprep.subr.mxu0 0.0
        %1287 = vmatpush1.msra.mxu0 0.0
        %1288 = vmatprep.subr.mxu0 0.0
        %1289 = vmatpush1.msra.mxu0 0.0
        %1290 = vmatprep.subr.mxu0 0.0
        %1291 = vmatpush1.msra.mxu0 0.0
        %1292 = vmatprep.subr.mxu0 0.0
        %1293 = vmatpush1.msra.mxu0 0.0
        %1294 = vmatprep.subr.mxu0 0.0
        %1295 = vmatpush1.msra.mxu0 0.0
        %1296 = vmatprep.subr.mxu0 0.0
        %1297 = vmatpush1.msra.mxu0 0.0
        %1298 = vmatprep.subr.mxu0 0.0
        %1299 = vmatpush1.msra.mxu0 0.0
        %1300 = vmatprep.subr.mxu0 0.0
        %1301 = vmatpush1.msra.mxu0 0.0
        %1302 = vmatprep.subr.mxu0 0.0
        %1303 = vmatpush1.msra.mxu0 0.0
        %1304 = vmatprep.subr.mxu0 0.0
        %1305 = vmatpush1.msra.mxu0 0.0
        %1306 = vmatprep.mubr.f32.mxu0 0.0
        %1307 = vmatmul.mubr.f32.gmra.mrb[0].mxu0 %v1237
        %v1308 = vpop.f32.mrb[0].mxu0
        %v1309 = vadd.f32 %v1234, %v1308
        %v1310 = vpop.f32.mrb[0].mxu0
        %1311 = vmatprep.mubr.f32.mxu0 0.0
        %1312 = vmatmul.mubr.f32.gmra.mrb[0].mxu0 %v1240
        %v1313 = vpop.f32.mrb[0].mxu0
        %v1314 = vadd.f32 %v1234, %v1313
        %v1315 = vpop.f32.mrb[0].mxu0
        %1316 = vdwg.mxu0
        %vm1317 = vcmask 64512
        %1318 = vst.msk [vmem:[#allocation3] sm:$0xff] %vm1317, %v1309
        %1319 = vst.msk [vmem:[#allocation3 + $0x8] sm:$0xff] %vm1317, %v1314
        %v1320 = vld [vmem:[#allocation3] ss:$2 sm:$0xff]
        %v1321 = vld [vmem:[%s15] sm:$0xff]
        %s1322 = scalar_lea.vmem [#allocation3], 1
        %v1323 = vld [vmem:[%s1322] ss:$2 sm:$0xff]
        %s1324 = scalar_lea.vmem %s15, 8
        %v1325 = vld [vmem:[%s1324] sm:$0xff]
        %v1327 = vsel %vm1317, %v1323, 0
        %1329 = vmatprep.subr.mxu0 0.0
        %1330 = vmatpush1.msra.mxu0 %v1325
        %1331 = vmatprep.subr.mxu0 0.0
        %1332 = vmatpush1.msra.mxu0 0.0
        %1333 = vmatprep.subr.mxu0 0.0
        %1334 = vmatpush1.msra.mxu0 0.0
        %1335 = vmatprep.subr.mxu0 0.0
        %1336 = vmatpush1.msra.mxu0 0.0
        %1337 = vmatprep.subr.mxu0 0.0
        %1338 = vmatpush1.msra.mxu0 0.0
        %1339 = vmatprep.subr.mxu0 0.0
        %1340 = vmatpush1.msra.mxu0 0.0
        %1341 = vmatprep.subr.mxu0 0.0
        %1342 = vmatpush1.msra.mxu0 0.0
        %1343 = vmatprep.subr.mxu0 0.0
        %1344 = vmatpush1.msra.mxu0 0.0
        %1345 = vmatprep.subr.mxu0 0.0
        %1346 = vmatpush1.msra.mxu0 0.0
        %1347 = vmatprep.subr.mxu0 0.0
        %1348 = vmatpush1.msra.mxu0 0.0
        %1349 = vmatprep.subr.mxu0 0.0
        %1350 = vmatpush1.msra.mxu0 0.0
        %1351 = vmatprep.subr.mxu0 0.0
        %1352 = vmatpush1.msra.mxu0 0.0
        %1353 = vmatprep.subr.mxu0 0.0
        %1354 = vmatpush1.msra.mxu0 0.0
        %1355 = vmatprep.subr.mxu0 0.0
        %1356 = vmatpush1.msra.mxu0 0.0
        %1357 = vmatprep.subr.mxu0 0.0
        %1358 = vmatpush1.msra.mxu0 0.0
        %1359 = vmatprep.subr.mxu0 0.0
        %1360 = vmatpush1.msra.mxu0 0.0
        %1361 = vmatprep.subr.mxu0 0.0
        %1362 = vmatpush1.msra.mxu0 0.0
        %1363 = vmatprep.subr.mxu0 0.0
        %1364 = vmatpush1.msra.mxu0 0.0
        %1365 = vmatprep.subr.mxu0 0.0
        %1366 = vmatpush1.msra.mxu0 0.0
        %1367 = vmatprep.subr.mxu0 0.0
        %1368 = vmatpush1.msra.mxu0 0.0
        %1369 = vmatprep.subr.mxu0 0.0
        %1370 = vmatpush1.msra.mxu0 0.0
        %1371 = vmatprep.subr.mxu0 0.0
        %1372 = vmatpush1.msra.mxu0 0.0
        %1373 = vmatprep.subr.mxu0 0.0
        %1374 = vmatpush1.msra.mxu0 0.0
        %1375 = vmatprep.subr.mxu0 0.0
        %1376 = vmatpush1.msra.mxu0 0.0
        %1377 = vmatprep.subr.mxu0 0.0
        %1378 = vmatpush1.msra.mxu0 0.0
        %1379 = vmatprep.subr.mxu0 0.0
        %1380 = vmatpush1.msra.mxu0 0.0
        %1381 = vmatprep.subr.mxu0 0.0
        %1382 = vmatpush1.msra.mxu0 0.0
        %1383 = vmatprep.subr.mxu0 0.0
        %1384 = vmatpush1.msra.mxu0 0.0
        %1385 = vmatprep.subr.mxu0 0.0
        %1386 = vmatpush1.msra.mxu0 0.0
        %1387 = vmatprep.subr.mxu0 0.0
        %1388 = vmatpush1.msra.mxu0 0.0
        %1389 = vmatprep.subr.mxu0 0.0
        %1390 = vmatpush1.msra.mxu0 0.0
        %1391 = vmatprep.subr.mxu0 0.0
        %1392 = vmatpush1.msra.mxu0 0.0
        %1393 = vmatprep.mubr.f32.mxu0 0.0
        %1394 = vmatmul.mubr.f32.gmra.mrb[0].mxu0 %v1327
        %v1395 = vpop.f32.mrb[0].mxu0
        %v1396 = vadd.f32 0.0, %v1395
        %v1397 = vpop.f32.mrb[0].mxu0
        %1398 = vdwg.mxu0
        %v1400 = vsel %vm1317, %v1320, 0
        %1402 = vmatprep.subr.mxu0 0.0
        %1403 = vmatpush1.msra.mxu0 %v1321
        %1404 = vmatprep.subr.mxu0 0.0
        %1405 = vmatpush1.msra.mxu0 0.0
        %1406 = vmatprep.subr.mxu0 0.0
        %1407 = vmatpush1.msra.mxu0 0.0
        %1408 = vmatprep.subr.mxu0 0.0
        %1409 = vmatpush1.msra.mxu0 0.0
        %1410 = vmatprep.subr.mxu0 0.0
        %1411 = vmatpush1.msra.mxu0 0.0
        %1412 = vmatprep.subr.mxu0 0.0
        %1413 = vmatpush1.msra.mxu0 0.0
        %1414 = vmatprep.subr.mxu0 0.0
        %1415 = vmatpush1.msra.mxu0 0.0
        %1416 = vmatprep.subr.mxu0 0.0
        %1417 = vmatpush1.msra.mxu0 0.0
        %1418 = vmatprep.subr.mxu0 0.0
        %1419 = vmatpush1.msra.mxu0 0.0
        %1420 = vmatprep.subr.mxu0 0.0
        %1421 = vmatpush1.msra.mxu0 0.0
        %1422 = vmatprep.subr.mxu0 0.0
        %1423 = vmatpush1.msra.mxu0 0.0
        %1424 = vmatprep.subr.mxu0 0.0
        %1425 = vmatpush1.msra.mxu0 0.0
        %1426 = vmatprep.subr.mxu0 0.0
        %1427 = vmatpush1.msra.mxu0 0.0
        %1428 = vmatprep.subr.mxu0 0.0
        %1429 = vmatpush1.msra.mxu0 0.0
        %1430 = vmatprep.subr.mxu0 0.0
        %1431 = vmatpush1.msra.mxu0 0.0
        %1432 = vmatprep.subr.mxu0 0.0
        %1433 = vmatpush1.msra.mxu0 0.0
        %1434 = vmatprep.subr.mxu0 0.0
        %1435 = vmatpush1.msra.mxu0 0.0
        %1436 = vmatprep.subr.mxu0 0.0
        %1437 = vmatpush1.msra.mxu0 0.0
        %1438 = vmatprep.subr.mxu0 0.0
        %1439 = vmatpush1.msra.mxu0 0.0
        %1440 = vmatprep.subr.mxu0 0.0
        %1441 = vmatpush1.msra.mxu0 0.0
        %1442 = vmatprep.subr.mxu0 0.0
        %1443 = vmatpush1.msra.mxu0 0.0
        %1444 = vmatprep.subr.mxu0 0.0
        %1445 = vmatpush1.msra.mxu0 0.0
        %1446 = vmatprep.subr.mxu0 0.0
        %1447 = vmatpush1.msra.mxu0 0.0
        %1448 = vmatprep.subr.mxu0 0.0
        %1449 = vmatpush1.msra.mxu0 0.0
        %1450 = vmatprep.subr.mxu0 0.0
        %1451 = vmatpush1.msra.mxu0 0.0
        %1452 = vmatprep.subr.mxu0 0.0
        %1453 = vmatpush1.msra.mxu0 0.0
        %1454 = vmatprep.subr.mxu0 0.0
        %1455 = vmatpush1.msra.mxu0 0.0
        %1456 = vmatprep.subr.mxu0 0.0
        %1457 = vmatpush1.msra.mxu0 0.0
        %1458 = vmatprep.subr.mxu0 0.0
        %1459 = vmatpush1.msra.mxu0 0.0
        %1460 = vmatprep.subr.mxu0 0.0
        %1461 = vmatpush1.msra.mxu0 0.0
        %1462 = vmatprep.subr.mxu0 0.0
        %1463 = vmatpush1.msra.mxu0 0.0
        %1464 = vmatprep.subr.mxu0 0.0
        %1465 = vmatpush1.msra.mxu0 0.0
        %1466 = vmatprep.mubr.f32.mxu0 0.0
        %1467 = vmatmul.mubr.f32.gmra.mrb[0].mxu0 %v1400
        %v1468 = vpop.f32.mrb[0].mxu0
        %v1469 = vadd.f32 %v1396, %v1468
        %v1470 = vpop.f32.mrb[0].mxu0
        %1471 = vdwg.mxu0
        %v1472 = vld [vmem:[%s17] sm:$0x1]
        %v1474 = vlaneseq
        %v1475 = vshrl.u32 %v1474, 7
        %v1476 = vsub.s32 0, %v1475
        %v1477 = vrot.slane %v1472, %v1476
        %v1479 = vadd.f32 %v1469, %v1477
        %v1480 = vld [vmem:[%s19] sm:$0x1]
        %v1481 = vld [vmem:[%s19 + $0x1] sm:$0x1]
        %v1482 = vld [vmem:[%s19 + $0x2] sm:$0x1]
        %v1483 = vld [vmem:[%s19 + $0x3] sm:$0x1]
        %v1484 = vlaneseq
        %v1485 = vshrl.u32 %v1484, 7
        %v1486 = vsub.s32 0, %v1485
        %v1487 = vrot.slane %v1482, %v1486
        %v1488 = vsub.f32 %v1479, %v1487
        %v1489 = vadd.f32 %v1483, 1e-05
        %v1490 = vrsqrt.pop %v1489
        %v1491 = vlaneseq
        %v1492 = vshrl.u32 %v1491, 7
        %v1493 = vsub.s32 0, %v1492
        %v1494 = vrot.slane %v1490, %v1493
        %v1495 = vmul.f32 %v1488, %v1494
        %v1496 = vlaneseq
        %v1497 = vshrl.u32 %v1496, 7
        %v1498 = vsub.s32 0, %v1497
        %v1499 = vrot.slane %v1480, %v1498
        %v1500 = vmul.f32 %v1495, %v1499
        %v1501 = vlaneseq
        %v1502 = vshrl.u32 %v1501, 7
        %v1503 = vsub.s32 0, %v1502
        %v1504 = vrot.slane %v1481, %v1503
        %v1505 = vadd.f32 %v1500, %v1504
        %vm1506 = vcmp.gt.f32.partialorder %v1505, 0.0
        %v1507 = vmul.f32 %v1505, 1.442695
        %v1508 = vpow.pop %v1507
        %v1509 = vsub.f32 %v1508, 1.0
        %v1510 = vsel %vm1506, %v1505, %v1509
        %v1511 = vld [vmem:[%s27] sm:$0xff]
        %v1512 = vld [vmem:[%s29] sm:$0x1]
        %v1514 = vlaneseq
        %v1515 = vshrl.u32 %v1514, 7
        %v1516 = vsub.s32 0, %v1515
        %v1517 = vrot.slane %v1512, %v1516
        %v1520 = vsel %vm1317, %v1510, 0
        %1522 = vmatprep.subr.mxu0 0.0
        %1523 = vmatpush1.msra.mxu0 %v1511
        %1524 = vmatprep.subr.mxu0 0.0
        %1525 = vmatpush1.msra.mxu0 0.0
        %1526 = vmatprep.subr.mxu0 0.0
        %1527 = vmatpush1.msra.mxu0 0.0
        %1528 = vmatprep.subr.mxu0 0.0
        %1529 = vmatpush1.msra.mxu0 0.0
        %1530 = vmatprep.subr.mxu0 0.0
        %1531 = vmatpush1.msra.mxu0 0.0
        %1532 = vmatprep.subr.mxu0 0.0
        %1533 = vmatpush1.msra.mxu0 0.0
        %1534 = vmatprep.subr.mxu0 0.0
        %1535 = vmatpush1.msra.mxu0 0.0
        %1536 = vmatprep.subr.mxu0 0.0
        %1537 = vmatpush1.msra.mxu0 0.0
        %1538 = vmatprep.subr.mxu0 0.0
        %1539 = vmatpush1.msra.mxu0 0.0
        %1540 = vmatprep.subr.mxu0 0.0
        %1541 = vmatpush1.msra.mxu0 0.0
        %1542 = vmatprep.subr.mxu0 0.0
        %1543 = vmatpush1.msra.mxu0 0.0
        %1544 = vmatprep.subr.mxu0 0.0
        %1545 = vmatpush1.msra.mxu0 0.0
        %1546 = vmatprep.subr.mxu0 0.0
        %1547 = vmatpush1.msra.mxu0 0.0
        %1548 = vmatprep.subr.mxu0 0.0
        %1549 = vmatpush1.msra.mxu0 0.0
        %1550 = vmatprep.subr.mxu0 0.0
        %1551 = vmatpush1.msra.mxu0 0.0
        %1552 = vmatprep.subr.mxu0 0.0
        %1553 = vmatpush1.msra.mxu0 0.0
        %1554 = vmatprep.subr.mxu0 0.0
        %1555 = vmatpush1.msra.mxu0 0.0
        %1556 = vmatprep.subr.mxu0 0.0
        %1557 = vmatpush1.msra.mxu0 0.0
        %1558 = vmatprep.subr.mxu0 0.0
        %1559 = vmatpush1.msra.mxu0 0.0
        %1560 = vmatprep.subr.mxu0 0.0
        %1561 = vmatpush1.msra.mxu0 0.0
        %1562 = vmatprep.subr.mxu0 0.0
        %1563 = vmatpush1.msra.mxu0 0.0
        %1564 = vmatprep.subr.mxu0 0.0
        %1565 = vmatpush1.msra.mxu0 0.0
        %1566 = vmatprep.subr.mxu0 0.0
        %1567 = vmatpush1.msra.mxu0 0.0
        %1568 = vmatprep.subr.mxu0 0.0
        %1569 = vmatpush1.msra.mxu0 0.0
        %1570 = vmatprep.subr.mxu0 0.0
        %1571 = vmatpush1.msra.mxu0 0.0
        %1572 = vmatprep.subr.mxu0 0.0
        %1573 = vmatpush1.msra.mxu0 0.0
        %1574 = vmatprep.subr.mxu0 0.0
        %1575 = vmatpush1.msra.mxu0 0.0
        %1576 = vmatprep.subr.mxu0 0.0
        %1577 = vmatpush1.msra.mxu0 0.0
        %1578 = vmatprep.subr.mxu0 0.0
        %1579 = vmatpush1.msra.mxu0 0.0
        %1580 = vmatprep.subr.mxu0 0.0
        %1581 = vmatpush1.msra.mxu0 0.0
        %1582 = vmatprep.subr.mxu0 0.0
        %1583 = vmatpush1.msra.mxu0 0.0
        %1584 = vmatprep.subr.mxu0 0.0
        %1585 = vmatpush1.msra.mxu0 0.0
        %1586 = vmatprep.mubr.f32.mxu0 0.0
        %1587 = vmatmul.mubr.f32.gmra.mrb[0].mxu0 %v1520
        %v1588 = vpop.f32.mrb[0].mxu0
        %v1589 = vadd.f32 %v1517, %v1588
        %v1590 = vpop.f32.mrb[0].mxu0
        %1591 = vdwg.mxu0
        %v1592 = vsel %vm1179, %v1589, 0.0
        %1593 = vadd.xlane.f32.xlu0 %v1592
        %v1594 = vpop.xlane.xlu0 %1593
        %v1595 = vmul.f32 %v1594, %v1186
        %v1596 = vsub.f32 %v1589, %v1595
        %v1597 = vmul.f32 %v1596, %v1596
        %v1598 = vsel %vm1179, %v1597, 0.0
        %1599 = vadd.xlane.f32.xlu0 %v1598
        %v1600 = vpop.xlane.xlu0 %1599
        %v1601 = vmul.f32 %v1600, %v1186
        %v1602 = vadd.f32 %v1601, 1e-05
        %v1603 = vrsqrt.pop %v1602
        %v1604 = vmul.f32 %v1596, %v1603
        %v1605 = vmul.f32 %v1604, %v1211
        %v1606 = vadd.f32 %v1605, %v1219
        %1607 = vst.msk [vmem:[#allocation2 + $0x10] sm:$0xff] %vm1179, %v1606
        %1608 = vst.msk [vmem:[#allocation3] sm:$0xff] %vm1317, %v1510
        %v1609 = vld [vmem:[#allocation3] ss:$2 sm:$0xf]
        %v1610 = vld [vmem:[%s21] sm:$0xff]
        %v1611 = vld [vmem:[%s1322] ss:$2 sm:$0xf]
        %s1612 = scalar_lea.vmem %s21, 8
        %v1613 = vld [vmem:[%s1612] sm:$0xff]
        %v1615 = vsel %vm1317, %v1611, 0
        %1617 = vmatprep.subr.mxu0 0.0
        %1618 = vmatpush1.msra.mxu0 %v1613
        %1619 = vmatprep.subr.mxu0 0.0
        %1620 = vmatpush1.msra.mxu0 0.0
        %1621 = vmatprep.subr.mxu0 0.0
        %1622 = vmatpush1.msra.mxu0 0.0
        %1623 = vmatprep.subr.mxu0 0.0
        %1624 = vmatpush1.msra.mxu0 0.0
        %1625 = vmatprep.subr.mxu0 0.0
        %1626 = vmatpush1.msra.mxu0 0.0
        %1627 = vmatprep.subr.mxu0 0.0
        %1628 = vmatpush1.msra.mxu0 0.0
        %1629 = vmatprep.subr.mxu0 0.0
        %1630 = vmatpush1.msra.mxu0 0.0
        %1631 = vmatprep.subr.mxu0 0.0
        %1632 = vmatpush1.msra.mxu0 0.0
        %1633 = vmatprep.subr.mxu0 0.0
        %1634 = vmatpush1.msra.mxu0 0.0
        %1635 = vmatprep.subr.mxu0 0.0
        %1636 = vmatpush1.msra.mxu0 0.0
        %1637 = vmatprep.subr.mxu0 0.0
        %1638 = vmatpush1.msra.mxu0 0.0
        %1639 = vmatprep.subr.mxu0 0.0
        %1640 = vmatpush1.msra.mxu0 0.0
        %1641 = vmatprep.subr.mxu0 0.0
        %1642 = vmatpush1.msra.mxu0 0.0
        %1643 = vmatprep.subr.mxu0 0.0
        %1644 = vmatpush1.msra.mxu0 0.0
        %1645 = vmatprep.subr.mxu0 0.0
        %1646 = vmatpush1.msra.mxu0 0.0
        %1647 = vmatprep.subr.mxu0 0.0
        %1648 = vmatpush1.msra.mxu0 0.0
        %1649 = vmatprep.subr.mxu0 0.0
        %1650 = vmatpush1.msra.mxu0 0.0
        %1651 = vmatprep.subr.mxu0 0.0
        %1652 = vmatpush1.msra.mxu0 0.0
        %1653 = vmatprep.subr.mxu0 0.0
        %1654 = vmatpush1.msra.mxu0 0.0
        %1655 = vmatprep.subr.mxu0 0.0
        %1656 = vmatpush1.msra.mxu0 0.0
        %1657 = vmatprep.subr.mxu0 0.0
        %1658 = vmatpush1.msra.mxu0 0.0
        %1659 = vmatprep.subr.mxu0 0.0
        %1660 = vmatpush1.msra.mxu0 0.0
        %1661 = vmatprep.subr.mxu0 0.0
        %1662 = vmatpush1.msra.mxu0 0.0
        %1663 = vmatprep.subr.mxu0 0.0
        %1664 = vmatpush1.msra.mxu0 0.0
        %1665 = vmatprep.subr.mxu0 0.0
        %1666 = vmatpush1.msra.mxu0 0.0
        %1667 = vmatprep.subr.mxu0 0.0
        %1668 = vmatpush1.msra.mxu0 0.0
        %1669 = vmatprep.subr.mxu0 0.0
        %1670 = vmatpush1.msra.mxu0 0.0
        %1671 = vmatprep.subr.mxu0 0.0
        %1672 = vmatpush1.msra.mxu0 0.0
        %1673 = vmatprep.subr.mxu0 0.0
        %1674 = vmatpush1.msra.mxu0 0.0
        %1675 = vmatprep.subr.mxu0 0.0
        %1676 = vmatpush1.msra.mxu0 0.0
        %1677 = vmatprep.subr.mxu0 0.0
        %1678 = vmatpush1.msra.mxu0 0.0
        %1679 = vmatprep.subr.mxu0 0.0
        %1680 = vmatpush1.msra.mxu0 0.0
        %1681 = vmatprep.mubr.f32.mxu0 0.0
        %1682 = vmatmul.mubr.f32.gmra.mrb[0].mxu0 %v1615
        %v1683 = vpop.f32.mrb[0].mxu0
        %v1684 = vadd.f32 0.0, %v1683
        %v1685 = vpop.f32.mrb[0].mxu0
        %1686 = vdwg.mxu0
        %v1688 = vsel %vm1317, %v1609, 0
        %1690 = vmatprep.subr.mxu0 0.0
        %1691 = vmatpush1.msra.mxu0 %v1610
        %1692 = vmatprep.subr.mxu0 0.0
        %1693 = vmatpush1.msra.mxu0 0.0
        %1694 = vmatprep.subr.mxu0 0.0
        %1695 = vmatpush1.msra.mxu0 0.0
        %1696 = vmatprep.subr.mxu0 0.0
        %1697 = vmatpush1.msra.mxu0 0.0
        %1698 = vmatprep.subr.mxu0 0.0
        %1699 = vmatpush1.msra.mxu0 0.0
        %1700 = vmatprep.subr.mxu0 0.0
        %1701 = vmatpush1.msra.mxu0 0.0
        %1702 = vmatprep.subr.mxu0 0.0
        %1703 = vmatpush1.msra.mxu0 0.0
        %1704 = vmatprep.subr.mxu0 0.0
        %1705 = vmatpush1.msra.mxu0 0.0
        %1706 = vmatprep.subr.mxu0 0.0
        %1707 = vmatpush1.msra.mxu0 0.0
        %1708 = vmatprep.subr.mxu0 0.0
        %1709 = vmatpush1.msra.mxu0 0.0
        %1710 = vmatprep.subr.mxu0 0.0
        %1711 = vmatpush1.msra.mxu0 0.0
        %1712 = vmatprep.subr.mxu0 0.0
        %1713 = vmatpush1.msra.mxu0 0.0
        %1714 = vmatprep.subr.mxu0 0.0
        %1715 = vmatpush1.msra.mxu0 0.0
        %1716 = vmatprep.subr.mxu0 0.0
        %1717 = vmatpush1.msra.mxu0 0.0
        %1718 = vmatprep.subr.mxu0 0.0
        %1719 = vmatpush1.msra.mxu0 0.0
        %1720 = vmatprep.subr.mxu0 0.0
        %1721 = vmatpush1.msra.mxu0 0.0
        %1722 = vmatprep.subr.mxu0 0.0
        %1723 = vmatpush1.msra.mxu0 0.0
        %1724 = vmatprep.subr.mxu0 0.0
        %1725 = vmatpush1.msra.mxu0 0.0
        %1726 = vmatprep.subr.mxu0 0.0
        %1727 = vmatpush1.msra.mxu0 0.0
        %1728 = vmatprep.subr.mxu0 0.0
        %1729 = vmatpush1.msra.mxu0 0.0
        %1730 = vmatprep.subr.mxu0 0.0
        %1731 = vmatpush1.msra.mxu0 0.0
        %1732 = vmatprep.subr.mxu0 0.0
        %1733 = vmatpush1.msra.mxu0 0.0
        %1734 = vmatprep.subr.mxu0 0.0
        %1735 = vmatpush1.msra.mxu0 0.0
        %1736 = vmatprep.subr.mxu0 0.0
        %1737 = vmatpush1.msra.mxu0 0.0
        %1738 = vmatprep.subr.mxu0 0.0
        %1739 = vmatpush1.msra.mxu0 0.0
        %1740 = vmatprep.subr.mxu0 0.0
        %1741 = vmatpush1.msra.mxu0 0.0
        %1742 = vmatprep.subr.mxu0 0.0
        %1743 = vmatpush1.msra.mxu0 0.0
        %1744 = vmatprep.subr.mxu0 0.0
        %1745 = vmatpush1.msra.mxu0 0.0
        %1746 = vmatprep.subr.mxu0 0.0
        %1747 = vmatpush1.msra.mxu0 0.0
        %1748 = vmatprep.subr.mxu0 0.0
        %1749 = vmatpush1.msra.mxu0 0.0
        %1750 = vmatprep.subr.mxu0 0.0
        %1751 = vmatpush1.msra.mxu0 0.0
        %1752 = vmatprep.subr.mxu0 0.0
        %1753 = vmatpush1.msra.mxu0 0.0
        %1754 = vmatprep.mubr.f32.mxu0 0.0
        %1755 = vmatmul.mubr.f32.gmra.mrb[0].mxu0 %v1688
        %v1756 = vpop.f32.mrb[0].mxu0
        %v1757 = vadd.f32 %v1684, %v1756
        %v1758 = vpop.f32.mrb[0].mxu0
        %1759 = vdwg.mxu0
        %v1760 = vld [vmem:[%s23] sm:$0x1]
        %v1762 = vlaneseq
        %v1763 = vshrl.u32 %v1762, 7
        %v1764 = vsub.s32 0, %v1763
        %v1765 = vrot.slane %v1760, %v1764
        %v1767 = vadd.f32 %v1757, %v1765
        %v1768 = vld [vmem:[%s25] sm:$0x1]
        %v1769 = vld [vmem:[%s25 + $0x1] sm:$0x1]
        %v1770 = vld [vmem:[%s25 + $0x2] sm:$0x1]
        %v1771 = vld [vmem:[%s25 + $0x3] sm:$0x1]
        %v1772 = vlaneseq
        %v1773 = vshrl.u32 %v1772, 7
        %v1774 = vsub.s32 0, %v1773
        %v1775 = vrot.slane %v1770, %v1774
        %v1776 = vsub.f32 %v1767, %v1775
        %v1777 = vadd.f32 %v1771, 1e-05
        %v1778 = vrsqrt.pop %v1777
        %v1779 = vlaneseq
        %v1780 = vshrl.u32 %v1779, 7
        %v1781 = vsub.s32 0, %v1780
        %v1782 = vrot.slane %v1778, %v1781
        %v1783 = vmul.f32 %v1776, %v1782
        %v1784 = vlaneseq
        %v1785 = vshrl.u32 %v1784, 7
        %v1786 = vsub.s32 0, %v1785
        %v1787 = vrot.slane %v1768, %v1786
        %v1788 = vmul.f32 %v1783, %v1787
        %v1789 = vlaneseq
        %v1790 = vshrl.u32 %v1789, 7
        %v1791 = vsub.s32 0, %v1790
        %v1792 = vrot.slane %v1769, %v1791
        %v1793 = vadd.f32 %v1788, %v1792
        %vm1794 = vcmp.gt.f32.partialorder %v1793, 0.0
        %v1795 = vmul.f32 %v1793, 1.442695
        %v1796 = vpow.pop %v1795
        %v1797 = vsub.f32 %v1796, 1.0
        %v1798 = vsel %vm1794, %v1793, %v1797
        %v1799 = vld [vmem:[%s27] sm:$0xff]
        %v1800 = vld [vmem:[%s29] sm:$0x1]
        %v1802 = vlaneseq
        %v1803 = vshrl.u32 %v1802, 7
        %v1804 = vsub.s32 0, %v1803
        %v1805 = vrot.slane %v1800, %v1804
        %v1808 = vsel %vm1317, %v1798, 0
        %1810 = vmatprep.subr.mxu0 0.0
        %1811 = vmatpush1.msra.mxu0 %v1799
        %1812 = vmatprep.subr.mxu0 0.0
        %1813 = vmatpush1.msra.mxu0 0.0
        %1814 = vmatprep.subr.mxu0 0.0
        %1815 = vmatpush1.msra.mxu0 0.0
        %1816 = vmatprep.subr.mxu0 0.0
        %1817 = vmatpush1.msra.mxu0 0.0
        %1818 = vmatprep.subr.mxu0 0.0
        %1819 = vmatpush1.msra.mxu0 0.0
        %1820 = vmatprep.subr.mxu0 0.0
        %1821 = vmatpush1.msra.mxu0 0.0
        %1822 = vmatprep.subr.mxu0 0.0
        %1823 = vmatpush1.msra.mxu0 0.0
        %1824 = vmatprep.subr.mxu0 0.0
        %1825 = vmatpush1.msra.mxu0 0.0
        %1826 = vmatprep.subr.mxu0 0.0
        %1827 = vmatpush1.msra.mxu0 0.0
        %1828 = vmatprep.subr.mxu0 0.0
        %1829 = vmatpush1.msra.mxu0 0.0
        %1830 = vmatprep.subr.mxu0 0.0
        %1831 = vmatpush1.msra.mxu0 0.0
        %1832 = vmatprep.subr.mxu0 0.0
        %1833 = vmatpush1.msra.mxu0 0.0
        %1834 = vmatprep.subr.mxu0 0.0
        %1835 = vmatpush1.msra.mxu0 0.0
        %1836 = vmatprep.subr.mxu0 0.0
        %1837 = vmatpush1.msra.mxu0 0.0
        %1838 = vmatprep.subr.mxu0 0.0
        %1839 = vmatpush1.msra.mxu0 0.0
        %1840 = vmatprep.subr.mxu0 0.0
        %1841 = vmatpush1.msra.mxu0 0.0
        %1842 = vmatprep.subr.mxu0 0.0
        %1843 = vmatpush1.msra.mxu0 0.0
        %1844 = vmatprep.subr.mxu0 0.0
        %1845 = vmatpush1.msra.mxu0 0.0
        %1846 = vmatprep.subr.mxu0 0.0
        %1847 = vmatpush1.msra.mxu0 0.0
        %1848 = vmatprep.subr.mxu0 0.0
        %1849 = vmatpush1.msra.mxu0 0.0
        %1850 = vmatprep.subr.mxu0 0.0
        %1851 = vmatpush1.msra.mxu0 0.0
        %1852 = vmatprep.subr.mxu0 0.0
        %1853 = vmatpush1.msra.mxu0 0.0
        %1854 = vmatprep.subr.mxu0 0.0
        %1855 = vmatpush1.msra.mxu0 0.0
        %1856 = vmatprep.subr.mxu0 0.0
        %1857 = vmatpush1.msra.mxu0 0.0
        %1858 = vmatprep.subr.mxu0 0.0
        %1859 = vmatpush1.msra.mxu0 0.0
        %1860 = vmatprep.subr.mxu0 0.0
        %1861 = vmatpush1.msra.mxu0 0.0
        %1862 = vmatprep.subr.mxu0 0.0
        %1863 = vmatpush1.msra.mxu0 0.0
        %1864 = vmatprep.subr.mxu0 0.0
        %1865 = vmatpush1.msra.mxu0 0.0
        %1866 = vmatprep.subr.mxu0 0.0
        %1867 = vmatpush1.msra.mxu0 0.0
        %1868 = vmatprep.subr.mxu0 0.0
        %1869 = vmatpush1.msra.mxu0 0.0
        %1870 = vmatprep.subr.mxu0 0.0
        %1871 = vmatpush1.msra.mxu0 0.0
        %1872 = vmatprep.subr.mxu0 0.0
        %1873 = vmatpush1.msra.mxu0 0.0
        %1874 = vmatprep.mubr.f32.mxu0 0.0
        %1875 = vmatmul.mubr.f32.gmra.mrb[0].mxu0 %v1808
        %v1876 = vpop.f32.mrb[0].mxu0
        %v1877 = vadd.f32 %v1805, %v1876
        %v1878 = vpop.f32.mrb[0].mxu0
        %1879 = vdwg.mxu0
        %vm1880 = vcmask 257024
        %v1881 = vsel %vm1880, %v1877, 0.0
        %1882 = vadd.xlane.f32.xlu0 %v1881
        %v1883 = vpop.xlane.xlu0 %1882
        %v1884 = vmul.f32 %v1883, %v1186
        %v1885 = vsub.f32 %v1877, %v1884
        %v1886 = vmul.f32 %v1885, %v1885
        %v1887 = vsel %vm1880, %v1886, 0.0
        %1888 = vadd.xlane.f32.xlu0 %v1887
        %v1889 = vpop.xlane.xlu0 %1888
        %v1890 = vmul.f32 %v1889, %v1186
        %v1891 = vadd.f32 %v1890, 1e-05
        %v1892 = vrsqrt.pop %v1891
        %v1893 = vmul.f32 %v1885, %v1892
        %v1894 = vmul.f32 %v1893, %v1211
        %v1895 = vadd.f32 %v1894, %v1219
        %1896 = vst.msk [vmem:[#allocation2 + $0x18] sm:$0xf] %vm1880, %v1895
        %vm1897 = vcmask 60416
        %1898 = vst.msk [vmem:[#allocation3] sm:$0xf] %vm1897, %v1798
        %v1899 = vld [vmem:[%s35] sm:$0xff]
        %v1900 = vld [vmem:[%s35 + $0x8] sm:$0xff]
        %v1901 = vld [vmem:[%s35 + $0x10] sm:$0xff]
        %v1902 = vld [vmem:[%s35 + $0x18] sm:$0xf]
        %v1903 = vld [vmem:[#allocation2] sm:$0xff]
        %v1904 = vld [vmem:[#allocation2 + $0x8] sm:$0xff]
        %v1905 = vld [vmem:[#allocation2 + $0x10] sm:$0xff]
        %v1906 = vld [vmem:[#allocation2 + $0x18] sm:$0xf]
        %v1907 = vld [vmem:[%s39] sm:$0xff]
        %v1908 = vld [vmem:[%s39 + $0x8] sm:$0xff]
        %v1909 = vld [vmem:[%s39 + $0x10] sm:$0xff]
        %v1910 = vld [vmem:[%s39 + $0x18] sm:$0xff]
        %v1912 = vsel %vm1179, %v1903, 0
        %v1915 = vsel %vm1179, %v1904, 0
        %v1918 = vsel %vm1179, %v1905, 0
        %v1921 = vsel %vm1179, %v1906, 0
        %1923 = vmatprep.subr.mxu0 0.0
        %1924 = vmatpush1.msra.mxu0 %v1907
        %1925 = vmatprep.subr.mxu0 0.0
        %1926 = vmatpush1.msra.mxu0 %v1908
        %1927 = vmatprep.subr.mxu0 0.0
        %1928 = vmatpush1.msra.mxu0 %v1909
        %1929 = vmatprep.subr.mxu0 0.0
        %1930 = vmatpush1.msra.mxu0 %v1910
        %1931 = vmatprep.subr.mxu0 0.0
        %1932 = vmatpush1.msra.mxu0 0.0
        %1933 = vmatprep.subr.mxu0 0.0
        %1934 = vmatpush1.msra.mxu0 0.0
        %1935 = vmatprep.subr.mxu0 0.0
        %1936 = vmatpush1.msra.mxu0 0.0
        %1937 = vmatprep.subr.mxu0 0.0
        %1938 = vmatpush1.msra.mxu0 0.0
        %1939 = vmatprep.subr.mxu0 0.0
        %1940 = vmatpush1.msra.mxu0 0.0
        %1941 = vmatprep.subr.mxu0 0.0
        %1942 = vmatpush1.msra.mxu0 0.0
        %1943 = vmatprep.subr.mxu0 0.0
        %1944 = vmatpush1.msra.mxu0 0.0
        %1945 = vmatprep.subr.mxu0 0.0
        %1946 = vmatpush1.msra.mxu0 0.0
        %1947 = vmatprep.subr.mxu0 0.0
        %1948 = vmatpush1.msra.mxu0 0.0
        %1949 = vmatprep.subr.mxu0 0.0
        %1950 = vmatpush1.msra.mxu0 0.0
        %1951 = vmatprep.subr.mxu0 0.0
        %1952 = vmatpush1.msra.mxu0 0.0
        %1953 = vmatprep.subr.mxu0 0.0
        %1954 = vmatpush1.msra.mxu0 0.0
        %1955 = vmatprep.subr.mxu0 0.0
        %1956 = vmatpush1.msra.mxu0 0.0
        %1957 = vmatprep.subr.mxu0 0.0
        %1958 = vmatpush1.msra.mxu0 0.0
        %1959 = vmatprep.subr.mxu0 0.0
        %1960 = vmatpush1.msra.mxu0 0.0
        %1961 = vmatprep.subr.mxu0 0.0
        %1962 = vmatpush1.msra.mxu0 0.0
        %1963 = vmatprep.subr.mxu0 0.0
        %1964 = vmatpush1.msra.mxu0 0.0
        %1965 = vmatprep.subr.mxu0 0.0
        %1966 = vmatpush1.msra.mxu0 0.0
        %1967 = vmatprep.subr.mxu0 0.0
        %1968 = vmatpush1.msra.mxu0 0.0
        %1969 = vmatprep.subr.mxu0 0.0
        %1970 = vmatpush1.msra.mxu0 0.0
        %1971 = vmatprep.subr.mxu0 0.0
        %1972 = vmatpush1.msra.mxu0 0.0
        %1973 = vmatprep.subr.mxu0 0.0
        %1974 = vmatpush1.msra.mxu0 0.0
        %1975 = vmatprep.subr.mxu0 0.0
        %1976 = vmatpush1.msra.mxu0 0.0
        %1977 = vmatprep.subr.mxu0 0.0
        %1978 = vmatpush1.msra.mxu0 0.0
        %1979 = vmatprep.subr.mxu0 0.0
        %1980 = vmatpush1.msra.mxu0 0.0
        %1981 = vmatprep.subr.mxu0 0.0
        %1982 = vmatpush1.msra.mxu0 0.0
        %1983 = vmatprep.subr.mxu0 0.0
        %1984 = vmatpush1.msra.mxu0 0.0
        %1985 = vmatprep.subr.mxu0 0.0
        %1986 = vmatpush1.msra.mxu0 0.0
        %1987 = vmatprep.mubr.f32.mxu0 0.0
        %1988 = vmatmul.mubr.f32.gmra.mrb[0].mxu0 %v1912
        %v1989 = vpop.f32.mrb[0].mxu0
        %v1990 = vadd.f32 0.0, %v1989
        %v1991 = vpop.f32.mrb[0].mxu0
        %1992 = vmatprep.mubr.f32.mxu0 0.0
        %1993 = vmatmul.mubr.f32.gmra.mrb[0].mxu0 %v1915
        %v1994 = vpop.f32.mrb[0].mxu0
        %v1995 = vadd.f32 0.0, %v1994
        %v1996 = vpop.f32.mrb[0].mxu0
        %1997 = vmatprep.mubr.f32.mxu0 0.0
        %1998 = vmatmul.mubr.f32.gmra.mrb[0].mxu0 %v1918
        %v1999 = vpop.f32.mrb[0].mxu0
        %v2000 = vadd.f32 0.0, %v1999
        %v2001 = vpop.f32.mrb[0].mxu0
        %2002 = vmatprep.mubr.f32.mxu0 0.0
        %2003 = vmatmul.mubr.f32.gmra.mrb[0].mxu0 %v1921
        %v2004 = vpop.f32.mrb[0].mxu0
        %v2005 = vadd.f32 0.0, %v2004
        %v2006 = vpop.f32.mrb[0].mxu0
        %2007 = vdwg.mxu0
        %v2008 = vld [vmem:[%s41] sm:$0xff]
        %v2009 = vld [vmem:[%s41 + $0x8] sm:$0xff]
        %v2010 = vld [vmem:[%s41 + $0x10] sm:$0xff]
        %v2011 = vld [vmem:[%s41 + $0x18] sm:$0xff]
        %2012 = vmatprep.subr.mxu0 0.0
        %2013 = vmatpush1.msra.mxu0 %v2008
        %2014 = vmatprep.subr.mxu0 0.0
        %2015 = vmatpush1.msra.mxu0 %v2009
        %2016 = vmatprep.subr.mxu0 0.0
        %2017 = vmatpush1.msra.mxu0 %v2010
        %2018 = vmatprep.subr.mxu0 0.0
        %2019 = vmatpush1.msra.mxu0 %v2011
        %2020 = vmatprep.subr.mxu0 0.0
        %2021 = vmatpush1.msra.mxu0 0.0
        %2022 = vmatprep.subr.mxu0 0.0
        %2023 = vmatpush1.msra.mxu0 0.0
        %2024 = vmatprep.subr.mxu0 0.0
        %2025 = vmatpush1.msra.mxu0 0.0
        %2026 = vmatprep.subr.mxu0 0.0
        %2027 = vmatpush1.msra.mxu0 0.0
        %2028 = vmatprep.subr.mxu0 0.0
        %2029 = vmatpush1.msra.mxu0 0.0
        %2030 = vmatprep.subr.mxu0 0.0
        %2031 = vmatpush1.msra.mxu0 0.0
        %2032 = vmatprep.subr.mxu0 0.0
        %2033 = vmatpush1.msra.mxu0 0.0
        %2034 = vmatprep.subr.mxu0 0.0
        %2035 = vmatpush1.msra.mxu0 0.0
        %2036 = vmatprep.subr.mxu0 0.0
        %2037 = vmatpush1.msra.mxu0 0.0
        %2038 = vmatprep.subr.mxu0 0.0
        %2039 = vmatpush1.msra.mxu0 0.0
        %2040 = vmatprep.subr.mxu0 0.0
        %2041 = vmatpush1.msra.mxu0 0.0
        %2042 = vmatprep.subr.mxu0 0.0
        %2043 = vmatpush1.msra.mxu0 0.0
        %2044 = vmatprep.subr.mxu0 0.0
        %2045 = vmatpush1.msra.mxu0 0.0
        %2046 = vmatprep.subr.mxu0 0.0
        %2047 = vmatpush1.msra.mxu0 0.0
        %2048 = vmatprep.subr.mxu0 0.0
        %2049 = vmatpush1.msra.mxu0 0.0
        %2050 = vmatprep.subr.mxu0 0.0
        %2051 = vmatpush1.msra.mxu0 0.0
        %2052 = vmatprep.subr.mxu0 0.0
        %2053 = vmatpush1.msra.mxu0 0.0
        %2054 = vmatprep.subr.mxu0 0.0
        %2055 = vmatpush1.msra.mxu0 0.0
        %2056 = vmatprep.subr.mxu0 0.0
        %2057 = vmatpush1.msra.mxu0 0.0
        %2058 = vmatprep.subr.mxu0 0.0
        %2059 = vmatpush1.msra.mxu0 0.0
        %2060 = vmatprep.subr.mxu0 0.0
        %2061 = vmatpush1.msra.mxu0 0.0
        %2062 = vmatprep.subr.mxu0 0.0
        %2063 = vmatpush1.msra.mxu0 0.0
        %2064 = vmatprep.subr.mxu0 0.0
        %2065 = vmatpush1.msra.mxu0 0.0
        %2066 = vmatprep.subr.mxu0 0.0
        %2067 = vmatpush1.msra.mxu0 0.0
        %2068 = vmatprep.subr.mxu0 0.0
        %2069 = vmatpush1.msra.mxu0 0.0
        %2070 = vmatprep.subr.mxu0 0.0
        %2071 = vmatpush1.msra.mxu0 0.0
        %2072 = vmatprep.subr.mxu0 0.0
        %2073 = vmatpush1.msra.mxu0 0.0
        %2074 = vmatprep.subr.mxu0 0.0
        %2075 = vmatpush1.msra.mxu0 0.0
        %2076 = vmatprep.mubr.f32.mxu0 0.0
        %2077 = vmatmul.mubr.f32.gmra.mrb[0].mxu0 %v1912
        %v2078 = vpop.f32.mrb[0].mxu0
        %v2079 = vadd.f32 0.0, %v2078
        %v2080 = vpop.f32.mrb[0].mxu0
        %2081 = vmatprep.mubr.f32.mxu0 0.0
        %2082 = vmatmul.mubr.f32.gmra.mrb[0].mxu0 %v1915
        %v2083 = vpop.f32.mrb[0].mxu0
        %v2084 = vadd.f32 0.0, %v2083
        %v2085 = vpop.f32.mrb[0].mxu0
        %2086 = vmatprep.mubr.f32.mxu0 0.0
        %2087 = vmatmul.mubr.f32.gmra.mrb[0].mxu0 %v1918
        %v2088 = vpop.f32.mrb[0].mxu0
        %v2089 = vadd.f32 0.0, %v2088
        %v2090 = vpop.f32.mrb[0].mxu0
        %2091 = vmatprep.mubr.f32.mxu0 0.0
        %2092 = vmatmul.mubr.f32.gmra.mrb[0].mxu0 %v1921
        %v2093 = vpop.f32.mrb[0].mxu0
        %v2094 = vadd.f32 0.0, %v2093
        %v2095 = vpop.f32.mrb[0].mxu0
        %2096 = vdwg.mxu0
        %v2097 = vld [vmem:[%s43] sm:$0xff]
        %v2098 = vld [vmem:[%s43 + $0x8] sm:$0xff]
        %v2099 = vld [vmem:[%s43 + $0x10] sm:$0xff]
        %v2100 = vld [vmem:[%s43 + $0x18] sm:$0xff]
        %2101 = vmatprep.subr.mxu0 0.0
        %2102 = vmatpush1.msra.mxu0 %v2097
        %2103 = vmatprep.subr.mxu0 0.0
        %2104 = vmatpush1.msra.mxu0 %v2098
        %2105 = vmatprep.subr.mxu0 0.0
        %2106 = vmatpush1.msra.mxu0 %v2099
        %2107 = vmatprep.subr.mxu0 0.0
        %2108 = vmatpush1.msra.mxu0 %v2100
        %2109 = vmatprep.subr.mxu0 0.0
        %2110 = vmatpush1.msra.mxu0 0.0
        %2111 = vmatprep.subr.mxu0 0.0
        %2112 = vmatpush1.msra.mxu0 0.0
        %2113 = vmatprep.subr.mxu0 0.0
        %2114 = vmatpush1.msra.mxu0 0.0
        %2115 = vmatprep.subr.mxu0 0.0
        %2116 = vmatpush1.msra.mxu0 0.0
        %2117 = vmatprep.subr.mxu0 0.0
        %2118 = vmatpush1.msra.mxu0 0.0
        %2119 = vmatprep.subr.mxu0 0.0
        %2120 = vmatpush1.msra.mxu0 0.0
        %2121 = vmatprep.subr.mxu0 0.0
        %2122 = vmatpush1.msra.mxu0 0.0
        %2123 = vmatprep.subr.mxu0 0.0
        %2124 = vmatpush1.msra.mxu0 0.0
        %2125 = vmatprep.subr.mxu0 0.0
        %2126 = vmatpush1.msra.mxu0 0.0
        %2127 = vmatprep.subr.mxu0 0.0
        %2128 = vmatpush1.msra.mxu0 0.0
        %2129 = vmatprep.subr.mxu0 0.0
        %2130 = vmatpush1.msra.mxu0 0.0
        %2131 = vmatprep.subr.mxu0 0.0
        %2132 = vmatpush1.msra.mxu0 0.0
        %2133 = vmatprep.subr.mxu0 0.0
        %2134 = vmatpush1.msra.mxu0 0.0
        %2135 = vmatprep.subr.mxu0 0.0
        %2136 = vmatpush1.msra.mxu0 0.0
        %2137 = vmatprep.subr.mxu0 0.0
        %2138 = vmatpush1.msra.mxu0 0.0
        %2139 = vmatprep.subr.mxu0 0.0
        %2140 = vmatpush1.msra.mxu0 0.0
        %2141 = vmatprep.subr.mxu0 0.0
        %2142 = vmatpush1.msra.mxu0 0.0
        %2143 = vmatprep.subr.mxu0 0.0
        %2144 = vmatpush1.msra.mxu0 0.0
        %2145 = vmatprep.subr.mxu0 0.0
        %2146 = vmatpush1.msra.mxu0 0.0
        %2147 = vmatprep.subr.mxu0 0.0
        %2148 = vmatpush1.msra.mxu0 0.0
        %2149 = vmatprep.subr.mxu0 0.0
        %2150 = vmatpush1.msra.mxu0 0.0
        %2151 = vmatprep.subr.mxu0 0.0
        %2152 = vmatpush1.msra.mxu0 0.0
        %2153 = vmatprep.subr.mxu0 0.0
        %2154 = vmatpush1.msra.mxu0 0.0
        %2155 = vmatprep.subr.mxu0 0.0
        %2156 = vmatpush1.msra.mxu0 0.0
        %2157 = vmatprep.subr.mxu0 0.0
        %2158 = vmatpush1.msra.mxu0 0.0
        %2159 = vmatprep.subr.mxu0 0.0
        %2160 = vmatpush1.msra.mxu0 0.0
        %2161 = vmatprep.subr.mxu0 0.0
        %2162 = vmatpush1.msra.mxu0 0.0
        %2163 = vmatprep.subr.mxu0 0.0
        %2164 = vmatpush1.msra.mxu0 0.0
        %2165 = vmatprep.mubr.f32.mxu0 0.0
        %2166 = vmatmul.mubr.f32.gmra.mrb[0].mxu0 %v1912
        %v2167 = vpop.f32.mrb[0].mxu0
        %v2168 = vadd.f32 0.0, %v2167
        %v2169 = vpop.f32.mrb[0].mxu0
        %2170 = vmatprep.mubr.f32.mxu0 0.0
        %2171 = vmatmul.mubr.f32.gmra.mrb[0].mxu0 %v1915
        %v2172 = vpop.f32.mrb[0].mxu0
        %v2173 = vadd.f32 0.0, %v2172
        %v2174 = vpop.f32.mrb[0].mxu0
        %2175 = vmatprep.mubr.f32.mxu0 0.0
        %2176 = vmatmul.mubr.f32.gmra.mrb[0].mxu0 %v1918
        %v2177 = vpop.f32.mrb[0].mxu0
        %v2178 = vadd.f32 0.0, %v2177
        %v2179 = vpop.f32.mrb[0].mxu0
        %2180 = vmatprep.mubr.f32.mxu0 0.0
        %2181 = vmatmul.mubr.f32.gmra.mrb[0].mxu0 %v1921
        %v2182 = vpop.f32.mrb[0].mxu0
        %v2183 = vadd.f32 0.0, %v2182
        %v2184 = vpop.f32.mrb[0].mxu0
        %2185 = vdwg.mxu0
        %v2187 = vsel %vm1317, %v1990, 0
        %v2190 = vsel %vm1317, %v1995, 0
        %v2193 = vsel %vm1317, %v2000, 0
        %v2196 = vsel %vm1317, %v2005, 0
        %v2199 = vsel %vm1317, %v2079, 0
        %v2202 = vsel %vm1317, %v2084, 0
        %v2205 = vsel %vm1317, %v2089, 0
        %v2208 = vsel %vm1317, %v2094, 0
        %2210 = vmatprep.subr.mxu0 0.0
        %2211 = vmatpush1.xpose.msra.mxu0 %v2199
        %2212 = vmatprep.subr.mxu0 0.0
        %2213 = vmatpush1.xpose.msra.mxu0 %v2202
        %2214 = vmatprep.subr.mxu0 0.0
        %2215 = vmatpush1.xpose.msra.mxu0 %v2205
        %2216 = vmatprep.subr.mxu0 0.0
        %2217 = vmatpush1.xpose.msra.mxu0 %v2208
        %2218 = vmatprep.subr.mxu0 0.0
        %2219 = vmatpush1.xpose.msra.mxu0 0.0
        %2220 = vmatprep.subr.mxu0 0.0
        %2221 = vmatpush1.xpose.msra.mxu0 0.0
        %2222 = vmatprep.subr.mxu0 0.0
        %2223 = vmatpush1.xpose.msra.mxu0 0.0
        %2224 = vmatprep.subr.mxu0 0.0
        %2225 = vmatpush1.xpose.msra.mxu0 0.0
        %2226 = vmatprep.subr.mxu0 0.0
        %2227 = vmatpush1.xpose.msra.mxu0 0.0
        %2228 = vmatprep.subr.mxu0 0.0
        %2229 = vmatpush1.xpose.msra.mxu0 0.0
        %2230 = vmatprep.subr.mxu0 0.0
        %2231 = vmatpush1.xpose.msra.mxu0 0.0
        %2232 = vmatprep.subr.mxu0 0.0
        %2233 = vmatpush1.xpose.msra.mxu0 0.0
        %2234 = vmatprep.subr.mxu0 0.0
        %2235 = vmatpush1.xpose.msra.mxu0 0.0
        %2236 = vmatprep.subr.mxu0 0.0
        %2237 = vmatpush1.xpose.msra.mxu0 0.0
        %2238 = vmatprep.subr.mxu0 0.0
        %2239 = vmatpush1.xpose.msra.mxu0 0.0
        %2240 = vmatprep.subr.mxu0 0.0
        %2241 = vmatpush1.xpose.msra.mxu0 0.0
        %2242 = vmatprep.subr.mxu0 0.0
        %2243 = vmatpush1.xpose.msra.mxu0 0.0
        %2244 = vmatprep.subr.mxu0 0.0
        %2245 = vmatpush1.xpose.msra.mxu0 0.0
        %2246 = vmatprep.subr.mxu0 0.0
        %2247 = vmatpush1.xpose.msra.mxu0 0.0
        %2248 = vmatprep.subr.mxu0 0.0
        %2249 = vmatpush1.xpose.msra.mxu0 0.0
        %2250 = vmatprep.subr.mxu0 0.0
        %2251 = vmatpush1.xpose.msra.mxu0 0.0
        %2252 = vmatprep.subr.mxu0 0.0
        %2253 = vmatpush1.xpose.msra.mxu0 0.0
        %2254 = vmatprep.subr.mxu0 0.0
        %2255 = vmatpush1.xpose.msra.mxu0 0.0
        %2256 = vmatprep.subr.mxu0 0.0
        %2257 = vmatpush1.xpose.msra.mxu0 0.0
        %2258 = vmatprep.subr.mxu0 0.0
        %2259 = vmatpush1.xpose.msra.mxu0 0.0
        %2260 = vmatprep.subr.mxu0 0.0
        %2261 = vmatpush1.xpose.msra.mxu0 0.0
        %2262 = vmatprep.subr.mxu0 0.0
        %2263 = vmatpush1.xpose.msra.mxu0 0.0
        %2264 = vmatprep.subr.mxu0 0.0
        %2265 = vmatpush1.xpose.msra.mxu0 0.0
        %2266 = vmatprep.subr.mxu0 0.0
        %2267 = vmatpush1.xpose.msra.mxu0 0.0
        %2268 = vmatprep.subr.mxu0 0.0
        %2269 = vmatpush1.xpose.msra.mxu0 0.0
        %2270 = vmatprep.subr.mxu0 0.0
        %2271 = vmatpush1.xpose.msra.mxu0 0.0
        %2272 = vmatprep.subr.mxu0 0.0
        %2273 = vmatpush1.xpose.msra.mxu0 0.0
        %2274 = vmatprep.mubr.f32.mxu0 0.0
        %2275 = vmatmul.mubr.f32.gmra.mrb[0].mxu0 %v2187
        %v2276 = vpop.f32.mrb[0].mxu0
        %v2277 = vadd.f32 %v1899, %v2276
        %v2278 = vpop.f32.mrb[0].mxu0
        %2279 = vmatprep.mubr.f32.mxu0 0.0
        %2280 = vmatmul.mubr.f32.gmra.mrb[0].mxu0 %v2190
        %v2281 = vpop.f32.mrb[0].mxu0
        %v2282 = vadd.f32 %v1900, %v2281
        %v2283 = vpop.f32.mrb[0].mxu0
        %2284 = vmatprep.mubr.f32.mxu0 0.0
        %2285 = vmatmul.mubr.f32.gmra.mrb[0].mxu0 %v2193
        %v2286 = vpop.f32.mrb[0].mxu0
        %v2287 = vadd.f32 %v1901, %v2286
        %v2288 = vpop.f32.mrb[0].mxu0
        %2289 = vmatprep.mubr.f32.mxu0 0.0
        %2290 = vmatmul.mubr.f32.gmra.mrb[0].mxu0 %v2196
        %v2291 = vpop.f32.mrb[0].mxu0
        %v2292 = vadd.f32 %v1902, %v2291
        %v2293 = vpop.f32.mrb[0].mxu0
        %2294 = vdwg.mxu0
        %vm2295 = vcmask 228352
        %v2296 = vsel %vm2295, %v2277, -inf
        %2297 = vmax.xlane.f32.xlu0 %v2296
        %v2298 = vpop.xlane.xlu0 %2297
        %v2299 = vsel %vm2295, %v2282, -inf
        %2300 = vmax.xlane.f32.xlu0 %v2299
        %v2301 = vpop.xlane.xlu0 %2300
        %v2302 = vsel %vm2295, %v2287, -inf
        %2303 = vmax.xlane.f32.xlu0 %v2302
        %v2304 = vpop.xlane.xlu0 %2303
        %vm2305 = vcmask 224256
        %v2306 = vsel %vm2305, %v2292, -inf
        %2307 = vmax.xlane.f32.xlu0 %v2306
        %v2308 = vpop.xlane.xlu0 %2307
        %v2309 = vsub.f32 %v2277, %v2298
        %v2310 = vsub.f32 %v2282, %v2301
        %v2311 = vsub.f32 %v2287, %v2304
        %v2312 = vsub.f32 %v2292, %v2308
        %v2313 = vmul.f32 %v2309, 1.442695
        %v2314 = vpow.pop %v2313
        %v2315 = vmul.f32 %v2310, 1.442695
        %v2316 = vpow.pop %v2315
        %v2317 = vmul.f32 %v2311, 1.442695
        %v2318 = vpow.pop %v2317
        %v2319 = vmul.f32 %v2312, 1.442695
        %v2320 = vpow.pop %v2319
        %v2321 = vsel %vm2295, %v2314, 0.0
        %2322 = vadd.xlane.f32.xlu0 %v2321
        %v2323 = vpop.xlane.xlu0 %2322
        %v2324 = vsel %vm2295, %v2316, 0.0
        %2325 = vadd.xlane.f32.xlu0 %v2324
        %v2326 = vpop.xlane.xlu0 %2325
        %v2327 = vsel %vm2295, %v2318, 0.0
        %2328 = vadd.xlane.f32.xlu0 %v2327
        %v2329 = vpop.xlane.xlu0 %2328
        %v2330 = vsel %vm2305, %v2320, 0.0
        %2331 = vadd.xlane.f32.xlu0 %v2330
        %v2332 = vpop.xlane.xlu0 %2331
        %v2333 = vrcp.pop %v2323
        %v2334 = vrcp.pop %v2326
        %v2335 = vrcp.pop %v2329
        %v2336 = vrcp.pop %v2332
        %v2338 = vsel %vm2295, %v2314, 0
        %v2341 = vsel %vm2295, %v2316, 0
        %v2344 = vsel %vm2295, %v2318, 0
        %v2347 = vsel %vm2295, %v2320, 0
        %vm2349 = vcmask 1043456
        %v2351 = vsel %vm2349, %v2183, 0
        %2353 = vmatprep.subr.mxu0 0.0
        %2354 = vmatpush1.msra.mxu0 %v2168
        %2355 = vmatprep.subr.mxu0 0.0
        %2356 = vmatpush1.msra.mxu0 %v2173
        %2357 = vmatprep.subr.mxu0 0.0
        %2358 = vmatpush1.msra.mxu0 %v2178
        %2359 = vmatprep.subr.mxu0 0.0
        %2360 = vmatpush1.msra.mxu0 %v2351
        %2361 = vmatprep.subr.mxu0 0.0
        %2362 = vmatpush1.msra.mxu0 0.0
        %2363 = vmatprep.subr.mxu0 0.0
        %2364 = vmatpush1.msra.mxu0 0.0
        %2365 = vmatprep.subr.mxu0 0.0
        %2366 = vmatpush1.msra.mxu0 0.0
        %2367 = vmatprep.subr.mxu0 0.0
        %2368 = vmatpush1.msra.mxu0 0.0
        %2369 = vmatprep.subr.mxu0 0.0
        %2370 = vmatpush1.msra.mxu0 0.0
        %2371 = vmatprep.subr.mxu0 0.0
        %2372 = vmatpush1.msra.mxu0 0.0
        %2373 = vmatprep.subr.mxu0 0.0
        %2374 = vmatpush1.msra.mxu0 0.0
        %2375 = vmatprep.subr.mxu0 0.0
        %2376 = vmatpush1.msra.mxu0 0.0
        %2377 = vmatprep.subr.mxu0 0.0
        %2378 = vmatpush1.msra.mxu0 0.0
        %2379 = vmatprep.subr.mxu0 0.0
        %2380 = vmatpush1.msra.mxu0 0.0
        %2381 = vmatprep.subr.mxu0 0.0
        %2382 = vmatpush1.msra.mxu0 0.0
        %2383 = vmatprep.subr.mxu0 0.0
        %2384 = vmatpush1.msra.mxu0 0.0
        %2385 = vmatprep.subr.mxu0 0.0
        %2386 = vmatpush1.msra.mxu0 0.0
        %2387 = vmatprep.subr.mxu0 0.0
        %2388 = vmatpush1.msra.mxu0 0.0
        %2389 = vmatprep.subr.mxu0 0.0
        %2390 = vmatpush1.msra.mxu0 0.0
        %2391 = vmatprep.subr.mxu0 0.0
        %2392 = vmatpush1.msra.mxu0 0.0
        %2393 = vmatprep.subr.mxu0 0.0
        %2394 = vmatpush1.msra.mxu0 0.0
        %2395 = vmatprep.subr.mxu0 0.0
        %2396 = vmatpush1.msra.mxu0 0.0
        %2397 = vmatprep.subr.mxu0 0.0
        %2398 = vmatpush1.msra.mxu0 0.0
        %2399 = vmatprep.subr.mxu0 0.0
        %2400 = vmatpush1.msra.mxu0 0.0
        %2401 = vmatprep.subr.mxu0 0.0
        %2402 = vmatpush1.msra.mxu0 0.0
        %2403 = vmatprep.subr.mxu0 0.0
        %2404 = vmatpush1.msra.mxu0 0.0
        %2405 = vmatprep.subr.mxu0 0.0
        %2406 = vmatpush1.msra.mxu0 0.0
        %2407 = vmatprep.subr.mxu0 0.0
        %2408 = vmatpush1.msra.mxu0 0.0
        %2409 = vmatprep.subr.mxu0 0.0
        %2410 = vmatpush1.msra.mxu0 0.0
        %2411 = vmatprep.subr.mxu0 0.0
        %2412 = vmatpush1.msra.mxu0 0.0
        %2413 = vmatprep.subr.mxu0 0.0
        %2414 = vmatpush1.msra.mxu0 0.0
        %2415 = vmatprep.subr.mxu0 0.0
        %2416 = vmatpush1.msra.mxu0 0.0
        %2417 = vmatprep.mubr.f32.mxu0 0.0
        %2418 = vmatmul.mubr.f32.gmra.mrb[0].mxu0 %v2338
        %v2419 = vpop.f32.mrb[0].mxu0
        %v2420 = vadd.f32 0.0, %v2419
        %v2421 = vpop.f32.mrb[0].mxu0
        %2422 = vmatprep.mubr.f32.mxu0 0.0
        %2423 = vmatmul.mubr.f32.gmra.mrb[0].mxu0 %v2341
        %v2424 = vpop.f32.mrb[0].mxu0
        %v2425 = vadd.f32 0.0, %v2424
        %v2426 = vpop.f32.mrb[0].mxu0
        %2427 = vmatprep.mubr.f32.mxu0 0.0
        %2428 = vmatmul.mubr.f32.gmra.mrb[0].mxu0 %v2344
        %v2429 = vpop.f32.mrb[0].mxu0
        %v2430 = vadd.f32 0.0, %v2429
        %v2431 = vpop.f32.mrb[0].mxu0
        %2432 = vmatprep.mubr.f32.mxu0 0.0
        %2433 = vmatmul.mubr.f32.gmra.mrb[0].mxu0 %v2347
        %v2434 = vpop.f32.mrb[0].mxu0
        %v2435 = vadd.f32 0.0, %v2434
        %v2436 = vpop.f32.mrb[0].mxu0
        %2437 = vdwg.mxu0
        %v2438 = vmul.f32 %v2420, %v2333
        %v2439 = vmul.f32 %v2425, %v2334
        %v2440 = vmul.f32 %v2430, %v2335
        %v2441 = vmul.f32 %v2435, %v2336
        %v2442 = vld [vmem:[%s45] sm:$0xff]
        %s2443 = scalar_lea.vmem %s39, 32
        %v2444 = vld [vmem:[%s2443] sm:$0xff]
        %v2445 = vld [vmem:[%s2443 + $0x8] sm:$0xff]
        %v2446 = vld [vmem:[%s2443 + $0x10] sm:$0xff]
        %v2447 = vld [vmem:[%s2443 + $0x18] sm:$0xff]
        %2448 = vmatprep.subr.mxu0 0.0
        %2449 = vmatpush1.msra.mxu0 %v2444
        %2450 = vmatprep.subr.mxu0 0.0
        %2451 = vmatpush1.msra.mxu0 %v2445
        %2452 = vmatprep.subr.mxu0 0.0
        %2453 = vmatpush1.msra.mxu0 %v2446
        %2454 = vmatprep.subr.mxu0 0.0
        %2455 = vmatpush1.msra.mxu0 %v2447
        %2456 = vmatprep.subr.mxu0 0.0
        %2457 = vmatpush1.msra.mxu0 0.0
        %2458 = vmatprep.subr.mxu0 0.0
        %2459 = vmatpush1.msra.mxu0 0.0
        %2460 = vmatprep.subr.mxu0 0.0
        %2461 = vmatpush1.msra.mxu0 0.0
        %2462 = vmatprep.subr.mxu0 0.0
        %2463 = vmatpush1.msra.mxu0 0.0
        %2464 = vmatprep.subr.mxu0 0.0
        %2465 = vmatpush1.msra.mxu0 0.0
        %2466 = vmatprep.subr.mxu0 0.0
        %2467 = vmatpush1.msra.mxu0 0.0
        %2468 = vmatprep.subr.mxu0 0.0
        %2469 = vmatpush1.msra.mxu0 0.0
        %2470 = vmatprep.subr.mxu0 0.0
        %2471 = vmatpush1.msra.mxu0 0.0
        %2472 = vmatprep.subr.mxu0 0.0
        %2473 = vmatpush1.msra.mxu0 0.0
        %2474 = vmatprep.subr.mxu0 0.0
        %2475 = vmatpush1.msra.mxu0 0.0
        %2476 = vmatprep.subr.mxu0 0.0
        %2477 = vmatpush1.msra.mxu0 0.0
        %2478 = vmatprep.subr.mxu0 0.0
        %2479 = vmatpush1.msra.mxu0 0.0
        %2480 = vmatprep.subr.mxu0 0.0
        %2481 = vmatpush1.msra.mxu0 0.0
        %2482 = vmatprep.subr.mxu0 0.0
        %2483 = vmatpush1.msra.mxu0 0.0
        %2484 = vmatprep.subr.mxu0 0.0
        %2485 = vmatpush1.msra.mxu0 0.0
        %2486 = vmatprep.subr.mxu0 0.0
        %2487 = vmatpush1.msra.mxu0 0.0
        %2488 = vmatprep.subr.mxu0 0.0
        %2489 = vmatpush1.msra.mxu0 0.0
        %2490 = vmatprep.subr.mxu0 0.0
        %2491 = vmatpush1.msra.mxu0 0.0
        %2492 = vmatprep.subr.mxu0 0.0
        %2493 = vmatpush1.msra.mxu0 0.0
        %2494 = vmatprep.subr.mxu0 0.0
        %2495 = vmatpush1.msra.mxu0 0.0
        %2496 = vmatprep.subr.mxu0 0.0
        %2497 = vmatpush1.msra.mxu0 0.0
        %2498 = vmatprep.subr.mxu0 0.0
        %2499 = vmatpush1.msra.mxu0 0.0
        %2500 = vmatprep.subr.mxu0 0.0
        %2501 = vmatpush1.msra.mxu0 0.0
        %2502 = vmatprep.subr.mxu0 0.0
        %2503 = vmatpush1.msra.mxu0 0.0
        %2504 = vmatprep.subr.mxu0 0.0
        %2505 = vmatpush1.msra.mxu0 0.0
        %2506 = vmatprep.subr.mxu0 0.0
        %2507 = vmatpush1.msra.mxu0 0.0
        %2508 = vmatprep.subr.mxu0 0.0
        %2509 = vmatpush1.msra.mxu0 0.0
        %2510 = vmatprep.subr.mxu0 0.0
        %2511 = vmatpush1.msra.mxu0 0.0
        %2512 = vmatprep.mubr.f32.mxu0 0.0
        %2513 = vmatmul.mubr.f32.gmra.mrb[0].mxu0 %v1912
        %v2514 = vpop.f32.mrb[0].mxu0
        %v2515 = vadd.f32 0.0, %v2514
        %v2516 = vpop.f32.mrb[0].mxu0
        %2517 = vmatprep.mubr.f32.mxu0 0.0
        %2518 = vmatmul.mubr.f32.gmra.mrb[0].mxu0 %v1915
        %v2519 = vpop.f32.mrb[0].mxu0
        %v2520 = vadd.f32 0.0, %v2519
        %v2521 = vpop.f32.mrb[0].mxu0
        %2522 = vmatprep.mubr.f32.mxu0 0.0
        %2523 = vmatmul.mubr.f32.gmra.mrb[0].mxu0 %v1918
        %v2524 = vpop.f32.mrb[0].mxu0
        %v2525 = vadd.f32 0.0, %v2524
        %v2526 = vpop.f32.mrb[0].mxu0
        %2527 = vmatprep.mubr.f32.mxu0 0.0
        %2528 = vmatmul.mubr.f32.gmra.mrb[0].mxu0 %v1921
        %v2529 = vpop.f32.mrb[0].mxu0
        %v2530 = vadd.f32 0.0, %v2529
        %v2531 = vpop.f32.mrb[0].mxu0
        %2532 = vdwg.mxu0
        %s2533 = scalar_lea.vmem %s41, 32
        %v2534 = vld [vmem:[%s2533] sm:$0xff]
        %v2535 = vld [vmem:[%s2533 + $0x8] sm:$0xff]
        %v2536 = vld [vmem:[%s2533 + $0x10] sm:$0xff]
        %v2537 = vld [vmem:[%s2533 + $0x18] sm:$0xff]
        %2538 = vmatprep.subr.mxu0 0.0
        %2539 = vmatpush1.msra.mxu0 %v2534
        %2540 = vmatprep.subr.mxu0 0.0
        %2541 = vmatpush1.msra.mxu0 %v2535
        %2542 = vmatprep.subr.mxu0 0.0
        %2543 = vmatpush1.msra.mxu0 %v2536
        %2544 = vmatprep.subr.mxu0 0.0
        %2545 = vmatpush1.msra.mxu0 %v2537
        %2546 = vmatprep.subr.mxu0 0.0
        %2547 = vmatpush1.msra.mxu0 0.0
        %2548 = vmatprep.subr.mxu0 0.0
        %2549 = vmatpush1.msra.mxu0 0.0
        %2550 = vmatprep.subr.mxu0 0.0
        %2551 = vmatpush1.msra.mxu0 0.0
        %2552 = vmatprep.subr.mxu0 0.0
        %2553 = vmatpush1.msra.mxu0 0.0
        %2554 = vmatprep.subr.mxu0 0.0
        %2555 = vmatpush1.msra.mxu0 0.0
        %2556 = vmatprep.subr.mxu0 0.0
        %2557 = vmatpush1.msra.mxu0 0.0
        %2558 = vmatprep.subr.mxu0 0.0
        %2559 = vmatpush1.msra.mxu0 0.0
        %2560 = vmatprep.subr.mxu0 0.0
        %2561 = vmatpush1.msra.mxu0 0.0
        %2562 = vmatprep.subr.mxu0 0.0
        %2563 = vmatpush1.msra.mxu0 0.0
        %2564 = vmatprep.subr.mxu0 0.0
        %2565 = vmatpush1.msra.mxu0 0.0
        %2566 = vmatprep.subr.mxu0 0.0
        %2567 = vmatpush1.msra.mxu0 0.0
        %2568 = vmatprep.subr.mxu0 0.0
        %2569 = vmatpush1.msra.mxu0 0.0
        %2570 = vmatprep.subr.mxu0 0.0
        %2571 = vmatpush1.msra.mxu0 0.0
        %2572 = vmatprep.subr.mxu0 0.0
        %2573 = vmatpush1.msra.mxu0 0.0
        %2574 = vmatprep.subr.mxu0 0.0
        %2575 = vmatpush1.msra.mxu0 0.0
        %2576 = vmatprep.subr.mxu0 0.0
        %2577 = vmatpush1.msra.mxu0 0.0
        %2578 = vmatprep.subr.mxu0 0.0
        %2579 = vmatpush1.msra.mxu0 0.0
        %2580 = vmatprep.subr.mxu0 0.0
        %2581 = vmatpush1.msra.mxu0 0.0
        %2582 = vmatprep.subr.mxu0 0.0
        %2583 = vmatpush1.msra.mxu0 0.0
        %2584 = vmatprep.subr.mxu0 0.0
        %2585 = vmatpush1.msra.mxu0 0.0
        %2586 = vmatprep.subr.mxu0 0.0
        %2587 = vmatpush1.msra.mxu0 0.0
        %2588 = vmatprep.subr.mxu0 0.0
        %2589 = vmatpush1.msra.mxu0 0.0
        %2590 = vmatprep.subr.mxu0 0.0
        %2591 = vmatpush1.msra.mxu0 0.0
        %2592 = vmatprep.subr.mxu0 0.0
        %2593 = vmatpush1.msra.mxu0 0.0
        %2594 = vmatprep.subr.mxu0 0.0
        %2595 = vmatpush1.msra.mxu0 0.0
        %2596 = vmatprep.subr.mxu0 0.0
        %2597 = vmatpush1.msra.mxu0 0.0
        %2598 = vmatprep.subr.mxu0 0.0
        %2599 = vmatpush1.msra.mxu0 0.0
        %2600 = vmatprep.subr.mxu0 0.0
        %2601 = vmatpush1.msra.mxu0 0.0
        %2602 = vmatprep.mubr.f32.mxu0 0.0
        %2603 = vmatmul.mubr.f32.gmra.mrb[0].mxu0 %v1912
        %v2604 = vpop.f32.mrb[0].mxu0
        %v2605 = vadd.f32 0.0, %v2604
        %v2606 = vpop.f32.mrb[0].mxu0
        %2607 = vmatprep.mubr.f32.mxu0 0.0
        %2608 = vmatmul.mubr.f32.gmra.mrb[0].mxu0 %v1915
        %v2609 = vpop.f32.mrb[0].mxu0
        %v2610 = vadd.f32 0.0, %v2609
        %v2611 = vpop.f32.mrb[0].mxu0
        %2612 = vmatprep.mubr.f32.mxu0 0.0
        %2613 = vmatmul.mubr.f32.gmra.mrb[0].mxu0 %v1918
        %v2614 = vpop.f32.mrb[0].mxu0
        %v2615 = vadd.f32 0.0, %v2614
        %v2616 = vpop.f32.mrb[0].mxu0
        %2617 = vmatprep.mubr.f32.mxu0 0.0
        %2618 = vmatmul.mubr.f32.gmra.mrb[0].mxu0 %v1921
        %v2619 = vpop.f32.mrb[0].mxu0
        %v2620 = vadd.f32 0.0, %v2619
        %v2621 = vpop.f32.mrb[0].mxu0
        %2622 = vdwg.mxu0
        %s2623 = scalar_lea.vmem %s43, 32
        %v2624 = vld [vmem:[%s2623] sm:$0xff]
        %v2625 = vld [vmem:[%s2623 + $0x8] sm:$0xff]
        %v2626 = vld [vmem:[%s2623 + $0x10] sm:$0xff]
        %v2627 = vld [vmem:[%s2623 + $0x18] sm:$0xff]
        %2628 = vmatprep.subr.mxu0 0.0
        %2629 = vmatpush1.msra.mxu0 %v2624
        %2630 = vmatprep.subr.mxu0 0.0
        %2631 = vmatpush1.msra.mxu0 %v2625
        %2632 = vmatprep.subr.mxu0 0.0
        %2633 = vmatpush1.msra.mxu0 %v2626
        %2634 = vmatprep.subr.mxu0 0.0
        %2635 = vmatpush1.msra.mxu0 %v2627
        %2636 = vmatprep.subr.mxu0 0.0
        %2637 = vmatpush1.msra.mxu0 0.0
        %2638 = vmatprep.subr.mxu0 0.0
        %2639 = vmatpush1.msra.mxu0 0.0
        %2640 = vmatprep.subr.mxu0 0.0
        %2641 = vmatpush1.msra.mxu0 0.0
        %2642 = vmatprep.subr.mxu0 0.0
        %2643 = vmatpush1.msra.mxu0 0.0
        %2644 = vmatprep.subr.mxu0 0.0
        %2645 = vmatpush1.msra.mxu0 0.0
        %2646 = vmatprep.subr.mxu0 0.0
        %2647 = vmatpush1.msra.mxu0 0.0
        %2648 = vmatprep.subr.mxu0 0.0
        %2649 = vmatpush1.msra.mxu0 0.0
        %2650 = vmatprep.subr.mxu0 0.0
        %2651 = vmatpush1.msra.mxu0 0.0
        %2652 = vmatprep.subr.mxu0 0.0
        %2653 = vmatpush1.msra.mxu0 0.0
        %2654 = vmatprep.subr.mxu0 0.0
        %2655 = vmatpush1.msra.mxu0 0.0
        %2656 = vmatprep.subr.mxu0 0.0
        %2657 = vmatpush1.msra.mxu0 0.0
        %2658 = vmatprep.subr.mxu0 0.0
        %2659 = vmatpush1.msra.mxu0 0.0
        %2660 = vmatprep.subr.mxu0 0.0
        %2661 = vmatpush1.msra.mxu0 0.0
        %2662 = vmatprep.subr.mxu0 0.0
        %2663 = vmatpush1.msra.mxu0 0.0
        %2664 = vmatprep.subr.mxu0 0.0
        %2665 = vmatpush1.msra.mxu0 0.0
        %2666 = vmatprep.subr.mxu0 0.0
        %2667 = vmatpush1.msra.mxu0 0.0
        %2668 = vmatprep.subr.mxu0 0.0
        %2669 = vmatpush1.msra.mxu0 0.0
        %2670 = vmatprep.subr.mxu0 0.0
        %2671 = vmatpush1.msra.mxu0 0.0
        %2672 = vmatprep.subr.mxu0 0.0
        %2673 = vmatpush1.msra.mxu0 0.0
        %2674 = vmatprep.subr.mxu0 0.0
        %2675 = vmatpush1.msra.mxu0 0.0
        %2676 = vmatprep.subr.mxu0 0.0
        %2677 = vmatpush1.msra.mxu0 0.0
        %2678 = vmatprep.subr.mxu0 0.0
        %2679 = vmatpush1.msra.mxu0 0.0
        %2680 = vmatprep.subr.mxu0 0.0
        %2681 = vmatpush1.msra.mxu0 0.0
        %2682 = vmatprep.subr.mxu0 0.0
        %2683 = vmatpush1.msra.mxu0 0.0
        %2684 = vmatprep.subr.mxu0 0.0
        %2685 = vmatpush1.msra.mxu0 0.0
        %2686 = vmatprep.subr.mxu0 0.0
        %2687 = vmatpush1.msra.mxu0 0.0
        %2688 = vmatprep.subr.mxu0 0.0
        %2689 = vmatpush1.msra.mxu0 0.0
        %2690 = vmatprep.subr.mxu0 0.0
        %2691 = vmatpush1.msra.mxu0 0.0
        %2692 = vmatprep.mubr.f32.mxu0 0.0
        %2693 = vmatmul.mubr.f32.gmra.mrb[0].mxu0 %v1912
        %v2694 = vpop.f32.mrb[0].mxu0
        %v2695 = vadd.f32 0.0, %v2694
        %v2696 = vpop.f32.mrb[0].mxu0
        %2697 = vmatprep.mubr.f32.mxu0 0.0
        %2698 = vmatmul.mubr.f32.gmra.mrb[0].mxu0 %v1915
        %v2699 = vpop.f32.mrb[0].mxu0
        %v2700 = vadd.f32 0.0, %v2699
        %v2701 = vpop.f32.mrb[0].mxu0
        %2702 = vmatprep.mubr.f32.mxu0 0.0
        %2703 = vmatmul.mubr.f32.gmra.mrb[0].mxu0 %v1918
        %v2704 = vpop.f32.mrb[0].mxu0
        %v2705 = vadd.f32 0.0, %v2704
        %v2706 = vpop.f32.mrb[0].mxu0
        %2707 = vmatprep.mubr.f32.mxu0 0.0
        %2708 = vmatmul.mubr.f32.gmra.mrb[0].mxu0 %v1921
        %v2709 = vpop.f32.mrb[0].mxu0
        %v2710 = vadd.f32 0.0, %v2709
        %v2711 = vpop.f32.mrb[0].mxu0
        %2712 = vdwg.mxu0
        %v2714 = vsel %vm1317, %v2515, 0
        %v2717 = vsel %vm1317, %v2520, 0
        %v2720 = vsel %vm1317, %v2525, 0
        %v2723 = vsel %vm1317, %v2530, 0
        %v2726 = vsel %vm1317, %v2605, 0
        %v2729 = vsel %vm1317, %v2610, 0
        %v2732 = vsel %vm1317, %v2615, 0
        %v2735 = vsel %vm1317, %v2620, 0
        %2737 = vmatprep.subr.mxu0 0.0
        %2738 = vmatpush1.xpose.msra.mxu0 %v2726
        %2739 = vmatprep.subr.mxu0 0.0
        %2740 = vmatpush1.xpose.msra.mxu0 %v2729
        %2741 = vmatprep.subr.mxu0 0.0
        %2742 = vmatpush1.xpose.msra.mxu0 %v2732
        %2743 = vmatprep.subr.mxu0 0.0
        %2744 = vmatpush1.xpose.msra.mxu0 %v2735
        %2745 = vmatprep.subr.mxu0 0.0
        %2746 = vmatpush1.xpose.msra.mxu0 0.0
        %2747 = vmatprep.subr.mxu0 0.0
        %2748 = vmatpush1.xpose.msra.mxu0 0.0
        %2749 = vmatprep.subr.mxu0 0.0
        %2750 = vmatpush1.xpose.msra.mxu0 0.0
        %2751 = vmatprep.subr.mxu0 0.0
        %2752 = vmatpush1.xpose.msra.mxu0 0.0
        %2753 = vmatprep.subr.mxu0 0.0
        %2754 = vmatpush1.xpose.msra.mxu0 0.0
        %2755 = vmatprep.subr.mxu0 0.0
        %2756 = vmatpush1.xpose.msra.mxu0 0.0
        %2757 = vmatprep.subr.mxu0 0.0
        %2758 = vmatpush1.xpose.msra.mxu0 0.0
        %2759 = vmatprep.subr.mxu0 0.0
        %2760 = vmatpush1.xpose.msra.mxu0 0.0
        %2761 = vmatprep.subr.mxu0 0.0
        %2762 = vmatpush1.xpose.msra.mxu0 0.0
        %2763 = vmatprep.subr.mxu0 0.0
        %2764 = vmatpush1.xpose.msra.mxu0 0.0
        %2765 = vmatprep.subr.mxu0 0.0
        %2766 = vmatpush1.xpose.msra.mxu0 0.0
        %2767 = vmatprep.subr.mxu0 0.0
        %2768 = vmatpush1.xpose.msra.mxu0 0.0
        %2769 = vmatprep.subr.mxu0 0.0
        %2770 = vmatpush1.xpose.msra.mxu0 0.0
        %2771 = vmatprep.subr.mxu0 0.0
        %2772 = vmatpush1.xpose.msra.mxu0 0.0
        %2773 = vmatprep.subr.mxu0 0.0
        %2774 = vmatpush1.xpose.msra.mxu0 0.0
        %2775 = vmatprep.subr.mxu0 0.0
        %2776 = vmatpush1.xpose.msra.mxu0 0.0
        %2777 = vmatprep.subr.mxu0 0.0
        %2778 = vmatpush1.xpose.msra.mxu0 0.0
        %2779 = vmatprep.subr.mxu0 0.0
        %2780 = vmatpush1.xpose.msra.mxu0 0.0
        %2781 = vmatprep.subr.mxu0 0.0
        %2782 = vmatpush1.xpose.msra.mxu0 0.0
        %2783 = vmatprep.subr.mxu0 0.0
        %2784 = vmatpush1.xpose.msra.mxu0 0.0
        %2785 = vmatprep.subr.mxu0 0.0
        %2786 = vmatpush1.xpose.msra.mxu0 0.0
        %2787 = vmatprep.subr.mxu0 0.0
        %2788 = vmatpush1.xpose.msra.mxu0 0.0
        %2789 = vmatprep.subr.mxu0 0.0
        %2790 = vmatpush1.xpose.msra.mxu0 0.0
        %2791 = vmatprep.subr.mxu0 0.0
        %2792 = vmatpush1.xpose.msra.mxu0 0.0
        %2793 = vmatprep.subr.mxu0 0.0
        %2794 = vmatpush1.xpose.msra.mxu0 0.0
        %2795 = vmatprep.subr.mxu0 0.0
        %2796 = vmatpush1.xpose.msra.mxu0 0.0
        %2797 = vmatprep.subr.mxu0 0.0
        %2798 = vmatpush1.xpose.msra.mxu0 0.0
        %2799 = vmatprep.subr.mxu0 0.0
        %2800 = vmatpush1.xpose.msra.mxu0 0.0
        %2801 = vmatprep.mubr.f32.mxu0 0.0
        %2802 = vmatmul.mubr.f32.gmra.mrb[0].mxu0 %v2714
        %v2803 = vpop.f32.mrb[0].mxu0
        %v2804 = vadd.f32 %v1899, %v2803
        %v2805 = vpop.f32.mrb[0].mxu0
        %2806 = vmatprep.mubr.f32.mxu0 0.0
        %2807 = vmatmul.mubr.f32.gmra.mrb[0].mxu0 %v2717
        %v2808 = vpop.f32.mrb[0].mxu0
        %v2809 = vadd.f32 %v1900, %v2808
        %v2810 = vpop.f32.mrb[0].mxu0
        %2811 = vmatprep.mubr.f32.mxu0 0.0
        %2812 = vmatmul.mubr.f32.gmra.mrb[0].mxu0 %v2720
        %v2813 = vpop.f32.mrb[0].mxu0
        %v2814 = vadd.f32 %v1901, %v2813
        %v2815 = vpop.f32.mrb[0].mxu0
        %2816 = vmatprep.mubr.f32.mxu0 0.0
        %2817 = vmatmul.mubr.f32.gmra.mrb[0].mxu0 %v2723
        %v2818 = vpop.f32.mrb[0].mxu0
        %v2819 = vadd.f32 %v1902, %v2818
        %v2820 = vpop.f32.mrb[0].mxu0
        %2821 = vdwg.mxu0
        %v2822 = vsel %vm2295, %v2804, -inf
        %2823 = vmax.xlane.f32.xlu0 %v2822
        %v2824 = vpop.xlane.xlu0 %2823
        %v2825 = vsel %vm2295, %v2809, -inf
        %2826 = vmax.xlane.f32.xlu0 %v2825
        %v2827 = vpop.xlane.xlu0 %2826
        %v2828 = vsel %vm2295, %v2814, -inf
        %2829 = vmax.xlane.f32.xlu0 %v2828
        %v2830 = vpop.xlane.xlu0 %2829
        %v2831 = vsel %vm2305, %v2819, -inf
        %2832 = vmax.xlane.f32.xlu0 %v2831
        %v2833 = vpop.xlane.xlu0 %2832
        %v2834 = vsub.f32 %v2804, %v2824
        %v2835 = vsub.f32 %v2809, %v2827
        %v2836 = vsub.f32 %v2814, %v2830
        %v2837 = vsub.f32 %v2819, %v2833
        %v2838 = vmul.f32 %v2834, 1.442695
        %v2839 = vpow.pop %v2838
        %v2840 = vmul.f32 %v2835, 1.442695
        %v2841 = vpow.pop %v2840
        %v2842 = vmul.f32 %v2836, 1.442695
        %v2843 = vpow.pop %v2842
        %v2844 = vmul.f32 %v2837, 1.442695
        %v2845 = vpow.pop %v2844
        %v2846 = vsel %vm2295, %v2839, 0.0
        %2847 = vadd.xlane.f32.xlu0 %v2846
        %v2848 = vpop.xlane.xlu0 %2847
        %v2849 = vsel %vm2295, %v2841, 0.0
        %2850 = vadd.xlane.f32.xlu0 %v2849
        %v2851 = vpop.xlane.xlu0 %2850
        %v2852 = vsel %vm2295, %v2843, 0.0
        %2853 = vadd.xlane.f32.xlu0 %v2852
        %v2854 = vpop.xlane.xlu0 %2853
        %v2855 = vsel %vm2305, %v2845, 0.0
        %2856 = vadd.xlane.f32.xlu0 %v2855
        %v2857 = vpop.xlane.xlu0 %2856
        %v2858 = vrcp.pop %v2848
        %v2859 = vrcp.pop %v2851
        %v2860 = vrcp.pop %v2854
        %v2861 = vrcp.pop %v2857
        %v2863 = vsel %vm2295, %v2839, 0
        %v2866 = vsel %vm2295, %v2841, 0
        %v2869 = vsel %vm2295, %v2843, 0
        %v2872 = vsel %vm2295, %v2845, 0
        %v2875 = vsel %vm2349, %v2710, 0
        %2877 = vmatprep.subr.mxu0 0.0
        %2878 = vmatpush1.msra.mxu0 %v2695
        %2879 = vmatprep.subr.mxu0 0.0
        %2880 = vmatpush1.msra.mxu0 %v2700
        %2881 = vmatprep.subr.mxu0 0.0
        %2882 = vmatpush1.msra.mxu0 %v2705
        %2883 = vmatprep.subr.mxu0 0.0
        %2884 = vmatpush1.msra.mxu0 %v2875
        %2885 = vmatprep.subr.mxu0 0.0
        %2886 = vmatpush1.msra.mxu0 0.0
        %2887 = vmatprep.subr.mxu0 0.0
        %2888 = vmatpush1.msra.mxu0 0.0
        %2889 = vmatprep.subr.mxu0 0.0
        %2890 = vmatpush1.msra.mxu0 0.0
        %2891 = vmatprep.subr.mxu0 0.0
        %2892 = vmatpush1.msra.mxu0 0.0
        %2893 = vmatprep.subr.mxu0 0.0
        %2894 = vmatpush1.msra.mxu0 0.0
        %2895 = vmatprep.subr.mxu0 0.0
        %2896 = vmatpush1.msra.mxu0 0.0
        %2897 = vmatprep.subr.mxu0 0.0
        %2898 = vmatpush1.msra.mxu0 0.0
        %2899 = vmatprep.subr.mxu0 0.0
        %2900 = vmatpush1.msra.mxu0 0.0
        %2901 = vmatprep.subr.mxu0 0.0
        %2902 = vmatpush1.msra.mxu0 0.0
        %2903 = vmatprep.subr.mxu0 0.0
        %2904 = vmatpush1.msra.mxu0 0.0
        %2905 = vmatprep.subr.mxu0 0.0
        %2906 = vmatpush1.msra.mxu0 0.0
        %2907 = vmatprep.subr.mxu0 0.0
        %2908 = vmatpush1.msra.mxu0 0.0
        %2909 = vmatprep.subr.mxu0 0.0
        %2910 = vmatpush1.msra.mxu0 0.0
        %2911 = vmatprep.subr.mxu0 0.0
        %2912 = vmatpush1.msra.mxu0 0.0
        %2913 = vmatprep.subr.mxu0 0.0
        %2914 = vmatpush1.msra.mxu0 0.0
        %2915 = vmatprep.subr.mxu0 0.0
        %2916 = vmatpush1.msra.mxu0 0.0
        %2917 = vmatprep.subr.mxu0 0.0
        %2918 = vmatpush1.msra.mxu0 0.0
        %2919 = vmatprep.subr.mxu0 0.0
        %2920 = vmatpush1.msra.mxu0 0.0
        %2921 = vmatprep.subr.mxu0 0.0
        %2922 = vmatpush1.msra.mxu0 0.0
        %2923 = vmatprep.subr.mxu0 0.0
        %2924 = vmatpush1.msra.mxu0 0.0
        %2925 = vmatprep.subr.mxu0 0.0
        %2926 = vmatpush1.msra.mxu0 0.0
        %2927 = vmatprep.subr.mxu0 0.0
        %2928 = vmatpush1.msra.mxu0 0.0
        %2929 = vmatprep.subr.mxu0 0.0
        %2930 = vmatpush1.msra.mxu0 0.0
        %2931 = vmatprep.subr.mxu0 0.0
        %2932 = vmatpush1.msra.mxu0 0.0
        %2933 = vmatprep.subr.mxu0 0.0
        %2934 = vmatpush1.msra.mxu0 0.0
        %2935 = vmatprep.subr.mxu0 0.0
        %2936 = vmatpush1.msra.mxu0 0.0
        %2937 = vmatprep.subr.mxu0 0.0
        %2938 = vmatpush1.msra.mxu0 0.0
        %2939 = vmatprep.subr.mxu0 0.0
        %2940 = vmatpush1.msra.mxu0 0.0
        %2941 = vmatprep.mubr.f32.mxu0 0.0
        %2942 = vmatmul.mubr.f32.gmra.mrb[0].mxu0 %v2863
        %v2943 = vpop.f32.mrb[0].mxu0
        %v2944 = vadd.f32 0.0, %v2943
        %v2945 = vpop.f32.mrb[0].mxu0
        %2946 = vmatprep.mubr.f32.mxu0 0.0
        %2947 = vmatmul.mubr.f32.gmra.mrb[0].mxu0 %v2866
        %v2948 = vpop.f32.mrb[0].mxu0
        %v2949 = vadd.f32 0.0, %v2948
        %v2950 = vpop.f32.mrb[0].mxu0
        %2951 = vmatprep.mubr.f32.mxu0 0.0
        %2952 = vmatmul.mubr.f32.gmra.mrb[0].mxu0 %v2869
        %v2953 = vpop.f32.mrb[0].mxu0
        %v2954 = vadd.f32 0.0, %v2953
        %v2955 = vpop.f32.mrb[0].mxu0
        %2956 = vmatprep.mubr.f32.mxu0 0.0
        %2957 = vmatmul.mubr.f32.gmra.mrb[0].mxu0 %v2872
        %v2958 = vpop.f32.mrb[0].mxu0
        %v2959 = vadd.f32 0.0, %v2958
        %v2960 = vpop.f32.mrb[0].mxu0
        %2961 = vdwg.mxu0
        %v2962 = vmul.f32 %v2944, %v2858
        %v2963 = vmul.f32 %v2949, %v2859
        %v2964 = vmul.f32 %v2954, %v2860
        %v2965 = vmul.f32 %v2959, %v2861
        %s2966 = scalar_lea.vmem %s45, 8
        %v2967 = vld [vmem:[%s2966] sm:$0xff]
        %v2969 = vsel %vm1317, %v2962, 0
        %v2972 = vsel %vm1317, %v2963, 0
        %v2975 = vsel %vm1317, %v2964, 0
        %v2978 = vsel %vm1317, %v2965, 0
        %2980 = vmatprep.subr.mxu0 0.0
        %2981 = vmatpush1.msra.mxu0 %v2967
        %2982 = vmatprep.subr.mxu0 0.0
        %2983 = vmatpush1.msra.mxu0 0.0
        %2984 = vmatprep.subr.mxu0 0.0
        %2985 = vmatpush1.msra.mxu0 0.0
        %2986 = vmatprep.subr.mxu0 0.0
        %2987 = vmatpush1.msra.mxu0 0.0
        %2988 = vmatprep.subr.mxu0 0.0
        %2989 = vmatpush1.msra.mxu0 0.0
        %2990 = vmatprep.subr.mxu0 0.0
        %2991 = vmatpush1.msra.mxu0 0.0
        %2992 = vmatprep.subr.mxu0 0.0
        %2993 = vmatpush1.msra.mxu0 0.0
        %2994 = vmatprep.subr.mxu0 0.0
        %2995 = vmatpush1.msra.mxu0 0.0
        %2996 = vmatprep.subr.mxu0 0.0
        %2997 = vmatpush1.msra.mxu0 0.0
        %2998 = vmatprep.subr.mxu0 0.0
        %2999 = vmatpush1.msra.mxu0 0.0
        %3000 = vmatprep.subr.mxu0 0.0
        %3001 = vmatpush1.msra.mxu0 0.0
        %3002 = vmatprep.subr.mxu0 0.0
        %3003 = vmatpush1.msra.mxu0 0.0
        %3004 = vmatprep.subr.mxu0 0.0
        %3005 = vmatpush1.msra.mxu0 0.0
        %3006 = vmatprep.subr.mxu0 0.0
        %3007 = vmatpush1.msra.mxu0 0.0
        %3008 = vmatprep.subr.mxu0 0.0
        %3009 = vmatpush1.msra.mxu0 0.0
        %3010 = vmatprep.subr.mxu0 0.0
        %3011 = vmatpush1.msra.mxu0 0.0
        %3012 = vmatprep.subr.mxu0 0.0
        %3013 = vmatpush1.msra.mxu0 0.0
        %3014 = vmatprep.subr.mxu0 0.0
        %3015 = vmatpush1.msra.mxu0 0.0
        %3016 = vmatprep.subr.mxu0 0.0
        %3017 = vmatpush1.msra.mxu0 0.0
        %3018 = vmatprep.subr.mxu0 0.0
        %3019 = vmatpush1.msra.mxu0 0.0
        %3020 = vmatprep.subr.mxu0 0.0
        %3021 = vmatpush1.msra.mxu0 0.0
        %3022 = vmatprep.subr.mxu0 0.0
        %3023 = vmatpush1.msra.mxu0 0.0
        %3024 = vmatprep.subr.mxu0 0.0
        %3025 = vmatpush1.msra.mxu0 0.0
        %3026 = vmatprep.subr.mxu0 0.0
        %3027 = vmatpush1.msra.mxu0 0.0
        %3028 = vmatprep.subr.mxu0 0.0
        %3029 = vmatpush1.msra.mxu0 0.0
        %3030 = vmatprep.subr.mxu0 0.0
        %3031 = vmatpush1.msra.mxu0 0.0
        %3032 = vmatprep.subr.mxu0 0.0
        %3033 = vmatpush1.msra.mxu0 0.0
        %3034 = vmatprep.subr.mxu0 0.0
        %3035 = vmatpush1.msra.mxu0 0.0
        %3036 = vmatprep.subr.mxu0 0.0
        %3037 = vmatpush1.msra.mxu0 0.0
        %3038 = vmatprep.subr.mxu0 0.0
        %3039 = vmatpush1.msra.mxu0 0.0
        %3040 = vmatprep.subr.mxu0 0.0
        %3041 = vmatpush1.msra.mxu0 0.0
        %3042 = vmatprep.subr.mxu0 0.0
        %3043 = vmatpush1.msra.mxu0 0.0
        %3044 = vmatprep.mubr.f32.mxu0 0.0
        %3045 = vmatmul.mubr.f32.gmra.mrb[0].mxu0 %v2969
        %v3046 = vpop.f32.mrb[0].mxu0
        %v3047 = vadd.f32 0.0, %v3046
        %v3048 = vpop.f32.mrb[0].mxu0
        %3049 = vmatprep.mubr.f32.mxu0 0.0
        %3050 = vmatmul.mubr.f32.gmra.mrb[0].mxu0 %v2972
        %v3051 = vpop.f32.mrb[0].mxu0
        %v3052 = vadd.f32 0.0, %v3051
        %v3053 = vpop.f32.mrb[0].mxu0
        %3054 = vmatprep.mubr.f32.mxu0 0.0
        %3055 = vmatmul.mubr.f32.gmra.mrb[0].mxu0 %v2975
        %v3056 = vpop.f32.mrb[0].mxu0
        %v3057 = vadd.f32 0.0, %v3056
        %v3058 = vpop.f32.mrb[0].mxu0
        %3059 = vmatprep.mubr.f32.mxu0 0.0
        %3060 = vmatmul.mubr.f32.gmra.mrb[0].mxu0 %v2978
        %v3061 = vpop.f32.mrb[0].mxu0
        %v3062 = vadd.f32 0.0, %v3061
        %v3063 = vpop.f32.mrb[0].mxu0
        %3064 = vdwg.mxu0
        %v3066 = vsel %vm1317, %v2438, 0
        %v3069 = vsel %vm1317, %v2439, 0
        %v3072 = vsel %vm1317, %v2440, 0
        %v3075 = vsel %vm1317, %v2441, 0
        %3077 = vmatprep.subr.mxu0 0.0
        %3078 = vmatpush1.msra.mxu0 %v2442
        %3079 = vmatprep.subr.mxu0 0.0
        %3080 = vmatpush1.msra.mxu0 0.0
        %3081 = vmatprep.subr.mxu0 0.0
        %3082 = vmatpush1.msra.mxu0 0.0
        %3083 = vmatprep.subr.mxu0 0.0
        %3084 = vmatpush1.msra.mxu0 0.0
        %3085 = vmatprep.subr.mxu0 0.0
        %3086 = vmatpush1.msra.mxu0 0.0
        %3087 = vmatprep.subr.mxu0 0.0
        %3088 = vmatpush1.msra.mxu0 0.0
        %3089 = vmatprep.subr.mxu0 0.0
        %3090 = vmatpush1.msra.mxu0 0.0
        %3091 = vmatprep.subr.mxu0 0.0
        %3092 = vmatpush1.msra.mxu0 0.0
        %3093 = vmatprep.subr.mxu0 0.0
        %3094 = vmatpush1.msra.mxu0 0.0
        %3095 = vmatprep.subr.mxu0 0.0
        %3096 = vmatpush1.msra.mxu0 0.0
        %3097 = vmatprep.subr.mxu0 0.0
        %3098 = vmatpush1.msra.mxu0 0.0
        %3099 = vmatprep.subr.mxu0 0.0
        %3100 = vmatpush1.msra.mxu0 0.0
        %3101 = vmatprep.subr.mxu0 0.0
        %3102 = vmatpush1.msra.mxu0 0.0
        %3103 = vmatprep.subr.mxu0 0.0
        %3104 = vmatpush1.msra.mxu0 0.0
        %3105 = vmatprep.subr.mxu0 0.0
        %3106 = vmatpush1.msra.mxu0 0.0
        %3107 = vmatprep.subr.mxu0 0.0
        %3108 = vmatpush1.msra.mxu0 0.0
        %3109 = vmatprep.subr.mxu0 0.0
        %3110 = vmatpush1.msra.mxu0 0.0
        %3111 = vmatprep.subr.mxu0 0.0
        %3112 = vmatpush1.msra.mxu0 0.0
        %3113 = vmatprep.subr.mxu0 0.0
        %3114 = vmatpush1.msra.mxu0 0.0
        %3115 = vmatprep.subr.mxu0 0.0
        %3116 = vmatpush1.msra.mxu0 0.0
        %3117 = vmatprep.subr.mxu0 0.0
        %3118 = vmatpush1.msra.mxu0 0.0
        %3119 = vmatprep.subr.mxu0 0.0
        %3120 = vmatpush1.msra.mxu0 0.0
        %3121 = vmatprep.subr.mxu0 0.0
        %3122 = vmatpush1.msra.mxu0 0.0
        %3123 = vmatprep.subr.mxu0 0.0
        %3124 = vmatpush1.msra.mxu0 0.0
        %3125 = vmatprep.subr.mxu0 0.0
        %3126 = vmatpush1.msra.mxu0 0.0
        %3127 = vmatprep.subr.mxu0 0.0
        %3128 = vmatpush1.msra.mxu0 0.0
        %3129 = vmatprep.subr.mxu0 0.0
        %3130 = vmatpush1.msra.mxu0 0.0
        %3131 = vmatprep.subr.mxu0 0.0
        %3132 = vmatpush1.msra.mxu0 0.0
        %3133 = vmatprep.subr.mxu0 0.0
        %3134 = vmatpush1.msra.mxu0 0.0
        %3135 = vmatprep.subr.mxu0 0.0
        %3136 = vmatpush1.msra.mxu0 0.0
        %3137 = vmatprep.subr.mxu0 0.0
        %3138 = vmatpush1.msra.mxu0 0.0
        %3139 = vmatprep.subr.mxu0 0.0
        %3140 = vmatpush1.msra.mxu0 0.0
        %3141 = vmatprep.mubr.f32.mxu0 0.0
        %3142 = vmatmul.mubr.f32.gmra.mrb[0].mxu0 %v3066
        %v3143 = vpop.f32.mrb[0].mxu0
        %v3144 = vadd.f32 %v3047, %v3143
        %v3145 = vpop.f32.mrb[0].mxu0
        %3146 = vmatprep.mubr.f32.mxu0 0.0
        %3147 = vmatmul.mubr.f32.gmra.mrb[0].mxu0 %v3069
        %v3148 = vpop.f32.mrb[0].mxu0
        %v3149 = vadd.f32 %v3052, %v3148
        %v3150 = vpop.f32.mrb[0].mxu0
        %3151 = vmatprep.mubr.f32.mxu0 0.0
        %3152 = vmatmul.mubr.f32.gmra.mrb[0].mxu0 %v3072
        %v3153 = vpop.f32.mrb[0].mxu0
        %v3154 = vadd.f32 %v3057, %v3153
        %v3155 = vpop.f32.mrb[0].mxu0
        %3156 = vmatprep.mubr.f32.mxu0 0.0
        %3157 = vmatmul.mubr.f32.gmra.mrb[0].mxu0 %v3075
        %v3158 = vpop.f32.mrb[0].mxu0
        %v3159 = vadd.f32 %v3062, %v3158
        %v3160 = vpop.f32.mrb[0].mxu0
        %3161 = vdwg.mxu0
        %s3162 = scalar_lea.vmem %s39, 64
        %v3163 = vld [vmem:[%s3162] sm:$0xff]
        %v3164 = vld [vmem:[%s3162 + $0x8] sm:$0xff]
        %v3165 = vld [vmem:[%s3162 + $0x10] sm:$0xff]
        %v3166 = vld [vmem:[%s3162 + $0x18] sm:$0xff]
        %3167 = vmatprep.subr.mxu0 0.0
        %3168 = vmatpush1.msra.mxu0 %v3163
        %3169 = vmatprep.subr.mxu0 0.0
        %3170 = vmatpush1.msra.mxu0 %v3164
        %3171 = vmatprep.subr.mxu0 0.0
        %3172 = vmatpush1.msra.mxu0 %v3165
        %3173 = vmatprep.subr.mxu0 0.0
        %3174 = vmatpush1.msra.mxu0 %v3166
        %3175 = vmatprep.subr.mxu0 0.0
        %3176 = vmatpush1.msra.mxu0 0.0
        %3177 = vmatprep.subr.mxu0 0.0
        %3178 = vmatpush1.msra.mxu0 0.0
        %3179 = vmatprep.subr.mxu0 0.0
        %3180 = vmatpush1.msra.mxu0 0.0
        %3181 = vmatprep.subr.mxu0 0.0
        %3182 = vmatpush1.msra.mxu0 0.0
        %3183 = vmatprep.subr.mxu0 0.0
        %3184 = vmatpush1.msra.mxu0 0.0
        %3185 = vmatprep.subr.mxu0 0.0
        %3186 = vmatpush1.msra.mxu0 0.0
        %3187 = vmatprep.subr.mxu0 0.0
        %3188 = vmatpush1.msra.mxu0 0.0
        %3189 = vmatprep.subr.mxu0 0.0
        %3190 = vmatpush1.msra.mxu0 0.0
        %3191 = vmatprep.subr.mxu0 0.0
        %3192 = vmatpush1.msra.mxu0 0.0
        %3193 = vmatprep.subr.mxu0 0.0
        %3194 = vmatpush1.msra.mxu0 0.0
        %3195 = vmatprep.subr.mxu0 0.0
        %3196 = vmatpush1.msra.mxu0 0.0
        %3197 = vmatprep.subr.mxu0 0.0
        %3198 = vmatpush1.msra.mxu0 0.0
        %3199 = vmatprep.subr.mxu0 0.0
        %3200 = vmatpush1.msra.mxu0 0.0
        %3201 = vmatprep.subr.mxu0 0.0
        %3202 = vmatpush1.msra.mxu0 0.0
        %3203 = vmatprep.subr.mxu0 0.0
        %3204 = vmatpush1.msra.mxu0 0.0
        %3205 = vmatprep.subr.mxu0 0.0
        %3206 = vmatpush1.msra.mxu0 0.0
        %3207 = vmatprep.subr.mxu0 0.0
        %3208 = vmatpush1.msra.mxu0 0.0
        %3209 = vmatprep.subr.mxu0 0.0
        %3210 = vmatpush1.msra.mxu0 0.0
        %3211 = vmatprep.subr.mxu0 0.0
        %3212 = vmatpush1.msra.mxu0 0.0
        %3213 = vmatprep.subr.mxu0 0.0
        %3214 = vmatpush1.msra.mxu0 0.0
        %3215 = vmatprep.subr.mxu0 0.0
        %3216 = vmatpush1.msra.mxu0 0.0
        %3217 = vmatprep.subr.mxu0 0.0
        %3218 = vmatpush1.msra.mxu0 0.0
        %3219 = vmatprep.subr.mxu0 0.0
        %3220 = vmatpush1.msra.mxu0 0.0
        %3221 = vmatprep.subr.mxu0 0.0
        %3222 = vmatpush1.msra.mxu0 0.0
        %3223 = vmatprep.subr.mxu0 0.0
        %3224 = vmatpush1.msra.mxu0 0.0
        %3225 = vmatprep.subr.mxu0 0.0
        %3226 = vmatpush1.msra.mxu0 0.0
        %3227 = vmatprep.subr.mxu0 0.0
        %3228 = vmatpush1.msra.mxu0 0.0
        %3229 = vmatprep.subr.mxu0 0.0
        %3230 = vmatpush1.msra.mxu0 0.0
        %3231 = vmatprep.mubr.f32.mxu0 0.0
        %3232 = vmatmul.mubr.f32.gmra.mrb[0].mxu0 %v1912
        %v3233 = vpop.f32.mrb[0].mxu0
        %v3234 = vadd.f32 0.0, %v3233
        %v3235 = vpop.f32.mrb[0].mxu0
        %3236 = vmatprep.mubr.f32.mxu0 0.0
        %3237 = vmatmul.mubr.f32.gmra.mrb[0].mxu0 %v1915
        %v3238 = vpop.f32.mrb[0].mxu0
        %v3239 = vadd.f32 0.0, %v3238
        %v3240 = vpop.f32.mrb[0].mxu0
        %3241 = vmatprep.mubr.f32.mxu0 0.0
        %3242 = vmatmul.mubr.f32.gmra.mrb[0].mxu0 %v1918
        %v3243 = vpop.f32.mrb[0].mxu0
        %v3244 = vadd.f32 0.0, %v3243
        %v3245 = vpop.f32.mrb[0].mxu0
        %3246 = vmatprep.mubr.f32.mxu0 0.0
        %3247 = vmatmul.mubr.f32.gmra.mrb[0].mxu0 %v1921
        %v3248 = vpop.f32.mrb[0].mxu0
        %v3249 = vadd.f32 0.0, %v3248
        %v3250 = vpop.f32.mrb[0].mxu0
        %3251 = vdwg.mxu0
        %s3252 = scalar_lea.vmem %s41, 64
        %v3253 = vld [vmem:[%s3252] sm:$0xff]
        %v3254 = vld [vmem:[%s3252 + $0x8] sm:$0xff]
        %v3255 = vld [vmem:[%s3252 + $0x10] sm:$0xff]
        %v3256 = vld [vmem:[%s3252 + $0x18] sm:$0xff]
        %3257 = vmatprep.subr.mxu0 0.0
        %3258 = vmatpush1.msra.mxu0 %v3253
        %3259 = vmatprep.subr.mxu0 0.0
        %3260 = vmatpush1.msra.mxu0 %v3254
        %3261 = vmatprep.subr.mxu0 0.0
        %3262 = vmatpush1.msra.mxu0 %v3255
        %3263 = vmatprep.subr.mxu0 0.0
        %3264 = vmatpush1.msra.mxu0 %v3256
        %3265 = vmatprep.subr.mxu0 0.0
        %3266 = vmatpush1.msra.mxu0 0.0
        %3267 = vmatprep.subr.mxu0 0.0
        %3268 = vmatpush1.msra.mxu0 0.0
        %3269 = vmatprep.subr.mxu0 0.0
        %3270 = vmatpush1.msra.mxu0 0.0
        %3271 = vmatprep.subr.mxu0 0.0
        %3272 = vmatpush1.msra.mxu0 0.0
        %3273 = vmatprep.subr.mxu0 0.0
        %3274 = vmatpush1.msra.mxu0 0.0
        %3275 = vmatprep.subr.mxu0 0.0
        %3276 = vmatpush1.msra.mxu0 0.0
        %3277 = vmatprep.subr.mxu0 0.0
        %3278 = vmatpush1.msra.mxu0 0.0
        %3279 = vmatprep.subr.mxu0 0.0
        %3280 = vmatpush1.msra.mxu0 0.0
        %3281 = vmatprep.subr.mxu0 0.0
        %3282 = vmatpush1.msra.mxu0 0.0
        %3283 = vmatprep.subr.mxu0 0.0
        %3284 = vmatpush1.msra.mxu0 0.0
        %3285 = vmatprep.subr.mxu0 0.0
        %3286 = vmatpush1.msra.mxu0 0.0
        %3287 = vmatprep.subr.mxu0 0.0
        %3288 = vmatpush1.msra.mxu0 0.0
        %3289 = vmatprep.subr.mxu0 0.0
        %3290 = vmatpush1.msra.mxu0 0.0
        %3291 = vmatprep.subr.mxu0 0.0
        %3292 = vmatpush1.msra.mxu0 0.0
        %3293 = vmatprep.subr.mxu0 0.0
        %3294 = vmatpush1.msra.mxu0 0.0
        %3295 = vmatprep.subr.mxu0 0.0
        %3296 = vmatpush1.msra.mxu0 0.0
        %3297 = vmatprep.subr.mxu0 0.0
        %3298 = vmatpush1.msra.mxu0 0.0
        %3299 = vmatprep.subr.mxu0 0.0
        %3300 = vmatpush1.msra.mxu0 0.0
        %3301 = vmatprep.subr.mxu0 0.0
        %3302 = vmatpush1.msra.mxu0 0.0
        %3303 = vmatprep.subr.mxu0 0.0
        %3304 = vmatpush1.msra.mxu0 0.0
        %3305 = vmatprep.subr.mxu0 0.0
        %3306 = vmatpush1.msra.mxu0 0.0
        %3307 = vmatprep.subr.mxu0 0.0
        %3308 = vmatpush1.msra.mxu0 0.0
        %3309 = vmatprep.subr.mxu0 0.0
        %3310 = vmatpush1.msra.mxu0 0.0
        %3311 = vmatprep.subr.mxu0 0.0
        %3312 = vmatpush1.msra.mxu0 0.0
        %3313 = vmatprep.subr.mxu0 0.0
        %3314 = vmatpush1.msra.mxu0 0.0
        %3315 = vmatprep.subr.mxu0 0.0
        %3316 = vmatpush1.msra.mxu0 0.0
        %3317 = vmatprep.subr.mxu0 0.0
        %3318 = vmatpush1.msra.mxu0 0.0
        %3319 = vmatprep.subr.mxu0 0.0
        %3320 = vmatpush1.msra.mxu0 0.0
        %3321 = vmatprep.mubr.f32.mxu0 0.0
        %3322 = vmatmul.mubr.f32.gmra.mrb[0].mxu0 %v1912
        %v3323 = vpop.f32.mrb[0].mxu0
        %v3324 = vadd.f32 0.0, %v3323
        %v3325 = vpop.f32.mrb[0].mxu0
        %3326 = vmatprep.mubr.f32.mxu0 0.0
        %3327 = vmatmul.mubr.f32.gmra.mrb[0].mxu0 %v1915
        %v3328 = vpop.f32.mrb[0].mxu0
        %v3329 = vadd.f32 0.0, %v3328
        %v3330 = vpop.f32.mrb[0].mxu0
        %3331 = vmatprep.mubr.f32.mxu0 0.0
        %3332 = vmatmul.mubr.f32.gmra.mrb[0].mxu0 %v1918
        %v3333 = vpop.f32.mrb[0].mxu0
        %v3334 = vadd.f32 0.0, %v3333
        %v3335 = vpop.f32.mrb[0].mxu0
        %3336 = vmatprep.mubr.f32.mxu0 0.0
        %3337 = vmatmul.mubr.f32.gmra.mrb[0].mxu0 %v1921
        %v3338 = vpop.f32.mrb[0].mxu0
        %v3339 = vadd.f32 0.0, %v3338
        %v3340 = vpop.f32.mrb[0].mxu0
        %3341 = vdwg.mxu0
        %s3342 = scalar_lea.vmem %s43, 64
        %v3343 = vld [vmem:[%s3342] sm:$0xff]
        %v3344 = vld [vmem:[%s3342 + $0x8] sm:$0xff]
        %v3345 = vld [vmem:[%s3342 + $0x10] sm:$0xff]
        %v3346 = vld [vmem:[%s3342 + $0x18] sm:$0xff]
        %3347 = vmatprep.subr.mxu0 0.0
        %3348 = vmatpush1.msra.mxu0 %v3343
        %3349 = vmatprep.subr.mxu0 0.0
        %3350 = vmatpush1.msra.mxu0 %v3344
        %3351 = vmatprep.subr.mxu0 0.0
        %3352 = vmatpush1.msra.mxu0 %v3345
        %3353 = vmatprep.subr.mxu0 0.0
        %3354 = vmatpush1.msra.mxu0 %v3346
        %3355 = vmatprep.subr.mxu0 0.0
        %3356 = vmatpush1.msra.mxu0 0.0
        %3357 = vmatprep.subr.mxu0 0.0
        %3358 = vmatpush1.msra.mxu0 0.0
        %3359 = vmatprep.subr.mxu0 0.0
        %3360 = vmatpush1.msra.mxu0 0.0
        %3361 = vmatprep.subr.mxu0 0.0
        %3362 = vmatpush1.msra.mxu0 0.0
        %3363 = vmatprep.subr.mxu0 0.0
        %3364 = vmatpush1.msra.mxu0 0.0
        %3365 = vmatprep.subr.mxu0 0.0
        %3366 = vmatpush1.msra.mxu0 0.0
        %3367 = vmatprep.subr.mxu0 0.0
        %3368 = vmatpush1.msra.mxu0 0.0
        %3369 = vmatprep.subr.mxu0 0.0
        %3370 = vmatpush1.msra.mxu0 0.0
        %3371 = vmatprep.subr.mxu0 0.0
        %3372 = vmatpush1.msra.mxu0 0.0
        %3373 = vmatprep.subr.mxu0 0.0
        %3374 = vmatpush1.msra.mxu0 0.0
        %3375 = vmatprep.subr.mxu0 0.0
        %3376 = vmatpush1.msra.mxu0 0.0
        %3377 = vmatprep.subr.mxu0 0.0
        %3378 = vmatpush1.msra.mxu0 0.0
        %3379 = vmatprep.subr.mxu0 0.0
        %3380 = vmatpush1.msra.mxu0 0.0
        %3381 = vmatprep.subr.mxu0 0.0
        %3382 = vmatpush1.msra.mxu0 0.0
        %3383 = vmatprep.subr.mxu0 0.0
        %3384 = vmatpush1.msra.mxu0 0.0
        %3385 = vmatprep.subr.mxu0 0.0
        %3386 = vmatpush1.msra.mxu0 0.0
        %3387 = vmatprep.subr.mxu0 0.0
        %3388 = vmatpush1.msra.mxu0 0.0
        %3389 = vmatprep.subr.mxu0 0.0
        %3390 = vmatpush1.msra.mxu0 0.0
        %3391 = vmatprep.subr.mxu0 0.0
        %3392 = vmatpush1.msra.mxu0 0.0
        %3393 = vmatprep.subr.mxu0 0.0
        %3394 = vmatpush1.msra.mxu0 0.0
        %3395 = vmatprep.subr.mxu0 0.0
        %3396 = vmatpush1.msra.mxu0 0.0
        %3397 = vmatprep.subr.mxu0 0.0
        %3398 = vmatpush1.msra.mxu0 0.0
        %3399 = vmatprep.subr.mxu0 0.0
        %3400 = vmatpush1.msra.mxu0 0.0
        %3401 = vmatprep.subr.mxu0 0.0
        %3402 = vmatpush1.msra.mxu0 0.0
        %3403 = vmatprep.subr.mxu0 0.0
        %3404 = vmatpush1.msra.mxu0 0.0
        %3405 = vmatprep.subr.mxu0 0.0
        %3406 = vmatpush1.msra.mxu0 0.0
        %3407 = vmatprep.subr.mxu0 0.0
        %3408 = vmatpush1.msra.mxu0 0.0
        %3409 = vmatprep.subr.mxu0 0.0
        %3410 = vmatpush1.msra.mxu0 0.0
        %3411 = vmatprep.mubr.f32.mxu0 0.0
        %3412 = vmatmul.mubr.f32.gmra.mrb[0].mxu0 %v1912
        %v3413 = vpop.f32.mrb[0].mxu0
        %v3414 = vadd.f32 0.0, %v3413
        %v3415 = vpop.f32.mrb[0].mxu0
        %3416 = vmatprep.mubr.f32.mxu0 0.0
        %3417 = vmatmul.mubr.f32.gmra.mrb[0].mxu0 %v1915
        %v3418 = vpop.f32.mrb[0].mxu0
        %v3419 = vadd.f32 0.0, %v3418
        %v3420 = vpop.f32.mrb[0].mxu0
        %3421 = vmatprep.mubr.f32.mxu0 0.0
        %3422 = vmatmul.mubr.f32.gmra.mrb[0].mxu0 %v1918
        %v3423 = vpop.f32.mrb[0].mxu0
        %v3424 = vadd.f32 0.0, %v3423
        %v3425 = vpop.f32.mrb[0].mxu0
        %3426 = vmatprep.mubr.f32.mxu0 0.0
        %3427 = vmatmul.mubr.f32.gmra.mrb[0].mxu0 %v1921
        %v3428 = vpop.f32.mrb[0].mxu0
        %v3429 = vadd.f32 0.0, %v3428
        %v3430 = vpop.f32.mrb[0].mxu0
        %3431 = vdwg.mxu0
        %v3433 = vsel %vm1317, %v3234, 0
        %v3436 = vsel %vm1317, %v3239, 0
        %v3439 = vsel %vm1317, %v3244, 0
        %v3442 = vsel %vm1317, %v3249, 0
        %v3445 = vsel %vm1317, %v3324, 0
        %v3448 = vsel %vm1317, %v3329, 0
        %v3451 = vsel %vm1317, %v3334, 0
        %v3454 = vsel %vm1317, %v3339, 0
        %3456 = vmatprep.subr.mxu0 0.0
        %3457 = vmatpush1.xpose.msra.mxu0 %v3445
        %3458 = vmatprep.subr.mxu0 0.0
        %3459 = vmatpush1.xpose.msra.mxu0 %v3448
        %3460 = vmatprep.subr.mxu0 0.0
        %3461 = vmatpush1.xpose.msra.mxu0 %v3451
        %3462 = vmatprep.subr.mxu0 0.0
        %3463 = vmatpush1.xpose.msra.mxu0 %v3454
        %3464 = vmatprep.subr.mxu0 0.0
        %3465 = vmatpush1.xpose.msra.mxu0 0.0
        %3466 = vmatprep.subr.mxu0 0.0
        %3467 = vmatpush1.xpose.msra.mxu0 0.0
        %3468 = vmatprep.subr.mxu0 0.0
        %3469 = vmatpush1.xpose.msra.mxu0 0.0
        %3470 = vmatprep.subr.mxu0 0.0
        %3471 = vmatpush1.xpose.msra.mxu0 0.0
        %3472 = vmatprep.subr.mxu0 0.0
        %3473 = vmatpush1.xpose.msra.mxu0 0.0
        %3474 = vmatprep.subr.mxu0 0.0
        %3475 = vmatpush1.xpose.msra.mxu0 0.0
        %3476 = vmatprep.subr.mxu0 0.0
        %3477 = vmatpush1.xpose.msra.mxu0 0.0
        %3478 = vmatprep.subr.mxu0 0.0
        %3479 = vmatpush1.xpose.msra.mxu0 0.0
        %3480 = vmatprep.subr.mxu0 0.0
        %3481 = vmatpush1.xpose.msra.mxu0 0.0
        %3482 = vmatprep.subr.mxu0 0.0
        %3483 = vmatpush1.xpose.msra.mxu0 0.0
        %3484 = vmatprep.subr.mxu0 0.0
        %3485 = vmatpush1.xpose.msra.mxu0 0.0
        %3486 = vmatprep.subr.mxu0 0.0
        %3487 = vmatpush1.xpose.msra.mxu0 0.0
        %3488 = vmatprep.subr.mxu0 0.0
        %3489 = vmatpush1.xpose.msra.mxu0 0.0
        %3490 = vmatprep.subr.mxu0 0.0
        %3491 = vmatpush1.xpose.msra.mxu0 0.0
        %3492 = vmatprep.subr.mxu0 0.0
        %3493 = vmatpush1.xpose.msra.mxu0 0.0
        %3494 = vmatprep.subr.mxu0 0.0
        %3495 = vmatpush1.xpose.msra.mxu0 0.0
        %3496 = vmatprep.subr.mxu0 0.0
        %3497 = vmatpush1.xpose.msra.mxu0 0.0
        %3498 = vmatprep.subr.mxu0 0.0
        %3499 = vmatpush1.xpose.msra.mxu0 0.0
        %3500 = vmatprep.subr.mxu0 0.0
        %3501 = vmatpush1.xpose.msra.mxu0 0.0
        %3502 = vmatprep.subr.mxu0 0.0
        %3503 = vmatpush1.xpose.msra.mxu0 0.0
        %3504 = vmatprep.subr.mxu0 0.0
        %3505 = vmatpush1.xpose.msra.mxu0 0.0
        %3506 = vmatprep.subr.mxu0 0.0
        %3507 = vmatpush1.xpose.msra.mxu0 0.0
        %3508 = vmatprep.subr.mxu0 0.0
        %3509 = vmatpush1.xpose.msra.mxu0 0.0
        %3510 = vmatprep.subr.mxu0 0.0
        %3511 = vmatpush1.xpose.msra.mxu0 0.0
        %3512 = vmatprep.subr.mxu0 0.0
        %3513 = vmatpush1.xpose.msra.mxu0 0.0
        %3514 = vmatprep.subr.mxu0 0.0
        %3515 = vmatpush1.xpose.msra.mxu0 0.0
        %3516 = vmatprep.subr.mxu0 0.0
        %3517 = vmatpush1.xpose.msra.mxu0 0.0
        %3518 = vmatprep.subr.mxu0 0.0
        %3519 = vmatpush1.xpose.msra.mxu0 0.0
        %3520 = vmatprep.mubr.f32.mxu0 0.0
        %3521 = vmatmul.mubr.f32.gmra.mrb[0].mxu0 %v3433
        %v3522 = vpop.f32.mrb[0].mxu0
        %v3523 = vadd.f32 %v1899, %v3522
        %v3524 = vpop.f32.mrb[0].mxu0
        %3525 = vmatprep.mubr.f32.mxu0 0.0
        %3526 = vmatmul.mubr.f32.gmra.mrb[0].mxu0 %v3436
        %v3527 = vpop.f32.mrb[0].mxu0
        %v3528 = vadd.f32 %v1900, %v3527
        %v3529 = vpop.f32.mrb[0].mxu0
        %3530 = vmatprep.mubr.f32.mxu0 0.0
        %3531 = vmatmul.mubr.f32.gmra.mrb[0].mxu0 %v3439
        %v3532 = vpop.f32.mrb[0].mxu0
        %v3533 = vadd.f32 %v1901, %v3532
        %v3534 = vpop.f32.mrb[0].mxu0
        %3535 = vmatprep.mubr.f32.mxu0 0.0
        %3536 = vmatmul.mubr.f32.gmra.mrb[0].mxu0 %v3442
        %v3537 = vpop.f32.mrb[0].mxu0
        %v3538 = vadd.f32 %v1902, %v3537
        %v3539 = vpop.f32.mrb[0].mxu0
        %3540 = vdwg.mxu0
        %v3541 = vsel %vm2295, %v3523, -inf
        %3542 = vmax.xlane.f32.xlu0 %v3541
        %v3543 = vpop.xlane.xlu0 %3542
        %v3544 = vsel %vm2295, %v3528, -inf
        %3545 = vmax.xlane.f32.xlu0 %v3544
        %v3546 = vpop.xlane.xlu0 %3545
        %v3547 = vsel %vm2295, %v3533, -inf
        %3548 = vmax.xlane.f32.xlu0 %v3547
        %v3549 = vpop.xlane.xlu0 %3548
        %v3550 = vsel %vm2305, %v3538, -inf
        %3551 = vmax.xlane.f32.xlu0 %v3550
        %v3552 = vpop.xlane.xlu0 %3551
        %v3553 = vsub.f32 %v3523, %v3543
        %v3554 = vsub.f32 %v3528, %v3546
        %v3555 = vsub.f32 %v3533, %v3549
        %v3556 = vsub.f32 %v3538, %v3552
        %v3557 = vmul.f32 %v3553, 1.442695
        %v3558 = vpow.pop %v3557
        %v3559 = vmul.f32 %v3554, 1.442695
        %v3560 = vpow.pop %v3559
        %v3561 = vmul.f32 %v3555, 1.442695
        %v3562 = vpow.pop %v3561
        %v3563 = vmul.f32 %v3556, 1.442695
        %v3564 = vpow.pop %v3563
        %v3565 = vsel %vm2295, %v3558, 0.0
        %3566 = vadd.xlane.f32.xlu0 %v3565
        %v3567 = vpop.xlane.xlu0 %3566
        %v3568 = vsel %vm2295, %v3560, 0.0
        %3569 = vadd.xlane.f32.xlu0 %v3568
        %v3570 = vpop.xlane.xlu0 %3569
        %v3571 = vsel %vm2295, %v3562, 0.0
        %3572 = vadd.xlane.f32.xlu0 %v3571
        %v3573 = vpop.xlane.xlu0 %3572
        %v3574 = vsel %vm2305, %v3564, 0.0
        %3575 = vadd.xlane.f32.xlu0 %v3574
        %v3576 = vpop.xlane.xlu0 %3575
        %v3577 = vrcp.pop %v3567
        %v3578 = vrcp.pop %v3570
        %v3579 = vrcp.pop %v3573
        %v3580 = vrcp.pop %v3576
        %v3582 = vsel %vm2295, %v3558, 0
        %v3585 = vsel %vm2295, %v3560, 0
        %v3588 = vsel %vm2295, %v3562, 0
        %v3591 = vsel %vm2295, %v3564, 0
        %v3594 = vsel %vm2349, %v3429, 0
        %3596 = vmatprep.subr.mxu0 0.0
        %3597 = vmatpush1.msra.mxu0 %v3414
        %3598 = vmatprep.subr.mxu0 0.0
        %3599 = vmatpush1.msra.mxu0 %v3419
        %3600 = vmatprep.subr.mxu0 0.0
        %3601 = vmatpush1.msra.mxu0 %v3424
        %3602 = vmatprep.subr.mxu0 0.0
        %3603 = vmatpush1.msra.mxu0 %v3594
        %3604 = vmatprep.subr.mxu0 0.0
        %3605 = vmatpush1.msra.mxu0 0.0
        %3606 = vmatprep.subr.mxu0 0.0
        %3607 = vmatpush1.msra.mxu0 0.0
        %3608 = vmatprep.subr.mxu0 0.0
        %3609 = vmatpush1.msra.mxu0 0.0
        %3610 = vmatprep.subr.mxu0 0.0
        %3611 = vmatpush1.msra.mxu0 0.0
        %3612 = vmatprep.subr.mxu0 0.0
        %3613 = vmatpush1.msra.mxu0 0.0
        %3614 = vmatprep.subr.mxu0 0.0
        %3615 = vmatpush1.msra.mxu0 0.0
        %3616 = vmatprep.subr.mxu0 0.0
        %3617 = vmatpush1.msra.mxu0 0.0
        %3618 = vmatprep.subr.mxu0 0.0
        %3619 = vmatpush1.msra.mxu0 0.0
        %3620 = vmatprep.subr.mxu0 0.0
        %3621 = vmatpush1.msra.mxu0 0.0
        %3622 = vmatprep.subr.mxu0 0.0
        %3623 = vmatpush1.msra.mxu0 0.0
        %3624 = vmatprep.subr.mxu0 0.0
        %3625 = vmatpush1.msra.mxu0 0.0
        %3626 = vmatprep.subr.mxu0 0.0
        %3627 = vmatpush1.msra.mxu0 0.0
        %3628 = vmatprep.subr.mxu0 0.0
        %3629 = vmatpush1.msra.mxu0 0.0
        %3630 = vmatprep.subr.mxu0 0.0
        %3631 = vmatpush1.msra.mxu0 0.0
        %3632 = vmatprep.subr.mxu0 0.0
        %3633 = vmatpush1.msra.mxu0 0.0
        %3634 = vmatprep.subr.mxu0 0.0
        %3635 = vmatpush1.msra.mxu0 0.0
        %3636 = vmatprep.subr.mxu0 0.0
        %3637 = vmatpush1.msra.mxu0 0.0
        %3638 = vmatprep.subr.mxu0 0.0
        %3639 = vmatpush1.msra.mxu0 0.0
        %3640 = vmatprep.subr.mxu0 0.0
        %3641 = vmatpush1.msra.mxu0 0.0
        %3642 = vmatprep.subr.mxu0 0.0
        %3643 = vmatpush1.msra.mxu0 0.0
        %3644 = vmatprep.subr.mxu0 0.0
        %3645 = vmatpush1.msra.mxu0 0.0
        %3646 = vmatprep.subr.mxu0 0.0
        %3647 = vmatpush1.msra.mxu0 0.0
        %3648 = vmatprep.subr.mxu0 0.0
        %3649 = vmatpush1.msra.mxu0 0.0
        %3650 = vmatprep.subr.mxu0 0.0
        %3651 = vmatpush1.msra.mxu0 0.0
        %3652 = vmatprep.subr.mxu0 0.0
        %3653 = vmatpush1.msra.mxu0 0.0
        %3654 = vmatprep.subr.mxu0 0.0
        %3655 = vmatpush1.msra.mxu0 0.0
        %3656 = vmatprep.subr.mxu0 0.0
        %3657 = vmatpush1.msra.mxu0 0.0
        %3658 = vmatprep.subr.mxu0 0.0
        %3659 = vmatpush1.msra.mxu0 0.0
        %3660 = vmatprep.mubr.f32.mxu0 0.0
        %3661 = vmatmul.mubr.f32.gmra.mrb[0].mxu0 %v3582
        %v3662 = vpop.f32.mrb[0].mxu0
        %v3663 = vadd.f32 0.0, %v3662
        %v3664 = vpop.f32.mrb[0].mxu0
        %3665 = vmatprep.mubr.f32.mxu0 0.0
        %3666 = vmatmul.mubr.f32.gmra.mrb[0].mxu0 %v3585
        %v3667 = vpop.f32.mrb[0].mxu0
        %v3668 = vadd.f32 0.0, %v3667
        %v3669 = vpop.f32.mrb[0].mxu0
        %3670 = vmatprep.mubr.f32.mxu0 0.0
        %3671 = vmatmul.mubr.f32.gmra.mrb[0].mxu0 %v3588
        %v3672 = vpop.f32.mrb[0].mxu0
        %v3673 = vadd.f32 0.0, %v3672
        %v3674 = vpop.f32.mrb[0].mxu0
        %3675 = vmatprep.mubr.f32.mxu0 0.0
        %3676 = vmatmul.mubr.f32.gmra.mrb[0].mxu0 %v3591
        %v3677 = vpop.f32.mrb[0].mxu0
        %v3678 = vadd.f32 0.0, %v3677
        %v3679 = vpop.f32.mrb[0].mxu0
        %3680 = vdwg.mxu0
        %v3681 = vmul.f32 %v3663, %v3577
        %v3682 = vmul.f32 %v3668, %v3578
        %v3683 = vmul.f32 %v3673, %v3579
        %v3684 = vmul.f32 %v3678, %v3580
        %s3685 = scalar_lea.vmem %s45, 16
        %v3686 = vld [vmem:[%s3685] sm:$0xff]
        %v3688 = vsel %vm1317, %v3681, 0
        %v3691 = vsel %vm1317, %v3682, 0
        %v3694 = vsel %vm1317, %v3683, 0
        %v3697 = vsel %vm1317, %v3684, 0
        %3699 = vmatprep.subr.mxu0 0.0
        %3700 = vmatpush1.msra.mxu0 %v3686
        %3701 = vmatprep.subr.mxu0 0.0
        %3702 = vmatpush1.msra.mxu0 0.0
        %3703 = vmatprep.subr.mxu0 0.0
        %3704 = vmatpush1.msra.mxu0 0.0
        %3705 = vmatprep.subr.mxu0 0.0
        %3706 = vmatpush1.msra.mxu0 0.0
        %3707 = vmatprep.subr.mxu0 0.0
        %3708 = vmatpush1.msra.mxu0 0.0
        %3709 = vmatprep.subr.mxu0 0.0
        %3710 = vmatpush1.msra.mxu0 0.0
        %3711 = vmatprep.subr.mxu0 0.0
        %3712 = vmatpush1.msra.mxu0 0.0
        %3713 = vmatprep.subr.mxu0 0.0
        %3714 = vmatpush1.msra.mxu0 0.0
        %3715 = vmatprep.subr.mxu0 0.0
        %3716 = vmatpush1.msra.mxu0 0.0
        %3717 = vmatprep.subr.mxu0 0.0
        %3718 = vmatpush1.msra.mxu0 0.0
        %3719 = vmatprep.subr.mxu0 0.0
        %3720 = vmatpush1.msra.mxu0 0.0
        %3721 = vmatprep.subr.mxu0 0.0
        %3722 = vmatpush1.msra.mxu0 0.0
        %3723 = vmatprep.subr.mxu0 0.0
        %3724 = vmatpush1.msra.mxu0 0.0
        %3725 = vmatprep.subr.mxu0 0.0
        %3726 = vmatpush1.msra.mxu0 0.0
        %3727 = vmatprep.subr.mxu0 0.0
        %3728 = vmatpush1.msra.mxu0 0.0
        %3729 = vmatprep.subr.mxu0 0.0
        %3730 = vmatpush1.msra.mxu0 0.0
        %3731 = vmatprep.subr.mxu0 0.0
        %3732 = vmatpush1.msra.mxu0 0.0
        %3733 = vmatprep.subr.mxu0 0.0
        %3734 = vmatpush1.msra.mxu0 0.0
        %3735 = vmatprep.subr.mxu0 0.0
        %3736 = vmatpush1.msra.mxu0 0.0
        %3737 = vmatprep.subr.mxu0 0.0
        %3738 = vmatpush1.msra.mxu0 0.0
        %3739 = vmatprep.subr.mxu0 0.0
        %3740 = vmatpush1.msra.mxu0 0.0
        %3741 = vmatprep.subr.mxu0 0.0
        %3742 = vmatpush1.msra.mxu0 0.0
        %3743 = vmatprep.subr.mxu0 0.0
        %3744 = vmatpush1.msra.mxu0 0.0
        %3745 = vmatprep.subr.mxu0 0.0
        %3746 = vmatpush1.msra.mxu0 0.0
        %3747 = vmatprep.subr.mxu0 0.0
        %3748 = vmatpush1.msra.mxu0 0.0
        %3749 = vmatprep.subr.mxu0 0.0
        %3750 = vmatpush1.msra.mxu0 0.0
        %3751 = vmatprep.subr.mxu0 0.0
        %3752 = vmatpush1.msra.mxu0 0.0
        %3753 = vmatprep.subr.mxu0 0.0
        %3754 = vmatpush1.msra.mxu0 0.0
        %3755 = vmatprep.subr.mxu0 0.0
        %3756 = vmatpush1.msra.mxu0 0.0
        %3757 = vmatprep.subr.mxu0 0.0
        %3758 = vmatpush1.msra.mxu0 0.0
        %3759 = vmatprep.subr.mxu0 0.0
        %3760 = vmatpush1.msra.mxu0 0.0
        %3761 = vmatprep.subr.mxu0 0.0
        %3762 = vmatpush1.msra.mxu0 0.0
        %3763 = vmatprep.mubr.f32.mxu0 0.0
        %3764 = vmatmul.mubr.f32.gmra.mrb[0].mxu0 %v3688
        %v3765 = vpop.f32.mrb[0].mxu0
        %v3766 = vadd.f32 0.0, %v3765
        %v3767 = vpop.f32.mrb[0].mxu0
        %3768 = vmatprep.mubr.f32.mxu0 0.0
        %3769 = vmatmul.mubr.f32.gmra.mrb[0].mxu0 %v3691
        %v3770 = vpop.f32.mrb[0].mxu0
        %v3771 = vadd.f32 0.0, %v3770
        %v3772 = vpop.f32.mrb[0].mxu0
        %3773 = vmatprep.mubr.f32.mxu0 0.0
        %3774 = vmatmul.mubr.f32.gmra.mrb[0].mxu0 %v3694
        %v3775 = vpop.f32.mrb[0].mxu0
        %v3776 = vadd.f32 0.0, %v3775
        %v3777 = vpop.f32.mrb[0].mxu0
        %3778 = vmatprep.mubr.f32.mxu0 0.0
        %3779 = vmatmul.mubr.f32.gmra.mrb[0].mxu0 %v3697
        %v3780 = vpop.f32.mrb[0].mxu0
        %v3781 = vadd.f32 0.0, %v3780
        %v3782 = vpop.f32.mrb[0].mxu0
        %3783 = vdwg.mxu0
        %v3784 = vadd.f32 %v3144, %v3766
        %v3785 = vadd.f32 %v3149, %v3771
        %v3786 = vadd.f32 %v3154, %v3776
        %v3787 = vadd.f32 %v3159, %v3781
        %s3788 = scalar_lea.vmem %s39, 96
        %v3789 = vld [vmem:[%s3788] sm:$0xff]
        %v3790 = vld [vmem:[%s3788 + $0x8] sm:$0xff]
        %v3791 = vld [vmem:[%s3788 + $0x10] sm:$0xff]
        %v3792 = vld [vmem:[%s3788 + $0x18] sm:$0xff]
        %3793 = vmatprep.subr.mxu0 0.0
        %3794 = vmatpush1.msra.mxu0 %v3789
        %3795 = vmatprep.subr.mxu0 0.0
        %3796 = vmatpush1.msra.mxu0 %v3790
        %3797 = vmatprep.subr.mxu0 0.0
        %3798 = vmatpush1.msra.mxu0 %v3791
        %3799 = vmatprep.subr.mxu0 0.0
        %3800 = vmatpush1.msra.mxu0 %v3792
        %3801 = vmatprep.subr.mxu0 0.0
        %3802 = vmatpush1.msra.mxu0 0.0
        %3803 = vmatprep.subr.mxu0 0.0
        %3804 = vmatpush1.msra.mxu0 0.0
        %3805 = vmatprep.subr.mxu0 0.0
        %3806 = vmatpush1.msra.mxu0 0.0
        %3807 = vmatprep.subr.mxu0 0.0
        %3808 = vmatpush1.msra.mxu0 0.0
        %3809 = vmatprep.subr.mxu0 0.0
        %3810 = vmatpush1.msra.mxu0 0.0
        %3811 = vmatprep.subr.mxu0 0.0
        %3812 = vmatpush1.msra.mxu0 0.0
        %3813 = vmatprep.subr.mxu0 0.0
        %3814 = vmatpush1.msra.mxu0 0.0
        %3815 = vmatprep.subr.mxu0 0.0
        %3816 = vmatpush1.msra.mxu0 0.0
        %3817 = vmatprep.subr.mxu0 0.0
        %3818 = vmatpush1.msra.mxu0 0.0
        %3819 = vmatprep.subr.mxu0 0.0
        %3820 = vmatpush1.msra.mxu0 0.0
        %3821 = vmatprep.subr.mxu0 0.0
        %3822 = vmatpush1.msra.mxu0 0.0
        %3823 = vmatprep.subr.mxu0 0.0
        %3824 = vmatpush1.msra.mxu0 0.0
        %3825 = vmatprep.subr.mxu0 0.0
        %3826 = vmatpush1.msra.mxu0 0.0
        %3827 = vmatprep.subr.mxu0 0.0
        %3828 = vmatpush1.msra.mxu0 0.0
        %3829 = vmatprep.subr.mxu0 0.0
        %3830 = vmatpush1.msra.mxu0 0.0
        %3831 = vmatprep.subr.mxu0 0.0
        %3832 = vmatpush1.msra.mxu0 0.0
        %3833 = vmatprep.subr.mxu0 0.0
        %3834 = vmatpush1.msra.mxu0 0.0
        %3835 = vmatprep.subr.mxu0 0.0
        %3836 = vmatpush1.msra.mxu0 0.0
        %3837 = vmatprep.subr.mxu0 0.0
        %3838 = vmatpush1.msra.mxu0 0.0
        %3839 = vmatprep.subr.mxu0 0.0
        %3840 = vmatpush1.msra.mxu0 0.0
        %3841 = vmatprep.subr.mxu0 0.0
        %3842 = vmatpush1.msra.mxu0 0.0
        %3843 = vmatprep.subr.mxu0 0.0
        %3844 = vmatpush1.msra.mxu0 0.0
        %3845 = vmatprep.subr.mxu0 0.0
        %3846 = vmatpush1.msra.mxu0 0.0
        %3847 = vmatprep.subr.mxu0 0.0
        %3848 = vmatpush1.msra.mxu0 0.0
        %3849 = vmatprep.subr.mxu0 0.0
        %3850 = vmatpush1.msra.mxu0 0.0
        %3851 = vmatprep.subr.mxu0 0.0
        %3852 = vmatpush1.msra.mxu0 0.0
        %3853 = vmatprep.subr.mxu0 0.0
        %3854 = vmatpush1.msra.mxu0 0.0
        %3855 = vmatprep.subr.mxu0 0.0
        %3856 = vmatpush1.msra.mxu0 0.0
        %3857 = vmatprep.mubr.f32.mxu0 0.0
        %3858 = vmatmul.mubr.f32.gmra.mrb[0].mxu0 %v1912
        %v3859 = vpop.f32.mrb[0].mxu0
        %v3860 = vadd.f32 0.0, %v3859
        %v3861 = vpop.f32.mrb[0].mxu0
        %3862 = vmatprep.mubr.f32.mxu0 0.0
        %3863 = vmatmul.mubr.f32.gmra.mrb[0].mxu0 %v1915
        %v3864 = vpop.f32.mrb[0].mxu0
        %v3865 = vadd.f32 0.0, %v3864
        %v3866 = vpop.f32.mrb[0].mxu0
        %3867 = vmatprep.mubr.f32.mxu0 0.0
        %3868 = vmatmul.mubr.f32.gmra.mrb[0].mxu0 %v1918
        %v3869 = vpop.f32.mrb[0].mxu0
        %v3870 = vadd.f32 0.0, %v3869
        %v3871 = vpop.f32.mrb[0].mxu0
        %3872 = vmatprep.mubr.f32.mxu0 0.0
        %3873 = vmatmul.mubr.f32.gmra.mrb[0].mxu0 %v1921
        %v3874 = vpop.f32.mrb[0].mxu0
        %v3875 = vadd.f32 0.0, %v3874
        %v3876 = vpop.f32.mrb[0].mxu0
        %3877 = vdwg.mxu0
        %s3878 = scalar_lea.vmem %s41, 96
        %v3879 = vld [vmem:[%s3878] sm:$0xff]
        %v3880 = vld [vmem:[%s3878 + $0x8] sm:$0xff]
        %v3881 = vld [vmem:[%s3878 + $0x10] sm:$0xff]
        %v3882 = vld [vmem:[%s3878 + $0x18] sm:$0xff]
        %3883 = vmatprep.subr.mxu0 0.0
        %3884 = vmatpush1.msra.mxu0 %v3879
        %3885 = vmatprep.subr.mxu0 0.0
        %3886 = vmatpush1.msra.mxu0 %v3880
        %3887 = vmatprep.subr.mxu0 0.0
        %3888 = vmatpush1.msra.mxu0 %v3881
        %3889 = vmatprep.subr.mxu0 0.0
        %3890 = vmatpush1.msra.mxu0 %v3882
        %3891 = vmatprep.subr.mxu0 0.0
        %3892 = vmatpush1.msra.mxu0 0.0
        %3893 = vmatprep.subr.mxu0 0.0
        %3894 = vmatpush1.msra.mxu0 0.0
        %3895 = vmatprep.subr.mxu0 0.0
        %3896 = vmatpush1.msra.mxu0 0.0
        %3897 = vmatprep.subr.mxu0 0.0
        %3898 = vmatpush1.msra.mxu0 0.0
        %3899 = vmatprep.subr.mxu0 0.0
        %3900 = vmatpush1.msra.mxu0 0.0
        %3901 = vmatprep.subr.mxu0 0.0
        %3902 = vmatpush1.msra.mxu0 0.0
        %3903 = vmatprep.subr.mxu0 0.0
        %3904 = vmatpush1.msra.mxu0 0.0
        %3905 = vmatprep.subr.mxu0 0.0
        %3906 = vmatpush1.msra.mxu0 0.0
        %3907 = vmatprep.subr.mxu0 0.0
        %3908 = vmatpush1.msra.mxu0 0.0
        %3909 = vmatprep.subr.mxu0 0.0
        %3910 = vmatpush1.msra.mxu0 0.0
        %3911 = vmatprep.subr.mxu0 0.0
        %3912 = vmatpush1.msra.mxu0 0.0
        %3913 = vmatprep.subr.mxu0 0.0
        %3914 = vmatpush1.msra.mxu0 0.0
        %3915 = vmatprep.subr.mxu0 0.0
        %3916 = vmatpush1.msra.mxu0 0.0
        %3917 = vmatprep.subr.mxu0 0.0
        %3918 = vmatpush1.msra.mxu0 0.0
        %3919 = vmatprep.subr.mxu0 0.0
        %3920 = vmatpush1.msra.mxu0 0.0
        %3921 = vmatprep.subr.mxu0 0.0
        %3922 = vmatpush1.msra.mxu0 0.0
        %3923 = vmatprep.subr.mxu0 0.0
        %3924 = vmatpush1.msra.mxu0 0.0
        %3925 = vmatprep.subr.mxu0 0.0
        %3926 = vmatpush1.msra.mxu0 0.0
        %3927 = vmatprep.subr.mxu0 0.0
        %3928 = vmatpush1.msra.mxu0 0.0
        %3929 = vmatprep.subr.mxu0 0.0
        %3930 = vmatpush1.msra.mxu0 0.0
        %3931 = vmatprep.subr.mxu0 0.0
        %3932 = vmatpush1.msra.mxu0 0.0
        %3933 = vmatprep.subr.mxu0 0.0
        %3934 = vmatpush1.msra.mxu0 0.0
        %3935 = vmatprep.subr.mxu0 0.0
        %3936 = vmatpush1.msra.mxu0 0.0
        %3937 = vmatprep.subr.mxu0 0.0
        %3938 = vmatpush1.msra.mxu0 0.0
        %3939 = vmatprep.subr.mxu0 0.0
        %3940 = vmatpush1.msra.mxu0 0.0
        %3941 = vmatprep.subr.mxu0 0.0
        %3942 = vmatpush1.msra.mxu0 0.0
        %3943 = vmatprep.subr.mxu0 0.0
        %3944 = vmatpush1.msra.mxu0 0.0
        %3945 = vmatprep.subr.mxu0 0.0
        %3946 = vmatpush1.msra.mxu0 0.0
        %3947 = vmatprep.mubr.f32.mxu0 0.0
        %3948 = vmatmul.mubr.f32.gmra.mrb[0].mxu0 %v1912
        %v3949 = vpop.f32.mrb[0].mxu0
        %v3950 = vadd.f32 0.0, %v3949
        %v3951 = vpop.f32.mrb[0].mxu0
        %3952 = vmatprep.mubr.f32.mxu0 0.0
        %3953 = vmatmul.mubr.f32.gmra.mrb[0].mxu0 %v1915
        %v3954 = vpop.f32.mrb[0].mxu0
        %v3955 = vadd.f32 0.0, %v3954
        %v3956 = vpop.f32.mrb[0].mxu0
        %3957 = vmatprep.mubr.f32.mxu0 0.0
        %3958 = vmatmul.mubr.f32.gmra.mrb[0].mxu0 %v1918
        %v3959 = vpop.f32.mrb[0].mxu0
        %v3960 = vadd.f32 0.0, %v3959
        %v3961 = vpop.f32.mrb[0].mxu0
        %3962 = vmatprep.mubr.f32.mxu0 0.0
        %3963 = vmatmul.mubr.f32.gmra.mrb[0].mxu0 %v1921
        %v3964 = vpop.f32.mrb[0].mxu0
        %v3965 = vadd.f32 0.0, %v3964
        %v3966 = vpop.f32.mrb[0].mxu0
        %3967 = vdwg.mxu0
        %s3968 = scalar_lea.vmem %s43, 96
        %v3969 = vld [vmem:[%s3968] sm:$0xff]
        %v3970 = vld [vmem:[%s3968 + $0x8] sm:$0xff]
        %v3971 = vld [vmem:[%s3968 + $0x10] sm:$0xff]
        %v3972 = vld [vmem:[%s3968 + $0x18] sm:$0xff]
        %3973 = vmatprep.subr.mxu0 0.0
        %3974 = vmatpush1.msra.mxu0 %v3969
        %3975 = vmatprep.subr.mxu0 0.0
        %3976 = vmatpush1.msra.mxu0 %v3970
        %3977 = vmatprep.subr.mxu0 0.0
        %3978 = vmatpush1.msra.mxu0 %v3971
        %3979 = vmatprep.subr.mxu0 0.0
        %3980 = vmatpush1.msra.mxu0 %v3972
        %3981 = vmatprep.subr.mxu0 0.0
        %3982 = vmatpush1.msra.mxu0 0.0
        %3983 = vmatprep.subr.mxu0 0.0
        %3984 = vmatpush1.msra.mxu0 0.0
        %3985 = vmatprep.subr.mxu0 0.0
        %3986 = vmatpush1.msra.mxu0 0.0
        %3987 = vmatprep.subr.mxu0 0.0
        %3988 = vmatpush1.msra.mxu0 0.0
        %3989 = vmatprep.subr.mxu0 0.0
        %3990 = vmatpush1.msra.mxu0 0.0
        %3991 = vmatprep.subr.mxu0 0.0
        %3992 = vmatpush1.msra.mxu0 0.0
        %3993 = vmatprep.subr.mxu0 0.0
        %3994 = vmatpush1.msra.mxu0 0.0
        %3995 = vmatprep.subr.mxu0 0.0
        %3996 = vmatpush1.msra.mxu0 0.0
        %3997 = vmatprep.subr.mxu0 0.0
        %3998 = vmatpush1.msra.mxu0 0.0
        %3999 = vmatprep.subr.mxu0 0.0
        %4000 = vmatpush1.msra.mxu0 0.0
        %4001 = vmatprep.subr.mxu0 0.0
        %4002 = vmatpush1.msra.mxu0 0.0
        %4003 = vmatprep.subr.mxu0 0.0
        %4004 = vmatpush1.msra.mxu0 0.0
        %4005 = vmatprep.subr.mxu0 0.0
        %4006 = vmatpush1.msra.mxu0 0.0
        %4007 = vmatprep.subr.mxu0 0.0
        %4008 = vmatpush1.msra.mxu0 0.0
        %4009 = vmatprep.subr.mxu0 0.0
        %4010 = vmatpush1.msra.mxu0 0.0
        %4011 = vmatprep.subr.mxu0 0.0
        %4012 = vmatpush1.msra.mxu0 0.0
        %4013 = vmatprep.subr.mxu0 0.0
        %4014 = vmatpush1.msra.mxu0 0.0
        %4015 = vmatprep.subr.mxu0 0.0
        %4016 = vmatpush1.msra.mxu0 0.0
        %4017 = vmatprep.subr.mxu0 0.0
        %4018 = vmatpush1.msra.mxu0 0.0
        %4019 = vmatprep.subr.mxu0 0.0
        %4020 = vmatpush1.msra.mxu0 0.0
        %4021 = vmatprep.subr.mxu0 0.0
        %4022 = vmatpush1.msra.mxu0 0.0
        %4023 = vmatprep.subr.mxu0 0.0
        %4024 = vmatpush1.msra.mxu0 0.0
        %4025 = vmatprep.subr.mxu0 0.0
        %4026 = vmatpush1.msra.mxu0 0.0
        %4027 = vmatprep.subr.mxu0 0.0
        %4028 = vmatpush1.msra.mxu0 0.0
        %4029 = vmatprep.subr.mxu0 0.0
        %4030 = vmatpush1.msra.mxu0 0.0
        %4031 = vmatprep.subr.mxu0 0.0
        %4032 = vmatpush1.msra.mxu0 0.0
        %4033 = vmatprep.subr.mxu0 0.0
        %4034 = vmatpush1.msra.mxu0 0.0
        %4035 = vmatprep.subr.mxu0 0.0
        %4036 = vmatpush1.msra.mxu0 0.0
        %4037 = vmatprep.mubr.f32.mxu0 0.0
        %4038 = vmatmul.mubr.f32.gmra.mrb[0].mxu0 %v1912
        %v4039 = vpop.f32.mrb[0].mxu0
        %v4040 = vadd.f32 0.0, %v4039
        %v4041 = vpop.f32.mrb[0].mxu0
        %4042 = vmatprep.mubr.f32.mxu0 0.0
        %4043 = vmatmul.mubr.f32.gmra.mrb[0].mxu0 %v1915
        %v4044 = vpop.f32.mrb[0].mxu0
        %v4045 = vadd.f32 0.0, %v4044
        %v4046 = vpop.f32.mrb[0].mxu0
        %4047 = vmatprep.mubr.f32.mxu0 0.0
        %4048 = vmatmul.mubr.f32.gmra.mrb[0].mxu0 %v1918
        %v4049 = vpop.f32.mrb[0].mxu0
        %v4050 = vadd.f32 0.0, %v4049
        %v4051 = vpop.f32.mrb[0].mxu0
        %4052 = vmatprep.mubr.f32.mxu0 0.0
        %4053 = vmatmul.mubr.f32.gmra.mrb[0].mxu0 %v1921
        %v4054 = vpop.f32.mrb[0].mxu0
        %v4055 = vadd.f32 0.0, %v4054
        %v4056 = vpop.f32.mrb[0].mxu0
        %4057 = vdwg.mxu0
        %v4059 = vsel %vm1317, %v3860, 0
        %v4062 = vsel %vm1317, %v3865, 0
        %v4065 = vsel %vm1317, %v3870, 0
        %v4068 = vsel %vm1317, %v3875, 0
        %v4071 = vsel %vm1317, %v3950, 0
        %v4074 = vsel %vm1317, %v3955, 0
        %v4077 = vsel %vm1317, %v3960, 0
        %v4080 = vsel %vm1317, %v3965, 0
        %4082 = vmatprep.subr.mxu0 0.0
        %4083 = vmatpush1.xpose.msra.mxu0 %v4071
        %4084 = vmatprep.subr.mxu0 0.0
        %4085 = vmatpush1.xpose.msra.mxu0 %v4074
        %4086 = vmatprep.subr.mxu0 0.0
        %4087 = vmatpush1.xpose.msra.mxu0 %v4077
        %4088 = vmatprep.subr.mxu0 0.0
        %4089 = vmatpush1.xpose.msra.mxu0 %v4080
        %4090 = vmatprep.subr.mxu0 0.0
        %4091 = vmatpush1.xpose.msra.mxu0 0.0
        %4092 = vmatprep.subr.mxu0 0.0
        %4093 = vmatpush1.xpose.msra.mxu0 0.0
        %4094 = vmatprep.subr.mxu0 0.0
        %4095 = vmatpush1.xpose.msra.mxu0 0.0
        %4096 = vmatprep.subr.mxu0 0.0
        %4097 = vmatpush1.xpose.msra.mxu0 0.0
        %4098 = vmatprep.subr.mxu0 0.0
        %4099 = vmatpush1.xpose.msra.mxu0 0.0
        %4100 = vmatprep.subr.mxu0 0.0
        %4101 = vmatpush1.xpose.msra.mxu0 0.0
        %4102 = vmatprep.subr.mxu0 0.0
        %4103 = vmatpush1.xpose.msra.mxu0 0.0
        %4104 = vmatprep.subr.mxu0 0.0
        %4105 = vmatpush1.xpose.msra.mxu0 0.0
        %4106 = vmatprep.subr.mxu0 0.0
        %4107 = vmatpush1.xpose.msra.mxu0 0.0
        %4108 = vmatprep.subr.mxu0 0.0
        %4109 = vmatpush1.xpose.msra.mxu0 0.0
        %4110 = vmatprep.subr.mxu0 0.0
        %4111 = vmatpush1.xpose.msra.mxu0 0.0
        %4112 = vmatprep.subr.mxu0 0.0
        %4113 = vmatpush1.xpose.msra.mxu0 0.0
        %4114 = vmatprep.subr.mxu0 0.0
        %4115 = vmatpush1.xpose.msra.mxu0 0.0
        %4116 = vmatprep.subr.mxu0 0.0
        %4117 = vmatpush1.xpose.msra.mxu0 0.0
        %4118 = vmatprep.subr.mxu0 0.0
        %4119 = vmatpush1.xpose.msra.mxu0 0.0
        %4120 = vmatprep.subr.mxu0 0.0
        %4121 = vmatpush1.xpose.msra.mxu0 0.0
        %4122 = vmatprep.subr.mxu0 0.0
        %4123 = vmatpush1.xpose.msra.mxu0 0.0
        %4124 = vmatprep.subr.mxu0 0.0
        %4125 = vmatpush1.xpose.msra.mxu0 0.0
        %4126 = vmatprep.subr.mxu0 0.0
        %4127 = vmatpush1.xpose.msra.mxu0 0.0
        %4128 = vmatprep.subr.mxu0 0.0
        %4129 = vmatpush1.xpose.msra.mxu0 0.0
        %4130 = vmatprep.subr.mxu0 0.0
        %4131 = vmatpush1.xpose.msra.mxu0 0.0
        %4132 = vmatprep.subr.mxu0 0.0
        %4133 = vmatpush1.xpose.msra.mxu0 0.0
        %4134 = vmatprep.subr.mxu0 0.0
        %4135 = vmatpush1.xpose.msra.mxu0 0.0
        %4136 = vmatprep.subr.mxu0 0.0
        %4137 = vmatpush1.xpose.msra.mxu0 0.0
        %4138 = vmatprep.subr.mxu0 0.0
        %4139 = vmatpush1.xpose.msra.mxu0 0.0
        %4140 = vmatprep.subr.mxu0 0.0
        %4141 = vmatpush1.xpose.msra.mxu0 0.0
        %4142 = vmatprep.subr.mxu0 0.0
        %4143 = vmatpush1.xpose.msra.mxu0 0.0
        %4144 = vmatprep.subr.mxu0 0.0
        %4145 = vmatpush1.xpose.msra.mxu0 0.0
        %4146 = vmatprep.mubr.f32.mxu0 0.0
        %4147 = vmatmul.mubr.f32.gmra.mrb[0].mxu0 %v4059
        %v4148 = vpop.f32.mrb[0].mxu0
        %v4149 = vadd.f32 %v1899, %v4148
        %v4150 = vpop.f32.mrb[0].mxu0
        %4151 = vmatprep.mubr.f32.mxu0 0.0
        %4152 = vmatmul.mubr.f32.gmra.mrb[0].mxu0 %v4062
        %v4153 = vpop.f32.mrb[0].mxu0
        %v4154 = vadd.f32 %v1900, %v4153
        %v4155 = vpop.f32.mrb[0].mxu0
        %4156 = vmatprep.mubr.f32.mxu0 0.0
        %4157 = vmatmul.mubr.f32.gmra.mrb[0].mxu0 %v4065
        %v4158 = vpop.f32.mrb[0].mxu0
        %v4159 = vadd.f32 %v1901, %v4158
        %v4160 = vpop.f32.mrb[0].mxu0
        %4161 = vmatprep.mubr.f32.mxu0 0.0
        %4162 = vmatmul.mubr.f32.gmra.mrb[0].mxu0 %v4068
        %v4163 = vpop.f32.mrb[0].mxu0
        %v4164 = vadd.f32 %v1902, %v4163
        %v4165 = vpop.f32.mrb[0].mxu0
        %4166 = vdwg.mxu0
        %v4167 = vsel %vm2295, %v4149, -inf
        %4168 = vmax.xlane.f32.xlu0 %v4167
        %v4169 = vpop.xlane.xlu0 %4168
        %v4170 = vsel %vm2295, %v4154, -inf
        %4171 = vmax.xlane.f32.xlu0 %v4170
        %v4172 = vpop.xlane.xlu0 %4171
        %v4173 = vsel %vm2295, %v4159, -inf
        %4174 = vmax.xlane.f32.xlu0 %v4173
        %v4175 = vpop.xlane.xlu0 %4174
        %v4176 = vsel %vm2305, %v4164, -inf
        %4177 = vmax.xlane.f32.xlu0 %v4176
        %v4178 = vpop.xlane.xlu0 %4177
        %v4179 = vsub.f32 %v4149, %v4169
        %v4180 = vsub.f32 %v4154, %v4172
        %v4181 = vsub.f32 %v4159, %v4175
        %v4182 = vsub.f32 %v4164, %v4178
        %v4183 = vmul.f32 %v4179, 1.442695
        %v4184 = vpow.pop %v4183
        %v4185 = vmul.f32 %v4180, 1.442695
        %v4186 = vpow.pop %v4185
        %v4187 = vmul.f32 %v4181, 1.442695
        %v4188 = vpow.pop %v4187
        %v4189 = vmul.f32 %v4182, 1.442695
        %v4190 = vpow.pop %v4189
        %v4191 = vsel %vm2295, %v4184, 0.0
        %4192 = vadd.xlane.f32.xlu0 %v4191
        %v4193 = vpop.xlane.xlu0 %4192
        %v4194 = vsel %vm2295, %v4186, 0.0
        %4195 = vadd.xlane.f32.xlu0 %v4194
        %v4196 = vpop.xlane.xlu0 %4195
        %v4197 = vsel %vm2295, %v4188, 0.0
        %4198 = vadd.xlane.f32.xlu0 %v4197
        %v4199 = vpop.xlane.xlu0 %4198
        %v4200 = vsel %vm2305, %v4190, 0.0
        %4201 = vadd.xlane.f32.xlu0 %v4200
        %v4202 = vpop.xlane.xlu0 %4201
        %v4203 = vrcp.pop %v4193
        %v4204 = vrcp.pop %v4196
        %v4205 = vrcp.pop %v4199
        %v4206 = vrcp.pop %v4202
        %v4208 = vsel %vm2295, %v4184, 0
        %v4211 = vsel %vm2295, %v4186, 0
        %v4214 = vsel %vm2295, %v4188, 0
        %v4217 = vsel %vm2295, %v4190, 0
        %v4220 = vsel %vm2349, %v4055, 0
        %4222 = vmatprep.subr.mxu0 0.0
        %4223 = vmatpush1.msra.mxu0 %v4040
        %4224 = vmatprep.subr.mxu0 0.0
        %4225 = vmatpush1.msra.mxu0 %v4045
        %4226 = vmatprep.subr.mxu0 0.0
        %4227 = vmatpush1.msra.mxu0 %v4050
        %4228 = vmatprep.subr.mxu0 0.0
        %4229 = vmatpush1.msra.mxu0 %v4220
        %4230 = vmatprep.subr.mxu0 0.0
        %4231 = vmatpush1.msra.mxu0 0.0
        %4232 = vmatprep.subr.mxu0 0.0
        %4233 = vmatpush1.msra.mxu0 0.0
        %4234 = vmatprep.subr.mxu0 0.0
        %4235 = vmatpush1.msra.mxu0 0.0
        %4236 = vmatprep.subr.mxu0 0.0
        %4237 = vmatpush1.msra.mxu0 0.0
        %4238 = vmatprep.subr.mxu0 0.0
        %4239 = vmatpush1.msra.mxu0 0.0
        %4240 = vmatprep.subr.mxu0 0.0
        %4241 = vmatpush1.msra.mxu0 0.0
        %4242 = vmatprep.subr.mxu0 0.0
        %4243 = vmatpush1.msra.mxu0 0.0
        %4244 = vmatprep.subr.mxu0 0.0
        %4245 = vmatpush1.msra.mxu0 0.0
        %4246 = vmatprep.subr.mxu0 0.0
        %4247 = vmatpush1.msra.mxu0 0.0
        %4248 = vmatprep.subr.mxu0 0.0
        %4249 = vmatpush1.msra.mxu0 0.0
        %4250 = vmatprep.subr.mxu0 0.0
        %4251 = vmatpush1.msra.mxu0 0.0
        %4252 = vmatprep.subr.mxu0 0.0
        %4253 = vmatpush1.msra.mxu0 0.0
        %4254 = vmatprep.subr.mxu0 0.0
        %4255 = vmatpush1.msra.mxu0 0.0
        %4256 = vmatprep.subr.mxu0 0.0
        %4257 = vmatpush1.msra.mxu0 0.0
        %4258 = vmatprep.subr.mxu0 0.0
        %4259 = vmatpush1.msra.mxu0 0.0
        %4260 = vmatprep.subr.mxu0 0.0
        %4261 = vmatpush1.msra.mxu0 0.0
        %4262 = vmatprep.subr.mxu0 0.0
        %4263 = vmatpush1.msra.mxu0 0.0
        %4264 = vmatprep.subr.mxu0 0.0
        %4265 = vmatpush1.msra.mxu0 0.0
        %4266 = vmatprep.subr.mxu0 0.0
        %4267 = vmatpush1.msra.mxu0 0.0
        %4268 = vmatprep.subr.mxu0 0.0
        %4269 = vmatpush1.msra.mxu0 0.0
        %4270 = vmatprep.subr.mxu0 0.0
        %4271 = vmatpush1.msra.mxu0 0.0
        %4272 = vmatprep.subr.mxu0 0.0
        %4273 = vmatpush1.msra.mxu0 0.0
        %4274 = vmatprep.subr.mxu0 0.0
        %4275 = vmatpush1.msra.mxu0 0.0
        %4276 = vmatprep.subr.mxu0 0.0
        %4277 = vmatpush1.msra.mxu0 0.0
        %4278 = vmatprep.subr.mxu0 0.0
        %4279 = vmatpush1.msra.mxu0 0.0
        %4280 = vmatprep.subr.mxu0 0.0
        %4281 = vmatpush1.msra.mxu0 0.0
        %4282 = vmatprep.subr.mxu0 0.0
        %4283 = vmatpush1.msra.mxu0 0.0
        %4284 = vmatprep.subr.mxu0 0.0
        %4285 = vmatpush1.msra.mxu0 0.0
        %4286 = vmatprep.mubr.f32.mxu0 0.0
        %4287 = vmatmul.mubr.f32.gmra.mrb[0].mxu0 %v4208
        %v4288 = vpop.f32.mrb[0].mxu0
        %v4289 = vadd.f32 0.0, %v4288
        %v4290 = vpop.f32.mrb[0].mxu0
        %4291 = vmatprep.mubr.f32.mxu0 0.0
        %4292 = vmatmul.mubr.f32.gmra.mrb[0].mxu0 %v4211
        %v4293 = vpop.f32.mrb[0].mxu0
        %v4294 = vadd.f32 0.0, %v4293
        %v4295 = vpop.f32.mrb[0].mxu0
        %4296 = vmatprep.mubr.f32.mxu0 0.0
        %4297 = vmatmul.mubr.f32.gmra.mrb[0].mxu0 %v4214
        %v4298 = vpop.f32.mrb[0].mxu0
        %v4299 = vadd.f32 0.0, %v4298
        %v4300 = vpop.f32.mrb[0].mxu0
        %4301 = vmatprep.mubr.f32.mxu0 0.0
        %4302 = vmatmul.mubr.f32.gmra.mrb[0].mxu0 %v4217
        %v4303 = vpop.f32.mrb[0].mxu0
        %v4304 = vadd.f32 0.0, %v4303
        %v4305 = vpop.f32.mrb[0].mxu0
        %4306 = vdwg.mxu0
        %v4307 = vmul.f32 %v4289, %v4203
        %v4308 = vmul.f32 %v4294, %v4204
        %v4309 = vmul.f32 %v4299, %v4205
        %v4310 = vmul.f32 %v4304, %v4206
        %s4311 = scalar_lea.vmem %s45, 24
        %v4312 = vld [vmem:[%s4311] sm:$0xff]
        %v4314 = vsel %vm1317, %v4307, 0
        %v4317 = vsel %vm1317, %v4308, 0
        %v4320 = vsel %vm1317, %v4309, 0
        %v4323 = vsel %vm1317, %v4310, 0
        %4325 = vmatprep.subr.mxu0 0.0
        %4326 = vmatpush1.msra.mxu0 %v4312
        %4327 = vmatprep.subr.mxu0 0.0
        %4328 = vmatpush1.msra.mxu0 0.0
        %4329 = vmatprep.subr.mxu0 0.0
        %4330 = vmatpush1.msra.mxu0 0.0
        %4331 = vmatprep.subr.mxu0 0.0
        %4332 = vmatpush1.msra.mxu0 0.0
        %4333 = vmatprep.subr.mxu0 0.0
        %4334 = vmatpush1.msra.mxu0 0.0
        %4335 = vmatprep.subr.mxu0 0.0
        %4336 = vmatpush1.msra.mxu0 0.0
        %4337 = vmatprep.subr.mxu0 0.0
        %4338 = vmatpush1.msra.mxu0 0.0
        %4339 = vmatprep.subr.mxu0 0.0
        %4340 = vmatpush1.msra.mxu0 0.0
        %4341 = vmatprep.subr.mxu0 0.0
        %4342 = vmatpush1.msra.mxu0 0.0
        %4343 = vmatprep.subr.mxu0 0.0
        %4344 = vmatpush1.msra.mxu0 0.0
        %4345 = vmatprep.subr.mxu0 0.0
        %4346 = vmatpush1.msra.mxu0 0.0
        %4347 = vmatprep.subr.mxu0 0.0
        %4348 = vmatpush1.msra.mxu0 0.0
        %4349 = vmatprep.subr.mxu0 0.0
        %4350 = vmatpush1.msra.mxu0 0.0
        %4351 = vmatprep.subr.mxu0 0.0
        %4352 = vmatpush1.msra.mxu0 0.0
        %4353 = vmatprep.subr.mxu0 0.0
        %4354 = vmatpush1.msra.mxu0 0.0
        %4355 = vmatprep.subr.mxu0 0.0
        %4356 = vmatpush1.msra.mxu0 0.0
        %4357 = vmatprep.subr.mxu0 0.0
        %4358 = vmatpush1.msra.mxu0 0.0
        %4359 = vmatprep.subr.mxu0 0.0
        %4360 = vmatpush1.msra.mxu0 0.0
        %4361 = vmatprep.subr.mxu0 0.0
        %4362 = vmatpush1.msra.mxu0 0.0
        %4363 = vmatprep.subr.mxu0 0.0
        %4364 = vmatpush1.msra.mxu0 0.0
        %4365 = vmatprep.subr.mxu0 0.0
        %4366 = vmatpush1.msra.mxu0 0.0
        %4367 = vmatprep.subr.mxu0 0.0
        %4368 = vmatpush1.msra.mxu0 0.0
        %4369 = vmatprep.subr.mxu0 0.0
        %4370 = vmatpush1.msra.mxu0 0.0
        %4371 = vmatprep.subr.mxu0 0.0
        %4372 = vmatpush1.msra.mxu0 0.0
        %4373 = vmatprep.subr.mxu0 0.0
        %4374 = vmatpush1.msra.mxu0 0.0
        %4375 = vmatprep.subr.mxu0 0.0
        %4376 = vmatpush1.msra.mxu0 0.0
        %4377 = vmatprep.subr.mxu0 0.0
        %4378 = vmatpush1.msra.mxu0 0.0
        %4379 = vmatprep.subr.mxu0 0.0
        %4380 = vmatpush1.msra.mxu0 0.0
        %4381 = vmatprep.subr.mxu0 0.0
        %4382 = vmatpush1.msra.mxu0 0.0
        %4383 = vmatprep.subr.mxu0 0.0
        %4384 = vmatpush1.msra.mxu0 0.0
        %4385 = vmatprep.subr.mxu0 0.0
        %4386 = vmatpush1.msra.mxu0 0.0
        %4387 = vmatprep.subr.mxu0 0.0
        %4388 = vmatpush1.msra.mxu0 0.0
        %4389 = vmatprep.mubr.f32.mxu0 0.0
        %4390 = vmatmul.mubr.f32.gmra.mrb[0].mxu0 %v4314
        %v4391 = vpop.f32.mrb[0].mxu0
        %v4392 = vadd.f32 0.0, %v4391
        %v4393 = vpop.f32.mrb[0].mxu0
        %4394 = vmatprep.mubr.f32.mxu0 0.0
        %4395 = vmatmul.mubr.f32.gmra.mrb[0].mxu0 %v4317
        %v4396 = vpop.f32.mrb[0].mxu0
        %v4397 = vadd.f32 0.0, %v4396
        %v4398 = vpop.f32.mrb[0].mxu0
        %4399 = vmatprep.mubr.f32.mxu0 0.0
        %4400 = vmatmul.mubr.f32.gmra.mrb[0].mxu0 %v4320
        %v4401 = vpop.f32.mrb[0].mxu0
        %v4402 = vadd.f32 0.0, %v4401
        %v4403 = vpop.f32.mrb[0].mxu0
        %4404 = vmatprep.mubr.f32.mxu0 0.0
        %4405 = vmatmul.mubr.f32.gmra.mrb[0].mxu0 %v4323
        %v4406 = vpop.f32.mrb[0].mxu0
        %v4407 = vadd.f32 0.0, %v4406
        %v4408 = vpop.f32.mrb[0].mxu0
        %4409 = vdwg.mxu0
        %v4410 = vadd.f32 %v3784, %v4392
        %v4411 = vadd.f32 %v3785, %v4397
        %v4412 = vadd.f32 %v3786, %v4402
        %v4413 = vadd.f32 %v3787, %v4407
        %v4414 = vld [vmem:[%s47] sm:$0x1]
        %v4416 = vlaneseq
        %v4417 = vshrl.u32 %v4416, 7
        %v4418 = vsub.s32 0, %v4417
        %v4419 = vrot.slane %v4414, %v4418
        %v4421 = vadd.f32 %v4410, %v4419
        %v4422 = vadd.f32 %v4411, %v4419
        %v4423 = vadd.f32 %v4412, %v4419
        %v4424 = vadd.f32 %v4413, %v4419
        %v4425 = vadd.f32 %v4421, %v1903
        %v4426 = vadd.f32 %v4422, %v1904
        %v4427 = vadd.f32 %v4423, %v1905
        %v4428 = vadd.f32 %v4424, %v1906
        %v4429 = vld [vmem:[%s49] sm:$0x1]
        %v4430 = vld [vmem:[%s51] sm:$0x1]
        %v4431 = vsel %vm1179, %v4425, 0.0
        %4432 = vadd.xlane.f32.xlu0 %v4431
        %v4433 = vpop.xlane.xlu0 %4432
        %v4434 = vsel %vm1179, %v4426, 0.0
        %4435 = vadd.xlane.f32.xlu0 %v4434
        %v4436 = vpop.xlane.xlu0 %4435
        %v4437 = vsel %vm1179, %v4427, 0.0
        %4438 = vadd.xlane.f32.xlu0 %v4437
        %v4439 = vpop.xlane.xlu0 %4438
        %v4440 = vsel %vm1880, %v4428, 0.0
        %4441 = vadd.xlane.f32.xlu0 %v4440
        %v4442 = vpop.xlane.xlu0 %4441
        %v4443 = vmul.f32 %v4433, %v1186
        %v4444 = vmul.f32 %v4436, %v1186
        %v4445 = vmul.f32 %v4439, %v1186
        %v4446 = vmul.f32 %v4442, %v1186
        %v4447 = vsub.f32 %v4425, %v4443
        %v4448 = vsub.f32 %v4426, %v4444
        %v4449 = vsub.f32 %v4427, %v4445
        %v4450 = vsub.f32 %v4428, %v4446
        %v4451 = vmul.f32 %v4447, %v4447
        %v4452 = vmul.f32 %v4448, %v4448
        %v4453 = vmul.f32 %v4449, %v4449
        %v4454 = vmul.f32 %v4450, %v4450
        %v4455 = vsel %vm1179, %v4451, 0.0
        %4456 = vadd.xlane.f32.xlu0 %v4455
        %v4457 = vpop.xlane.xlu0 %4456
        %v4458 = vsel %vm1179, %v4452, 0.0
        %4459 = vadd.xlane.f32.xlu0 %v4458
        %v4460 = vpop.xlane.xlu0 %4459
        %v4461 = vsel %vm1179, %v4453, 0.0
        %4462 = vadd.xlane.f32.xlu0 %v4461
        %v4463 = vpop.xlane.xlu0 %4462
        %v4464 = vsel %vm1880, %v4454, 0.0
        %4465 = vadd.xlane.f32.xlu0 %v4464
        %v4466 = vpop.xlane.xlu0 %4465
        %v4467 = vmul.f32 %v4457, %v1186
        %v4468 = vmul.f32 %v4460, %v1186
        %v4469 = vmul.f32 %v4463, %v1186
        %v4470 = vmul.f32 %v4466, %v1186
        %v4471 = vadd.f32 %v4467, 1e-06
        %v4472 = vadd.f32 %v4468, 1e-06
        %v4473 = vadd.f32 %v4469, 1e-06
        %v4474 = vadd.f32 %v4470, 1e-06
        %v4475 = vrsqrt.pop %v4471
        %v4476 = vrsqrt.pop %v4472
        %v4477 = vrsqrt.pop %v4473
        %v4478 = vrsqrt.pop %v4474
        %v4479 = vmul.f32 %v4447, %v4475
        %v4480 = vmul.f32 %v4448, %v4476
        %v4481 = vmul.f32 %v4449, %v4477
        %v4482 = vmul.f32 %v4450, %v4478
        %v4484 = vlaneseq
        %v4485 = vshrl.u32 %v4484, 7
        %v4486 = vsub.s32 0, %v4485
        %v4487 = vrot.slane %v4429, %v4486
        %v4489 = vmul.f32 %v4479, %v4487
        %v4490 = vmul.f32 %v4480, %v4487
        %v4491 = vmul.f32 %v4481, %v4487
        %v4492 = vmul.f32 %v4482, %v4487
        %v4494 = vlaneseq
        %v4495 = vshrl.u32 %v4494, 7
        %v4496 = vsub.s32 0, %v4495
        %v4497 = vrot.slane %v4430, %v4496
        %v4499 = vadd.f32 %v4489, %v4497
        %v4500 = vadd.f32 %v4490, %v4497
        %v4501 = vadd.f32 %v4491, %v4497
        %v4502 = vadd.f32 %v4492, %v4497
        %v4503 = vld [vmem:[%s53] sm:$0xff]
        %v4504 = vld [vmem:[%s53 + $0x8] sm:$0xff]
        %v4505 = vld [vmem:[%s53 + $0x10] sm:$0xff]
        %v4506 = vld [vmem:[%s53 + $0x18] sm:$0xff]
        %v4507 = vld [vmem:[%s55] sm:$0x1]
        %v4509 = vlaneseq
        %v4510 = vshrl.u32 %v4509, 7
        %v4511 = vsub.s32 0, %v4510
        %v4512 = vrot.slane %v4507, %v4511
        %v4515 = vsel %vm1179, %v4499, 0
        %v4518 = vsel %vm1179, %v4500, 0
        %v4521 = vsel %vm1179, %v4501, 0
        %v4524 = vsel %vm1179, %v4502, 0
        %4526 = vmatprep.subr.mxu0 0.0
        %4527 = vmatpush1.msra.mxu0 %v4503
        %4528 = vmatprep.subr.mxu0 0.0
        %4529 = vmatpush1.msra.mxu0 %v4504
        %4530 = vmatprep.subr.mxu0 0.0
        %4531 = vmatpush1.msra.mxu0 %v4505
        %4532 = vmatprep.subr.mxu0 0.0
        %4533 = vmatpush1.msra.mxu0 %v4506
        %4534 = vmatprep.subr.mxu0 0.0
        %4535 = vmatpush1.msra.mxu0 0.0
        %4536 = vmatprep.subr.mxu0 0.0
        %4537 = vmatpush1.msra.mxu0 0.0
        %4538 = vmatprep.subr.mxu0 0.0
        %4539 = vmatpush1.msra.mxu0 0.0
        %4540 = vmatprep.subr.mxu0 0.0
        %4541 = vmatpush1.msra.mxu0 0.0
        %4542 = vmatprep.subr.mxu0 0.0
        %4543 = vmatpush1.msra.mxu0 0.0
        %4544 = vmatprep.subr.mxu0 0.0
        %4545 = vmatpush1.msra.mxu0 0.0
        %4546 = vmatprep.subr.mxu0 0.0
        %4547 = vmatpush1.msra.mxu0 0.0
        %4548 = vmatprep.subr.mxu0 0.0
        %4549 = vmatpush1.msra.mxu0 0.0
        %4550 = vmatprep.subr.mxu0 0.0
        %4551 = vmatpush1.msra.mxu0 0.0
        %4552 = vmatprep.subr.mxu0 0.0
        %4553 = vmatpush1.msra.mxu0 0.0
        %4554 = vmatprep.subr.mxu0 0.0
        %4555 = vmatpush1.msra.mxu0 0.0
        %4556 = vmatprep.subr.mxu0 0.0
        %4557 = vmatpush1.msra.mxu0 0.0
        %4558 = vmatprep.subr.mxu0 0.0
        %4559 = vmatpush1.msra.mxu0 0.0
        %4560 = vmatprep.subr.mxu0 0.0
        %4561 = vmatpush1.msra.mxu0 0.0
        %4562 = vmatprep.subr.mxu0 0.0
        %4563 = vmatpush1.msra.mxu0 0.0
        %4564 = vmatprep.subr.mxu0 0.0
        %4565 = vmatpush1.msra.mxu0 0.0
        %4566 = vmatprep.subr.mxu0 0.0
        %4567 = vmatpush1.msra.mxu0 0.0
        %4568 = vmatprep.subr.mxu0 0.0
        %4569 = vmatpush1.msra.mxu0 0.0
        %4570 = vmatprep.subr.mxu0 0.0
        %4571 = vmatpush1.msra.mxu0 0.0
        %4572 = vmatprep.subr.mxu0 0.0
        %4573 = vmatpush1.msra.mxu0 0.0
        %4574 = vmatprep.subr.mxu0 0.0
        %4575 = vmatpush1.msra.mxu0 0.0
        %4576 = vmatprep.subr.mxu0 0.0
        %4577 = vmatpush1.msra.mxu0 0.0
        %4578 = vmatprep.subr.mxu0 0.0
        %4579 = vmatpush1.msra.mxu0 0.0
        %4580 = vmatprep.subr.mxu0 0.0
        %4581 = vmatpush1.msra.mxu0 0.0
        %4582 = vmatprep.subr.mxu0 0.0
        %4583 = vmatpush1.msra.mxu0 0.0
        %4584 = vmatprep.subr.mxu0 0.0
        %4585 = vmatpush1.msra.mxu0 0.0
        %4586 = vmatprep.subr.mxu0 0.0
        %4587 = vmatpush1.msra.mxu0 0.0
        %4588 = vmatprep.subr.mxu0 0.0
        %4589 = vmatpush1.msra.mxu0 0.0
        %4590 = vmatprep.mubr.f32.mxu0 0.0
        %4591 = vmatmul.mubr.f32.gmra.mrb[0].mxu0 %v4515
        %v4592 = vpop.f32.mrb[0].mxu0
        %v4593 = vadd.f32 %v4512, %v4592
        %v4594 = vpop.f32.mrb[0].mxu0
        %4595 = vmatprep.mubr.f32.mxu0 0.0
        %4596 = vmatmul.mubr.f32.gmra.mrb[0].mxu0 %v4518
        %v4597 = vpop.f32.mrb[0].mxu0
        %v4598 = vadd.f32 %v4512, %v4597
        %v4599 = vpop.f32.mrb[0].mxu0
        %4600 = vmatprep.mubr.f32.mxu0 0.0
        %4601 = vmatmul.mubr.f32.gmra.mrb[0].mxu0 %v4521
        %v4602 = vpop.f32.mrb[0].mxu0
        %v4603 = vadd.f32 %v4512, %v4602
        %v4604 = vpop.f32.mrb[0].mxu0
        %4605 = vmatprep.mubr.f32.mxu0 0.0
        %4606 = vmatmul.mubr.f32.gmra.mrb[0].mxu0 %v4524
        %v4607 = vpop.f32.mrb[0].mxu0
        %v4608 = vadd.f32 %v4512, %v4607
        %v4609 = vpop.f32.mrb[0].mxu0
        %4610 = vdwg.mxu0
        %v4611 = vmul.f32 %v4593, 0.5
        %v4612 = vmul.f32 %v4598, 0.5
        %v4613 = vmul.f32 %v4603, 0.5
        %v4614 = vmul.f32 %v4608, 0.5
        %v4615 = vmul.f32 %v4593, 0.044715
        %v4616 = vmul.f32 %v4598, 0.044715
        %v4617 = vmul.f32 %v4603, 0.044715
        %v4618 = vmul.f32 %v4608, 0.044715
        %v4619 = vmul.f32 %v4615, %v4593
        %v4620 = vmul.f32 %v4616, %v4598
        %v4621 = vmul.f32 %v4617, %v4603
        %v4622 = vmul.f32 %v4618, %v4608
        %v4623 = vmul.f32 %v4619, %v4593
        %v4624 = vmul.f32 %v4620, %v4598
        %v4625 = vmul.f32 %v4621, %v4603
        %v4626 = vmul.f32 %v4622, %v4608
        %v4627 = vadd.f32 %v4593, %v4623
        %v4628 = vadd.f32 %v4598, %v4624
        %v4629 = vadd.f32 %v4603, %v4625
        %v4630 = vadd.f32 %v4608, %v4626
        %v4631 = vmul.f32 %v4627, 0.7978846
        %v4632 = vmul.f32 %v4628, 0.7978846
        %v4633 = vmul.f32 %v4629, 0.7978846
        %v4634 = vmul.f32 %v4630, 0.7978846
        %v4635 = vtanh.pop %v4631
        %v4636 = vtanh.pop %v4632
        %v4637 = vtanh.pop %v4633
        %v4638 = vtanh.pop %v4634
        %v4639 = vadd.f32 %v4635, 1.0
        %v4640 = vadd.f32 %v4636, 1.0
        %v4641 = vadd.f32 %v4637, 1.0
        %v4642 = vadd.f32 %v4638, 1.0
        %v4643 = vmul.f32 %v4611, %v4639
        %v4644 = vmul.f32 %v4612, %v4640
        %v4645 = vmul.f32 %v4613, %v4641
        %v4646 = vmul.f32 %v4614, %v4642
        %v4647 = vld [vmem:[%s57] sm:$0xff]
        %v4648 = vld [vmem:[%s57 + $0x8] sm:$0xff]
        %v4649 = vld [vmem:[%s57 + $0x10] sm:$0xff]
        %v4650 = vld [vmem:[%s57 + $0x18] sm:$0xff]
        %v4651 = vld [vmem:[%s57 + $0x20] sm:$0xff]
        %v4652 = vld [vmem:[%s57 + $0x28] sm:$0xff]
        %v4653 = vld [vmem:[%s57 + $0x30] sm:$0xff]
        %v4654 = vld [vmem:[%s57 + $0x38] sm:$0xff]
        %v4655 = vld [vmem:[%s59] sm:$0x1]
        %v4657 = vlaneseq
        %v4658 = vshrl.u32 %v4657, 7
        %v4659 = vsub.s32 0, %v4658
        %v4660 = vrot.slane %v4655, %v4659
        %vm4662 = vcmask 523264
        %v4664 = vsel %vm4662, %v4643, 0
        %v4667 = vsel %vm4662, %v4644, 0
        %v4670 = vsel %vm4662, %v4645, 0
        %v4673 = vsel %vm4662, %v4646, 0
        %4675 = vmatprep.subr.mxu0 0.0
        %4676 = vmatpush1.msra.mxu0 %v4647
        %4677 = vmatprep.subr.mxu0 0.0
        %4678 = vmatpush1.msra.mxu0 %v4648
        %4679 = vmatprep.subr.mxu0 0.0
        %4680 = vmatpush1.msra.mxu0 %v4649
        %4681 = vmatprep.subr.mxu0 0.0
        %4682 = vmatpush1.msra.mxu0 %v4650
        %4683 = vmatprep.subr.mxu0 0.0
        %4684 = vmatpush1.msra.mxu0 %v4651
        %4685 = vmatprep.subr.mxu0 0.0
        %4686 = vmatpush1.msra.mxu0 %v4652
        %4687 = vmatprep.subr.mxu0 0.0
        %4688 = vmatpush1.msra.mxu0 %v4653
        %4689 = vmatprep.subr.mxu0 0.0
        %4690 = vmatpush1.msra.mxu0 %v4654
        %4691 = vmatprep.subr.mxu0 0.0
        %4692 = vmatpush1.msra.mxu0 0.0
        %4693 = vmatprep.subr.mxu0 0.0
        %4694 = vmatpush1.msra.mxu0 0.0
        %4695 = vmatprep.subr.mxu0 0.0
        %4696 = vmatpush1.msra.mxu0 0.0
        %4697 = vmatprep.subr.mxu0 0.0
        %4698 = vmatpush1.msra.mxu0 0.0
        %4699 = vmatprep.subr.mxu0 0.0
        %4700 = vmatpush1.msra.mxu0 0.0
        %4701 = vmatprep.subr.mxu0 0.0
        %4702 = vmatpush1.msra.mxu0 0.0
        %4703 = vmatprep.subr.mxu0 0.0
        %4704 = vmatpush1.msra.mxu0 0.0
        %4705 = vmatprep.subr.mxu0 0.0
        %4706 = vmatpush1.msra.mxu0 0.0
        %4707 = vmatprep.subr.mxu0 0.0
        %4708 = vmatpush1.msra.mxu0 0.0
        %4709 = vmatprep.subr.mxu0 0.0
        %4710 = vmatpush1.msra.mxu0 0.0
        %4711 = vmatprep.subr.mxu0 0.0
        %4712 = vmatpush1.msra.mxu0 0.0
        %4713 = vmatprep.subr.mxu0 0.0
        %4714 = vmatpush1.msra.mxu0 0.0
        %4715 = vmatprep.subr.mxu0 0.0
        %4716 = vmatpush1.msra.mxu0 0.0
        %4717 = vmatprep.subr.mxu0 0.0
        %4718 = vmatpush1.msra.mxu0 0.0
        %4719 = vmatprep.subr.mxu0 0.0
        %4720 = vmatpush1.msra.mxu0 0.0
        %4721 = vmatprep.subr.mxu0 0.0
        %4722 = vmatpush1.msra.mxu0 0.0
        %4723 = vmatprep.subr.mxu0 0.0
        %4724 = vmatpush1.msra.mxu0 0.0
        %4725 = vmatprep.subr.mxu0 0.0
        %4726 = vmatpush1.msra.mxu0 0.0
        %4727 = vmatprep.subr.mxu0 0.0
        %4728 = vmatpush1.msra.mxu0 0.0
        %4729 = vmatprep.subr.mxu0 0.0
        %4730 = vmatpush1.msra.mxu0 0.0
        %4731 = vmatprep.subr.mxu0 0.0
        %4732 = vmatpush1.msra.mxu0 0.0
        %4733 = vmatprep.subr.mxu0 0.0
        %4734 = vmatpush1.msra.mxu0 0.0
        %4735 = vmatprep.subr.mxu0 0.0
        %4736 = vmatpush1.msra.mxu0 0.0
        %4737 = vmatprep.subr.mxu0 0.0
        %4738 = vmatpush1.msra.mxu0 0.0
        %4739 = vmatprep.mubr.f32.mxu0 0.0
        %4740 = vmatmul.mubr.f32.gmra.mrb[0].mxu0 %v4664
        %v4741 = vpop.f32.mrb[0].mxu0
        %v4742 = vadd.f32 %v4660, %v4741
        %v4743 = vpop.f32.mrb[0].mxu0
        %4744 = vmatprep.mubr.f32.mxu0 0.0
        %4745 = vmatmul.mubr.f32.gmra.mrb[0].mxu0 %v4667
        %v4746 = vpop.f32.mrb[0].mxu0
        %v4747 = vadd.f32 %v4660, %v4746
        %v4748 = vpop.f32.mrb[0].mxu0
        %4749 = vmatprep.mubr.f32.mxu0 0.0
        %4750 = vmatmul.mubr.f32.gmra.mrb[0].mxu0 %v4670
        %v4751 = vpop.f32.mrb[0].mxu0
        %v4752 = vadd.f32 %v4660, %v4751
        %v4753 = vpop.f32.mrb[0].mxu0
        %4754 = vmatprep.mubr.f32.mxu0 0.0
        %4755 = vmatmul.mubr.f32.gmra.mrb[0].mxu0 %v4673
        %v4756 = vpop.f32.mrb[0].mxu0
        %v4757 = vadd.f32 %v4660, %v4756
        %v4758 = vpop.f32.mrb[0].mxu0
        %4759 = vdwg.mxu0
        %v4760 = vadd.f32 %v4742, %v4499
        %v4761 = vadd.f32 %v4747, %v4500
        %v4762 = vadd.f32 %v4752, %v4501
        %v4763 = vadd.f32 %v4757, %v4502
        %v4764 = vld [vmem:[%s61] sm:$0x1]
        %v4765 = vld [vmem:[%s63] sm:$0x1]
        %v4766 = vsel %vm1179, %v4760, 0.0
        %4767 = vadd.xlane.f32.xlu0 %v4766
        %v4768 = vpop.xlane.xlu0 %4767
        %v4769 = vsel %vm1179, %v4761, 0.0
        %4770 = vadd.xlane.f32.xlu0 %v4769
        %v4771 = vpop.xlane.xlu0 %4770
        %v4772 = vsel %vm1179, %v4762, 0.0
        %4773 = vadd.xlane.f32.xlu0 %v4772
        %v4774 = vpop.xlane.xlu0 %4773
        %v4775 = vsel %vm1880, %v4763, 0.0
        %4776 = vadd.xlane.f32.xlu0 %v4775
        %v4777 = vpop.xlane.xlu0 %4776
        %v4778 = vmul.f32 %v4768, %v1186
        %v4779 = vmul.f32 %v4771, %v1186
        %v4780 = vmul.f32 %v4774, %v1186
        %v4781 = vmul.f32 %v4777, %v1186
        %v4782 = vsub.f32 %v4760, %v4778
        %v4783 = vsub.f32 %v4761, %v4779
        %v4784 = vsub.f32 %v4762, %v4780
        %v4785 = vsub.f32 %v4763, %v4781
        %v4786 = vmul.f32 %v4782, %v4782
        %v4787 = vmul.f32 %v4783, %v4783
        %v4788 = vmul.f32 %v4784, %v4784
        %v4789 = vmul.f32 %v4785, %v4785
        %v4790 = vsel %vm1179, %v4786, 0.0
        %4791 = vadd.xlane.f32.xlu0 %v4790
        %v4792 = vpop.xlane.xlu0 %4791
        %v4793 = vsel %vm1179, %v4787, 0.0
        %4794 = vadd.xlane.f32.xlu0 %v4793
        %v4795 = vpop.xlane.xlu0 %4794
        %v4796 = vsel %vm1179, %v4788, 0.0
        %4797 = vadd.xlane.f32.xlu0 %v4796
        %v4798 = vpop.xlane.xlu0 %4797
        %v4799 = vsel %vm1880, %v4789, 0.0
        %4800 = vadd.xlane.f32.xlu0 %v4799
        %v4801 = vpop.xlane.xlu0 %4800
        %v4802 = vmul.f32 %v4792, %v1186
        %v4803 = vmul.f32 %v4795, %v1186
        %v4804 = vmul.f32 %v4798, %v1186
        %v4805 = vmul.f32 %v4801, %v1186
        %v4806 = vadd.f32 %v4802, 1e-06
        %v4807 = vadd.f32 %v4803, 1e-06
        %v4808 = vadd.f32 %v4804, 1e-06
        %v4809 = vadd.f32 %v4805, 1e-06
        %v4810 = vrsqrt.pop %v4806
        %v4811 = vrsqrt.pop %v4807
        %v4812 = vrsqrt.pop %v4808
        %v4813 = vrsqrt.pop %v4809
        %v4814 = vmul.f32 %v4782, %v4810
        %v4815 = vmul.f32 %v4783, %v4811
        %v4816 = vmul.f32 %v4784, %v4812
        %v4817 = vmul.f32 %v4785, %v4813
        %v4819 = vlaneseq
        %v4820 = vshrl.u32 %v4819, 7
        %v4821 = vsub.s32 0, %v4820
        %v4822 = vrot.slane %v4764, %v4821
        %v4824 = vmul.f32 %v4814, %v4822
        %v4825 = vmul.f32 %v4815, %v4822
        %v4826 = vmul.f32 %v4816, %v4822
        %v4827 = vmul.f32 %v4817, %v4822
        %v4829 = vlaneseq
        %v4830 = vshrl.u32 %v4829, 7
        %v4831 = vsub.s32 0, %v4830
        %v4832 = vrot.slane %v4765, %v4831
        %v4834 = vadd.f32 %v4824, %v4832
        %v4835 = vadd.f32 %v4825, %v4832
        %v4836 = vadd.f32 %v4826, %v4832
        %v4837 = vadd.f32 %v4827, %v4832
        %s4838 = scalar_lea.vmem %s39, 128
        %v4839 = vld [vmem:[%s4838] sm:$0xff]
        %v4840 = vld [vmem:[%s4838 + $0x8] sm:$0xff]
        %v4841 = vld [vmem:[%s4838 + $0x10] sm:$0xff]
        %v4842 = vld [vmem:[%s4838 + $0x18] sm:$0xff]
        %v4844 = vsel %vm1179, %v4834, 0
        %v4847 = vsel %vm1179, %v4835, 0
        %v4850 = vsel %vm1179, %v4836, 0
        %v4853 = vsel %vm1179, %v4837, 0
        %4855 = vmatprep.subr.mxu0 0.0
        %4856 = vmatpush1.msra.mxu0 %v4839
        %4857 = vmatprep.subr.mxu0 0.0
        %4858 = vmatpush1.msra.mxu0 %v4840
        %4859 = vmatprep.subr.mxu0 0.0
        %4860 = vmatpush1.msra.mxu0 %v4841
        %4861 = vmatprep.subr.mxu0 0.0
        %4862 = vmatpush1.msra.mxu0 %v4842
        %4863 = vmatprep.subr.mxu0 0.0
        %4864 = vmatpush1.msra.mxu0 0.0
        %4865 = vmatprep.subr.mxu0 0.0
        %4866 = vmatpush1.msra.mxu0 0.0
        %4867 = vmatprep.subr.mxu0 0.0
        %4868 = vmatpush1.msra.mxu0 0.0
        %4869 = vmatprep.subr.mxu0 0.0
        %4870 = vmatpush1.msra.mxu0 0.0
        %4871 = vmatprep.subr.mxu0 0.0
        %4872 = vmatpush1.msra.mxu0 0.0
        %4873 = vmatprep.subr.mxu0 0.0
        %4874 = vmatpush1.msra.mxu0 0.0
        %4875 = vmatprep.subr.mxu0 0.0
        %4876 = vmatpush1.msra.mxu0 0.0
        %4877 = vmatprep.subr.mxu0 0.0
        %4878 = vmatpush1.msra.mxu0 0.0
        %4879 = vmatprep.subr.mxu0 0.0
        %4880 = vmatpush1.msra.mxu0 0.0
        %4881 = vmatprep.subr.mxu0 0.0
        %4882 = vmatpush1.msra.mxu0 0.0
        %4883 = vmatprep.subr.mxu0 0.0
        %4884 = vmatpush1.msra.mxu0 0.0
        %4885 = vmatprep.subr.mxu0 0.0
        %4886 = vmatpush1.msra.mxu0 0.0
        %4887 = vmatprep.subr.mxu0 0.0
        %4888 = vmatpush1.msra.mxu0 0.0
        %4889 = vmatprep.subr.mxu0 0.0
        %4890 = vmatpush1.msra.mxu0 0.0
        %4891 = vmatprep.subr.mxu0 0.0
        %4892 = vmatpush1.msra.mxu0 0.0
        %4893 = vmatprep.subr.mxu0 0.0
        %4894 = vmatpush1.msra.mxu0 0.0
        %4895 = vmatprep.subr.mxu0 0.0
        %4896 = vmatpush1.msra.mxu0 0.0
        %4897 = vmatprep.subr.mxu0 0.0
        %4898 = vmatpush1.msra.mxu0 0.0
        %4899 = vmatprep.subr.mxu0 0.0
        %4900 = vmatpush1.msra.mxu0 0.0
        %4901 = vmatprep.subr.mxu0 0.0
        %4902 = vmatpush1.msra.mxu0 0.0
        %4903 = vmatprep.subr.mxu0 0.0
        %4904 = vmatpush1.msra.mxu0 0.0
        %4905 = vmatprep.subr.mxu0 0.0
        %4906 = vmatpush1.msra.mxu0 0.0
        %4907 = vmatprep.subr.mxu0 0.0
        %4908 = vmatpush1.msra.mxu0 0.0
        %4909 = vmatprep.subr.mxu0 0.0
        %4910 = vmatpush1.msra.mxu0 0.0
        %4911 = vmatprep.subr.mxu0 0.0
        %4912 = vmatpush1.msra.mxu0 0.0
        %4913 = vmatprep.subr.mxu0 0.0
        %4914 = vmatpush1.msra.mxu0 0.0
        %4915 = vmatprep.subr.mxu0 0.0
        %4916 = vmatpush1.msra.mxu0 0.0
        %4917 = vmatprep.subr.mxu0 0.0
        %4918 = vmatpush1.msra.mxu0 0.0
        %4919 = vmatprep.mubr.f32.mxu0 0.0
        %4920 = vmatmul.mubr.f32.gmra.mrb[0].mxu0 %v4844
        %v4921 = vpop.f32.mrb[0].mxu0
        %v4922 = vadd.f32 0.0, %v4921
        %v4923 = vpop.f32.mrb[0].mxu0
        %4924 = vmatprep.mubr.f32.mxu0 0.0
        %4925 = vmatmul.mubr.f32.gmra.mrb[0].mxu0 %v4847
        %v4926 = vpop.f32.mrb[0].mxu0
        %v4927 = vadd.f32 0.0, %v4926
        %v4928 = vpop.f32.mrb[0].mxu0
        %4929 = vmatprep.mubr.f32.mxu0 0.0
        %4930 = vmatmul.mubr.f32.gmra.mrb[0].mxu0 %v4850
        %v4931 = vpop.f32.mrb[0].mxu0
        %v4932 = vadd.f32 0.0, %v4931
        %v4933 = vpop.f32.mrb[0].mxu0
        %4934 = vmatprep.mubr.f32.mxu0 0.0
        %4935 = vmatmul.mubr.f32.gmra.mrb[0].mxu0 %v4853
        %v4936 = vpop.f32.mrb[0].mxu0
        %v4937 = vadd.f32 0.0, %v4936
        %v4938 = vpop.f32.mrb[0].mxu0
        %4939 = vdwg.mxu0
        %s4940 = scalar_lea.vmem %s41, 128
        %v4941 = vld [vmem:[%s4940] sm:$0xff]
        %v4942 = vld [vmem:[%s4940 + $0x8] sm:$0xff]
        %v4943 = vld [vmem:[%s4940 + $0x10] sm:$0xff]
        %v4944 = vld [vmem:[%s4940 + $0x18] sm:$0xff]
        %4945 = vmatprep.subr.mxu0 0.0
        %4946 = vmatpush1.msra.mxu0 %v4941
        %4947 = vmatprep.subr.mxu0 0.0
        %4948 = vmatpush1.msra.mxu0 %v4942
        %4949 = vmatprep.subr.mxu0 0.0
        %4950 = vmatpush1.msra.mxu0 %v4943
        %4951 = vmatprep.subr.mxu0 0.0
        %4952 = vmatpush1.msra.mxu0 %v4944
        %4953 = vmatprep.subr.mxu0 0.0
        %4954 = vmatpush1.msra.mxu0 0.0
        %4955 = vmatprep.subr.mxu0 0.0
        %4956 = vmatpush1.msra.mxu0 0.0
        %4957 = vmatprep.subr.mxu0 0.0
        %4958 = vmatpush1.msra.mxu0 0.0
        %4959 = vmatprep.subr.mxu0 0.0
        %4960 = vmatpush1.msra.mxu0 0.0
        %4961 = vmatprep.subr.mxu0 0.0
        %4962 = vmatpush1.msra.mxu0 0.0
        %4963 = vmatprep.subr.mxu0 0.0
        %4964 = vmatpush1.msra.mxu0 0.0
        %4965 = vmatprep.subr.mxu0 0.0
        %4966 = vmatpush1.msra.mxu0 0.0
        %4967 = vmatprep.subr.mxu0 0.0
        %4968 = vmatpush1.msra.mxu0 0.0
        %4969 = vmatprep.subr.mxu0 0.0
        %4970 = vmatpush1.msra.mxu0 0.0
        %4971 = vmatprep.subr.mxu0 0.0
        %4972 = vmatpush1.msra.mxu0 0.0
        %4973 = vmatprep.subr.mxu0 0.0
        %4974 = vmatpush1.msra.mxu0 0.0
        %4975 = vmatprep.subr.mxu0 0.0
        %4976 = vmatpush1.msra.mxu0 0.0
        %4977 = vmatprep.subr.mxu0 0.0
        %4978 = vmatpush1.msra.mxu0 0.0
        %4979 = vmatprep.subr.mxu0 0.0
        %4980 = vmatpush1.msra.mxu0 0.0
        %4981 = vmatprep.subr.mxu0 0.0
        %4982 = vmatpush1.msra.mxu0 0.0
        %4983 = vmatprep.subr.mxu0 0.0
        %4984 = vmatpush1.msra.mxu0 0.0
        %4985 = vmatprep.subr.mxu0 0.0
        %4986 = vmatpush1.msra.mxu0 0.0
        %4987 = vmatprep.subr.mxu0 0.0
        %4988 = vmatpush1.msra.mxu0 0.0
        %4989 = vmatprep.subr.mxu0 0.0
        %4990 = vmatpush1.msra.mxu0 0.0
        %4991 = vmatprep.subr.mxu0 0.0
        %4992 = vmatpush1.msra.mxu0 0.0
        %4993 = vmatprep.subr.mxu0 0.0
        %4994 = vmatpush1.msra.mxu0 0.0
        %4995 = vmatprep.subr.mxu0 0.0
        %4996 = vmatpush1.msra.mxu0 0.0
        %4997 = vmatprep.subr.mxu0 0.0
        %4998 = vmatpush1.msra.mxu0 0.0
        %4999 = vmatprep.subr.mxu0 0.0
        %5000 = vmatpush1.msra.mxu0 0.0
        %5001 = vmatprep.subr.mxu0 0.0
        %5002 = vmatpush1.msra.mxu0 0.0
        %5003 = vmatprep.subr.mxu0 0.0
        %5004 = vmatpush1.msra.mxu0 0.0
        %5005 = vmatprep.subr.mxu0 0.0
        %5006 = vmatpush1.msra.mxu0 0.0
        %5007 = vmatprep.subr.mxu0 0.0
        %5008 = vmatpush1.msra.mxu0 0.0
        %5009 = vmatprep.mubr.f32.mxu0 0.0
        %5010 = vmatmul.mubr.f32.gmra.mrb[0].mxu0 %v4844
        %v5011 = vpop.f32.mrb[0].mxu0
        %v5012 = vadd.f32 0.0, %v5011
        %v5013 = vpop.f32.mrb[0].mxu0
        %5014 = vmatprep.mubr.f32.mxu0 0.0
        %5015 = vmatmul.mubr.f32.gmra.mrb[0].mxu0 %v4847
        %v5016 = vpop.f32.mrb[0].mxu0
        %v5017 = vadd.f32 0.0, %v5016
        %v5018 = vpop.f32.mrb[0].mxu0
        %5019 = vmatprep.mubr.f32.mxu0 0.0
        %5020 = vmatmul.mubr.f32.gmra.mrb[0].mxu0 %v4850
        %v5021 = vpop.f32.mrb[0].mxu0
        %v5022 = vadd.f32 0.0, %v5021
        %v5023 = vpop.f32.mrb[0].mxu0
        %5024 = vmatprep.mubr.f32.mxu0 0.0
        %5025 = vmatmul.mubr.f32.gmra.mrb[0].mxu0 %v4853
        %v5026 = vpop.f32.mrb[0].mxu0
        %v5027 = vadd.f32 0.0, %v5026
        %v5028 = vpop.f32.mrb[0].mxu0
        %5029 = vdwg.mxu0
        %s5030 = scalar_lea.vmem %s43, 128
        %v5031 = vld [vmem:[%s5030] sm:$0xff]
        %v5032 = vld [vmem:[%s5030 + $0x8] sm:$0xff]
        %v5033 = vld [vmem:[%s5030 + $0x10] sm:$0xff]
        %v5034 = vld [vmem:[%s5030 + $0x18] sm:$0xff]
        %5035 = vmatprep.subr.mxu0 0.0
        %5036 = vmatpush1.msra.mxu0 %v5031
        %5037 = vmatprep.subr.mxu0 0.0
        %5038 = vmatpush1.msra.mxu0 %v5032
        %5039 = vmatprep.subr.mxu0 0.0
        %5040 = vmatpush1.msra.mxu0 %v5033
        %5041 = vmatprep.subr.mxu0 0.0
        %5042 = vmatpush1.msra.mxu0 %v5034
        %5043 = vmatprep.subr.mxu0 0.0
        %5044 = vmatpush1.msra.mxu0 0.0
        %5045 = vmatprep.subr.mxu0 0.0
        %5046 = vmatpush1.msra.mxu0 0.0
        %5047 = vmatprep.subr.mxu0 0.0
        %5048 = vmatpush1.msra.mxu0 0.0
        %5049 = vmatprep.subr.mxu0 0.0
        %5050 = vmatpush1.msra.mxu0 0.0
        %5051 = vmatprep.subr.mxu0 0.0
        %5052 = vmatpush1.msra.mxu0 0.0
        %5053 = vmatprep.subr.mxu0 0.0
        %5054 = vmatpush1.msra.mxu0 0.0
        %5055 = vmatprep.subr.mxu0 0.0
        %5056 = vmatpush1.msra.mxu0 0.0
        %5057 = vmatprep.subr.mxu0 0.0
        %5058 = vmatpush1.msra.mxu0 0.0
        %5059 = vmatprep.subr.mxu0 0.0
        %5060 = vmatpush1.msra.mxu0 0.0
        %5061 = vmatprep.subr.mxu0 0.0
        %5062 = vmatpush1.msra.mxu0 0.0
        %5063 = vmatprep.subr.mxu0 0.0
        %5064 = vmatpush1.msra.mxu0 0.0
        %5065 = vmatprep.subr.mxu0 0.0
        %5066 = vmatpush1.msra.mxu0 0.0
        %5067 = vmatprep.subr.mxu0 0.0
        %5068 = vmatpush1.msra.mxu0 0.0
        %5069 = vmatprep.subr.mxu0 0.0
        %5070 = vmatpush1.msra.mxu0 0.0
        %5071 = vmatprep.subr.mxu0 0.0
        %5072 = vmatpush1.msra.mxu0 0.0
        %5073 = vmatprep.subr.mxu0 0.0
        %5074 = vmatpush1.msra.mxu0 0.0
        %5075 = vmatprep.subr.mxu0 0.0
        %5076 = vmatpush1.msra.mxu0 0.0
        %5077 = vmatprep.subr.mxu0 0.0
        %5078 = vmatpush1.msra.mxu0 0.0
        %5079 = vmatprep.subr.mxu0 0.0
        %5080 = vmatpush1.msra.mxu0 0.0
        %5081 = vmatprep.subr.mxu0 0.0
        %5082 = vmatpush1.msra.mxu0 0.0
        %5083 = vmatprep.subr.mxu0 0.0
        %5084 = vmatpush1.msra.mxu0 0.0
        %5085 = vmatprep.subr.mxu0 0.0
        %5086 = vmatpush1.msra.mxu0 0.0
        %5087 = vmatprep.subr.mxu0 0.0
        %5088 = vmatpush1.msra.mxu0 0.0
        %5089 = vmatprep.subr.mxu0 0.0
        %5090 = vmatpush1.msra.mxu0 0.0
        %5091 = vmatprep.subr.mxu0 0.0
        %5092 = vmatpush1.msra.mxu0 0.0
        %5093 = vmatprep.subr.mxu0 0.0
        %5094 = vmatpush1.msra.mxu0 0.0
        %5095 = vmatprep.subr.mxu0 0.0
        %5096 = vmatpush1.msra.mxu0 0.0
        %5097 = vmatprep.subr.mxu0 0.0
        %5098 = vmatpush1.msra.mxu0 0.0
        %5099 = vmatprep.mubr.f32.mxu0 0.0
        %5100 = vmatmul.mubr.f32.gmra.mrb[0].mxu0 %v4844
        %v5101 = vpop.f32.mrb[0].mxu0
        %v5102 = vadd.f32 0.0, %v5101
        %v5103 = vpop.f32.mrb[0].mxu0
        %5104 = vmatprep.mubr.f32.mxu0 0.0
        %5105 = vmatmul.mubr.f32.gmra.mrb[0].mxu0 %v4847
        %v5106 = vpop.f32.mrb[0].mxu0
        %v5107 = vadd.f32 0.0, %v5106
        %v5108 = vpop.f32.mrb[0].mxu0
        %5109 = vmatprep.mubr.f32.mxu0 0.0
        %5110 = vmatmul.mubr.f32.gmra.mrb[0].mxu0 %v4850
        %v5111 = vpop.f32.mrb[0].mxu0
        %v5112 = vadd.f32 0.0, %v5111
        %v5113 = vpop.f32.mrb[0].mxu0
        %5114 = vmatprep.mubr.f32.mxu0 0.0
        %5115 = vmatmul.mubr.f32.gmra.mrb[0].mxu0 %v4853
        %v5116 = vpop.f32.mrb[0].mxu0
        %v5117 = vadd.f32 0.0, %v5116
        %v5118 = vpop.f32.mrb[0].mxu0
        %5119 = vdwg.mxu0
        %v5121 = vsel %vm1317, %v4922, 0
        %v5124 = vsel %vm1317, %v4927, 0
        %v5127 = vsel %vm1317, %v4932, 0
        %v5130 = vsel %vm1317, %v4937, 0
        %v5133 = vsel %vm1317, %v5012, 0
        %v5136 = vsel %vm1317, %v5017, 0
        %v5139 = vsel %vm1317, %v5022, 0
        %v5142 = vsel %vm1317, %v5027, 0
        %5144 = vmatprep.subr.mxu0 0.0
        %5145 = vmatpush1.xpose.msra.mxu0 %v5133
        %5146 = vmatprep.subr.mxu0 0.0
        %5147 = vmatpush1.xpose.msra.mxu0 %v5136
        %5148 = vmatprep.subr.mxu0 0.0
        %5149 = vmatpush1.xpose.msra.mxu0 %v5139
        %5150 = vmatprep.subr.mxu0 0.0
        %5151 = vmatpush1.xpose.msra.mxu0 %v5142
        %5152 = vmatprep.subr.mxu0 0.0
        %5153 = vmatpush1.xpose.msra.mxu0 0.0
        %5154 = vmatprep.subr.mxu0 0.0
        %5155 = vmatpush1.xpose.msra.mxu0 0.0
        %5156 = vmatprep.subr.mxu0 0.0
        %5157 = vmatpush1.xpose.msra.mxu0 0.0
        %5158 = vmatprep.subr.mxu0 0.0
        %5159 = vmatpush1.xpose.msra.mxu0 0.0
        %5160 = vmatprep.subr.mxu0 0.0
        %5161 = vmatpush1.xpose.msra.mxu0 0.0
        %5162 = vmatprep.subr.mxu0 0.0
        %5163 = vmatpush1.xpose.msra.mxu0 0.0
        %5164 = vmatprep.subr.mxu0 0.0
        %5165 = vmatpush1.xpose.msra.mxu0 0.0
        %5166 = vmatprep.subr.mxu0 0.0
        %5167 = vmatpush1.xpose.msra.mxu0 0.0
        %5168 = vmatprep.subr.mxu0 0.0
        %5169 = vmatpush1.xpose.msra.mxu0 0.0
        %5170 = vmatprep.subr.mxu0 0.0
        %5171 = vmatpush1.xpose.msra.mxu0 0.0
        %5172 = vmatprep.subr.mxu0 0.0
        %5173 = vmatpush1.xpose.msra.mxu0 0.0
        %5174 = vmatprep.subr.mxu0 0.0
        %5175 = vmatpush1.xpose.msra.mxu0 0.0
        %5176 = vmatprep.subr.mxu0 0.0
        %5177 = vmatpush1.xpose.msra.mxu0 0.0
        %5178 = vmatprep.subr.mxu0 0.0
        %5179 = vmatpush1.xpose.msra.mxu0 0.0
        %5180 = vmatprep.subr.mxu0 0.0
        %5181 = vmatpush1.xpose.msra.mxu0 0.0
        %5182 = vmatprep.subr.mxu0 0.0
        %5183 = vmatpush1.xpose.msra.mxu0 0.0
        %5184 = vmatprep.subr.mxu0 0.0
        %5185 = vmatpush1.xpose.msra.mxu0 0.0
        %5186 = vmatprep.subr.mxu0 0.0
        %5187 = vmatpush1.xpose.msra.mxu0 0.0
        %5188 = vmatprep.subr.mxu0 0.0
        %5189 = vmatpush1.xpose.msra.mxu0 0.0
        %5190 = vmatprep.subr.mxu0 0.0
        %5191 = vmatpush1.xpose.msra.mxu0 0.0
        %5192 = vmatprep.subr.mxu0 0.0
        %5193 = vmatpush1.xpose.msra.mxu0 0.0
        %5194 = vmatprep.subr.mxu0 0.0
        %5195 = vmatpush1.xpose.msra.mxu0 0.0
        %5196 = vmatprep.subr.mxu0 0.0
        %5197 = vmatpush1.xpose.msra.mxu0 0.0
        %5198 = vmatprep.subr.mxu0 0.0
        %5199 = vmatpush1.xpose.msra.mxu0 0.0
        %5200 = vmatprep.subr.mxu0 0.0
        %5201 = vmatpush1.xpose.msra.mxu0 0.0
        %5202 = vmatprep.subr.mxu0 0.0
        %5203 = vmatpush1.xpose.msra.mxu0 0.0
        %5204 = vmatprep.subr.mxu0 0.0
        %5205 = vmatpush1.xpose.msra.mxu0 0.0
        %5206 = vmatprep.subr.mxu0 0.0
        %5207 = vmatpush1.xpose.msra.mxu0 0.0
        %5208 = vmatprep.mubr.f32.mxu0 0.0
        %5209 = vmatmul.mubr.f32.gmra.mrb[0].mxu0 %v5121
        %v5210 = vpop.f32.mrb[0].mxu0
        %v5211 = vadd.f32 %v1899, %v5210
        %v5212 = vpop.f32.mrb[0].mxu0
        %5213 = vmatprep.mubr.f32.mxu0 0.0
        %5214 = vmatmul.mubr.f32.gmra.mrb[0].mxu0 %v5124
        %v5215 = vpop.f32.mrb[0].mxu0
        %v5216 = vadd.f32 %v1900, %v5215
        %v5217 = vpop.f32.mrb[0].mxu0
        %5218 = vmatprep.mubr.f32.mxu0 0.0
        %5219 = vmatmul.mubr.f32.gmra.mrb[0].mxu0 %v5127
        %v5220 = vpop.f32.mrb[0].mxu0
        %v5221 = vadd.f32 %v1901, %v5220
        %v5222 = vpop.f32.mrb[0].mxu0
        %5223 = vmatprep.mubr.f32.mxu0 0.0
        %5224 = vmatmul.mubr.f32.gmra.mrb[0].mxu0 %v5130
        %v5225 = vpop.f32.mrb[0].mxu0
        %v5226 = vadd.f32 %v1902, %v5225
        %v5227 = vpop.f32.mrb[0].mxu0
        %5228 = vdwg.mxu0
        %v5229 = vsel %vm2295, %v5211, -inf
        %5230 = vmax.xlane.f32.xlu0 %v5229
        %v5231 = vpop.xlane.xlu0 %5230
        %v5232 = vsel %vm2295, %v5216, -inf
        %5233 = vmax.xlane.f32.xlu0 %v5232
        %v5234 = vpop.xlane.xlu0 %5233
        %v5235 = vsel %vm2295, %v5221, -inf
        %5236 = vmax.xlane.f32.xlu0 %v5235
        %v5237 = vpop.xlane.xlu0 %5236
        %v5238 = vsel %vm2305, %v5226, -inf
        %5239 = vmax.xlane.f32.xlu0 %v5238
        %v5240 = vpop.xlane.xlu0 %5239
        %v5241 = vsub.f32 %v5211, %v5231
        %v5242 = vsub.f32 %v5216, %v5234
        %v5243 = vsub.f32 %v5221, %v5237
        %v5244 = vsub.f32 %v5226, %v5240
        %v5245 = vmul.f32 %v5241, 1.442695
        %v5246 = vpow.pop %v5245
        %v5247 = vmul.f32 %v5242, 1.442695
        %v5248 = vpow.pop %v5247
        %v5249 = vmul.f32 %v5243, 1.442695
        %v5250 = vpow.pop %v5249
        %v5251 = vmul.f32 %v5244, 1.442695
        %v5252 = vpow.pop %v5251
        %v5253 = vsel %vm2295, %v5246, 0.0
        %5254 = vadd.xlane.f32.xlu0 %v5253
        %v5255 = vpop.xlane.xlu0 %5254
        %v5256 = vsel %vm2295, %v5248, 0.0
        %5257 = vadd.xlane.f32.xlu0 %v5256
        %v5258 = vpop.xlane.xlu0 %5257
        %v5259 = vsel %vm2295, %v5250, 0.0
        %5260 = vadd.xlane.f32.xlu0 %v5259
        %v5261 = vpop.xlane.xlu0 %5260
        %v5262 = vsel %vm2305, %v5252, 0.0
        %5263 = vadd.xlane.f32.xlu0 %v5262
        %v5264 = vpop.xlane.xlu0 %5263
        %v5265 = vrcp.pop %v5255
        %v5266 = vrcp.pop %v5258
        %v5267 = vrcp.pop %v5261
        %v5268 = vrcp.pop %v5264
        %v5270 = vsel %vm2295, %v5246, 0
        %v5273 = vsel %vm2295, %v5248, 0
        %v5276 = vsel %vm2295, %v5250, 0
        %v5279 = vsel %vm2295, %v5252, 0
        %v5282 = vsel %vm2349, %v5117, 0
        %5284 = vmatprep.subr.mxu0 0.0
        %5285 = vmatpush1.msra.mxu0 %v5102
        %5286 = vmatprep.subr.mxu0 0.0
        %5287 = vmatpush1.msra.mxu0 %v5107
        %5288 = vmatprep.subr.mxu0 0.0
        %5289 = vmatpush1.msra.mxu0 %v5112
        %5290 = vmatprep.subr.mxu0 0.0
        %5291 = vmatpush1.msra.mxu0 %v5282
        %5292 = vmatprep.subr.mxu0 0.0
        %5293 = vmatpush1.msra.mxu0 0.0
        %5294 = vmatprep.subr.mxu0 0.0
        %5295 = vmatpush1.msra.mxu0 0.0
        %5296 = vmatprep.subr.mxu0 0.0
        %5297 = vmatpush1.msra.mxu0 0.0
        %5298 = vmatprep.subr.mxu0 0.0
        %5299 = vmatpush1.msra.mxu0 0.0
        %5300 = vmatprep.subr.mxu0 0.0
        %5301 = vmatpush1.msra.mxu0 0.0
        %5302 = vmatprep.subr.mxu0 0.0
        %5303 = vmatpush1.msra.mxu0 0.0
        %5304 = vmatprep.subr.mxu0 0.0
        %5305 = vmatpush1.msra.mxu0 0.0
        %5306 = vmatprep.subr.mxu0 0.0
        %5307 = vmatpush1.msra.mxu0 0.0
        %5308 = vmatprep.subr.mxu0 0.0
        %5309 = vmatpush1.msra.mxu0 0.0
        %5310 = vmatprep.subr.mxu0 0.0
        %5311 = vmatpush1.msra.mxu0 0.0
        %5312 = vmatprep.subr.mxu0 0.0
        %5313 = vmatpush1.msra.mxu0 0.0
        %5314 = vmatprep.subr.mxu0 0.0
        %5315 = vmatpush1.msra.mxu0 0.0
        %5316 = vmatprep.subr.mxu0 0.0
        %5317 = vmatpush1.msra.mxu0 0.0
        %5318 = vmatprep.subr.mxu0 0.0
        %5319 = vmatpush1.msra.mxu0 0.0
        %5320 = vmatprep.subr.mxu0 0.0
        %5321 = vmatpush1.msra.mxu0 0.0
        %5322 = vmatprep.subr.mxu0 0.0
        %5323 = vmatpush1.msra.mxu0 0.0
        %5324 = vmatprep.subr.mxu0 0.0
        %5325 = vmatpush1.msra.mxu0 0.0
        %5326 = vmatprep.subr.mxu0 0.0
        %5327 = vmatpush1.msra.mxu0 0.0
        %5328 = vmatprep.subr.mxu0 0.0
        %5329 = vmatpush1.msra.mxu0 0.0
        %5330 = vmatprep.subr.mxu0 0.0
        %5331 = vmatpush1.msra.mxu0 0.0
        %5332 = vmatprep.subr.mxu0 0.0
        %5333 = vmatpush1.msra.mxu0 0.0
        %5334 = vmatprep.subr.mxu0 0.0
        %5335 = vmatpush1.msra.mxu0 0.0
        %5336 = vmatprep.subr.mxu0 0.0
        %5337 = vmatpush1.msra.mxu0 0.0
        %5338 = vmatprep.subr.mxu0 0.0
        %5339 = vmatpush1.msra.mxu0 0.0
        %5340 = vmatprep.subr.mxu0 0.0
        %5341 = vmatpush1.msra.mxu0 0.0
        %5342 = vmatprep.subr.mxu0 0.0
        %5343 = vmatpush1.msra.mxu0 0.0
        %5344 = vmatprep.subr.mxu0 0.0
        %5345 = vmatpush1.msra.mxu0 0.0
        %5346 = vmatprep.subr.mxu0 0.0
        %5347 = vmatpush1.msra.mxu0 0.0
        %5348 = vmatprep.mubr.f32.mxu0 0.0
        %5349 = vmatmul.mubr.f32.gmra.mrb[0].mxu0 %v5270
        %v5350 = vpop.f32.mrb[0].mxu0
        %v5351 = vadd.f32 0.0, %v5350
        %v5352 = vpop.f32.mrb[0].mxu0
        %5353 = vmatprep.mubr.f32.mxu0 0.0
        %5354 = vmatmul.mubr.f32.gmra.mrb[0].mxu0 %v5273
        %v5355 = vpop.f32.mrb[0].mxu0
        %v5356 = vadd.f32 0.0, %v5355
        %v5357 = vpop.f32.mrb[0].mxu0
        %5358 = vmatprep.mubr.f32.mxu0 0.0
        %5359 = vmatmul.mubr.f32.gmra.mrb[0].mxu0 %v5276
        %v5360 = vpop.f32.mrb[0].mxu0
        %v5361 = vadd.f32 0.0, %v5360
        %v5362 = vpop.f32.mrb[0].mxu0
        %5363 = vmatprep.mubr.f32.mxu0 0.0
        %5364 = vmatmul.mubr.f32.gmra.mrb[0].mxu0 %v5279
        %v5365 = vpop.f32.mrb[0].mxu0
        %v5366 = vadd.f32 0.0, %v5365
        %v5367 = vpop.f32.mrb[0].mxu0
        %5368 = vdwg.mxu0
        %v5369 = vmul.f32 %v5351, %v5265
        %v5370 = vmul.f32 %v5356, %v5266
        %v5371 = vmul.f32 %v5361, %v5267
        %v5372 = vmul.f32 %v5366, %v5268
        %s5373 = scalar_lea.vmem %s45, 32
        %v5374 = vld [vmem:[%s5373] sm:$0xff]
        %s5375 = scalar_lea.vmem %s39, 160
        %v5376 = vld [vmem:[%s5375] sm:$0xff]
        %v5377 = vld [vmem:[%s5375 + $0x8] sm:$0xff]
        %v5378 = vld [vmem:[%s5375 + $0x10] sm:$0xff]
        %v5379 = vld [vmem:[%s5375 + $0x18] sm:$0xff]
        %5380 = vmatprep.subr.mxu0 0.0
        %5381 = vmatpush1.msra.mxu0 %v5376
        %5382 = vmatprep.subr.mxu0 0.0
        %5383 = vmatpush1.msra.mxu0 %v5377
        %5384 = vmatprep.subr.mxu0 0.0
        %5385 = vmatpush1.msra.mxu0 %v5378
        %5386 = vmatprep.subr.mxu0 0.0
        %5387 = vmatpush1.msra.mxu0 %v5379
        %5388 = vmatprep.subr.mxu0 0.0
        %5389 = vmatpush1.msra.mxu0 0.0
        %5390 = vmatprep.subr.mxu0 0.0
        %5391 = vmatpush1.msra.mxu0 0.0
        %5392 = vmatprep.subr.mxu0 0.0
        %5393 = vmatpush1.msra.mxu0 0.0
        %5394 = vmatprep.subr.mxu0 0.0
        %5395 = vmatpush1.msra.mxu0 0.0
        %5396 = vmatprep.subr.mxu0 0.0
        %5397 = vmatpush1.msra.mxu0 0.0
        %5398 = vmatprep.subr.mxu0 0.0
        %5399 = vmatpush1.msra.mxu0 0.0
        %5400 = vmatprep.subr.mxu0 0.0
        %5401 = vmatpush1.msra.mxu0 0.0
        %5402 = vmatprep.subr.mxu0 0.0
        %5403 = vmatpush1.msra.mxu0 0.0
        %5404 = vmatprep.subr.mxu0 0.0
        %5405 = vmatpush1.msra.mxu0 0.0
        %5406 = vmatprep.subr.mxu0 0.0
        %5407 = vmatpush1.msra.mxu0 0.0
        %5408 = vmatprep.subr.mxu0 0.0
        %5409 = vmatpush1.msra.mxu0 0.0
        %5410 = vmatprep.subr.mxu0 0.0
        %5411 = vmatpush1.msra.mxu0 0.0
        %5412 = vmatprep.subr.mxu0 0.0
        %5413 = vmatpush1.msra.mxu0 0.0
        %5414 = vmatprep.subr.mxu0 0.0
        %5415 = vmatpush1.msra.mxu0 0.0
        %5416 = vmatprep.subr.mxu0 0.0
        %5417 = vmatpush1.msra.mxu0 0.0
        %5418 = vmatprep.subr.mxu0 0.0
        %5419 = vmatpush1.msra.mxu0 0.0
        %5420 = vmatprep.subr.mxu0 0.0
        %5421 = vmatpush1.msra.mxu0 0.0
        %5422 = vmatprep.subr.mxu0 0.0
        %5423 = vmatpush1.msra.mxu0 0.0
        %5424 = vmatprep.subr.mxu0 0.0
        %5425 = vmatpush1.msra.mxu0 0.0
        %5426 = vmatprep.subr.mxu0 0.0
        %5427 = vmatpush1.msra.mxu0 0.0
        %5428 = vmatprep.subr.mxu0 0.0
        %5429 = vmatpush1.msra.mxu0 0.0
        %5430 = vmatprep.subr.mxu0 0.0
        %5431 = vmatpush1.msra.mxu0 0.0
        %5432 = vmatprep.subr.mxu0 0.0
        %5433 = vmatpush1.msra.mxu0 0.0
        %5434 = vmatprep.subr.mxu0 0.0
        %5435 = vmatpush1.msra.mxu0 0.0
        %5436 = vmatprep.subr.mxu0 0.0
        %5437 = vmatpush1.msra.mxu0 0.0
        %5438 = vmatprep.subr.mxu0 0.0
        %5439 = vmatpush1.msra.mxu0 0.0
        %5440 = vmatprep.subr.mxu0 0.0
        %5441 = vmatpush1.msra.mxu0 0.0
        %5442 = vmatprep.subr.mxu0 0.0
        %5443 = vmatpush1.msra.mxu0 0.0
        %5444 = vmatprep.mubr.f32.mxu0 0.0
        %5445 = vmatmul.mubr.f32.gmra.mrb[0].mxu0 %v4844
        %v5446 = vpop.f32.mrb[0].mxu0
        %v5447 = vadd.f32 0.0, %v5446
        %v5448 = vpop.f32.mrb[0].mxu0
        %5449 = vmatprep.mubr.f32.mxu0 0.0
        %5450 = vmatmul.mubr.f32.gmra.mrb[0].mxu0 %v4847
        %v5451 = vpop.f32.mrb[0].mxu0
        %v5452 = vadd.f32 0.0, %v5451
        %v5453 = vpop.f32.mrb[0].mxu0
        %5454 = vmatprep.mubr.f32.mxu0 0.0
        %5455 = vmatmul.mubr.f32.gmra.mrb[0].mxu0 %v4850
        %v5456 = vpop.f32.mrb[0].mxu0
        %v5457 = vadd.f32 0.0, %v5456
        %v5458 = vpop.f32.mrb[0].mxu0
        %5459 = vmatprep.mubr.f32.mxu0 0.0
        %5460 = vmatmul.mubr.f32.gmra.mrb[0].mxu0 %v4853
        %v5461 = vpop.f32.mrb[0].mxu0
        %v5462 = vadd.f32 0.0, %v5461
        %v5463 = vpop.f32.mrb[0].mxu0
        %5464 = vdwg.mxu0
        %s5465 = scalar_lea.vmem %s41, 160
        %v5466 = vld [vmem:[%s5465] sm:$0xff]
        %v5467 = vld [vmem:[%s5465 + $0x8] sm:$0xff]
        %v5468 = vld [vmem:[%s5465 + $0x10] sm:$0xff]
        %v5469 = vld [vmem:[%s5465 + $0x18] sm:$0xff]
        %5470 = vmatprep.subr.mxu0 0.0
        %5471 = vmatpush1.msra.mxu0 %v5466
        %5472 = vmatprep.subr.mxu0 0.0
        %5473 = vmatpush1.msra.mxu0 %v5467
        %5474 = vmatprep.subr.mxu0 0.0
        %5475 = vmatpush1.msra.mxu0 %v5468
        %5476 = vmatprep.subr.mxu0 0.0
        %5477 = vmatpush1.msra.mxu0 %v5469
        %5478 = vmatprep.subr.mxu0 0.0
        %5479 = vmatpush1.msra.mxu0 0.0
        %5480 = vmatprep.subr.mxu0 0.0
        %5481 = vmatpush1.msra.mxu0 0.0
        %5482 = vmatprep.subr.mxu0 0.0
        %5483 = vmatpush1.msra.mxu0 0.0
        %5484 = vmatprep.subr.mxu0 0.0
        %5485 = vmatpush1.msra.mxu0 0.0
        %5486 = vmatprep.subr.mxu0 0.0
        %5487 = vmatpush1.msra.mxu0 0.0
        %5488 = vmatprep.subr.mxu0 0.0
        %5489 = vmatpush1.msra.mxu0 0.0
        %5490 = vmatprep.subr.mxu0 0.0
        %5491 = vmatpush1.msra.mxu0 0.0
        %5492 = vmatprep.subr.mxu0 0.0
        %5493 = vmatpush1.msra.mxu0 0.0
        %5494 = vmatprep.subr.mxu0 0.0
        %5495 = vmatpush1.msra.mxu0 0.0
        %5496 = vmatprep.subr.mxu0 0.0
        %5497 = vmatpush1.msra.mxu0 0.0
        %5498 = vmatprep.subr.mxu0 0.0
        %5499 = vmatpush1.msra.mxu0 0.0
        %5500 = vmatprep.subr.mxu0 0.0
        %5501 = vmatpush1.msra.mxu0 0.0
        %5502 = vmatprep.subr.mxu0 0.0
        %5503 = vmatpush1.msra.mxu0 0.0
        %5504 = vmatprep.subr.mxu0 0.0
        %5505 = vmatpush1.msra.mxu0 0.0
        %5506 = vmatprep.subr.mxu0 0.0
        %5507 = vmatpush1.msra.mxu0 0.0
        %5508 = vmatprep.subr.mxu0 0.0
        %5509 = vmatpush1.msra.mxu0 0.0
        %5510 = vmatprep.subr.mxu0 0.0
        %5511 = vmatpush1.msra.mxu0 0.0
        %5512 = vmatprep.subr.mxu0 0.0
        %5513 = vmatpush1.msra.mxu0 0.0
        %5514 = vmatprep.subr.mxu0 0.0
        %5515 = vmatpush1.msra.mxu0 0.0
        %5516 = vmatprep.subr.mxu0 0.0
        %5517 = vmatpush1.msra.mxu0 0.0
        %5518 = vmatprep.subr.mxu0 0.0
        %5519 = vmatpush1.msra.mxu0 0.0
        %5520 = vmatprep.subr.mxu0 0.0
        %5521 = vmatpush1.msra.mxu0 0.0
        %5522 = vmatprep.subr.mxu0 0.0
        %5523 = vmatpush1.msra.mxu0 0.0
        %5524 = vmatprep.subr.mxu0 0.0
        %5525 = vmatpush1.msra.mxu0 0.0
        %5526 = vmatprep.subr.mxu0 0.0
        %5527 = vmatpush1.msra.mxu0 0.0
        %5528 = vmatprep.subr.mxu0 0.0
        %5529 = vmatpush1.msra.mxu0 0.0
        %5530 = vmatprep.subr.mxu0 0.0
        %5531 = vmatpush1.msra.mxu0 0.0
        %5532 = vmatprep.subr.mxu0 0.0
        %5533 = vmatpush1.msra.mxu0 0.0
        %5534 = vmatprep.mubr.f32.mxu0 0.0
        %5535 = vmatmul.mubr.f32.gmra.mrb[0].mxu0 %v4844
        %v5536 = vpop.f32.mrb[0].mxu0
        %v5537 = vadd.f32 0.0, %v5536
        %v5538 = vpop.f32.mrb[0].mxu0
        %5539 = vmatprep.mubr.f32.mxu0 0.0
        %5540 = vmatmul.mubr.f32.gmra.mrb[0].mxu0 %v4847
        %v5541 = vpop.f32.mrb[0].mxu0
        %v5542 = vadd.f32 0.0, %v5541
        %v5543 = vpop.f32.mrb[0].mxu0
        %5544 = vmatprep.mubr.f32.mxu0 0.0
        %5545 = vmatmul.mubr.f32.gmra.mrb[0].mxu0 %v4850
        %v5546 = vpop.f32.mrb[0].mxu0
        %v5547 = vadd.f32 0.0, %v5546
        %v5548 = vpop.f32.mrb[0].mxu0
        %5549 = vmatprep.mubr.f32.mxu0 0.0
        %5550 = vmatmul.mubr.f32.gmra.mrb[0].mxu0 %v4853
        %v5551 = vpop.f32.mrb[0].mxu0
        %v5552 = vadd.f32 0.0, %v5551
        %v5553 = vpop.f32.mrb[0].mxu0
        %5554 = vdwg.mxu0
        %s5555 = scalar_lea.vmem %s43, 160
        %v5556 = vld [vmem:[%s5555] sm:$0xff]
        %v5557 = vld [vmem:[%s5555 + $0x8] sm:$0xff]
        %v5558 = vld [vmem:[%s5555 + $0x10] sm:$0xff]
        %v5559 = vld [vmem:[%s5555 + $0x18] sm:$0xff]
        %5560 = vmatprep.subr.mxu0 0.0
        %5561 = vmatpush1.msra.mxu0 %v5556
        %5562 = vmatprep.subr.mxu0 0.0
        %5563 = vmatpush1.msra.mxu0 %v5557
        %5564 = vmatprep.subr.mxu0 0.0
        %5565 = vmatpush1.msra.mxu0 %v5558
        %5566 = vmatprep.subr.mxu0 0.0
        %5567 = vmatpush1.msra.mxu0 %v5559
        %5568 = vmatprep.subr.mxu0 0.0
        %5569 = vmatpush1.msra.mxu0 0.0
        %5570 = vmatprep.subr.mxu0 0.0
        %5571 = vmatpush1.msra.mxu0 0.0
        %5572 = vmatprep.subr.mxu0 0.0
        %5573 = vmatpush1.msra.mxu0 0.0
        %5574 = vmatprep.subr.mxu0 0.0
        %5575 = vmatpush1.msra.mxu0 0.0
        %5576 = vmatprep.subr.mxu0 0.0
        %5577 = vmatpush1.msra.mxu0 0.0
        %5578 = vmatprep.subr.mxu0 0.0
        %5579 = vmatpush1.msra.mxu0 0.0
        %5580 = vmatprep.subr.mxu0 0.0
        %5581 = vmatpush1.msra.mxu0 0.0
        %5582 = vmatprep.subr.mxu0 0.0
        %5583 = vmatpush1.msra.mxu0 0.0
        %5584 = vmatprep.subr.mxu0 0.0
        %5585 = vmatpush1.msra.mxu0 0.0
        %5586 = vmatprep.subr.mxu0 0.0
        %5587 = vmatpush1.msra.mxu0 0.0
        %5588 = vmatprep.subr.mxu0 0.0
        %5589 = vmatpush1.msra.mxu0 0.0
        %5590 = vmatprep.subr.mxu0 0.0
        %5591 = vmatpush1.msra.mxu0 0.0
        %5592 = vmatprep.subr.mxu0 0.0
        %5593 = vmatpush1.msra.mxu0 0.0
        %5594 = vmatprep.subr.mxu0 0.0
        %5595 = vmatpush1.msra.mxu0 0.0
        %5596 = vmatprep.subr.mxu0 0.0
        %5597 = vmatpush1.msra.mxu0 0.0
        %5598 = vmatprep.subr.mxu0 0.0
        %5599 = vmatpush1.msra.mxu0 0.0
        %5600 = vmatprep.subr.mxu0 0.0
        %5601 = vmatpush1.msra.mxu0 0.0
        %5602 = vmatprep.subr.mxu0 0.0
        %5603 = vmatpush1.msra.mxu0 0.0
        %5604 = vmatprep.subr.mxu0 0.0
        %5605 = vmatpush1.msra.mxu0 0.0
        %5606 = vmatprep.subr.mxu0 0.0
        %5607 = vmatpush1.msra.mxu0 0.0
        %5608 = vmatprep.subr.mxu0 0.0
        %5609 = vmatpush1.msra.mxu0 0.0
        %5610 = vmatprep.subr.mxu0 0.0
        %5611 = vmatpush1.msra.mxu0 0.0
        %5612 = vmatprep.subr.mxu0 0.0
        %5613 = vmatpush1.msra.mxu0 0.0
        %5614 = vmatprep.subr.mxu0 0.0
        %5615 = vmatpush1.msra.mxu0 0.0
        %5616 = vmatprep.subr.mxu0 0.0
        %5617 = vmatpush1.msra.mxu0 0.0
        %5618 = vmatprep.subr.mxu0 0.0
        %5619 = vmatpush1.msra.mxu0 0.0
        %5620 = vmatprep.subr.mxu0 0.0
        %5621 = vmatpush1.msra.mxu0 0.0
        %5622 = vmatprep.subr.mxu0 0.0
        %5623 = vmatpush1.msra.mxu0 0.0
        %5624 = vmatprep.mubr.f32.mxu0 0.0
        %5625 = vmatmul.mubr.f32.gmra.mrb[0].mxu0 %v4844
        %v5626 = vpop.f32.mrb[0].mxu0
        %v5627 = vadd.f32 0.0, %v5626
        %v5628 = vpop.f32.mrb[0].mxu0
        %5629 = vmatprep.mubr.f32.mxu0 0.0
        %5630 = vmatmul.mubr.f32.gmra.mrb[0].mxu0 %v4847
        %v5631 = vpop.f32.mrb[0].mxu0
        %v5632 = vadd.f32 0.0, %v5631
        %v5633 = vpop.f32.mrb[0].mxu0
        %5634 = vmatprep.mubr.f32.mxu0 0.0
        %5635 = vmatmul.mubr.f32.gmra.mrb[0].mxu0 %v4850
        %v5636 = vpop.f32.mrb[0].mxu0
        %v5637 = vadd.f32 0.0, %v5636
        %v5638 = vpop.f32.mrb[0].mxu0
        %5639 = vmatprep.mubr.f32.mxu0 0.0
        %5640 = vmatmul.mubr.f32.gmra.mrb[0].mxu0 %v4853
        %v5641 = vpop.f32.mrb[0].mxu0
        %v5642 = vadd.f32 0.0, %v5641
        %v5643 = vpop.f32.mrb[0].mxu0
        %5644 = vdwg.mxu0
        %v5646 = vsel %vm1317, %v5447, 0
        %v5649 = vsel %vm1317, %v5452, 0
        %v5652 = vsel %vm1317, %v5457, 0
        %v5655 = vsel %vm1317, %v5462, 0
        %v5658 = vsel %vm1317, %v5537, 0
        %v5661 = vsel %vm1317, %v5542, 0
        %v5664 = vsel %vm1317, %v5547, 0
        %v5667 = vsel %vm1317, %v5552, 0
        %5669 = vmatprep.subr.mxu0 0.0
        %5670 = vmatpush1.xpose.msra.mxu0 %v5658
        %5671 = vmatprep.subr.mxu0 0.0
        %5672 = vmatpush1.xpose.msra.mxu0 %v5661
        %5673 = vmatprep.subr.mxu0 0.0
        %5674 = vmatpush1.xpose.msra.mxu0 %v5664
        %5675 = vmatprep.subr.mxu0 0.0
        %5676 = vmatpush1.xpose.msra.mxu0 %v5667
        %5677 = vmatprep.subr.mxu0 0.0
        %5678 = vmatpush1.xpose.msra.mxu0 0.0
        %5679 = vmatprep.subr.mxu0 0.0
        %5680 = vmatpush1.xpose.msra.mxu0 0.0
        %5681 = vmatprep.subr.mxu0 0.0
        %5682 = vmatpush1.xpose.msra.mxu0 0.0
        %5683 = vmatprep.subr.mxu0 0.0
        %5684 = vmatpush1.xpose.msra.mxu0 0.0
        %5685 = vmatprep.subr.mxu0 0.0
        %5686 = vmatpush1.xpose.msra.mxu0 0.0
        %5687 = vmatprep.subr.mxu0 0.0
        %5688 = vmatpush1.xpose.msra.mxu0 0.0
        %5689 = vmatprep.subr.mxu0 0.0
        %5690 = vmatpush1.xpose.msra.mxu0 0.0
        %5691 = vmatprep.subr.mxu0 0.0
        %5692 = vmatpush1.xpose.msra.mxu0 0.0
        %5693 = vmatprep.subr.mxu0 0.0
        %5694 = vmatpush1.xpose.msra.mxu0 0.0
        %5695 = vmatprep.subr.mxu0 0.0
        %5696 = vmatpush1.xpose.msra.mxu0 0.0
        %5697 = vmatprep.subr.mxu0 0.0
        %5698 = vmatpush1.xpose.msra.mxu0 0.0
        %5699 = vmatprep.subr.mxu0 0.0
        %5700 = vmatpush1.xpose.msra.mxu0 0.0
        %5701 = vmatprep.subr.mxu0 0.0
        %5702 = vmatpush1.xpose.msra.mxu0 0.0
        %5703 = vmatprep.subr.mxu0 0.0
        %5704 = vmatpush1.xpose.msra.mxu0 0.0
        %5705 = vmatprep.subr.mxu0 0.0
        %5706 = vmatpush1.xpose.msra.mxu0 0.0
        %5707 = vmatprep.subr.mxu0 0.0
        %5708 = vmatpush1.xpose.msra.mxu0 0.0
        %5709 = vmatprep.subr.mxu0 0.0
        %5710 = vmatpush1.xpose.msra.mxu0 0.0
        %5711 = vmatprep.subr.mxu0 0.0
        %5712 = vmatpush1.xpose.msra.mxu0 0.0
        %5713 = vmatprep.subr.mxu0 0.0
        %5714 = vmatpush1.xpose.msra.mxu0 0.0
        %5715 = vmatprep.subr.mxu0 0.0
        %5716 = vmatpush1.xpose.msra.mxu0 0.0
        %5717 = vmatprep.subr.mxu0 0.0
        %5718 = vmatpush1.xpose.msra.mxu0 0.0
        %5719 = vmatprep.subr.mxu0 0.0
        %5720 = vmatpush1.xpose.msra.mxu0 0.0
        %5721 = vmatprep.subr.mxu0 0.0
        %5722 = vmatpush1.xpose.msra.mxu0 0.0
        %5723 = vmatprep.subr.mxu0 0.0
        %5724 = vmatpush1.xpose.msra.mxu0 0.0
        %5725 = vmatprep.subr.mxu0 0.0
        %5726 = vmatpush1.xpose.msra.mxu0 0.0
        %5727 = vmatprep.subr.mxu0 0.0
        %5728 = vmatpush1.xpose.msra.mxu0 0.0
        %5729 = vmatprep.subr.mxu0 0.0
        %5730 = vmatpush1.xpose.msra.mxu0 0.0
        %5731 = vmatprep.subr.mxu0 0.0
        %5732 = vmatpush1.xpose.msra.mxu0 0.0
        %5733 = vmatprep.mubr.f32.mxu0 0.0
        %5734 = vmatmul.mubr.f32.gmra.mrb[0].mxu0 %v5646
        %v5735 = vpop.f32.mrb[0].mxu0
        %v5736 = vadd.f32 %v1899, %v5735
        %v5737 = vpop.f32.mrb[0].mxu0
        %5738 = vmatprep.mubr.f32.mxu0 0.0
        %5739 = vmatmul.mubr.f32.gmra.mrb[0].mxu0 %v5649
        %v5740 = vpop.f32.mrb[0].mxu0
        %v5741 = vadd.f32 %v1900, %v5740
        %v5742 = vpop.f32.mrb[0].mxu0
        %5743 = vmatprep.mubr.f32.mxu0 0.0
        %5744 = vmatmul.mubr.f32.gmra.mrb[0].mxu0 %v5652
        %v5745 = vpop.f32.mrb[0].mxu0
        %v5746 = vadd.f32 %v1901, %v5745
        %v5747 = vpop.f32.mrb[0].mxu0
        %5748 = vmatprep.mubr.f32.mxu0 0.0
        %5749 = vmatmul.mubr.f32.gmra.mrb[0].mxu0 %v5655
        %v5750 = vpop.f32.mrb[0].mxu0
        %v5751 = vadd.f32 %v1902, %v5750
        %v5752 = vpop.f32.mrb[0].mxu0
        %5753 = vdwg.mxu0
        %v5754 = vsel %vm2295, %v5736, -inf
        %5755 = vmax.xlane.f32.xlu0 %v5754
        %v5756 = vpop.xlane.xlu0 %5755
        %v5757 = vsel %vm2295, %v5741, -inf
        %5758 = vmax.xlane.f32.xlu0 %v5757
        %v5759 = vpop.xlane.xlu0 %5758
        %v5760 = vsel %vm2295, %v5746, -inf
        %5761 = vmax.xlane.f32.xlu0 %v5760
        %v5762 = vpop.xlane.xlu0 %5761
        %v5763 = vsel %vm2305, %v5751, -inf
        %5764 = vmax.xlane.f32.xlu0 %v5763
        %v5765 = vpop.xlane.xlu0 %5764
        %v5766 = vsub.f32 %v5736, %v5756
        %v5767 = vsub.f32 %v5741, %v5759
        %v5768 = vsub.f32 %v5746, %v5762
        %v5769 = vsub.f32 %v5751, %v5765
        %v5770 = vmul.f32 %v5766, 1.442695
        %v5771 = vpow.pop %v5770
        %v5772 = vmul.f32 %v5767, 1.442695
        %v5773 = vpow.pop %v5772
        %v5774 = vmul.f32 %v5768, 1.442695
        %v5775 = vpow.pop %v5774
        %v5776 = vmul.f32 %v5769, 1.442695
        %v5777 = vpow.pop %v5776
        %v5778 = vsel %vm2295, %v5771, 0.0
        %5779 = vadd.xlane.f32.xlu0 %v5778
        %v5780 = vpop.xlane.xlu0 %5779
        %v5781 = vsel %vm2295, %v5773, 0.0
        %5782 = vadd.xlane.f32.xlu0 %v5781
        %v5783 = vpop.xlane.xlu0 %5782
        %v5784 = vsel %vm2295, %v5775, 0.0
        %5785 = vadd.xlane.f32.xlu0 %v5784
        %v5786 = vpop.xlane.xlu0 %5785
        %v5787 = vsel %vm2305, %v5777, 0.0
        %5788 = vadd.xlane.f32.xlu0 %v5787
        %v5789 = vpop.xlane.xlu0 %5788
        %v5790 = vrcp.pop %v5780
        %v5791 = vrcp.pop %v5783
        %v5792 = vrcp.pop %v5786
        %v5793 = vrcp.pop %v5789
        %v5795 = vsel %vm2295, %v5771, 0
        %v5798 = vsel %vm2295, %v5773, 0
        %v5801 = vsel %vm2295, %v5775, 0
        %v5804 = vsel %vm2295, %v5777, 0
        %v5807 = vsel %vm2349, %v5642, 0
        %5809 = vmatprep.subr.mxu0 0.0
        %5810 = vmatpush1.msra.mxu0 %v5627
        %5811 = vmatprep.subr.mxu0 0.0
        %5812 = vmatpush1.msra.mxu0 %v5632
        %5813 = vmatprep.subr.mxu0 0.0
        %5814 = vmatpush1.msra.mxu0 %v5637
        %5815 = vmatprep.subr.mxu0 0.0
        %5816 = vmatpush1.msra.mxu0 %v5807
        %5817 = vmatprep.subr.mxu0 0.0
        %5818 = vmatpush1.msra.mxu0 0.0
        %5819 = vmatprep.subr.mxu0 0.0
        %5820 = vmatpush1.msra.mxu0 0.0
        %5821 = vmatprep.subr.mxu0 0.0
        %5822 = vmatpush1.msra.mxu0 0.0
        %5823 = vmatprep.subr.mxu0 0.0
        %5824 = vmatpush1.msra.mxu0 0.0
        %5825 = vmatprep.subr.mxu0 0.0
        %5826 = vmatpush1.msra.mxu0 0.0
        %5827 = vmatprep.subr.mxu0 0.0
        %5828 = vmatpush1.msra.mxu0 0.0
        %5829 = vmatprep.subr.mxu0 0.0
        %5830 = vmatpush1.msra.mxu0 0.0
        %5831 = vmatprep.subr.mxu0 0.0
        %5832 = vmatpush1.msra.mxu0 0.0
        %5833 = vmatprep.subr.mxu0 0.0
        %5834 = vmatpush1.msra.mxu0 0.0
        %5835 = vmatprep.subr.mxu0 0.0
        %5836 = vmatpush1.msra.mxu0 0.0
        %5837 = vmatprep.subr.mxu0 0.0
        %5838 = vmatpush1.msra.mxu0 0.0
        %5839 = vmatprep.subr.mxu0 0.0
        %5840 = vmatpush1.msra.mxu0 0.0
        %5841 = vmatprep.subr.mxu0 0.0
        %5842 = vmatpush1.msra.mxu0 0.0
        %5843 = vmatprep.subr.mxu0 0.0
        %5844 = vmatpush1.msra.mxu0 0.0
        %5845 = vmatprep.subr.mxu0 0.0
        %5846 = vmatpush1.msra.mxu0 0.0
        %5847 = vmatprep.subr.mxu0 0.0
        %5848 = vmatpush1.msra.mxu0 0.0
        %5849 = vmatprep.subr.mxu0 0.0
        %5850 = vmatpush1.msra.mxu0 0.0
        %5851 = vmatprep.subr.mxu0 0.0
        %5852 = vmatpush1.msra.mxu0 0.0
        %5853 = vmatprep.subr.mxu0 0.0
        %5854 = vmatpush1.msra.mxu0 0.0
        %5855 = vmatprep.subr.mxu0 0.0
        %5856 = vmatpush1.msra.mxu0 0.0
        %5857 = vmatprep.subr.mxu0 0.0
        %5858 = vmatpush1.msra.mxu0 0.0
        %5859 = vmatprep.subr.mxu0 0.0
        %5860 = vmatpush1.msra.mxu0 0.0
        %5861 = vmatprep.subr.mxu0 0.0
        %5862 = vmatpush1.msra.mxu0 0.0
        %5863 = vmatprep.subr.mxu0 0.0
        %5864 = vmatpush1.msra.mxu0 0.0
        %5865 = vmatprep.subr.mxu0 0.0
        %5866 = vmatpush1.msra.mxu0 0.0
        %5867 = vmatprep.subr.mxu0 0.0
        %5868 = vmatpush1.msra.mxu0 0.0
        %5869 = vmatprep.subr.mxu0 0.0
        %5870 = vmatpush1.msra.mxu0 0.0
        %5871 = vmatprep.subr.mxu0 0.0
        %5872 = vmatpush1.msra.mxu0 0.0
        %5873 = vmatprep.mubr.f32.mxu0 0.0
        %5874 = vmatmul.mubr.f32.gmra.mrb[0].mxu0 %v5795
        %v5875 = vpop.f32.mrb[0].mxu0
        %v5876 = vadd.f32 0.0, %v5875
        %v5877 = vpop.f32.mrb[0].mxu0
        %5878 = vmatprep.mubr.f32.mxu0 0.0
        %5879 = vmatmul.mubr.f32.gmra.mrb[0].mxu0 %v5798
        %v5880 = vpop.f32.mrb[0].mxu0
        %v5881 = vadd.f32 0.0, %v5880
        %v5882 = vpop.f32.mrb[0].mxu0
        %5883 = vmatprep.mubr.f32.mxu0 0.0
        %5884 = vmatmul.mubr.f32.gmra.mrb[0].mxu0 %v5801
        %v5885 = vpop.f32.mrb[0].mxu0
        %v5886 = vadd.f32 0.0, %v5885
        %v5887 = vpop.f32.mrb[0].mxu0
        %5888 = vmatprep.mubr.f32.mxu0 0.0
        %5889 = vmatmul.mubr.f32.gmra.mrb[0].mxu0 %v5804
        %v5890 = vpop.f32.mrb[0].mxu0
        %v5891 = vadd.f32 0.0, %v5890
        %v5892 = vpop.f32.mrb[0].mxu0
        %5893 = vdwg.mxu0
        %v5894 = vmul.f32 %v5876, %v5790
        %v5895 = vmul.f32 %v5881, %v5791
        %v5896 = vmul.f32 %v5886, %v5792
        %v5897 = vmul.f32 %v5891, %v5793
        %s5898 = scalar_lea.vmem %s45, 40
        %v5899 = vld [vmem:[%s5898] sm:$0xff]
        %v5901 = vsel %vm1317, %v5894, 0
        %v5904 = vsel %vm1317, %v5895, 0
        %v5907 = vsel %vm1317, %v5896, 0
        %v5910 = vsel %vm1317, %v5897, 0
        %5912 = vmatprep.subr.mxu0 0.0
        %5913 = vmatpush1.msra.mxu0 %v5899
        %5914 = vmatprep.subr.mxu0 0.0
        %5915 = vmatpush1.msra.mxu0 0.0
        %5916 = vmatprep.subr.mxu0 0.0
        %5917 = vmatpush1.msra.mxu0 0.0
        %5918 = vmatprep.subr.mxu0 0.0
        %5919 = vmatpush1.msra.mxu0 0.0
        %5920 = vmatprep.subr.mxu0 0.0
        %5921 = vmatpush1.msra.mxu0 0.0
        %5922 = vmatprep.subr.mxu0 0.0
        %5923 = vmatpush1.msra.mxu0 0.0
        %5924 = vmatprep.subr.mxu0 0.0
        %5925 = vmatpush1.msra.mxu0 0.0
        %5926 = vmatprep.subr.mxu0 0.0
        %5927 = vmatpush1.msra.mxu0 0.0
        %5928 = vmatprep.subr.mxu0 0.0
        %5929 = vmatpush1.msra.mxu0 0.0
        %5930 = vmatprep.subr.mxu0 0.0
        %5931 = vmatpush1.msra.mxu0 0.0
        %5932 = vmatprep.subr.mxu0 0.0
        %5933 = vmatpush1.msra.mxu0 0.0
        %5934 = vmatprep.subr.mxu0 0.0
        %5935 = vmatpush1.msra.mxu0 0.0
        %5936 = vmatprep.subr.mxu0 0.0
        %5937 = vmatpush1.msra.mxu0 0.0
        %5938 = vmatprep.subr.mxu0 0.0
        %5939 = vmatpush1.msra.mxu0 0.0
        %5940 = vmatprep.subr.mxu0 0.0
        %5941 = vmatpush1.msra.mxu0 0.0
        %5942 = vmatprep.subr.mxu0 0.0
        %5943 = vmatpush1.msra.mxu0 0.0
        %5944 = vmatprep.subr.mxu0 0.0
        %5945 = vmatpush1.msra.mxu0 0.0
        %5946 = vmatprep.subr.mxu0 0.0
        %5947 = vmatpush1.msra.mxu0 0.0
        %5948 = vmatprep.subr.mxu0 0.0
        %5949 = vmatpush1.msra.mxu0 0.0
        %5950 = vmatprep.subr.mxu0 0.0
        %5951 = vmatpush1.msra.mxu0 0.0
        %5952 = vmatprep.subr.mxu0 0.0
        %5953 = vmatpush1.msra.mxu0 0.0
        %5954 = vmatprep.subr.mxu0 0.0
        %5955 = vmatpush1.msra.mxu0 0.0
        %5956 = vmatprep.subr.mxu0 0.0
        %5957 = vmatpush1.msra.mxu0 0.0
        %5958 = vmatprep.subr.mxu0 0.0
        %5959 = vmatpush1.msra.mxu0 0.0
        %5960 = vmatprep.subr.mxu0 0.0
        %5961 = vmatpush1.msra.mxu0 0.0
        %5962 = vmatprep.subr.mxu0 0.0
        %5963 = vmatpush1.msra.mxu0 0.0
        %5964 = vmatprep.subr.mxu0 0.0
        %5965 = vmatpush1.msra.mxu0 0.0
        %5966 = vmatprep.subr.mxu0 0.0
        %5967 = vmatpush1.msra.mxu0 0.0
        %5968 = vmatprep.subr.mxu0 0.0
        %5969 = vmatpush1.msra.mxu0 0.0
        %5970 = vmatprep.subr.mxu0 0.0
        %5971 = vmatpush1.msra.mxu0 0.0
        %5972 = vmatprep.subr.mxu0 0.0
        %5973 = vmatpush1.msra.mxu0 0.0
        %5974 = vmatprep.subr.mxu0 0.0
        %5975 = vmatpush1.msra.mxu0 0.0
        %5976 = vmatprep.mubr.f32.mxu0 0.0
        %5977 = vmatmul.mubr.f32.gmra.mrb[0].mxu0 %v5901
        %v5978 = vpop.f32.mrb[0].mxu0
        %v5979 = vadd.f32 0.0, %v5978
        %v5980 = vpop.f32.mrb[0].mxu0
        %5981 = vmatprep.mubr.f32.mxu0 0.0
        %5982 = vmatmul.mubr.f32.gmra.mrb[0].mxu0 %v5904
        %v5983 = vpop.f32.mrb[0].mxu0
        %v5984 = vadd.f32 0.0, %v5983
        %v5985 = vpop.f32.mrb[0].mxu0
        %5986 = vmatprep.mubr.f32.mxu0 0.0
        %5987 = vmatmul.mubr.f32.gmra.mrb[0].mxu0 %v5907
        %v5988 = vpop.f32.mrb[0].mxu0
        %v5989 = vadd.f32 0.0, %v5988
        %v5990 = vpop.f32.mrb[0].mxu0
        %5991 = vmatprep.mubr.f32.mxu0 0.0
        %5992 = vmatmul.mubr.f32.gmra.mrb[0].mxu0 %v5910
        %v5993 = vpop.f32.mrb[0].mxu0
        %v5994 = vadd.f32 0.0, %v5993
        %v5995 = vpop.f32.mrb[0].mxu0
        %5996 = vdwg.mxu0
        %v5998 = vsel %vm1317, %v5369, 0
        %v6001 = vsel %vm1317, %v5370, 0
        %v6004 = vsel %vm1317, %v5371, 0
        %v6007 = vsel %vm1317, %v5372, 0
        %6009 = vmatprep.subr.mxu0 0.0
        %6010 = vmatpush1.msra.mxu0 %v5374
        %6011 = vmatprep.subr.mxu0 0.0
        %6012 = vmatpush1.msra.mxu0 0.0
        %6013 = vmatprep.subr.mxu0 0.0
        %6014 = vmatpush1.msra.mxu0 0.0
        %6015 = vmatprep.subr.mxu0 0.0
        %6016 = vmatpush1.msra.mxu0 0.0
        %6017 = vmatprep.subr.mxu0 0.0
        %6018 = vmatpush1.msra.mxu0 0.0
        %6019 = vmatprep.subr.mxu0 0.0
        %6020 = vmatpush1.msra.mxu0 0.0
        %6021 = vmatprep.subr.mxu0 0.0
        %6022 = vmatpush1.msra.mxu0 0.0
        %6023 = vmatprep.subr.mxu0 0.0
        %6024 = vmatpush1.msra.mxu0 0.0
        %6025 = vmatprep.subr.mxu0 0.0
        %6026 = vmatpush1.msra.mxu0 0.0
        %6027 = vmatprep.subr.mxu0 0.0
        %6028 = vmatpush1.msra.mxu0 0.0
        %6029 = vmatprep.subr.mxu0 0.0
        %6030 = vmatpush1.msra.mxu0 0.0
        %6031 = vmatprep.subr.mxu0 0.0
        %6032 = vmatpush1.msra.mxu0 0.0
        %6033 = vmatprep.subr.mxu0 0.0
        %6034 = vmatpush1.msra.mxu0 0.0
        %6035 = vmatprep.subr.mxu0 0.0
        %6036 = vmatpush1.msra.mxu0 0.0
        %6037 = vmatprep.subr.mxu0 0.0
        %6038 = vmatpush1.msra.mxu0 0.0
        %6039 = vmatprep.subr.mxu0 0.0
        %6040 = vmatpush1.msra.mxu0 0.0
        %6041 = vmatprep.subr.mxu0 0.0
        %6042 = vmatpush1.msra.mxu0 0.0
        %6043 = vmatprep.subr.mxu0 0.0
        %6044 = vmatpush1.msra.mxu0 0.0
        %6045 = vmatprep.subr.mxu0 0.0
        %6046 = vmatpush1.msra.mxu0 0.0
        %6047 = vmatprep.subr.mxu0 0.0
        %6048 = vmatpush1.msra.mxu0 0.0
        %6049 = vmatprep.subr.mxu0 0.0
        %6050 = vmatpush1.msra.mxu0 0.0
        %6051 = vmatprep.subr.mxu0 0.0
        %6052 = vmatpush1.msra.mxu0 0.0
        %6053 = vmatprep.subr.mxu0 0.0
        %6054 = vmatpush1.msra.mxu0 0.0
        %6055 = vmatprep.subr.mxu0 0.0
        %6056 = vmatpush1.msra.mxu0 0.0
        %6057 = vmatprep.subr.mxu0 0.0
        %6058 = vmatpush1.msra.mxu0 0.0
        %6059 = vmatprep.subr.mxu0 0.0
        %6060 = vmatpush1.msra.mxu0 0.0
        %6061 = vmatprep.subr.mxu0 0.0
        %6062 = vmatpush1.msra.mxu0 0.0
        %6063 = vmatprep.subr.mxu0 0.0
        %6064 = vmatpush1.msra.mxu0 0.0
        %6065 = vmatprep.subr.mxu0 0.0
        %6066 = vmatpush1.msra.mxu0 0.0
        %6067 = vmatprep.subr.mxu0 0.0
        %6068 = vmatpush1.msra.mxu0 0.0
        %6069 = vmatprep.subr.mxu0 0.0
        %6070 = vmatpush1.msra.mxu0 0.0
        %6071 = vmatprep.subr.mxu0 0.0
        %6072 = vmatpush1.msra.mxu0 0.0
        %6073 = vmatprep.mubr.f32.mxu0 0.0
        %6074 = vmatmul.mubr.f32.gmra.mrb[0].mxu0 %v5998
        %v6075 = vpop.f32.mrb[0].mxu0
        %v6076 = vadd.f32 %v5979, %v6075
        %v6077 = vpop.f32.mrb[0].mxu0
        %6078 = vmatprep.mubr.f32.mxu0 0.0
        %6079 = vmatmul.mubr.f32.gmra.mrb[0].mxu0 %v6001
        %v6080 = vpop.f32.mrb[0].mxu0
        %v6081 = vadd.f32 %v5984, %v6080
        %v6082 = vpop.f32.mrb[0].mxu0
        %6083 = vmatprep.mubr.f32.mxu0 0.0
        %6084 = vmatmul.mubr.f32.gmra.mrb[0].mxu0 %v6004
        %v6085 = vpop.f32.mrb[0].mxu0
        %v6086 = vadd.f32 %v5989, %v6085
        %v6087 = vpop.f32.mrb[0].mxu0
        %6088 = vmatprep.mubr.f32.mxu0 0.0
        %6089 = vmatmul.mubr.f32.gmra.mrb[0].mxu0 %v6007
        %v6090 = vpop.f32.mrb[0].mxu0
        %v6091 = vadd.f32 %v5994, %v6090
        %v6092 = vpop.f32.mrb[0].mxu0
        %6093 = vdwg.mxu0
        %s6094 = scalar_lea.vmem %s39, 192
        %v6095 = vld [vmem:[%s6094] sm:$0xff]
        %v6096 = vld [vmem:[%s6094 + $0x8] sm:$0xff]
        %v6097 = vld [vmem:[%s6094 + $0x10] sm:$0xff]
        %v6098 = vld [vmem:[%s6094 + $0x18] sm:$0xff]
        %6099 = vmatprep.subr.mxu0 0.0
        %6100 = vmatpush1.msra.mxu0 %v6095
        %6101 = vmatprep.subr.mxu0 0.0
        %6102 = vmatpush1.msra.mxu0 %v6096
        %6103 = vmatprep.subr.mxu0 0.0
        %6104 = vmatpush1.msra.mxu0 %v6097
        %6105 = vmatprep.subr.mxu0 0.0
        %6106 = vmatpush1.msra.mxu0 %v6098
        %6107 = vmatprep.subr.mxu0 0.0
        %6108 = vmatpush1.msra.mxu0 0.0
        %6109 = vmatprep.subr.mxu0 0.0
        %6110 = vmatpush1.msra.mxu0 0.0
        %6111 = vmatprep.subr.mxu0 0.0
        %6112 = vmatpush1.msra.mxu0 0.0
        %6113 = vmatprep.subr.mxu0 0.0
        %6114 = vmatpush1.msra.mxu0 0.0
        %6115 = vmatprep.subr.mxu0 0.0
        %6116 = vmatpush1.msra.mxu0 0.0
        %6117 = vmatprep.subr.mxu0 0.0
        %6118 = vmatpush1.msra.mxu0 0.0
        %6119 = vmatprep.subr.mxu0 0.0
        %6120 = vmatpush1.msra.mxu0 0.0
        %6121 = vmatprep.subr.mxu0 0.0
        %6122 = vmatpush1.msra.mxu0 0.0
        %6123 = vmatprep.subr.mxu0 0.0
        %6124 = vmatpush1.msra.mxu0 0.0
        %6125 = vmatprep.subr.mxu0 0.0
        %6126 = vmatpush1.msra.mxu0 0.0
        %6127 = vmatprep.subr.mxu0 0.0
        %6128 = vmatpush1.msra.mxu0 0.0
        %6129 = vmatprep.subr.mxu0 0.0
        %6130 = vmatpush1.msra.mxu0 0.0
        %6131 = vmatprep.subr.mxu0 0.0
        %6132 = vmatpush1.msra.mxu0 0.0
        %6133 = vmatprep.subr.mxu0 0.0
        %6134 = vmatpush1.msra.mxu0 0.0
        %6135 = vmatprep.subr.mxu0 0.0
        %6136 = vmatpush1.msra.mxu0 0.0
        %6137 = vmatprep.subr.mxu0 0.0
        %6138 = vmatpush1.msra.mxu0 0.0
        %6139 = vmatprep.subr.mxu0 0.0
        %6140 = vmatpush1.msra.mxu0 0.0
        %6141 = vmatprep.subr.mxu0 0.0
        %6142 = vmatpush1.msra.mxu0 0.0
        %6143 = vmatprep.subr.mxu0 0.0
        %6144 = vmatpush1.msra.mxu0 0.0
        %6145 = vmatprep.subr.mxu0 0.0
        %6146 = vmatpush1.msra.mxu0 0.0
        %6147 = vmatprep.subr.mxu0 0.0
        %6148 = vmatpush1.msra.mxu0 0.0
        %6149 = vmatprep.subr.mxu0 0.0
        %6150 = vmatpush1.msra.mxu0 0.0
        %6151 = vmatprep.subr.mxu0 0.0
        %6152 = vmatpush1.msra.mxu0 0.0
        %6153 = vmatprep.subr.mxu0 0.0
        %6154 = vmatpush1.msra.mxu0 0.0
        %6155 = vmatprep.subr.mxu0 0.0
        %6156 = vmatpush1.msra.mxu0 0.0
        %6157 = vmatprep.subr.mxu0 0.0
        %6158 = vmatpush1.msra.mxu0 0.0
        %6159 = vmatprep.subr.mxu0 0.0
        %6160 = vmatpush1.msra.mxu0 0.0
        %6161 = vmatprep.subr.mxu0 0.0
        %6162 = vmatpush1.msra.mxu0 0.0
        %6163 = vmatprep.mubr.f32.mxu0 0.0
        %6164 = vmatmul.mubr.f32.gmra.mrb[0].mxu0 %v4844
        %v6165 = vpop.f32.mrb[0].mxu0
        %v6166 = vadd.f32 0.0, %v6165
        %v6167 = vpop.f32.mrb[0].mxu0
        %6168 = vmatprep.mubr.f32.mxu0 0.0
        %6169 = vmatmul.mubr.f32.gmra.mrb[0].mxu0 %v4847
        %v6170 = vpop.f32.mrb[0].mxu0
        %v6171 = vadd.f32 0.0, %v6170
        %v6172 = vpop.f32.mrb[0].mxu0
        %6173 = vmatprep.mubr.f32.mxu0 0.0
        %6174 = vmatmul.mubr.f32.gmra.mrb[0].mxu0 %v4850
        %v6175 = vpop.f32.mrb[0].mxu0
        %v6176 = vadd.f32 0.0, %v6175
        %v6177 = vpop.f32.mrb[0].mxu0
        %6178 = vmatprep.mubr.f32.mxu0 0.0
        %6179 = vmatmul.mubr.f32.gmra.mrb[0].mxu0 %v4853
        %v6180 = vpop.f32.mrb[0].mxu0
        %v6181 = vadd.f32 0.0, %v6180
        %v6182 = vpop.f32.mrb[0].mxu0
        %6183 = vdwg.mxu0
        %s6184 = scalar_lea.vmem %s41, 192
        %v6185 = vld [vmem:[%s6184] sm:$0xff]
        %v6186 = vld [vmem:[%s6184 + $0x8] sm:$0xff]
        %v6187 = vld [vmem:[%s6184 + $0x10] sm:$0xff]
        %v6188 = vld [vmem:[%s6184 + $0x18] sm:$0xff]
        %6189 = vmatprep.subr.mxu0 0.0
        %6190 = vmatpush1.msra.mxu0 %v6185
        %6191 = vmatprep.subr.mxu0 0.0
        %6192 = vmatpush1.msra.mxu0 %v6186
        %6193 = vmatprep.subr.mxu0 0.0
        %6194 = vmatpush1.msra.mxu0 %v6187
        %6195 = vmatprep.subr.mxu0 0.0
        %6196 = vmatpush1.msra.mxu0 %v6188
        %6197 = vmatprep.subr.mxu0 0.0
        %6198 = vmatpush1.msra.mxu0 0.0
        %6199 = vmatprep.subr.mxu0 0.0
        %6200 = vmatpush1.msra.mxu0 0.0
        %6201 = vmatprep.subr.mxu0 0.0
        %6202 = vmatpush1.msra.mxu0 0.0
        %6203 = vmatprep.subr.mxu0 0.0
        %6204 = vmatpush1.msra.mxu0 0.0
        %6205 = vmatprep.subr.mxu0 0.0
        %6206 = vmatpush1.msra.mxu0 0.0
        %6207 = vmatprep.subr.mxu0 0.0
        %6208 = vmatpush1.msra.mxu0 0.0
        %6209 = vmatprep.subr.mxu0 0.0
        %6210 = vmatpush1.msra.mxu0 0.0
        %6211 = vmatprep.subr.mxu0 0.0
        %6212 = vmatpush1.msra.mxu0 0.0
        %6213 = vmatprep.subr.mxu0 0.0
        %6214 = vmatpush1.msra.mxu0 0.0
        %6215 = vmatprep.subr.mxu0 0.0
        %6216 = vmatpush1.msra.mxu0 0.0
        %6217 = vmatprep.subr.mxu0 0.0
        %6218 = vmatpush1.msra.mxu0 0.0
        %6219 = vmatprep.subr.mxu0 0.0
        %6220 = vmatpush1.msra.mxu0 0.0
        %6221 = vmatprep.subr.mxu0 0.0
        %6222 = vmatpush1.msra.mxu0 0.0
        %6223 = vmatprep.subr.mxu0 0.0
        %6224 = vmatpush1.msra.mxu0 0.0
        %6225 = vmatprep.subr.mxu0 0.0
        %6226 = vmatpush1.msra.mxu0 0.0
        %6227 = vmatprep.subr.mxu0 0.0
        %6228 = vmatpush1.msra.mxu0 0.0
        %6229 = vmatprep.subr.mxu0 0.0
        %6230 = vmatpush1.msra.mxu0 0.0
        %6231 = vmatprep.subr.mxu0 0.0
        %6232 = vmatpush1.msra.mxu0 0.0
        %6233 = vmatprep.subr.mxu0 0.0
        %6234 = vmatpush1.msra.mxu0 0.0
        %6235 = vmatprep.subr.mxu0 0.0
        %6236 = vmatpush1.msra.mxu0 0.0
        %6237 = vmatprep.subr.mxu0 0.0
        %6238 = vmatpush1.msra.mxu0 0.0
        %6239 = vmatprep.subr.mxu0 0.0
        %6240 = vmatpush1.msra.mxu0 0.0
        %6241 = vmatprep.subr.mxu0 0.0
        %6242 = vmatpush1.msra.mxu0 0.0
        %6243 = vmatprep.subr.mxu0 0.0
        %6244 = vmatpush1.msra.mxu0 0.0
        %6245 = vmatprep.subr.mxu0 0.0
        %6246 = vmatpush1.msra.mxu0 0.0
        %6247 = vmatprep.subr.mxu0 0.0
        %6248 = vmatpush1.msra.mxu0 0.0
        %6249 = vmatprep.subr.mxu0 0.0
        %6250 = vmatpush1.msra.mxu0 0.0
        %6251 = vmatprep.subr.mxu0 0.0
        %6252 = vmatpush1.msra.mxu0 0.0
        %6253 = vmatprep.mubr.f32.mxu0 0.0
        %6254 = vmatmul.mubr.f32.gmra.mrb[0].mxu0 %v4844
        %v6255 = vpop.f32.mrb[0].mxu0
        %v6256 = vadd.f32 0.0, %v6255
        %v6257 = vpop.f32.mrb[0].mxu0
        %6258 = vmatprep.mubr.f32.mxu0 0.0
        %6259 = vmatmul.mubr.f32.gmra.mrb[0].mxu0 %v4847
        %v6260 = vpop.f32.mrb[0].mxu0
        %v6261 = vadd.f32 0.0, %v6260
        %v6262 = vpop.f32.mrb[0].mxu0
        %6263 = vmatprep.mubr.f32.mxu0 0.0
        %6264 = vmatmul.mubr.f32.gmra.mrb[0].mxu0 %v4850
        %v6265 = vpop.f32.mrb[0].mxu0
        %v6266 = vadd.f32 0.0, %v6265
        %v6267 = vpop.f32.mrb[0].mxu0
        %6268 = vmatprep.mubr.f32.mxu0 0.0
        %6269 = vmatmul.mubr.f32.gmra.mrb[0].mxu0 %v4853
        %v6270 = vpop.f32.mrb[0].mxu0
        %v6271 = vadd.f32 0.0, %v6270
        %v6272 = vpop.f32.mrb[0].mxu0
        %6273 = vdwg.mxu0
        %s6274 = scalar_lea.vmem %s43, 192
        %v6275 = vld [vmem:[%s6274] sm:$0xff]
        %v6276 = vld [vmem:[%s6274 + $0x8] sm:$0xff]
        %v6277 = vld [vmem:[%s6274 + $0x10] sm:$0xff]
        %v6278 = vld [vmem:[%s6274 + $0x18] sm:$0xff]
        %6279 = vmatprep.subr.mxu0 0.0
        %6280 = vmatpush1.msra.mxu0 %v6275
        %6281 = vmatprep.subr.mxu0 0.0
        %6282 = vmatpush1.msra.mxu0 %v6276
        %6283 = vmatprep.subr.mxu0 0.0
        %6284 = vmatpush1.msra.mxu0 %v6277
        %6285 = vmatprep.subr.mxu0 0.0
        %6286 = vmatpush1.msra.mxu0 %v6278
        %6287 = vmatprep.subr.mxu0 0.0
        %6288 = vmatpush1.msra.mxu0 0.0
        %6289 = vmatprep.subr.mxu0 0.0
        %6290 = vmatpush1.msra.mxu0 0.0
        %6291 = vmatprep.subr.mxu0 0.0
        %6292 = vmatpush1.msra.mxu0 0.0
        %6293 = vmatprep.subr.mxu0 0.0
        %6294 = vmatpush1.msra.mxu0 0.0
        %6295 = vmatprep.subr.mxu0 0.0
        %6296 = vmatpush1.msra.mxu0 0.0
        %6297 = vmatprep.subr.mxu0 0.0
        %6298 = vmatpush1.msra.mxu0 0.0
        %6299 = vmatprep.subr.mxu0 0.0
        %6300 = vmatpush1.msra.mxu0 0.0
        %6301 = vmatprep.subr.mxu0 0.0
        %6302 = vmatpush1.msra.mxu0 0.0
        %6303 = vmatprep.subr.mxu0 0.0
        %6304 = vmatpush1.msra.mxu0 0.0
        %6305 = vmatprep.subr.mxu0 0.0
        %6306 = vmatpush1.msra.mxu0 0.0
        %6307 = vmatprep.subr.mxu0 0.0
        %6308 = vmatpush1.msra.mxu0 0.0
        %6309 = vmatprep.subr.mxu0 0.0
        %6310 = vmatpush1.msra.mxu0 0.0
        %6311 = vmatprep.subr.mxu0 0.0
        %6312 = vmatpush1.msra.mxu0 0.0
        %6313 = vmatprep.subr.mxu0 0.0
        %6314 = vmatpush1.msra.mxu0 0.0
        %6315 = vmatprep.subr.mxu0 0.0
        %6316 = vmatpush1.msra.mxu0 0.0
        %6317 = vmatprep.subr.mxu0 0.0
        %6318 = vmatpush1.msra.mxu0 0.0
        %6319 = vmatprep.subr.mxu0 0.0
        %6320 = vmatpush1.msra.mxu0 0.0
        %6321 = vmatprep.subr.mxu0 0.0
        %6322 = vmatpush1.msra.mxu0 0.0
        %6323 = vmatprep.subr.mxu0 0.0
        %6324 = vmatpush1.msra.mxu0 0.0
        %6325 = vmatprep.subr.mxu0 0.0
        %6326 = vmatpush1.msra.mxu0 0.0
        %6327 = vmatprep.subr.mxu0 0.0
        %6328 = vmatpush1.msra.mxu0 0.0
        %6329 = vmatprep.subr.mxu0 0.0
        %6330 = vmatpush1.msra.mxu0 0.0
        %6331 = vmatprep.subr.mxu0 0.0
        %6332 = vmatpush1.msra.mxu0 0.0
        %6333 = vmatprep.subr.mxu0 0.0
        %6334 = vmatpush1.msra.mxu0 0.0
        %6335 = vmatprep.subr.mxu0 0.0
        %6336 = vmatpush1.msra.mxu0 0.0
        %6337 = vmatprep.subr.mxu0 0.0
        %6338 = vmatpush1.msra.mxu0 0.0
        %6339 = vmatprep.subr.mxu0 0.0
        %6340 = vmatpush1.msra.mxu0 0.0
        %6341 = vmatprep.subr.mxu0 0.0
        %6342 = vmatpush1.msra.mxu0 0.0
        %6343 = vmatprep.mubr.f32.mxu0 0.0
        %6344 = vmatmul.mubr.f32.gmra.mrb[0].mxu0 %v4844
        %v6345 = vpop.f32.mrb[0].mxu0
        %v6346 = vadd.f32 0.0, %v6345
        %v6347 = vpop.f32.mrb[0].mxu0
        %6348 = vmatprep.mubr.f32.mxu0 0.0
        %6349 = vmatmul.mubr.f32.gmra.mrb[0].mxu0 %v4847
        %v6350 = vpop.f32.mrb[0].mxu0
        %v6351 = vadd.f32 0.0, %v6350
        %v6352 = vpop.f32.mrb[0].mxu0
        %6353 = vmatprep.mubr.f32.mxu0 0.0
        %6354 = vmatmul.mubr.f32.gmra.mrb[0].mxu0 %v4850
        %v6355 = vpop.f32.mrb[0].mxu0
        %v6356 = vadd.f32 0.0, %v6355
        %v6357 = vpop.f32.mrb[0].mxu0
        %6358 = vmatprep.mubr.f32.mxu0 0.0
        %6359 = vmatmul.mubr.f32.gmra.mrb[0].mxu0 %v4853
        %v6360 = vpop.f32.mrb[0].mxu0
        %v6361 = vadd.f32 0.0, %v6360
        %v6362 = vpop.f32.mrb[0].mxu0
        %6363 = vdwg.mxu0
        %v6365 = vsel %vm1317, %v6166, 0
        %v6368 = vsel %vm1317, %v6171, 0
        %v6371 = vsel %vm1317, %v6176, 0
        %v6374 = vsel %vm1317, %v6181, 0
        %v6377 = vsel %vm1317, %v6256, 0
        %v6380 = vsel %vm1317, %v6261, 0
        %v6383 = vsel %vm1317, %v6266, 0
        %v6386 = vsel %vm1317, %v6271, 0
        %6388 = vmatprep.subr.mxu0 0.0
        %6389 = vmatpush1.xpose.msra.mxu0 %v6377
        %6390 = vmatprep.subr.mxu0 0.0
        %6391 = vmatpush1.xpose.msra.mxu0 %v6380
        %6392 = vmatprep.subr.mxu0 0.0
        %6393 = vmatpush1.xpose.msra.mxu0 %v6383
        %6394 = vmatprep.subr.mxu0 0.0
        %6395 = vmatpush1.xpose.msra.mxu0 %v6386
        %6396 = vmatprep.subr.mxu0 0.0
        %6397 = vmatpush1.xpose.msra.mxu0 0.0
        %6398 = vmatprep.subr.mxu0 0.0
        %6399 = vmatpush1.xpose.msra.mxu0 0.0
        %6400 = vmatprep.subr.mxu0 0.0
        %6401 = vmatpush1.xpose.msra.mxu0 0.0
        %6402 = vmatprep.subr.mxu0 0.0
        %6403 = vmatpush1.xpose.msra.mxu0 0.0
        %6404 = vmatprep.subr.mxu0 0.0
        %6405 = vmatpush1.xpose.msra.mxu0 0.0
        %6406 = vmatprep.subr.mxu0 0.0
        %6407 = vmatpush1.xpose.msra.mxu0 0.0
        %6408 = vmatprep.subr.mxu0 0.0
        %6409 = vmatpush1.xpose.msra.mxu0 0.0
        %6410 = vmatprep.subr.mxu0 0.0
        %6411 = vmatpush1.xpose.msra.mxu0 0.0
        %6412 = vmatprep.subr.mxu0 0.0
        %6413 = vmatpush1.xpose.msra.mxu0 0.0
        %6414 = vmatprep.subr.mxu0 0.0
        %6415 = vmatpush1.xpose.msra.mxu0 0.0
        %6416 = vmatprep.subr.mxu0 0.0
        %6417 = vmatpush1.xpose.msra.mxu0 0.0
        %6418 = vmatprep.subr.mxu0 0.0
        %6419 = vmatpush1.xpose.msra.mxu0 0.0
        %6420 = vmatprep.subr.mxu0 0.0
        %6421 = vmatpush1.xpose.msra.mxu0 0.0
        %6422 = vmatprep.subr.mxu0 0.0
        %6423 = vmatpush1.xpose.msra.mxu0 0.0
        %6424 = vmatprep.subr.mxu0 0.0
        %6425 = vmatpush1.xpose.msra.mxu0 0.0
        %6426 = vmatprep.subr.mxu0 0.0
        %6427 = vmatpush1.xpose.msra.mxu0 0.0
        %6428 = vmatprep.subr.mxu0 0.0
        %6429 = vmatpush1.xpose.msra.mxu0 0.0
        %6430 = vmatprep.subr.mxu0 0.0
        %6431 = vmatpush1.xpose.msra.mxu0 0.0
        %6432 = vmatprep.subr.mxu0 0.0
        %6433 = vmatpush1.xpose.msra.mxu0 0.0
        %6434 = vmatprep.subr.mxu0 0.0
        %6435 = vmatpush1.xpose.msra.mxu0 0.0
        %6436 = vmatprep.subr.mxu0 0.0
        %6437 = vmatpush1.xpose.msra.mxu0 0.0
        %6438 = vmatprep.subr.mxu0 0.0
        %6439 = vmatpush1.xpose.msra.mxu0 0.0
        %6440 = vmatprep.subr.mxu0 0.0
        %6441 = vmatpush1.xpose.msra.mxu0 0.0
        %6442 = vmatprep.subr.mxu0 0.0
        %6443 = vmatpush1.xpose.msra.mxu0 0.0
        %6444 = vmatprep.subr.mxu0 0.0
        %6445 = vmatpush1.xpose.msra.mxu0 0.0
        %6446 = vmatprep.subr.mxu0 0.0
        %6447 = vmatpush1.xpose.msra.mxu0 0.0
        %6448 = vmatprep.subr.mxu0 0.0
        %6449 = vmatpush1.xpose.msra.mxu0 0.0
        %6450 = vmatprep.subr.mxu0 0.0
        %6451 = vmatpush1.xpose.msra.mxu0 0.0
        %6452 = vmatprep.mubr.f32.mxu0 0.0
        %6453 = vmatmul.mubr.f32.gmra.mrb[0].mxu0 %v6365
        %v6454 = vpop.f32.mrb[0].mxu0
        %v6455 = vadd.f32 %v1899, %v6454
        %v6456 = vpop.f32.mrb[0].mxu0
        %6457 = vmatprep.mubr.f32.mxu0 0.0
        %6458 = vmatmul.mubr.f32.gmra.mrb[0].mxu0 %v6368
        %v6459 = vpop.f32.mrb[0].mxu0
        %v6460 = vadd.f32 %v1900, %v6459
        %v6461 = vpop.f32.mrb[0].mxu0
        %6462 = vmatprep.mubr.f32.mxu0 0.0
        %6463 = vmatmul.mubr.f32.gmra.mrb[0].mxu0 %v6371
        %v6464 = vpop.f32.mrb[0].mxu0
        %v6465 = vadd.f32 %v1901, %v6464
        %v6466 = vpop.f32.mrb[0].mxu0
        %6467 = vmatprep.mubr.f32.mxu0 0.0
        %6468 = vmatmul.mubr.f32.gmra.mrb[0].mxu0 %v6374
        %v6469 = vpop.f32.mrb[0].mxu0
        %v6470 = vadd.f32 %v1902, %v6469
        %v6471 = vpop.f32.mrb[0].mxu0
        %6472 = vdwg.mxu0
        %v6473 = vsel %vm2295, %v6455, -inf
        %6474 = vmax.xlane.f32.xlu0 %v6473
        %v6475 = vpop.xlane.xlu0 %6474
        %v6476 = vsel %vm2295, %v6460, -inf
        %6477 = vmax.xlane.f32.xlu0 %v6476
        %v6478 = vpop.xlane.xlu0 %6477
        %v6479 = vsel %vm2295, %v6465, -inf
        %6480 = vmax.xlane.f32.xlu0 %v6479
        %v6481 = vpop.xlane.xlu0 %6480
        %v6482 = vsel %vm2305, %v6470, -inf
        %6483 = vmax.xlane.f32.xlu0 %v6482
        %v6484 = vpop.xlane.xlu0 %6483
        %v6485 = vsub.f32 %v6455, %v6475
        %v6486 = vsub.f32 %v6460, %v6478
        %v6487 = vsub.f32 %v6465, %v6481
        %v6488 = vsub.f32 %v6470, %v6484
        %v6489 = vmul.f32 %v6485, 1.442695
        %v6490 = vpow.pop %v6489
        %v6491 = vmul.f32 %v6486, 1.442695
        %v6492 = vpow.pop %v6491
        %v6493 = vmul.f32 %v6487, 1.442695
        %v6494 = vpow.pop %v6493
        %v6495 = vmul.f32 %v6488, 1.442695
        %v6496 = vpow.pop %v6495
        %v6497 = vsel %vm2295, %v6490, 0.0
        %6498 = vadd.xlane.f32.xlu0 %v6497
        %v6499 = vpop.xlane.xlu0 %6498
        %v6500 = vsel %vm2295, %v6492, 0.0
        %6501 = vadd.xlane.f32.xlu0 %v6500
        %v6502 = vpop.xlane.xlu0 %6501
        %v6503 = vsel %vm2295, %v6494, 0.0
        %6504 = vadd.xlane.f32.xlu0 %v6503
        %v6505 = vpop.xlane.xlu0 %6504
        %v6506 = vsel %vm2305, %v6496, 0.0
        %6507 = vadd.xlane.f32.xlu0 %v6506
        %v6508 = vpop.xlane.xlu0 %6507
        %v6509 = vrcp.pop %v6499
        %v6510 = vrcp.pop %v6502
        %v6511 = vrcp.pop %v6505
        %v6512 = vrcp.pop %v6508
        %v6514 = vsel %vm2295, %v6490, 0
        %v6517 = vsel %vm2295, %v6492, 0
        %v6520 = vsel %vm2295, %v6494, 0
        %v6523 = vsel %vm2295, %v6496, 0
        %v6526 = vsel %vm2349, %v6361, 0
        %6528 = vmatprep.subr.mxu0 0.0
        %6529 = vmatpush1.msra.mxu0 %v6346
        %6530 = vmatprep.subr.mxu0 0.0
        %6531 = vmatpush1.msra.mxu0 %v6351
        %6532 = vmatprep.subr.mxu0 0.0
        %6533 = vmatpush1.msra.mxu0 %v6356
        %6534 = vmatprep.subr.mxu0 0.0
        %6535 = vmatpush1.msra.mxu0 %v6526
        %6536 = vmatprep.subr.mxu0 0.0
        %6537 = vmatpush1.msra.mxu0 0.0
        %6538 = vmatprep.subr.mxu0 0.0
        %6539 = vmatpush1.msra.mxu0 0.0
        %6540 = vmatprep.subr.mxu0 0.0
        %6541 = vmatpush1.msra.mxu0 0.0
        %6542 = vmatprep.subr.mxu0 0.0
        %6543 = vmatpush1.msra.mxu0 0.0
        %6544 = vmatprep.subr.mxu0 0.0
        %6545 = vmatpush1.msra.mxu0 0.0
        %6546 = vmatprep.subr.mxu0 0.0
        %6547 = vmatpush1.msra.mxu0 0.0
        %6548 = vmatprep.subr.mxu0 0.0
        %6549 = vmatpush1.msra.mxu0 0.0
        %6550 = vmatprep.subr.mxu0 0.0
        %6551 = vmatpush1.msra.mxu0 0.0
        %6552 = vmatprep.subr.mxu0 0.0
        %6553 = vmatpush1.msra.mxu0 0.0
        %6554 = vmatprep.subr.mxu0 0.0
        %6555 = vmatpush1.msra.mxu0 0.0
        %6556 = vmatprep.subr.mxu0 0.0
        %6557 = vmatpush1.msra.mxu0 0.0
        %6558 = vmatprep.subr.mxu0 0.0
        %6559 = vmatpush1.msra.mxu0 0.0
        %6560 = vmatprep.subr.mxu0 0.0
        %6561 = vmatpush1.msra.mxu0 0.0
        %6562 = vmatprep.subr.mxu0 0.0
        %6563 = vmatpush1.msra.mxu0 0.0
        %6564 = vmatprep.subr.mxu0 0.0
        %6565 = vmatpush1.msra.mxu0 0.0
        %6566 = vmatprep.subr.mxu0 0.0
        %6567 = vmatpush1.msra.mxu0 0.0
        %6568 = vmatprep.subr.mxu0 0.0
        %6569 = vmatpush1.msra.mxu0 0.0
        %6570 = vmatprep.subr.mxu0 0.0
        %6571 = vmatpush1.msra.mxu0 0.0
        %6572 = vmatprep.subr.mxu0 0.0
        %6573 = vmatpush1.msra.mxu0 0.0
        %6574 = vmatprep.subr.mxu0 0.0
        %6575 = vmatpush1.msra.mxu0 0.0
        %6576 = vmatprep.subr.mxu0 0.0
        %6577 = vmatpush1.msra.mxu0 0.0
        %6578 = vmatprep.subr.mxu0 0.0
        %6579 = vmatpush1.msra.mxu0 0.0
        %6580 = vmatprep.subr.mxu0 0.0
        %6581 = vmatpush1.msra.mxu0 0.0
        %6582 = vmatprep.subr.mxu0 0.0
        %6583 = vmatpush1.msra.mxu0 0.0
        %6584 = vmatprep.subr.mxu0 0.0
        %6585 = vmatpush1.msra.mxu0 0.0
        %6586 = vmatprep.subr.mxu0 0.0
        %6587 = vmatpush1.msra.mxu0 0.0
        %6588 = vmatprep.subr.mxu0 0.0
        %6589 = vmatpush1.msra.mxu0 0.0
        %6590 = vmatprep.subr.mxu0 0.0
        %6591 = vmatpush1.msra.mxu0 0.0
        %6592 = vmatprep.mubr.f32.mxu0 0.0
        %6593 = vmatmul.mubr.f32.gmra.mrb[0].mxu0 %v6514
        %v6594 = vpop.f32.mrb[0].mxu0
        %v6595 = vadd.f32 0.0, %v6594
        %v6596 = vpop.f32.mrb[0].mxu0
        %6597 = vmatprep.mubr.f32.mxu0 0.0
        %6598 = vmatmul.mubr.f32.gmra.mrb[0].mxu0 %v6517
        %v6599 = vpop.f32.mrb[0].mxu0
        %v6600 = vadd.f32 0.0, %v6599
        %v6601 = vpop.f32.mrb[0].mxu0
        %6602 = vmatprep.mubr.f32.mxu0 0.0
        %6603 = vmatmul.mubr.f32.gmra.mrb[0].mxu0 %v6520
        %v6604 = vpop.f32.mrb[0].mxu0
        %v6605 = vadd.f32 0.0, %v6604
        %v6606 = vpop.f32.mrb[0].mxu0
        %6607 = vmatprep.mubr.f32.mxu0 0.0
        %6608 = vmatmul.mubr.f32.gmra.mrb[0].mxu0 %v6523
        %v6609 = vpop.f32.mrb[0].mxu0
        %v6610 = vadd.f32 0.0, %v6609
        %v6611 = vpop.f32.mrb[0].mxu0
        %6612 = vdwg.mxu0
        %v6613 = vmul.f32 %v6595, %v6509
        %v6614 = vmul.f32 %v6600, %v6510
        %v6615 = vmul.f32 %v6605, %v6511
        %v6616 = vmul.f32 %v6610, %v6512
        %s6617 = scalar_lea.vmem %s45, 48
        %v6618 = vld [vmem:[%s6617] sm:$0xff]
        %v6620 = vsel %vm1317, %v6613, 0
        %v6623 = vsel %vm1317, %v6614, 0
        %v6626 = vsel %vm1317, %v6615, 0
        %v6629 = vsel %vm1317, %v6616, 0
        %6631 = vmatprep.subr.mxu0 0.0
        %6632 = vmatpush1.msra.mxu0 %v6618
        %6633 = vmatprep.subr.mxu0 0.0
        %6634 = vmatpush1.msra.mxu0 0.0
        %6635 = vmatprep.subr.mxu0 0.0
        %6636 = vmatpush1.msra.mxu0 0.0
        %6637 = vmatprep.subr.mxu0 0.0
        %6638 = vmatpush1.msra.mxu0 0.0
        %6639 = vmatprep.subr.mxu0 0.0
        %6640 = vmatpush1.msra.mxu0 0.0
        %6641 = vmatprep.subr.mxu0 0.0
        %6642 = vmatpush1.msra.mxu0 0.0
        %6643 = vmatprep.subr.mxu0 0.0
        %6644 = vmatpush1.msra.mxu0 0.0
        %6645 = vmatprep.subr.mxu0 0.0
        %6646 = vmatpush1.msra.mxu0 0.0
        %6647 = vmatprep.subr.mxu0 0.0
        %6648 = vmatpush1.msra.mxu0 0.0
        %6649 = vmatprep.subr.mxu0 0.0
        %6650 = vmatpush1.msra.mxu0 0.0
        %6651 = vmatprep.subr.mxu0 0.0
        %6652 = vmatpush1.msra.mxu0 0.0
        %6653 = vmatprep.subr.mxu0 0.0
        %6654 = vmatpush1.msra.mxu0 0.0
        %6655 = vmatprep.subr.mxu0 0.0
        %6656 = vmatpush1.msra.mxu0 0.0
        %6657 = vmatprep.subr.mxu0 0.0
        %6658 = vmatpush1.msra.mxu0 0.0
        %6659 = vmatprep.subr.mxu0 0.0
        %6660 = vmatpush1.msra.mxu0 0.0
        %6661 = vmatprep.subr.mxu0 0.0
        %6662 = vmatpush1.msra.mxu0 0.0
        %6663 = vmatprep.subr.mxu0 0.0
        %6664 = vmatpush1.msra.mxu0 0.0
        %6665 = vmatprep.subr.mxu0 0.0
        %6666 = vmatpush1.msra.mxu0 0.0
        %6667 = vmatprep.subr.mxu0 0.0
        %6668 = vmatpush1.msra.mxu0 0.0
        %6669 = vmatprep.subr.mxu0 0.0
        %6670 = vmatpush1.msra.mxu0 0.0
        %6671 = vmatprep.subr.mxu0 0.0
        %6672 = vmatpush1.msra.mxu0 0.0
        %6673 = vmatprep.subr.mxu0 0.0
        %6674 = vmatpush1.msra.mxu0 0.0
        %6675 = vmatprep.subr.mxu0 0.0
        %6676 = vmatpush1.msra.mxu0 0.0
        %6677 = vmatprep.subr.mxu0 0.0
        %6678 = vmatpush1.msra.mxu0 0.0
        %6679 = vmatprep.subr.mxu0 0.0
        %6680 = vmatpush1.msra.mxu0 0.0
        %6681 = vmatprep.subr.mxu0 0.0
        %6682 = vmatpush1.msra.mxu0 0.0
        %6683 = vmatprep.subr.mxu0 0.0
        %6684 = vmatpush1.msra.mxu0 0.0
        %6685 = vmatprep.subr.mxu0 0.0
        %6686 = vmatpush1.msra.mxu0 0.0
        %6687 = vmatprep.subr.mxu0 0.0
        %6688 = vmatpush1.msra.mxu0 0.0
        %6689 = vmatprep.subr.mxu0 0.0
        %6690 = vmatpush1.msra.mxu0 0.0
        %6691 = vmatprep.subr.mxu0 0.0
        %6692 = vmatpush1.msra.mxu0 0.0
        %6693 = vmatprep.subr.mxu0 0.0
        %6694 = vmatpush1.msra.mxu0 0.0
        %6695 = vmatprep.mubr.f32.mxu0 0.0
        %6696 = vmatmul.mubr.f32.gmra.mrb[0].mxu0 %v6620
        %v6697 = vpop.f32.mrb[0].mxu0
        %v6698 = vadd.f32 0.0, %v6697
        %v6699 = vpop.f32.mrb[0].mxu0
        %6700 = vmatprep.mubr.f32.mxu0 0.0
        %6701 = vmatmul.mubr.f32.gmra.mrb[0].mxu0 %v6623
        %v6702 = vpop.f32.mrb[0].mxu0
        %v6703 = vadd.f32 0.0, %v6702
        %v6704 = vpop.f32.mrb[0].mxu0
        %6705 = vmatprep.mubr.f32.mxu0 0.0
        %6706 = vmatmul.mubr.f32.gmra.mrb[0].mxu0 %v6626
        %v6707 = vpop.f32.mrb[0].mxu0
        %v6708 = vadd.f32 0.0, %v6707
        %v6709 = vpop.f32.mrb[0].mxu0
        %6710 = vmatprep.mubr.f32.mxu0 0.0
        %6711 = vmatmul.mubr.f32.gmra.mrb[0].mxu0 %v6629
        %v6712 = vpop.f32.mrb[0].mxu0
        %v6713 = vadd.f32 0.0, %v6712
        %v6714 = vpop.f32.mrb[0].mxu0
        %6715 = vdwg.mxu0
        %v6716 = vadd.f32 %v6076, %v6698
        %v6717 = vadd.f32 %v6081, %v6703
        %v6718 = vadd.f32 %v6086, %v6708
        %v6719 = vadd.f32 %v6091, %v6713
        %s6720 = scalar_lea.vmem %s39, 224
        %v6721 = vld [vmem:[%s6720] sm:$0xff]
        %v6722 = vld [vmem:[%s6720 + $0x8] sm:$0xff]
        %v6723 = vld [vmem:[%s6720 + $0x10] sm:$0xff]
        %v6724 = vld [vmem:[%s6720 + $0x18] sm:$0xff]
        %6725 = vmatprep.subr.mxu0 0.0
        %6726 = vmatpush1.msra.mxu0 %v6721
        %6727 = vmatprep.subr.mxu0 0.0
        %6728 = vmatpush1.msra.mxu0 %v6722
        %6729 = vmatprep.subr.mxu0 0.0
        %6730 = vmatpush1.msra.mxu0 %v6723
        %6731 = vmatprep.subr.mxu0 0.0
        %6732 = vmatpush1.msra.mxu0 %v6724
        %6733 = vmatprep.subr.mxu0 0.0
        %6734 = vmatpush1.msra.mxu0 0.0
        %6735 = vmatprep.subr.mxu0 0.0
        %6736 = vmatpush1.msra.mxu0 0.0
        %6737 = vmatprep.subr.mxu0 0.0
        %6738 = vmatpush1.msra.mxu0 0.0
        %6739 = vmatprep.subr.mxu0 0.0
        %6740 = vmatpush1.msra.mxu0 0.0
        %6741 = vmatprep.subr.mxu0 0.0
        %6742 = vmatpush1.msra.mxu0 0.0
        %6743 = vmatprep.subr.mxu0 0.0
        %6744 = vmatpush1.msra.mxu0 0.0
        %6745 = vmatprep.subr.mxu0 0.0
        %6746 = vmatpush1.msra.mxu0 0.0
        %6747 = vmatprep.subr.mxu0 0.0
        %6748 = vmatpush1.msra.mxu0 0.0
        %6749 = vmatprep.subr.mxu0 0.0
        %6750 = vmatpush1.msra.mxu0 0.0
        %6751 = vmatprep.subr.mxu0 0.0
        %6752 = vmatpush1.msra.mxu0 0.0
        %6753 = vmatprep.subr.mxu0 0.0
        %6754 = vmatpush1.msra.mxu0 0.0
        %6755 = vmatprep.subr.mxu0 0.0
        %6756 = vmatpush1.msra.mxu0 0.0
        %6757 = vmatprep.subr.mxu0 0.0
        %6758 = vmatpush1.msra.mxu0 0.0
        %6759 = vmatprep.subr.mxu0 0.0
        %6760 = vmatpush1.msra.mxu0 0.0
        %6761 = vmatprep.subr.mxu0 0.0
        %6762 = vmatpush1.msra.mxu0 0.0
        %6763 = vmatprep.subr.mxu0 0.0
        %6764 = vmatpush1.msra.mxu0 0.0
        %6765 = vmatprep.subr.mxu0 0.0
        %6766 = vmatpush1.msra.mxu0 0.0
        %6767 = vmatprep.subr.mxu0 0.0
        %6768 = vmatpush1.msra.mxu0 0.0
        %6769 = vmatprep.subr.mxu0 0.0
        %6770 = vmatpush1.msra.mxu0 0.0
        %6771 = vmatprep.subr.mxu0 0.0
        %6772 = vmatpush1.msra.mxu0 0.0
        %6773 = vmatprep.subr.mxu0 0.0
        %6774 = vmatpush1.msra.mxu0 0.0
        %6775 = vmatprep.subr.mxu0 0.0
        %6776 = vmatpush1.msra.mxu0 0.0
        %6777 = vmatprep.subr.mxu0 0.0
        %6778 = vmatpush1.msra.mxu0 0.0
        %6779 = vmatprep.subr.mxu0 0.0
        %6780 = vmatpush1.msra.mxu0 0.0
        %6781 = vmatprep.subr.mxu0 0.0
        %6782 = vmatpush1.msra.mxu0 0.0
        %6783 = vmatprep.subr.mxu0 0.0
        %6784 = vmatpush1.msra.mxu0 0.0
        %6785 = vmatprep.subr.mxu0 0.0
        %6786 = vmatpush1.msra.mxu0 0.0
        %6787 = vmatprep.subr.mxu0 0.0
        %6788 = vmatpush1.msra.mxu0 0.0
        %6789 = vmatprep.mubr.f32.mxu0 0.0
        %6790 = vmatmul.mubr.f32.gmra.mrb[0].mxu0 %v4844
        %v6791 = vpop.f32.mrb[0].mxu0
        %v6792 = vadd.f32 0.0, %v6791
        %v6793 = vpop.f32.mrb[0].mxu0
        %6794 = vmatprep.mubr.f32.mxu0 0.0
        %6795 = vmatmul.mubr.f32.gmra.mrb[0].mxu0 %v4847
        %v6796 = vpop.f32.mrb[0].mxu0
        %v6797 = vadd.f32 0.0, %v6796
        %v6798 = vpop.f32.mrb[0].mxu0
        %6799 = vmatprep.mubr.f32.mxu0 0.0
        %6800 = vmatmul.mubr.f32.gmra.mrb[0].mxu0 %v4850
        %v6801 = vpop.f32.mrb[0].mxu0
        %v6802 = vadd.f32 0.0, %v6801
        %v6803 = vpop.f32.mrb[0].mxu0
        %6804 = vmatprep.mubr.f32.mxu0 0.0
        %6805 = vmatmul.mubr.f32.gmra.mrb[0].mxu0 %v4853
        %v6806 = vpop.f32.mrb[0].mxu0
        %v6807 = vadd.f32 0.0, %v6806
        %v6808 = vpop.f32.mrb[0].mxu0
        %6809 = vdwg.mxu0
        %s6810 = scalar_lea.vmem %s41, 224
        %v6811 = vld [vmem:[%s6810] sm:$0xff]
        %v6812 = vld [vmem:[%s6810 + $0x8] sm:$0xff]
        %v6813 = vld [vmem:[%s6810 + $0x10] sm:$0xff]
        %v6814 = vld [vmem:[%s6810 + $0x18] sm:$0xff]
        %6815 = vmatprep.subr.mxu0 0.0
        %6816 = vmatpush1.msra.mxu0 %v6811
        %6817 = vmatprep.subr.mxu0 0.0
        %6818 = vmatpush1.msra.mxu0 %v6812
        %6819 = vmatprep.subr.mxu0 0.0
        %6820 = vmatpush1.msra.mxu0 %v6813
        %6821 = vmatprep.subr.mxu0 0.0
        %6822 = vmatpush1.msra.mxu0 %v6814
        %6823 = vmatprep.subr.mxu0 0.0
        %6824 = vmatpush1.msra.mxu0 0.0
        %6825 = vmatprep.subr.mxu0 0.0
        %6826 = vmatpush1.msra.mxu0 0.0
        %6827 = vmatprep.subr.mxu0 0.0
        %6828 = vmatpush1.msra.mxu0 0.0
        %6829 = vmatprep.subr.mxu0 0.0
        %6830 = vmatpush1.msra.mxu0 0.0
        %6831 = vmatprep.subr.mxu0 0.0
        %6832 = vmatpush1.msra.mxu0 0.0
        %6833 = vmatprep.subr.mxu0 0.0
        %6834 = vmatpush1.msra.mxu0 0.0
        %6835 = vmatprep.subr.mxu0 0.0
        %6836 = vmatpush1.msra.mxu0 0.0
        %6837 = vmatprep.subr.mxu0 0.0
        %6838 = vmatpush1.msra.mxu0 0.0
        %6839 = vmatprep.subr.mxu0 0.0
        %6840 = vmatpush1.msra.mxu0 0.0
        %6841 = vmatprep.subr.mxu0 0.0
        %6842 = vmatpush1.msra.mxu0 0.0
        %6843 = vmatprep.subr.mxu0 0.0
        %6844 = vmatpush1.msra.mxu0 0.0
        %6845 = vmatprep.subr.mxu0 0.0
        %6846 = vmatpush1.msra.mxu0 0.0
        %6847 = vmatprep.subr.mxu0 0.0
        %6848 = vmatpush1.msra.mxu0 0.0
        %6849 = vmatprep.subr.mxu0 0.0
        %6850 = vmatpush1.msra.mxu0 0.0
        %6851 = vmatprep.subr.mxu0 0.0
        %6852 = vmatpush1.msra.mxu0 0.0
        %6853 = vmatprep.subr.mxu0 0.0
        %6854 = vmatpush1.msra.mxu0 0.0
        %6855 = vmatprep.subr.mxu0 0.0
        %6856 = vmatpush1.msra.mxu0 0.0
        %6857 = vmatprep.subr.mxu0 0.0
        %6858 = vmatpush1.msra.mxu0 0.0
        %6859 = vmatprep.subr.mxu0 0.0
        %6860 = vmatpush1.msra.mxu0 0.0
        %6861 = vmatprep.subr.mxu0 0.0
        %6862 = vmatpush1.msra.mxu0 0.0
        %6863 = vmatprep.subr.mxu0 0.0
        %6864 = vmatpush1.msra.mxu0 0.0
        %6865 = vmatprep.subr.mxu0 0.0
        %6866 = vmatpush1.msra.mxu0 0.0
        %6867 = vmatprep.subr.mxu0 0.0
        %6868 = vmatpush1.msra.mxu0 0.0
        %6869 = vmatprep.subr.mxu0 0.0
        %6870 = vmatpush1.msra.mxu0 0.0
        %6871 = vmatprep.subr.mxu0 0.0
        %6872 = vmatpush1.msra.mxu0 0.0
        %6873 = vmatprep.subr.mxu0 0.0
        %6874 = vmatpush1.msra.mxu0 0.0
        %6875 = vmatprep.subr.mxu0 0.0
        %6876 = vmatpush1.msra.mxu0 0.0
        %6877 = vmatprep.subr.mxu0 0.0
        %6878 = vmatpush1.msra.mxu0 0.0
        %6879 = vmatprep.mubr.f32.mxu0 0.0
        %6880 = vmatmul.mubr.f32.gmra.mrb[0].mxu0 %v4844
        %v6881 = vpop.f32.mrb[0].mxu0
        %v6882 = vadd.f32 0.0, %v6881
        %v6883 = vpop.f32.mrb[0].mxu0
        %6884 = vmatprep.mubr.f32.mxu0 0.0
        %6885 = vmatmul.mubr.f32.gmra.mrb[0].mxu0 %v4847
        %v6886 = vpop.f32.mrb[0].mxu0
        %v6887 = vadd.f32 0.0, %v6886
        %v6888 = vpop.f32.mrb[0].mxu0
        %6889 = vmatprep.mubr.f32.mxu0 0.0
        %6890 = vmatmul.mubr.f32.gmra.mrb[0].mxu0 %v4850
        %v6891 = vpop.f32.mrb[0].mxu0
        %v6892 = vadd.f32 0.0, %v6891
        %v6893 = vpop.f32.mrb[0].mxu0
        %6894 = vmatprep.mubr.f32.mxu0 0.0
        %6895 = vmatmul.mubr.f32.gmra.mrb[0].mxu0 %v4853
        %v6896 = vpop.f32.mrb[0].mxu0
        %v6897 = vadd.f32 0.0, %v6896
        %v6898 = vpop.f32.mrb[0].mxu0
        %6899 = vdwg.mxu0
        %s6900 = scalar_lea.vmem %s43, 224
        %v6901 = vld [vmem:[%s6900] sm:$0xff]
        %v6902 = vld [vmem:[%s6900 + $0x8] sm:$0xff]
        %v6903 = vld [vmem:[%s6900 + $0x10] sm:$0xff]
        %v6904 = vld [vmem:[%s6900 + $0x18] sm:$0xff]
        %6905 = vmatprep.subr.mxu0 0.0
        %6906 = vmatpush1.msra.mxu0 %v6901
        %6907 = vmatprep.subr.mxu0 0.0
        %6908 = vmatpush1.msra.mxu0 %v6902
        %6909 = vmatprep.subr.mxu0 0.0
        %6910 = vmatpush1.msra.mxu0 %v6903
        %6911 = vmatprep.subr.mxu0 0.0
        %6912 = vmatpush1.msra.mxu0 %v6904
        %6913 = vmatprep.subr.mxu0 0.0
        %6914 = vmatpush1.msra.mxu0 0.0
        %6915 = vmatprep.subr.mxu0 0.0
        %6916 = vmatpush1.msra.mxu0 0.0
        %6917 = vmatprep.subr.mxu0 0.0
        %6918 = vmatpush1.msra.mxu0 0.0
        %6919 = vmatprep.subr.mxu0 0.0
        %6920 = vmatpush1.msra.mxu0 0.0
        %6921 = vmatprep.subr.mxu0 0.0
        %6922 = vmatpush1.msra.mxu0 0.0
        %6923 = vmatprep.subr.mxu0 0.0
        %6924 = vmatpush1.msra.mxu0 0.0
        %6925 = vmatprep.subr.mxu0 0.0
        %6926 = vmatpush1.msra.mxu0 0.0
        %6927 = vmatprep.subr.mxu0 0.0
        %6928 = vmatpush1.msra.mxu0 0.0
        %6929 = vmatprep.subr.mxu0 0.0
        %6930 = vmatpush1.msra.mxu0 0.0
        %6931 = vmatprep.subr.mxu0 0.0
        %6932 = vmatpush1.msra.mxu0 0.0
        %6933 = vmatprep.subr.mxu0 0.0
        %6934 = vmatpush1.msra.mxu0 0.0
        %6935 = vmatprep.subr.mxu0 0.0
        %6936 = vmatpush1.msra.mxu0 0.0
        %6937 = vmatprep.subr.mxu0 0.0
        %6938 = vmatpush1.msra.mxu0 0.0
        %6939 = vmatprep.subr.mxu0 0.0
        %6940 = vmatpush1.msra.mxu0 0.0
        %6941 = vmatprep.subr.mxu0 0.0
        %6942 = vmatpush1.msra.mxu0 0.0
        %6943 = vmatprep.subr.mxu0 0.0
        %6944 = vmatpush1.msra.mxu0 0.0
        %6945 = vmatprep.subr.mxu0 0.0
        %6946 = vmatpush1.msra.mxu0 0.0
        %6947 = vmatprep.subr.mxu0 0.0
        %6948 = vmatpush1.msra.mxu0 0.0
        %6949 = vmatprep.subr.mxu0 0.0
        %6950 = vmatpush1.msra.mxu0 0.0
        %6951 = vmatprep.subr.mxu0 0.0
        %6952 = vmatpush1.msra.mxu0 0.0
        %6953 = vmatprep.subr.mxu0 0.0
        %6954 = vmatpush1.msra.mxu0 0.0
        %6955 = vmatprep.subr.mxu0 0.0
        %6956 = vmatpush1.msra.mxu0 0.0
        %6957 = vmatprep.subr.mxu0 0.0
        %6958 = vmatpush1.msra.mxu0 0.0
        %6959 = vmatprep.subr.mxu0 0.0
        %6960 = vmatpush1.msra.mxu0 0.0
        %6961 = vmatprep.subr.mxu0 0.0
        %6962 = vmatpush1.msra.mxu0 0.0
        %6963 = vmatprep.subr.mxu0 0.0
        %6964 = vmatpush1.msra.mxu0 0.0
        %6965 = vmatprep.subr.mxu0 0.0
        %6966 = vmatpush1.msra.mxu0 0.0
        %6967 = vmatprep.subr.mxu0 0.0
        %6968 = vmatpush1.msra.mxu0 0.0
        %6969 = vmatprep.mubr.f32.mxu0 0.0
        %6970 = vmatmul.mubr.f32.gmra.mrb[0].mxu0 %v4844
        %v6971 = vpop.f32.mrb[0].mxu0
        %v6972 = vadd.f32 0.0, %v6971
        %v6973 = vpop.f32.mrb[0].mxu0
        %6974 = vmatprep.mubr.f32.mxu0 0.0
        %6975 = vmatmul.mubr.f32.gmra.mrb[0].mxu0 %v4847
        %v6976 = vpop.f32.mrb[0].mxu0
        %v6977 = vadd.f32 0.0, %v6976
        %v6978 = vpop.f32.mrb[0].mxu0
        %6979 = vmatprep.mubr.f32.mxu0 0.0
        %6980 = vmatmul.mubr.f32.gmra.mrb[0].mxu0 %v4850
        %v6981 = vpop.f32.mrb[0].mxu0
        %v6982 = vadd.f32 0.0, %v6981
        %v6983 = vpop.f32.mrb[0].mxu0
        %6984 = vmatprep.mubr.f32.mxu0 0.0
        %6985 = vmatmul.mubr.f32.gmra.mrb[0].mxu0 %v4853
        %v6986 = vpop.f32.mrb[0].mxu0
        %v6987 = vadd.f32 0.0, %v6986
        %v6988 = vpop.f32.mrb[0].mxu0
        %6989 = vdwg.mxu0
        %v6991 = vsel %vm1317, %v6792, 0
        %v6994 = vsel %vm1317, %v6797, 0
        %v6997 = vsel %vm1317, %v6802, 0
        %v7000 = vsel %vm1317, %v6807, 0
        %v7003 = vsel %vm1317, %v6882, 0
        %v7006 = vsel %vm1317, %v6887, 0
        %v7009 = vsel %vm1317, %v6892, 0
        %v7012 = vsel %vm1317, %v6897, 0
        %7014 = vmatprep.subr.mxu0 0.0
        %7015 = vmatpush1.xpose.msra.mxu0 %v7003
        %7016 = vmatprep.subr.mxu0 0.0
        %7017 = vmatpush1.xpose.msra.mxu0 %v7006
        %7018 = vmatprep.subr.mxu0 0.0
        %7019 = vmatpush1.xpose.msra.mxu0 %v7009
        %7020 = vmatprep.subr.mxu0 0.0
        %7021 = vmatpush1.xpose.msra.mxu0 %v7012
        %7022 = vmatprep.subr.mxu0 0.0
        %7023 = vmatpush1.xpose.msra.mxu0 0.0
        %7024 = vmatprep.subr.mxu0 0.0
        %7025 = vmatpush1.xpose.msra.mxu0 0.0
        %7026 = vmatprep.subr.mxu0 0.0
        %7027 = vmatpush1.xpose.msra.mxu0 0.0
        %7028 = vmatprep.subr.mxu0 0.0
        %7029 = vmatpush1.xpose.msra.mxu0 0.0
        %7030 = vmatprep.subr.mxu0 0.0
        %7031 = vmatpush1.xpose.msra.mxu0 0.0
        %7032 = vmatprep.subr.mxu0 0.0
        %7033 = vmatpush1.xpose.msra.mxu0 0.0
        %7034 = vmatprep.subr.mxu0 0.0
        %7035 = vmatpush1.xpose.msra.mxu0 0.0
        %7036 = vmatprep.subr.mxu0 0.0
        %7037 = vmatpush1.xpose.msra.mxu0 0.0
        %7038 = vmatprep.subr.mxu0 0.0
        %7039 = vmatpush1.xpose.msra.mxu0 0.0
        %7040 = vmatprep.subr.mxu0 0.0
        %7041 = vmatpush1.xpose.msra.mxu0 0.0
        %7042 = vmatprep.subr.mxu0 0.0
        %7043 = vmatpush1.xpose.msra.mxu0 0.0
        %7044 = vmatprep.subr.mxu0 0.0
        %7045 = vmatpush1.xpose.msra.mxu0 0.0
        %7046 = vmatprep.subr.mxu0 0.0
        %7047 = vmatpush1.xpose.msra.mxu0 0.0
        %7048 = vmatprep.subr.mxu0 0.0
        %7049 = vmatpush1.xpose.msra.mxu0 0.0
        %7050 = vmatprep.subr.mxu0 0.0
        %7051 = vmatpush1.xpose.msra.mxu0 0.0
        %7052 = vmatprep.subr.mxu0 0.0
        %7053 = vmatpush1.xpose.msra.mxu0 0.0
        %7054 = vmatprep.subr.mxu0 0.0
        %7055 = vmatpush1.xpose.msra.mxu0 0.0
        %7056 = vmatprep.subr.mxu0 0.0
        %7057 = vmatpush1.xpose.msra.mxu0 0.0
        %7058 = vmatprep.subr.mxu0 0.0
        %7059 = vmatpush1.xpose.msra.mxu0 0.0
        %7060 = vmatprep.subr.mxu0 0.0
        %7061 = vmatpush1.xpose.msra.mxu0 0.0
        %7062 = vmatprep.subr.mxu0 0.0
        %7063 = vmatpush1.xpose.msra.mxu0 0.0
        %7064 = vmatprep.subr.mxu0 0.0
        %7065 = vmatpush1.xpose.msra.mxu0 0.0
        %7066 = vmatprep.subr.mxu0 0.0
        %7067 = vmatpush1.xpose.msra.mxu0 0.0
        %7068 = vmatprep.subr.mxu0 0.0
        %7069 = vmatpush1.xpose.msra.mxu0 0.0
        %7070 = vmatprep.subr.mxu0 0.0
        %7071 = vmatpush1.xpose.msra.mxu0 0.0
        %7072 = vmatprep.subr.mxu0 0.0
        %7073 = vmatpush1.xpose.msra.mxu0 0.0
        %7074 = vmatprep.subr.mxu0 0.0
        %7075 = vmatpush1.xpose.msra.mxu0 0.0
        %7076 = vmatprep.subr.mxu0 0.0
        %7077 = vmatpush1.xpose.msra.mxu0 0.0
        %7078 = vmatprep.mubr.f32.mxu0 0.0
        %7079 = vmatmul.mubr.f32.gmra.mrb[0].mxu0 %v6991
        %v7080 = vpop.f32.mrb[0].mxu0
        %v7081 = vadd.f32 %v1899, %v7080
        %v7082 = vpop.f32.mrb[0].mxu0
        %7083 = vmatprep.mubr.f32.mxu0 0.0
        %7084 = vmatmul.mubr.f32.gmra.mrb[0].mxu0 %v6994
        %v7085 = vpop.f32.mrb[0].mxu0
        %v7086 = vadd.f32 %v1900, %v7085
        %v7087 = vpop.f32.mrb[0].mxu0
        %7088 = vmatprep.mubr.f32.mxu0 0.0
        %7089 = vmatmul.mubr.f32.gmra.mrb[0].mxu0 %v6997
        %v7090 = vpop.f32.mrb[0].mxu0
        %v7091 = vadd.f32 %v1901, %v7090
        %v7092 = vpop.f32.mrb[0].mxu0
        %7093 = vmatprep.mubr.f32.mxu0 0.0
        %7094 = vmatmul.mubr.f32.gmra.mrb[0].mxu0 %v7000
        %v7095 = vpop.f32.mrb[0].mxu0
        %v7096 = vadd.f32 %v1902, %v7095
        %v7097 = vpop.f32.mrb[0].mxu0
        %7098 = vdwg.mxu0
        %v7099 = vsel %vm2295, %v7081, -inf
        %7100 = vmax.xlane.f32.xlu0 %v7099
        %v7101 = vpop.xlane.xlu0 %7100
        %v7102 = vsel %vm2295, %v7086, -inf
        %7103 = vmax.xlane.f32.xlu0 %v7102
        %v7104 = vpop.xlane.xlu0 %7103
        %v7105 = vsel %vm2295, %v7091, -inf
        %7106 = vmax.xlane.f32.xlu0 %v7105
        %v7107 = vpop.xlane.xlu0 %7106
        %v7108 = vsel %vm2305, %v7096, -inf
        %7109 = vmax.xlane.f32.xlu0 %v7108
        %v7110 = vpop.xlane.xlu0 %7109
        %v7111 = vsub.f32 %v7081, %v7101
        %v7112 = vsub.f32 %v7086, %v7104
        %v7113 = vsub.f32 %v7091, %v7107
        %v7114 = vsub.f32 %v7096, %v7110
        %v7115 = vmul.f32 %v7111, 1.442695
        %v7116 = vpow.pop %v7115
        %v7117 = vmul.f32 %v7112, 1.442695
        %v7118 = vpow.pop %v7117
        %v7119 = vmul.f32 %v7113, 1.442695
        %v7120 = vpow.pop %v7119
        %v7121 = vmul.f32 %v7114, 1.442695
        %v7122 = vpow.pop %v7121
        %v7123 = vsel %vm2295, %v7116, 0.0
        %7124 = vadd.xlane.f32.xlu0 %v7123
        %v7125 = vpop.xlane.xlu0 %7124
        %v7126 = vsel %vm2295, %v7118, 0.0
        %7127 = vadd.xlane.f32.xlu0 %v7126
        %v7128 = vpop.xlane.xlu0 %7127
        %v7129 = vsel %vm2295, %v7120, 0.0
        %7130 = vadd.xlane.f32.xlu0 %v7129
        %v7131 = vpop.xlane.xlu0 %7130
        %v7132 = vsel %vm2305, %v7122, 0.0
        %7133 = vadd.xlane.f32.xlu0 %v7132
        %v7134 = vpop.xlane.xlu0 %7133
        %v7135 = vrcp.pop %v7125
        %v7136 = vrcp.pop %v7128
        %v7137 = vrcp.pop %v7131
        %v7138 = vrcp.pop %v7134
        %v7140 = vsel %vm2295, %v7116, 0
        %v7143 = vsel %vm2295, %v7118, 0
        %v7146 = vsel %vm2295, %v7120, 0
        %v7149 = vsel %vm2295, %v7122, 0
        %v7152 = vsel %vm2349, %v6987, 0
        %7154 = vmatprep.subr.mxu0 0.0
        %7155 = vmatpush1.msra.mxu0 %v6972
        %7156 = vmatprep.subr.mxu0 0.0
        %7157 = vmatpush1.msra.mxu0 %v6977
        %7158 = vmatprep.subr.mxu0 0.0
        %7159 = vmatpush1.msra.mxu0 %v6982
        %7160 = vmatprep.subr.mxu0 0.0
        %7161 = vmatpush1.msra.mxu0 %v7152
        %7162 = vmatprep.subr.mxu0 0.0
        %7163 = vmatpush1.msra.mxu0 0.0
        %7164 = vmatprep.subr.mxu0 0.0
        %7165 = vmatpush1.msra.mxu0 0.0
        %7166 = vmatprep.subr.mxu0 0.0
        %7167 = vmatpush1.msra.mxu0 0.0
        %7168 = vmatprep.subr.mxu0 0.0
        %7169 = vmatpush1.msra.mxu0 0.0
        %7170 = vmatprep.subr.mxu0 0.0
        %7171 = vmatpush1.msra.mxu0 0.0
        %7172 = vmatprep.subr.mxu0 0.0
        %7173 = vmatpush1.msra.mxu0 0.0
        %7174 = vmatprep.subr.mxu0 0.0
        %7175 = vmatpush1.msra.mxu0 0.0
        %7176 = vmatprep.subr.mxu0 0.0
        %7177 = vmatpush1.msra.mxu0 0.0
        %7178 = vmatprep.subr.mxu0 0.0
        %7179 = vmatpush1.msra.mxu0 0.0
        %7180 = vmatprep.subr.mxu0 0.0
        %7181 = vmatpush1.msra.mxu0 0.0
        %7182 = vmatprep.subr.mxu0 0.0
        %7183 = vmatpush1.msra.mxu0 0.0
        %7184 = vmatprep.subr.mxu0 0.0
        %7185 = vmatpush1.msra.mxu0 0.0
        %7186 = vmatprep.subr.mxu0 0.0
        %7187 = vmatpush1.msra.mxu0 0.0
        %7188 = vmatprep.subr.mxu0 0.0
        %7189 = vmatpush1.msra.mxu0 0.0
        %7190 = vmatprep.subr.mxu0 0.0
        %7191 = vmatpush1.msra.mxu0 0.0
        %7192 = vmatprep.subr.mxu0 0.0
        %7193 = vmatpush1.msra.mxu0 0.0
        %7194 = vmatprep.subr.mxu0 0.0
        %7195 = vmatpush1.msra.mxu0 0.0
        %7196 = vmatprep.subr.mxu0 0.0
        %7197 = vmatpush1.msra.mxu0 0.0
        %7198 = vmatprep.subr.mxu0 0.0
        %7199 = vmatpush1.msra.mxu0 0.0
        %7200 = vmatprep.subr.mxu0 0.0
        %7201 = vmatpush1.msra.mxu0 0.0
        %7202 = vmatprep.subr.mxu0 0.0
        %7203 = vmatpush1.msra.mxu0 0.0
        %7204 = vmatprep.subr.mxu0 0.0
        %7205 = vmatpush1.msra.mxu0 0.0
        %7206 = vmatprep.subr.mxu0 0.0
        %7207 = vmatpush1.msra.mxu0 0.0
        %7208 = vmatprep.subr.mxu0 0.0
        %7209 = vmatpush1.msra.mxu0 0.0
        %7210 = vmatprep.subr.mxu0 0.0
        %7211 = vmatpush1.msra.mxu0 0.0
        %7212 = vmatprep.subr.mxu0 0.0
        %7213 = vmatpush1.msra.mxu0 0.0
        %7214 = vmatprep.subr.mxu0 0.0
        %7215 = vmatpush1.msra.mxu0 0.0
        %7216 = vmatprep.subr.mxu0 0.0
        %7217 = vmatpush1.msra.mxu0 0.0
        %7218 = vmatprep.mubr.f32.mxu0 0.0
        %7219 = vmatmul.mubr.f32.gmra.mrb[0].mxu0 %v7140
        %v7220 = vpop.f32.mrb[0].mxu0
        %v7221 = vadd.f32 0.0, %v7220
        %v7222 = vpop.f32.mrb[0].mxu0
        %7223 = vmatprep.mubr.f32.mxu0 0.0
        %7224 = vmatmul.mubr.f32.gmra.mrb[0].mxu0 %v7143
        %v7225 = vpop.f32.mrb[0].mxu0
        %v7226 = vadd.f32 0.0, %v7225
        %v7227 = vpop.f32.mrb[0].mxu0
        %7228 = vmatprep.mubr.f32.mxu0 0.0
        %7229 = vmatmul.mubr.f32.gmra.mrb[0].mxu0 %v7146
        %v7230 = vpop.f32.mrb[0].mxu0
        %v7231 = vadd.f32 0.0, %v7230
        %v7232 = vpop.f32.mrb[0].mxu0
        %7233 = vmatprep.mubr.f32.mxu0 0.0
        %7234 = vmatmul.mubr.f32.gmra.mrb[0].mxu0 %v7149
        %v7235 = vpop.f32.mrb[0].mxu0
        %v7236 = vadd.f32 0.0, %v7235
        %v7237 = vpop.f32.mrb[0].mxu0
        %7238 = vdwg.mxu0
        %v7239 = vmul.f32 %v7221, %v7135
        %v7240 = vmul.f32 %v7226, %v7136
        %v7241 = vmul.f32 %v7231, %v7137
        %v7242 = vmul.f32 %v7236, %v7138
        %s7243 = scalar_lea.vmem %s45, 56
        %v7244 = vld [vmem:[%s7243] sm:$0xff]
        %v7246 = vsel %vm1317, %v7239, 0
        %v7249 = vsel %vm1317, %v7240, 0
        %v7252 = vsel %vm1317, %v7241, 0
        %v7255 = vsel %vm1317, %v7242, 0
        %7257 = vmatprep.subr.mxu0 0.0
        %7258 = vmatpush1.msra.mxu0 %v7244
        %7259 = vmatprep.subr.mxu0 0.0
        %7260 = vmatpush1.msra.mxu0 0.0
        %7261 = vmatprep.subr.mxu0 0.0
        %7262 = vmatpush1.msra.mxu0 0.0
        %7263 = vmatprep.subr.mxu0 0.0
        %7264 = vmatpush1.msra.mxu0 0.0
        %7265 = vmatprep.subr.mxu0 0.0
        %7266 = vmatpush1.msra.mxu0 0.0
        %7267 = vmatprep.subr.mxu0 0.0
        %7268 = vmatpush1.msra.mxu0 0.0
        %7269 = vmatprep.subr.mxu0 0.0
        %7270 = vmatpush1.msra.mxu0 0.0
        %7271 = vmatprep.subr.mxu0 0.0
        %7272 = vmatpush1.msra.mxu0 0.0
        %7273 = vmatprep.subr.mxu0 0.0
        %7274 = vmatpush1.msra.mxu0 0.0
        %7275 = vmatprep.subr.mxu0 0.0
        %7276 = vmatpush1.msra.mxu0 0.0
        %7277 = vmatprep.subr.mxu0 0.0
        %7278 = vmatpush1.msra.mxu0 0.0
        %7279 = vmatprep.subr.mxu0 0.0
        %7280 = vmatpush1.msra.mxu0 0.0
        %7281 = vmatprep.subr.mxu0 0.0
        %7282 = vmatpush1.msra.mxu0 0.0
        %7283 = vmatprep.subr.mxu0 0.0
        %7284 = vmatpush1.msra.mxu0 0.0
        %7285 = vmatprep.subr.mxu0 0.0
        %7286 = vmatpush1.msra.mxu0 0.0
        %7287 = vmatprep.subr.mxu0 0.0
        %7288 = vmatpush1.msra.mxu0 0.0
        %7289 = vmatprep.subr.mxu0 0.0
        %7290 = vmatpush1.msra.mxu0 0.0
        %7291 = vmatprep.subr.mxu0 0.0
        %7292 = vmatpush1.msra.mxu0 0.0
        %7293 = vmatprep.subr.mxu0 0.0
        %7294 = vmatpush1.msra.mxu0 0.0
        %7295 = vmatprep.subr.mxu0 0.0
        %7296 = vmatpush1.msra.mxu0 0.0
        %7297 = vmatprep.subr.mxu0 0.0
        %7298 = vmatpush1.msra.mxu0 0.0
        %7299 = vmatprep.subr.mxu0 0.0
        %7300 = vmatpush1.msra.mxu0 0.0
        %7301 = vmatprep.subr.mxu0 0.0
        %7302 = vmatpush1.msra.mxu0 0.0
        %7303 = vmatprep.subr.mxu0 0.0
        %7304 = vmatpush1.msra.mxu0 0.0
        %7305 = vmatprep.subr.mxu0 0.0
        %7306 = vmatpush1.msra.mxu0 0.0
        %7307 = vmatprep.subr.mxu0 0.0
        %7308 = vmatpush1.msra.mxu0 0.0
        %7309 = vmatprep.subr.mxu0 0.0
        %7310 = vmatpush1.msra.mxu0 0.0
        %7311 = vmatprep.subr.mxu0 0.0
        %7312 = vmatpush1.msra.mxu0 0.0
        %7313 = vmatprep.subr.mxu0 0.0
        %7314 = vmatpush1.msra.mxu0 0.0
        %7315 = vmatprep.subr.mxu0 0.0
        %7316 = vmatpush1.msra.mxu0 0.0
        %7317 = vmatprep.subr.mxu0 0.0
        %7318 = vmatpush1.msra.mxu0 0.0
        %7319 = vmatprep.subr.mxu0 0.0
        %7320 = vmatpush1.msra.mxu0 0.0
        %7321 = vmatprep.mubr.f32.mxu0 0.0
        %7322 = vmatmul.mubr.f32.gmra.mrb[0].mxu0 %v7246
        %v7323 = vpop.f32.mrb[0].mxu0
        %v7324 = vadd.f32 0.0, %v7323
        %v7325 = vpop.f32.mrb[0].mxu0
        %7326 = vmatprep.mubr.f32.mxu0 0.0
        %7327 = vmatmul.mubr.f32.gmra.mrb[0].mxu0 %v7249
        %v7328 = vpop.f32.mrb[0].mxu0
        %v7329 = vadd.f32 0.0, %v7328
        %v7330 = vpop.f32.mrb[0].mxu0
        %7331 = vmatprep.mubr.f32.mxu0 0.0
        %7332 = vmatmul.mubr.f32.gmra.mrb[0].mxu0 %v7252
        %v7333 = vpop.f32.mrb[0].mxu0
        %v7334 = vadd.f32 0.0, %v7333
        %v7335 = vpop.f32.mrb[0].mxu0
        %7336 = vmatprep.mubr.f32.mxu0 0.0
        %7337 = vmatmul.mubr.f32.gmra.mrb[0].mxu0 %v7255
        %v7338 = vpop.f32.mrb[0].mxu0
        %v7339 = vadd.f32 0.0, %v7338
        %v7340 = vpop.f32.mrb[0].mxu0
        %7341 = vdwg.mxu0
        %v7342 = vadd.f32 %v6716, %v7324
        %v7343 = vadd.f32 %v6717, %v7329
        %v7344 = vadd.f32 %v6718, %v7334
        %v7345 = vadd.f32 %v6719, %v7339
        %s7346 = scalar_lea.vmem %s47, 1
        %v7347 = vld [vmem:[%s7346] sm:$0x1]
        %v7349 = vlaneseq
        %v7350 = vshrl.u32 %v7349, 7
        %v7351 = vsub.s32 0, %v7350
        %v7352 = vrot.slane %v7347, %v7351
        %v7354 = vadd.f32 %v7342, %v7352
        %v7355 = vadd.f32 %v7343, %v7352
        %v7356 = vadd.f32 %v7344, %v7352
        %v7357 = vadd.f32 %v7345, %v7352
        %v7358 = vadd.f32 %v7354, %v4834
        %v7359 = vadd.f32 %v7355, %v4835
        %v7360 = vadd.f32 %v7356, %v4836
        %v7361 = vadd.f32 %v7357, %v4837
        %s7362 = scalar_lea.vmem %s49, 1
        %v7363 = vld [vmem:[%s7362] sm:$0x1]
        %s7364 = scalar_lea.vmem %s51, 1
        %v7365 = vld [vmem:[%s7364] sm:$0x1]
        %v7366 = vsel %vm1179, %v7358, 0.0
        %7367 = vadd.xlane.f32.xlu0 %v7366
        %v7368 = vpop.xlane.xlu0 %7367
        %v7369 = vsel %vm1179, %v7359, 0.0
        %7370 = vadd.xlane.f32.xlu0 %v7369
        %v7371 = vpop.xlane.xlu0 %7370
        %v7372 = vsel %vm1179, %v7360, 0.0
        %7373 = vadd.xlane.f32.xlu0 %v7372
        %v7374 = vpop.xlane.xlu0 %7373
        %v7375 = vsel %vm1880, %v7361, 0.0
        %7376 = vadd.xlane.f32.xlu0 %v7375
        %v7377 = vpop.xlane.xlu0 %7376
        %v7378 = vmul.f32 %v7368, %v1186
        %v7379 = vmul.f32 %v7371, %v1186
        %v7380 = vmul.f32 %v7374, %v1186
        %v7381 = vmul.f32 %v7377, %v1186
        %v7382 = vsub.f32 %v7358, %v7378
        %v7383 = vsub.f32 %v7359, %v7379
        %v7384 = vsub.f32 %v7360, %v7380
        %v7385 = vsub.f32 %v7361, %v7381
        %v7386 = vmul.f32 %v7382, %v7382
        %v7387 = vmul.f32 %v7383, %v7383
        %v7388 = vmul.f32 %v7384, %v7384
        %v7389 = vmul.f32 %v7385, %v7385
        %v7390 = vsel %vm1179, %v7386, 0.0
        %7391 = vadd.xlane.f32.xlu0 %v7390
        %v7392 = vpop.xlane.xlu0 %7391
        %v7393 = vsel %vm1179, %v7387, 0.0
        %7394 = vadd.xlane.f32.xlu0 %v7393
        %v7395 = vpop.xlane.xlu0 %7394
        %v7396 = vsel %vm1179, %v7388, 0.0
        %7397 = vadd.xlane.f32.xlu0 %v7396
        %v7398 = vpop.xlane.xlu0 %7397
        %v7399 = vsel %vm1880, %v7389, 0.0
        %7400 = vadd.xlane.f32.xlu0 %v7399
        %v7401 = vpop.xlane.xlu0 %7400
        %v7402 = vmul.f32 %v7392, %v1186
        %v7403 = vmul.f32 %v7395, %v1186
        %v7404 = vmul.f32 %v7398, %v1186
        %v7405 = vmul.f32 %v7401, %v1186
        %v7406 = vadd.f32 %v7402, 1e-06
        %v7407 = vadd.f32 %v7403, 1e-06
        %v7408 = vadd.f32 %v7404, 1e-06
        %v7409 = vadd.f32 %v7405, 1e-06
        %v7410 = vrsqrt.pop %v7406
        %v7411 = vrsqrt.pop %v7407
        %v7412 = vrsqrt.pop %v7408
        %v7413 = vrsqrt.pop %v7409
        %v7414 = vmul.f32 %v7382, %v7410
        %v7415 = vmul.f32 %v7383, %v7411
        %v7416 = vmul.f32 %v7384, %v7412
        %v7417 = vmul.f32 %v7385, %v7413
        %v7419 = vlaneseq
        %v7420 = vshrl.u32 %v7419, 7
        %v7421 = vsub.s32 0, %v7420
        %v7422 = vrot.slane %v7363, %v7421
        %v7424 = vmul.f32 %v7414, %v7422
        %v7425 = vmul.f32 %v7415, %v7422
        %v7426 = vmul.f32 %v7416, %v7422
        %v7427 = vmul.f32 %v7417, %v7422
        %v7429 = vlaneseq
        %v7430 = vshrl.u32 %v7429, 7
        %v7431 = vsub.s32 0, %v7430
        %v7432 = vrot.slane %v7365, %v7431
        %v7434 = vadd.f32 %v7424, %v7432
        %v7435 = vadd.f32 %v7425, %v7432
        %v7436 = vadd.f32 %v7426, %v7432
        %v7437 = vadd.f32 %v7427, %v7432
        %s7438 = scalar_lea.vmem %s53, 32
        %v7439 = vld [vmem:[%s7438] sm:$0xff]
        %v7440 = vld [vmem:[%s7438 + $0x8] sm:$0xff]
        %v7441 = vld [vmem:[%s7438 + $0x10] sm:$0xff]
        %v7442 = vld [vmem:[%s7438 + $0x18] sm:$0xff]
        %s7443 = scalar_lea.vmem %s55, 1
        %v7444 = vld [vmem:[%s7443] sm:$0x1]
        %v7446 = vlaneseq
        %v7447 = vshrl.u32 %v7446, 7
        %v7448 = vsub.s32 0, %v7447
        %v7449 = vrot.slane %v7444, %v7448
        %v7452 = vsel %vm1179, %v7434, 0
        %v7455 = vsel %vm1179, %v7435, 0
        %v7458 = vsel %vm1179, %v7436, 0
        %v7461 = vsel %vm1179, %v7437, 0
        %7463 = vmatprep.subr.mxu0 0.0
        %7464 = vmatpush1.msra.mxu0 %v7439
        %7465 = vmatprep.subr.mxu0 0.0
        %7466 = vmatpush1.msra.mxu0 %v7440
        %7467 = vmatprep.subr.mxu0 0.0
        %7468 = vmatpush1.msra.mxu0 %v7441
        %7469 = vmatprep.subr.mxu0 0.0
        %7470 = vmatpush1.msra.mxu0 %v7442
        %7471 = vmatprep.subr.mxu0 0.0
        %7472 = vmatpush1.msra.mxu0 0.0
        %7473 = vmatprep.subr.mxu0 0.0
        %7474 = vmatpush1.msra.mxu0 0.0
        %7475 = vmatprep.subr.mxu0 0.0
        %7476 = vmatpush1.msra.mxu0 0.0
        %7477 = vmatprep.subr.mxu0 0.0
        %7478 = vmatpush1.msra.mxu0 0.0
        %7479 = vmatprep.subr.mxu0 0.0
        %7480 = vmatpush1.msra.mxu0 0.0
        %7481 = vmatprep.subr.mxu0 0.0
        %7482 = vmatpush1.msra.mxu0 0.0
        %7483 = vmatprep.subr.mxu0 0.0
        %7484 = vmatpush1.msra.mxu0 0.0
        %7485 = vmatprep.subr.mxu0 0.0
        %7486 = vmatpush1.msra.mxu0 0.0
        %7487 = vmatprep.subr.mxu0 0.0
        %7488 = vmatpush1.msra.mxu0 0.0
        %7489 = vmatprep.subr.mxu0 0.0
        %7490 = vmatpush1.msra.mxu0 0.0
        %7491 = vmatprep.subr.mxu0 0.0
        %7492 = vmatpush1.msra.mxu0 0.0
        %7493 = vmatprep.subr.mxu0 0.0
        %7494 = vmatpush1.msra.mxu0 0.0
        %7495 = vmatprep.subr.mxu0 0.0
        %7496 = vmatpush1.msra.mxu0 0.0
        %7497 = vmatprep.subr.mxu0 0.0
        %7498 = vmatpush1.msra.mxu0 0.0
        %7499 = vmatprep.subr.mxu0 0.0
        %7500 = vmatpush1.msra.mxu0 0.0
        %7501 = vmatprep.subr.mxu0 0.0
        %7502 = vmatpush1.msra.mxu0 0.0
        %7503 = vmatprep.subr.mxu0 0.0
        %7504 = vmatpush1.msra.mxu0 0.0
        %7505 = vmatprep.subr.mxu0 0.0
        %7506 = vmatpush1.msra.mxu0 0.0
        %7507 = vmatprep.subr.mxu0 0.0
        %7508 = vmatpush1.msra.mxu0 0.0
        %7509 = vmatprep.subr.mxu0 0.0
        %7510 = vmatpush1.msra.mxu0 0.0
        %7511 = vmatprep.subr.mxu0 0.0
        %7512 = vmatpush1.msra.mxu0 0.0
        %7513 = vmatprep.subr.mxu0 0.0
        %7514 = vmatpush1.msra.mxu0 0.0
        %7515 = vmatprep.subr.mxu0 0.0
        %7516 = vmatpush1.msra.mxu0 0.0
        %7517 = vmatprep.subr.mxu0 0.0
        %7518 = vmatpush1.msra.mxu0 0.0
        %7519 = vmatprep.subr.mxu0 0.0
        %7520 = vmatpush1.msra.mxu0 0.0
        %7521 = vmatprep.subr.mxu0 0.0
        %7522 = vmatpush1.msra.mxu0 0.0
        %7523 = vmatprep.subr.mxu0 0.0
        %7524 = vmatpush1.msra.mxu0 0.0
        %7525 = vmatprep.subr.mxu0 0.0
        %7526 = vmatpush1.msra.mxu0 0.0
        %7527 = vmatprep.mubr.f32.mxu0 0.0
        %7528 = vmatmul.mubr.f32.gmra.mrb[0].mxu0 %v7452
        %v7529 = vpop.f32.mrb[0].mxu0
        %v7530 = vadd.f32 %v7449, %v7529
        %v7531 = vpop.f32.mrb[0].mxu0
        %7532 = vmatprep.mubr.f32.mxu0 0.0
        %7533 = vmatmul.mubr.f32.gmra.mrb[0].mxu0 %v7455
        %v7534 = vpop.f32.mrb[0].mxu0
        %v7535 = vadd.f32 %v7449, %v7534
        %v7536 = vpop.f32.mrb[0].mxu0
        %7537 = vmatprep.mubr.f32.mxu0 0.0
        %7538 = vmatmul.mubr.f32.gmra.mrb[0].mxu0 %v7458
        %v7539 = vpop.f32.mrb[0].mxu0
        %v7540 = vadd.f32 %v7449, %v7539
        %v7541 = vpop.f32.mrb[0].mxu0
        %7542 = vmatprep.mubr.f32.mxu0 0.0
        %7543 = vmatmul.mubr.f32.gmra.mrb[0].mxu0 %v7461
        %v7544 = vpop.f32.mrb[0].mxu0
        %v7545 = vadd.f32 %v7449, %v7544
        %v7546 = vpop.f32.mrb[0].mxu0
        %7547 = vdwg.mxu0
        %v7548 = vmul.f32 %v7530, 0.5
        %v7549 = vmul.f32 %v7535, 0.5
        %v7550 = vmul.f32 %v7540, 0.5
        %v7551 = vmul.f32 %v7545, 0.5
        %v7552 = vmul.f32 %v7530, 0.044715
        %v7553 = vmul.f32 %v7535, 0.044715
        %v7554 = vmul.f32 %v7540, 0.044715
        %v7555 = vmul.f32 %v7545, 0.044715
        %v7556 = vmul.f32 %v7552, %v7530
        %v7557 = vmul.f32 %v7553, %v7535
        %v7558 = vmul.f32 %v7554, %v7540
        %v7559 = vmul.f32 %v7555, %v7545
        %v7560 = vmul.f32 %v7556, %v7530
        %v7561 = vmul.f32 %v7557, %v7535
        %v7562 = vmul.f32 %v7558, %v7540
        %v7563 = vmul.f32 %v7559, %v7545
        %v7564 = vadd.f32 %v7530, %v7560
        %v7565 = vadd.f32 %v7535, %v7561
        %v7566 = vadd.f32 %v7540, %v7562
        %v7567 = vadd.f32 %v7545, %v7563
        %v7568 = vmul.f32 %v7564, 0.7978846
        %v7569 = vmul.f32 %v7565, 0.7978846
        %v7570 = vmul.f32 %v7566, 0.7978846
        %v7571 = vmul.f32 %v7567, 0.7978846
        %v7572 = vtanh.pop %v7568
        %v7573 = vtanh.pop %v7569
        %v7574 = vtanh.pop %v7570
        %v7575 = vtanh.pop %v7571
        %v7576 = vadd.f32 %v7572, 1.0
        %v7577 = vadd.f32 %v7573, 1.0
        %v7578 = vadd.f32 %v7574, 1.0
        %v7579 = vadd.f32 %v7575, 1.0
        %v7580 = vmul.f32 %v7548, %v7576
        %v7581 = vmul.f32 %v7549, %v7577
        %v7582 = vmul.f32 %v7550, %v7578
        %v7583 = vmul.f32 %v7551, %v7579
        %s7584 = scalar_lea.vmem %s57, 64
        %v7585 = vld [vmem:[%s7584] sm:$0xff]
        %v7586 = vld [vmem:[%s7584 + $0x8] sm:$0xff]
        %v7587 = vld [vmem:[%s7584 + $0x10] sm:$0xff]
        %v7588 = vld [vmem:[%s7584 + $0x18] sm:$0xff]
        %v7589 = vld [vmem:[%s7584 + $0x20] sm:$0xff]
        %v7590 = vld [vmem:[%s7584 + $0x28] sm:$0xff]
        %v7591 = vld [vmem:[%s7584 + $0x30] sm:$0xff]
        %v7592 = vld [vmem:[%s7584 + $0x38] sm:$0xff]
        %s7593 = scalar_lea.vmem %s59, 1
        %v7594 = vld [vmem:[%s7593] sm:$0x1]
        %v7596 = vlaneseq
        %v7597 = vshrl.u32 %v7596, 7
        %v7598 = vsub.s32 0, %v7597
        %v7599 = vrot.slane %v7594, %v7598
        %v7602 = vsel %vm4662, %v7580, 0
        %v7605 = vsel %vm4662, %v7581, 0
        %v7608 = vsel %vm4662, %v7582, 0
        %v7611 = vsel %vm4662, %v7583, 0
        %7613 = vmatprep.subr.mxu0 0.0
        %7614 = vmatpush1.msra.mxu0 %v7585
        %7615 = vmatprep.subr.mxu0 0.0
        %7616 = vmatpush1.msra.mxu0 %v7586
        %7617 = vmatprep.subr.mxu0 0.0
        %7618 = vmatpush1.msra.mxu0 %v7587
        %7619 = vmatprep.subr.mxu0 0.0
        %7620 = vmatpush1.msra.mxu0 %v7588
        %7621 = vmatprep.subr.mxu0 0.0
        %7622 = vmatpush1.msra.mxu0 %v7589
        %7623 = vmatprep.subr.mxu0 0.0
        %7624 = vmatpush1.msra.mxu0 %v7590
        %7625 = vmatprep.subr.mxu0 0.0
        %7626 = vmatpush1.msra.mxu0 %v7591
        %7627 = vmatprep.subr.mxu0 0.0
        %7628 = vmatpush1.msra.mxu0 %v7592
        %7629 = vmatprep.subr.mxu0 0.0
        %7630 = vmatpush1.msra.mxu0 0.0
        %7631 = vmatprep.subr.mxu0 0.0
        %7632 = vmatpush1.msra.mxu0 0.0
        %7633 = vmatprep.subr.mxu0 0.0
        %7634 = vmatpush1.msra.mxu0 0.0
        %7635 = vmatprep.subr.mxu0 0.0
        %7636 = vmatpush1.msra.mxu0 0.0
        %7637 = vmatprep.subr.mxu0 0.0
        %7638 = vmatpush1.msra.mxu0 0.0
        %7639 = vmatprep.subr.mxu0 0.0
        %7640 = vmatpush1.msra.mxu0 0.0
        %7641 = vmatprep.subr.mxu0 0.0
        %7642 = vmatpush1.msra.mxu0 0.0
        %7643 = vmatprep.subr.mxu0 0.0
        %7644 = vmatpush1.msra.mxu0 0.0
        %7645 = vmatprep.subr.mxu0 0.0
        %7646 = vmatpush1.msra.mxu0 0.0
        %7647 = vmatprep.subr.mxu0 0.0
        %7648 = vmatpush1.msra.mxu0 0.0
        %7649 = vmatprep.subr.mxu0 0.0
        %7650 = vmatpush1.msra.mxu0 0.0
        %7651 = vmatprep.subr.mxu0 0.0
        %7652 = vmatpush1.msra.mxu0 0.0
        %7653 = vmatprep.subr.mxu0 0.0
        %7654 = vmatpush1.msra.mxu0 0.0
        %7655 = vmatprep.subr.mxu0 0.0
        %7656 = vmatpush1.msra.mxu0 0.0
        %7657 = vmatprep.subr.mxu0 0.0
        %7658 = vmatpush1.msra.mxu0 0.0
        %7659 = vmatprep.subr.mxu0 0.0
        %7660 = vmatpush1.msra.mxu0 0.0
        %7661 = vmatprep.subr.mxu0 0.0
        %7662 = vmatpush1.msra.mxu0 0.0
        %7663 = vmatprep.subr.mxu0 0.0
        %7664 = vmatpush1.msra.mxu0 0.0
        %7665 = vmatprep.subr.mxu0 0.0
        %7666 = vmatpush1.msra.mxu0 0.0
        %7667 = vmatprep.subr.mxu0 0.0
        %7668 = vmatpush1.msra.mxu0 0.0
        %7669 = vmatprep.subr.mxu0 0.0
        %7670 = vmatpush1.msra.mxu0 0.0
        %7671 = vmatprep.subr.mxu0 0.0
        %7672 = vmatpush1.msra.mxu0 0.0
        %7673 = vmatprep.subr.mxu0 0.0
        %7674 = vmatpush1.msra.mxu0 0.0
        %7675 = vmatprep.subr.mxu0 0.0
        %7676 = vmatpush1.msra.mxu0 0.0
        %7677 = vmatprep.mubr.f32.mxu0 0.0
        %7678 = vmatmul.mubr.f32.gmra.mrb[0].mxu0 %v7602
        %v7679 = vpop.f32.mrb[0].mxu0
        %v7680 = vadd.f32 %v7599, %v7679
        %v7681 = vpop.f32.mrb[0].mxu0
        %7682 = vmatprep.mubr.f32.mxu0 0.0
        %7683 = vmatmul.mubr.f32.gmra.mrb[0].mxu0 %v7605
        %v7684 = vpop.f32.mrb[0].mxu0
        %v7685 = vadd.f32 %v7599, %v7684
        %v7686 = vpop.f32.mrb[0].mxu0
        %7687 = vmatprep.mubr.f32.mxu0 0.0
        %7688 = vmatmul.mubr.f32.gmra.mrb[0].mxu0 %v7608
        %v7689 = vpop.f32.mrb[0].mxu0
        %v7690 = vadd.f32 %v7599, %v7689
        %v7691 = vpop.f32.mrb[0].mxu0
        %7692 = vmatprep.mubr.f32.mxu0 0.0
        %7693 = vmatmul.mubr.f32.gmra.mrb[0].mxu0 %v7611
        %v7694 = vpop.f32.mrb[0].mxu0
        %v7695 = vadd.f32 %v7599, %v7694
        %v7696 = vpop.f32.mrb[0].mxu0
        %7697 = vdwg.mxu0
        %v7698 = vadd.f32 %v7680, %v7434
        %v7699 = vadd.f32 %v7685, %v7435
        %v7700 = vadd.f32 %v7690, %v7436
        %v7701 = vadd.f32 %v7695, %v7437
        %s7702 = scalar_lea.vmem %s61, 1
        %v7703 = vld [vmem:[%s7702] sm:$0x1]
        %s7704 = scalar_lea.vmem %s63, 1
        %v7705 = vld [vmem:[%s7704] sm:$0x1]
        %v7706 = vsel %vm1179, %v7698, 0.0
        %7707 = vadd.xlane.f32.xlu0 %v7706
        %v7708 = vpop.xlane.xlu0 %7707
        %v7709 = vsel %vm1179, %v7699, 0.0
        %7710 = vadd.xlane.f32.xlu0 %v7709
        %v7711 = vpop.xlane.xlu0 %7710
        %v7712 = vsel %vm1179, %v7700, 0.0
        %7713 = vadd.xlane.f32.xlu0 %v7712
        %v7714 = vpop.xlane.xlu0 %7713
        %v7715 = vsel %vm1880, %v7701, 0.0
        %7716 = vadd.xlane.f32.xlu0 %v7715
        %v7717 = vpop.xlane.xlu0 %7716
        %v7718 = vmul.f32 %v7708, %v1186
        %v7719 = vmul.f32 %v7711, %v1186
        %v7720 = vmul.f32 %v7714, %v1186
        %v7721 = vmul.f32 %v7717, %v1186
        %v7722 = vsub.f32 %v7698, %v7718
        %v7723 = vsub.f32 %v7699, %v7719
        %v7724 = vsub.f32 %v7700, %v7720
        %v7725 = vsub.f32 %v7701, %v7721
        %v7726 = vmul.f32 %v7722, %v7722
        %v7727 = vmul.f32 %v7723, %v7723
        %v7728 = vmul.f32 %v7724, %v7724
        %v7729 = vmul.f32 %v7725, %v7725
        %v7730 = vsel %vm1179, %v7726, 0.0
        %7731 = vadd.xlane.f32.xlu0 %v7730
        %v7732 = vpop.xlane.xlu0 %7731
        %v7733 = vsel %vm1179, %v7727, 0.0
        %7734 = vadd.xlane.f32.xlu0 %v7733
        %v7735 = vpop.xlane.xlu0 %7734
        %v7736 = vsel %vm1179, %v7728, 0.0
        %7737 = vadd.xlane.f32.xlu0 %v7736
        %v7738 = vpop.xlane.xlu0 %7737
        %v7739 = vsel %vm1880, %v7729, 0.0
        %7740 = vadd.xlane.f32.xlu0 %v7739
        %v7741 = vpop.xlane.xlu0 %7740
        %v7742 = vmul.f32 %v7732, %v1186
        %v7743 = vmul.f32 %v7735, %v1186
        %v7744 = vmul.f32 %v7738, %v1186
        %v7745 = vmul.f32 %v7741, %v1186
        %v7746 = vadd.f32 %v7742, 1e-06
        %v7747 = vadd.f32 %v7743, 1e-06
        %v7748 = vadd.f32 %v7744, 1e-06
        %v7749 = vadd.f32 %v7745, 1e-06
        %v7750 = vrsqrt.pop %v7746
        %v7751 = vrsqrt.pop %v7747
        %v7752 = vrsqrt.pop %v7748
        %v7753 = vrsqrt.pop %v7749
        %v7754 = vmul.f32 %v7722, %v7750
        %v7755 = vmul.f32 %v7723, %v7751
        %v7756 = vmul.f32 %v7724, %v7752
        %v7757 = vmul.f32 %v7725, %v7753
        %v7759 = vlaneseq
        %v7760 = vshrl.u32 %v7759, 7
        %v7761 = vsub.s32 0, %v7760
        %v7762 = vrot.slane %v7703, %v7761
        %v7764 = vmul.f32 %v7754, %v7762
        %v7765 = vmul.f32 %v7755, %v7762
        %v7766 = vmul.f32 %v7756, %v7762
        %v7767 = vmul.f32 %v7757, %v7762
        %v7769 = vlaneseq
        %v7770 = vshrl.u32 %v7769, 7
        %v7771 = vsub.s32 0, %v7770
        %v7772 = vrot.slane %v7705, %v7771
        %v7774 = vadd.f32 %v7764, %v7772
        %v7775 = vadd.f32 %v7765, %v7772
        %v7776 = vadd.f32 %v7766, %v7772
        %v7777 = vadd.f32 %v7767, %v7772
        %7778 = vst.msk [vmem:[%s979] sm:$0xff] %vm1179, %v7774
        %7779 = vst.msk [vmem:[%s979 + $0x8] sm:$0xff] %vm1179, %v7775
        %v7780 = vld [vmem:[%s37] sm:$0xff]
        %v7781 = vld [vmem:[%s37 + $0x8] sm:$0xff]
        %v7783 = vsel %vm2295, %v7780, 0
        %v7786 = vsel %vm2295, %v7781, 0
        %v7789 = vsel %vm2349, %v7777, 0
        %7791 = vmatprep.subr.mxu0 0.0
        %7792 = vmatpush1.msra.mxu0 %v7774
        %7793 = vmatprep.subr.mxu0 0.0
        %7794 = vmatpush1.msra.mxu0 %v7775
        %7795 = vmatprep.subr.mxu0 0.0
        %7796 = vmatpush1.msra.mxu0 %v7776
        %7797 = vmatprep.subr.mxu0 0.0
        %7798 = vmatpush1.msra.mxu0 %v7789
        %7799 = vmatprep.subr.mxu0 0.0
        %7800 = vmatpush1.msra.mxu0 0.0
        %7801 = vmatprep.subr.mxu0 0.0
        %7802 = vmatpush1.msra.mxu0 0.0
        %7803 = vmatprep.subr.mxu0 0.0
        %7804 = vmatpush1.msra.mxu0 0.0
        %7805 = vmatprep.subr.mxu0 0.0
        %7806 = vmatpush1.msra.mxu0 0.0
        %7807 = vmatprep.subr.mxu0 0.0
        %7808 = vmatpush1.msra.mxu0 0.0
        %7809 = vmatprep.subr.mxu0 0.0
        %7810 = vmatpush1.msra.mxu0 0.0
        %7811 = vmatprep.subr.mxu0 0.0
        %7812 = vmatpush1.msra.mxu0 0.0
        %7813 = vmatprep.subr.mxu0 0.0
        %7814 = vmatpush1.msra.mxu0 0.0
        %7815 = vmatprep.subr.mxu0 0.0
        %7816 = vmatpush1.msra.mxu0 0.0
        %7817 = vmatprep.subr.mxu0 0.0
        %7818 = vmatpush1.msra.mxu0 0.0
        %7819 = vmatprep.subr.mxu0 0.0
        %7820 = vmatpush1.msra.mxu0 0.0
        %7821 = vmatprep.subr.mxu0 0.0
        %7822 = vmatpush1.msra.mxu0 0.0
        %7823 = vmatprep.subr.mxu0 0.0
        %7824 = vmatpush1.msra.mxu0 0.0
        %7825 = vmatprep.subr.mxu0 0.0
        %7826 = vmatpush1.msra.mxu0 0.0
        %7827 = vmatprep.subr.mxu0 0.0
        %7828 = vmatpush1.msra.mxu0 0.0
        %7829 = vmatprep.subr.mxu0 0.0
        %7830 = vmatpush1.msra.mxu0 0.0
        %7831 = vmatprep.subr.mxu0 0.0
        %7832 = vmatpush1.msra.mxu0 0.0
        %7833 = vmatprep.subr.mxu0 0.0
        %7834 = vmatpush1.msra.mxu0 0.0
        %7835 = vmatprep.subr.mxu0 0.0
        %7836 = vmatpush1.msra.mxu0 0.0
        %7837 = vmatprep.subr.mxu0 0.0
        %7838 = vmatpush1.msra.mxu0 0.0
        %7839 = vmatprep.subr.mxu0 0.0
        %7840 = vmatpush1.msra.mxu0 0.0
        %7841 = vmatprep.subr.mxu0 0.0
        %7842 = vmatpush1.msra.mxu0 0.0
        %7843 = vmatprep.subr.mxu0 0.0
        %7844 = vmatpush1.msra.mxu0 0.0
        %7845 = vmatprep.subr.mxu0 0.0
        %7846 = vmatpush1.msra.mxu0 0.0
        %7847 = vmatprep.subr.mxu0 0.0
        %7848 = vmatpush1.msra.mxu0 0.0
        %7849 = vmatprep.subr.mxu0 0.0
        %7850 = vmatpush1.msra.mxu0 0.0
        %7851 = vmatprep.subr.mxu0 0.0
        %7852 = vmatpush1.msra.mxu0 0.0
        %7853 = vmatprep.subr.mxu0 0.0
        %7854 = vmatpush1.msra.mxu0 0.0
        %7855 = vmatprep.mubr.f32.mxu0 0.0
        %7856 = vmatmul.mubr.f32.gmra.mrb[0].mxu0 %v7783
        %v7857 = vpop.f32.mrb[0].mxu0
        %v7858 = vadd.f32 0.0, %v7857
        %v7859 = vpop.f32.mrb[0].mxu0
        %7860 = vmatprep.mubr.f32.mxu0 0.0
        %7861 = vmatmul.mubr.f32.gmra.mrb[0].mxu0 %v7786
        %v7862 = vpop.f32.mrb[0].mxu0
        %v7863 = vadd.f32 0.0, %v7862
        %v7864 = vpop.f32.mrb[0].mxu0
        %7865 = vdwg.mxu0
        %7868 = vrot.lane.b32.xlu0 %v7858, 32
        %v7869 = vpop.permute.xlu0 %7868
        %7870 = vrot.lane.b32.xlu0 %v7863, 32
        %v7871 = vpop.permute.xlu0 %7870
        %vm7874 = vcmask 523520
        %7875 = vst.msk [vmem:[%s979] sm:$0xff] %vm7874, %v7869
        %7876 = vst.msk [vmem:[%s979 + $0x8] sm:$0xff] %vm7874, %v7871
        %s7877 = scalar_lea.vmem %s37, 16
        %v7878 = vld [vmem:[%s7877] sm:$0xff]
        %v7879 = vld [vmem:[%s7877 + $0x8] sm:$0xff]
        %v7881 = vsel %vm2295, %v7878, 0
        %v7884 = vsel %vm2295, %v7879, 0
        %7886 = vmatprep.subr.mxu0 0.0
        %7887 = vmatpush1.msra.mxu0 %v7774
        %7888 = vmatprep.subr.mxu0 0.0
        %7889 = vmatpush1.msra.mxu0 %v7775
        %7890 = vmatprep.subr.mxu0 0.0
        %7891 = vmatpush1.msra.mxu0 %v7776
        %7892 = vmatprep.subr.mxu0 0.0
        %7893 = vmatpush1.msra.mxu0 %v7789
        %7894 = vmatprep.subr.mxu0 0.0
        %7895 = vmatpush1.msra.mxu0 0.0
        %7896 = vmatprep.subr.mxu0 0.0
        %7897 = vmatpush1.msra.mxu0 0.0
        %7898 = vmatprep.subr.mxu0 0.0
        %7899 = vmatpush1.msra.mxu0 0.0
        %7900 = vmatprep.subr.mxu0 0.0
        %7901 = vmatpush1.msra.mxu0 0.0
        %7902 = vmatprep.subr.mxu0 0.0
        %7903 = vmatpush1.msra.mxu0 0.0
        %7904 = vmatprep.subr.mxu0 0.0
        %7905 = vmatpush1.msra.mxu0 0.0
        %7906 = vmatprep.subr.mxu0 0.0
        %7907 = vmatpush1.msra.mxu0 0.0
        %7908 = vmatprep.subr.mxu0 0.0
        %7909 = vmatpush1.msra.mxu0 0.0
        %7910 = vmatprep.subr.mxu0 0.0
        %7911 = vmatpush1.msra.mxu0 0.0
        %7912 = vmatprep.subr.mxu0 0.0
        %7913 = vmatpush1.msra.mxu0 0.0
        %7914 = vmatprep.subr.mxu0 0.0
        %7915 = vmatpush1.msra.mxu0 0.0
        %7916 = vmatprep.subr.mxu0 0.0
        %7917 = vmatpush1.msra.mxu0 0.0
        %7918 = vmatprep.subr.mxu0 0.0
        %7919 = vmatpush1.msra.mxu0 0.0
        %7920 = vmatprep.subr.mxu0 0.0
        %7921 = vmatpush1.msra.mxu0 0.0
        %7922 = vmatprep.subr.mxu0 0.0
        %7923 = vmatpush1.msra.mxu0 0.0
        %7924 = vmatprep.subr.mxu0 0.0
        %7925 = vmatpush1.msra.mxu0 0.0
        %7926 = vmatprep.subr.mxu0 0.0
        %7927 = vmatpush1.msra.mxu0 0.0
        %7928 = vmatprep.subr.mxu0 0.0
        %7929 = vmatpush1.msra.mxu0 0.0
        %7930 = vmatprep.subr.mxu0 0.0
        %7931 = vmatpush1.msra.mxu0 0.0
        %7932 = vmatprep.subr.mxu0 0.0
        %7933 = vmatpush1.msra.mxu0 0.0
        %7934 = vmatprep.subr.mxu0 0.0
        %7935 = vmatpush1.msra.mxu0 0.0
        %7936 = vmatprep.subr.mxu0 0.0
        %7937 = vmatpush1.msra.mxu0 0.0
        %7938 = vmatprep.subr.mxu0 0.0
        %7939 = vmatpush1.msra.mxu0 0.0
        %7940 = vmatprep.subr.mxu0 0.0
        %7941 = vmatpush1.msra.mxu0 0.0
        %7942 = vmatprep.subr.mxu0 0.0
        %7943 = vmatpush1.msra.mxu0 0.0
        %7944 = vmatprep.subr.mxu0 0.0
        %7945 = vmatpush1.msra.mxu0 0.0
        %7946 = vmatprep.subr.mxu0 0.0
        %7947 = vmatpush1.msra.mxu0 0.0
        %7948 = vmatprep.subr.mxu0 0.0
        %7949 = vmatpush1.msra.mxu0 0.0
        %7950 = vmatprep.mubr.f32.mxu0 0.0
        %7951 = vmatmul.mubr.f32.gmra.mrb[0].mxu0 %v7881
        %v7952 = vpop.f32.mrb[0].mxu0
        %v7953 = vadd.f32 0.0, %v7952
        %v7954 = vpop.f32.mrb[0].mxu0
        %7955 = vmatprep.mubr.f32.mxu0 0.0
        %7956 = vmatmul.mubr.f32.gmra.mrb[0].mxu0 %v7884
        %v7957 = vpop.f32.mrb[0].mxu0
        %v7958 = vadd.f32 0.0, %v7957
        %v7959 = vpop.f32.mrb[0].mxu0
        %7960 = vdwg.mxu0
        %7963 = vrot.lane.b32.xlu0 %v7953, 64
        %v7964 = vpop.permute.xlu0 %7963
        %7965 = vrot.lane.b32.xlu0 %v7958, 64
        %v7966 = vpop.permute.xlu0 %7965
        %vm7969 = vcmask 785920
        %7970 = vst.msk [vmem:[%s979] sm:$0xff] %vm7969, %v7964
        %7971 = vst.msk [vmem:[%s979 + $0x8] sm:$0xff] %vm7969, %v7966
        %s7972 = sand.u32 %s764, 1
        %s7973 = scalar_lea.sflag [#allocation5], %s7972
        %s7974 = sand.u32 %s764, 1
        %s7975 = smul.addr %s7974, 16
        %s7976 = scalar_lea.vmem [#allocation4], %s7975
        // Predicated region
        $region149: #{tpu_custom_call.1} parent=147 // pred_check
          %p7977 = pneg %p774
        $region150: #{tpu_custom_call.1} parent=147 // pred_check_branch
          %7979 = sbr.rel (%p7977) target = $region152
        $region151: #{tpu_custom_call.1} parent=147 // pred_region
          %s7981 = ssub.s32 256, 256
          %7982 = vsyncadd %s7973, %s7981
          %s7983 = smul.addr %s79, 2
          %s7984 = smul.addr %s7983, 128
          %s7985 = scalar_lea.hbm %s65, %s7984
          %s7986 = sshll.u32 %s7976, 4
          %s7987 = int_to_ptr.vmem [resolvable:$true] %s7986
          %7992 = dma.vmem_to_hbm [thread:$0]  %s7987, 256, %s7985, %s7973, 128, 128, 8
        $region152: #{tpu_custom_call.1} parent=147 // pred_fallthru
          _
      $region148: #{tpu_custom_call.1} parent=5 // pred_fallthru
        _
      %p7993 = scmp.le.s32.totalorder 2, %s74
      // Predicated region
      $region153: #{tpu_custom_call.1} parent=5 // pred_check
        %p7994 = pneg %p7993
      $region154: #{tpu_custom_call.1} parent=5 // pred_check_branch
        %7996 = sbr.rel (%p7994) target = $region156
      $region155: #{tpu_custom_call.1} parent=5 // pred_region
        %s7997 = ssub.s32 %s74, 2
        // Predicated region
        $region157: #{tpu_custom_call.1} parent=155 // pred_check
          %p7998 = pneg %p780
        $region158: #{tpu_custom_call.1} parent=155 // pred_check_branch
          %8000 = sbr.rel (%p7998) target = $region160
        $region159: #{tpu_custom_call.1} parent=155 // pred_region
          %s8001 = sand.u32 %s765, 1
          %s8002 = scalar_lea.sflag [#allocation5], %s8001
          %s8003 = sand.u32 %s765, 1
          %s8004 = smul.addr %s8003, 16
          %s8005 = scalar_lea.vmem [#allocation4], %s8004
          %8006 = dma.done %s8002, 256
        $region160: #{tpu_custom_call.1} parent=155 // pred_fallthru
          _
      $region156: #{tpu_custom_call.1} parent=5 // pred_fallthru
        _
    $region6: #{tpu_custom_call.1} parent=1 // loop_footer
      %s78 = sadd.s32 1, %s74
    $region7: #{tpu_custom_call.1} parent=1 // loop_footer_branch
      %73 = sbr.rel target = $region3
    $region8: #{tpu_custom_call.1} parent=1 // loop_exit
      _
    %8007 = vsyncpa [#allocation5], 1
    %s8008 = scalar_lea.sflag [#allocation5], 1
    %8009 = vsyncpa %s8008, 1

</llo_original>
